<compile_context>
chip_gen: v7x
topology: tpu7x:2x2x1
jax: 0.10.0
libtpu: 0.0.40
codegen_flags: <defaults>
</compile_context>

<pallas_src>
import numpy as np
import jax
import jax.numpy as jnp
from jax import lax
from jax.experimental import pallas as pl
from jax.experimental.pallas import tpu as pltpu


def _make_kernel(Nb, H, W, C):
    M = Nb * H * W
    K = 9 * C

    def kernel(x_ref, w_ref, b_ref, a_ref, s_ref, o_ref, pad_ref, col_ref):
        # x_ref  : (Nb, H, W, C)       f32   input block (Nb batch elements)
        # w_ref  : (3, 9*C, C)         bf16  conv weights, row = tap*C + cin
        # b_ref  : (3, 1, 1, C)        f32   conv biases
        # a_ref  : (3, 1, 1, C)        f32   PReLU per-channel slopes
        # s_ref  : (5,)     (SMEM)     f32   scale1..scale5
        # o_ref  : (Nb, H, W, C)       f32   output block
        # pad_ref: (Nb, H+2, W+2, C)   f32   zero-padded activation scratch
        # col_ref: (Nb, H, W, 9*C)     bf16  im2col scratch

        # Zero the padded scratch once per grid step: only the halo ring needs
        # the zeros, the interior is fully overwritten before every conv.
        pad_ref[...] = jnp.zeros_like(pad_ref)

        def prelu(v, i):
            return jnp.where(v >= 0.0, v, v * a_ref[i])

        def conv3x3(v, i):
            # Write the activation into the padded interior (halo stays 0).
            pad_ref[:, 1:H + 1, 1:W + 1, :] = v
            # im2col: each shifted patch is copied exactly once (cast to bf16),
            # then a single (M, 9C) x (9C, C) MXU matmul with f32 accumulation.
            for dy in range(3):
                for dx in range(3):
                    t = dy * 3 + dx
                    col_ref[:, :, :, t * C:(t + 1) * C] = (
                        pad_ref[:, dy:dy + H, dx:dx + W, :].astype(jnp.bfloat16))
            out = jnp.dot(col_ref[...].reshape(M, K), w_ref[i],
                          preferred_element_type=jnp.float32)
            return out.reshape(Nb, H, W, C) + b_ref[i]

        s1, s2, s3, s4, s5 = (s_ref[j] for j in range(5))

        x = x_ref[...]
        yn = x
        k1 = conv3x3(prelu(x, 0), 0)
        yn_1 = k1 * s1 + yn
        k2 = conv3x3(prelu(yn_1, 1), 1)
        yn_2 = yn + s2 * k2 + k1 * s3
        k3 = conv3x3(prelu(yn_2, 2), 2)
        o_ref[...] = (k3 + k2 * s4 + k1) * s5 + yn

    return kernel


def residual_block_pallas(x_nchw, w_oihw, b, alpha, scales, max_block_n=8):
    """x_nchw: (N, C, H, W); w_oihw: (3, C, C, 3, 3); b, alpha: (3, C); scales: (5,)."""
    x = jnp.transpose(x_nchw, (0, 2, 3, 1)).astype(jnp.float32)   # -> NHWC
    N, H, W, C = x.shape

    # Fold several batch elements into one grid step (largest divisor of N
    # not exceeding max_block_n).  VMEM use stays tiny at these sizes; for
    # much larger H/W/C re-derive the tile for v7x's 64 MiB VMEM.
    Nb = min(N, max_block_n)
    while N % Nb:
        Nb -= 1

    # (conv, Cout, Cin, ky, kx) -> (conv, tap*Cin, Cout) with tap = ky*3 + kx,
    # matching the im2col column ordering.  bf16: MXU-native operands.
    w_k = (jnp.transpose(w_oihw, (0, 3, 4, 2, 1))
           .reshape(3, 9 * C, C).astype(jnp.bfloat16))
    b4 = b.reshape(3, 1, 1, C).astype(jnp.float32)
    a4 = alpha.reshape(3, 1, 1, C).astype(jnp.float32)
    scales = scales.astype(jnp.float32)

    kernel = _make_kernel(Nb, H, W, C)
    out = pl.pallas_call(
        kernel,
        out_shape=jax.ShapeDtypeStruct((N, H, W, C), jnp.float32),
        grid_spec=pltpu.PrefetchScalarGridSpec(
            num_scalar_prefetch=0,
            grid=(N // Nb,),
            in_specs=[
                pl.BlockSpec((Nb, H, W, C), lambda n: (n, 0, 0, 0)),
                pl.BlockSpec((3, 9 * C, C), lambda n: (0, 0, 0)),
                pl.BlockSpec((3, 1, 1, C), lambda n: (0, 0, 0, 0)),
                pl.BlockSpec((3, 1, 1, C), lambda n: (0, 0, 0, 0)),
                pl.BlockSpec(memory_space=pltpu.MemorySpace.SMEM),
            ],
            out_specs=pl.BlockSpec((Nb, H, W, C), lambda n: (n, 0, 0, 0)),
            scratch_shapes=[
                pltpu.VMEM((Nb, H + 2, W + 2, C), jnp.float32),   # padded act
                pltpu.VMEM((Nb, H, W, 9 * C), jnp.bfloat16),      # im2col
            ],
        ),
        # Batch axis is dependency-free -> "parallel" lets v7x use both TCs.
        compiler_params=pltpu.CompilerParams(
            dimension_semantics=("parallel",)),
    )(x, w_k, b4, a4, scales)
    return jnp.transpose(out, (0, 3, 1, 2))                        # -> NCHW


def residual_block_ref(x_nchw, w_oihw, b, alpha, scales):
    """Pure-JAX reference (same math as the PyTorch module), NCHW in/out."""
    x = jnp.transpose(x_nchw, (0, 2, 3, 1)).astype(jnp.float32)

    def conv(v, i):
        w_hwio = jnp.transpose(w_oihw[i], (2, 3, 1, 0))
        return lax.conv_general_dilated(
            v, w_hwio, (1, 1), "SAME",
            dimension_numbers=("NHWC", "HWIO", "NHWC"),
            precision=lax.Precision.HIGHEST) + b[i]

    def prelu(v, i):
        return jnp.where(v >= 0.0, v, v * alpha[i])

    s1, s2, s3, s4, s5 = (scales[j] for j in range(5))
    yn = x
    k1 = conv(prelu(x, 0), 0)
    yn_1 = k1 * s1 + yn
    k2 = conv(prelu(yn_1, 1), 1)
    yn_2 = yn + s2 * k2
    yn_2 = yn_2 + k1 * s3
    k3 = conv(prelu(yn_2, 2), 2)
    yn_3 = k3 + k2 * s4 + k1
    yn_3 = yn_3 * s5
    out = yn_3 + yn
    return jnp.transpose(out, (0, 3, 1, 2))


if __name__ == "__main__":
    N, C, H, W = 2, 16, 16, 16          # n_feats = 16
    key = jax.random.PRNGKey(0)
    kx, kw, kb = jax.random.split(key, 3)

    # Round inputs/weights to bf16-representable values so that the bf16 MXU
    # operands in the kernel vs the HIGHEST-precision f32 conv in the
    # reference only differ by (small) activation rounding.
    def q(v):
        return v.astype(jnp.bfloat16).astype(jnp.float32)

    x = q(jax.random.normal(kx, (N, C, H, W), jnp.float32))
    w = q(jax.random.normal(kw, (3, C, C, 3, 3), jnp.float32) * 0.1)   # 3 convs, OIHW
    b = q(jax.random.normal(kb, (3, C), jnp.float32) * 0.05)
    alpha = jnp.full((3, C), 0.25, jnp.float32)                        # PReLU init 0.25
    scales = jnp.array([0.5, 2.0, -1.0, 4.0, 1.0 / 6.0], jnp.float32)  # scale1..scale5

    out = jax.block_until_ready(residual_block_pallas(x, w, b, alpha, scales))
    ref = jax.block_until_ready(residual_block_ref(x, w, b, alpha, scales))

    # Tolerance covers bf16 rounding of the conv2/conv3 input activations and
    # MXU vs HIGHEST-precision accumulation order differences.
    np.testing.assert_allclose(np.asarray(out), np.asarray(ref),
                               rtol=5e-2, atol=5e-2)
    print("KERNEL_OK")
</pallas_src>

<mosaic_0001>
module attributes {stable_mosaic.version = 11 : i64} {
  func.func @kernel(%arg0: i32, %arg1: memref<2x16x16x16xf32, #tpu.memory_space<vmem>>, %arg2: memref<3x144x16xbf16, #tpu.memory_space<vmem>>, %arg3: memref<3x1x1x16xf32, #tpu.memory_space<vmem>>, %arg4: memref<3x1x1x16xf32, #tpu.memory_space<vmem>>, %arg5: memref<5xf32, #tpu.memory_space<smem>>, %arg6: memref<2x16x16x16xf32, #tpu.memory_space<vmem>>, %arg7: memref<2x18x18x16xf32, #tpu.memory_space<vmem>>, %arg8: memref<2x16x16x144xbf16, #tpu.memory_space<vmem>>) attributes {dimension_semantics = [#tpu.dimension_semantics<parallel>], iteration_bounds = array<i64: 1>, scalar_prefetch = 0 : i64, scratch_operands = 2 : i64, tpu.core_type = #tpu.core_type<tc>, window_params = [{transform_indices = @transform_0, window_bounds = array<i64: 2, 16, 16, 16>}, {pipeline_mode = #tpu.pipeline_mode<synchronous>, transform_indices = @transform_1, window_bounds = array<i64: 3, 144, 16>}, {pipeline_mode = #tpu.pipeline_mode<synchronous>, transform_indices = @transform_2, window_bounds = array<i64: 3, 1, 1, 16>}, {pipeline_mode = #tpu.pipeline_mode<synchronous>, transform_indices = @transform_3, window_bounds = array<i64: 3, 1, 1, 16>}, {transform_indices = @transform_4, window_bounds = array<i64: 5>}, {transform_indices = @transform_5, window_bounds = array<i64: 2, 16, 16, 16>}]} {
    %cst = arith.constant 0.000000e+00 : f32
    %0 = vector.broadcast %cst : f32 to vector<2x18x18x16xf32>
    %c0 = arith.constant 0 : index
    %c0_0 = arith.constant 0 : index
    %c0_1 = arith.constant 0 : index
    %c0_2 = arith.constant 0 : index
    %1 = vector.load %arg7[%c0, %c0_0, %c0_1, %c0_2] : memref<2x18x18x16xf32, #tpu.memory_space<vmem>>, vector<2x18x18x16xf32>
    tpu.vector_store %arg7[%c0, %c0_0, %c0_1, %c0_2], %0 {strides = array<i32>} : memref<2x18x18x16xf32, #tpu.memory_space<vmem>>, vector<2x18x18x16xf32>,
    %c0_3 = arith.constant 0 : index
    %2 = memref.load %arg5[%c0_3] : memref<5xf32, #tpu.memory_space<smem>>
    %c1 = arith.constant 1 : index
    %3 = memref.load %arg5[%c1] : memref<5xf32, #tpu.memory_space<smem>>
    %c2 = arith.constant 2 : index
    %4 = memref.load %arg5[%c2] : memref<5xf32, #tpu.memory_space<smem>>
    %c3 = arith.constant 3 : index
    %5 = memref.load %arg5[%c3] : memref<5xf32, #tpu.memory_space<smem>>
    %c4 = arith.constant 4 : index
    %6 = memref.load %arg5[%c4] : memref<5xf32, #tpu.memory_space<smem>>
    %c0_4 = arith.constant 0 : index
    %c0_5 = arith.constant 0 : index
    %c0_6 = arith.constant 0 : index
    %c0_7 = arith.constant 0 : index
    %7 = vector.load %arg1[%c0_4, %c0_5, %c0_6, %c0_7] : memref<2x16x16x16xf32, #tpu.memory_space<vmem>>, vector<2x16x16x16xf32>
    %cst_8 = arith.constant 0.000000e+00 : f32
    %8 = vector.broadcast %cst_8 : f32 to vector<2x16x16x16xf32>
    %9 = arith.cmpf oge, %7, %8 : vector<2x16x16x16xf32>
    %c0_9 = arith.constant 0 : index
    %c0_10 = arith.constant 0 : index
    %c0_11 = arith.constant 0 : index
    %c0_12 = arith.constant 0 : index
    %10 = vector.load %arg4[%c0_9, %c0_10, %c0_11, %c0_12] : memref<3x1x1x16xf32, #tpu.memory_space<vmem>>, vector<1x1x1x16xf32>
    %11 = vector.shape_cast %10 : vector<1x1x1x16xf32> to vector<1x1x16xf32>
    %12 = vector.shape_cast %11 : vector<1x1x16xf32> to vector<1x1x1x16xf32>
    %13 = vector.broadcast %12 : vector<1x1x1x16xf32> to vector<2x16x16x16xf32>
    %14 = arith.mulf %7, %13 : vector<2x16x16x16xf32>
    %15 = arith.select %9, %7, %14 : vector<2x16x16x16xi1>, vector<2x16x16x16xf32>
    %c0_13 = arith.constant 0 : index
    %c1_14 = arith.constant 1 : index
    %c1_15 = arith.constant 1 : index
    %c0_16 = arith.constant 0 : index
    %16 = vector.load %arg7[%c0_13, %c1_14, %c1_15, %c0_16] : memref<2x18x18x16xf32, #tpu.memory_space<vmem>>, vector<2x16x16x16xf32>
    tpu.vector_store %arg7[%c0_13, %c1_14, %c1_15, %c0_16], %15 {strides = array<i32>} : memref<2x18x18x16xf32, #tpu.memory_space<vmem>>, vector<2x16x16x16xf32>,
    %c0_17 = arith.constant 0 : index
    %c0_18 = arith.constant 0 : index
    %c0_19 = arith.constant 0 : index
    %c0_20 = arith.constant 0 : index
    %17 = vector.load %arg7[%c0_17, %c0_18, %c0_19, %c0_20] : memref<2x18x18x16xf32, #tpu.memory_space<vmem>>, vector<2x16x16x16xf32>
    %18 = arith.truncf %17 : vector<2x16x16x16xf32> to vector<2x16x16x16xbf16>
    %c0_21 = arith.constant 0 : index
    %c0_22 = arith.constant 0 : index
    %c0_23 = arith.constant 0 : index
    %c0_24 = arith.constant 0 : index
    %19 = vector.load %arg8[%c0_21, %c0_22, %c0_23, %c0_24] : memref<2x16x16x144xbf16, #tpu.memory_space<vmem>>, vector<2x16x16x16xbf16>
    tpu.vector_store %arg8[%c0_21, %c0_22, %c0_23, %c0_24], %18 {strides = array<i32>} : memref<2x16x16x144xbf16, #tpu.memory_space<vmem>>, vector<2x16x16x16xbf16>,
    %c0_25 = arith.constant 0 : index
    %c0_26 = arith.constant 0 : index
    %c1_27 = arith.constant 1 : index
    %c0_28 = arith.constant 0 : index
    %20 = vector.load %arg7[%c0_25, %c0_26, %c1_27, %c0_28] : memref<2x18x18x16xf32, #tpu.memory_space<vmem>>, vector<2x16x16x16xf32>
    %21 = arith.truncf %20 : vector<2x16x16x16xf32> to vector<2x16x16x16xbf16>
    %c0_29 = arith.constant 0 : index
    %c0_30 = arith.constant 0 : index
    %c0_31 = arith.constant 0 : index
    %c16 = arith.constant 16 : index
    %22 = vector.load %arg8[%c0_29, %c0_30, %c0_31, %c16] : memref<2x16x16x144xbf16, #tpu.memory_space<vmem>>, vector<2x16x16x16xbf16>
    tpu.vector_store %arg8[%c0_29, %c0_30, %c0_31, %c16], %21 {strides = array<i32>} : memref<2x16x16x144xbf16, #tpu.memory_space<vmem>>, vector<2x16x16x16xbf16>,
    %c0_32 = arith.constant 0 : index
    %c0_33 = arith.constant 0 : index
    %c2_34 = arith.constant 2 : index
    %c0_35 = arith.constant 0 : index
    %23 = vector.load %arg7[%c0_32, %c0_33, %c2_34, %c0_35] : memref<2x18x18x16xf32, #tpu.memory_space<vmem>>, vector<2x16x16x16xf32>
    %24 = arith.truncf %23 : vector<2x16x16x16xf32> to vector<2x16x16x16xbf16>
    %c0_36 = arith.constant 0 : index
    %c0_37 = arith.constant 0 : index
    %c0_38 = arith.constant 0 : index
    %c32 = arith.constant 32 : index
    %25 = vector.load %arg8[%c0_36, %c0_37, %c0_38, %c32] : memref<2x16x16x144xbf16, #tpu.memory_space<vmem>>, vector<2x16x16x16xbf16>
    tpu.vector_store %arg8[%c0_36, %c0_37, %c0_38, %c32], %24 {strides = array<i32>} : memref<2x16x16x144xbf16, #tpu.memory_space<vmem>>, vector<2x16x16x16xbf16>,
    %c0_39 = arith.constant 0 : index
    %c1_40 = arith.constant 1 : index
    %c0_41 = arith.constant 0 : index
    %c0_42 = arith.constant 0 : index
    %26 = vector.load %arg7[%c0_39, %c1_40, %c0_41, %c0_42] : memref<2x18x18x16xf32, #tpu.memory_space<vmem>>, vector<2x16x16x16xf32>
    %27 = arith.truncf %26 : vector<2x16x16x16xf32> to vector<2x16x16x16xbf16>
    %c0_43 = arith.constant 0 : index
    %c0_44 = arith.constant 0 : index
    %c0_45 = arith.constant 0 : index
    %c48 = arith.constant 48 : index
    %28 = vector.load %arg8[%c0_43, %c0_44, %c0_45, %c48] : memref<2x16x16x144xbf16, #tpu.memory_space<vmem>>, vector<2x16x16x16xbf16>
    tpu.vector_store %arg8[%c0_43, %c0_44, %c0_45, %c48], %27 {strides = array<i32>} : memref<2x16x16x144xbf16, #tpu.memory_space<vmem>>, vector<2x16x16x16xbf16>,
    %c0_46 = arith.constant 0 : index
    %c1_47 = arith.constant 1 : index
    %c1_48 = arith.constant 1 : index
    %c0_49 = arith.constant 0 : index
    %29 = vector.load %arg7[%c0_46, %c1_47, %c1_48, %c0_49] : memref<2x18x18x16xf32, #tpu.memory_space<vmem>>, vector<2x16x16x16xf32>
    %30 = arith.truncf %29 : vector<2x16x16x16xf32> to vector<2x16x16x16xbf16>
    %c0_50 = arith.constant 0 : index
    %c0_51 = arith.constant 0 : index
    %c0_52 = arith.constant 0 : index
    %c64 = arith.constant 64 : index
    %31 = vector.load %arg8[%c0_50, %c0_51, %c0_52, %c64] : memref<2x16x16x144xbf16, #tpu.memory_space<vmem>>, vector<2x16x16x16xbf16>
    tpu.vector_store %arg8[%c0_50, %c0_51, %c0_52, %c64], %30 {strides = array<i32>} : memref<2x16x16x144xbf16, #tpu.memory_space<vmem>>, vector<2x16x16x16xbf16>,
    %c0_53 = arith.constant 0 : index
    %c1_54 = arith.constant 1 : index
    %c2_55 = arith.constant 2 : index
    %c0_56 = arith.constant 0 : index
    %32 = vector.load %arg7[%c0_53, %c1_54, %c2_55, %c0_56] : memref<2x18x18x16xf32, #tpu.memory_space<vmem>>, vector<2x16x16x16xf32>
    %33 = arith.truncf %32 : vector<2x16x16x16xf32> to vector<2x16x16x16xbf16>
    %c0_57 = arith.constant 0 : index
    %c0_58 = arith.constant 0 : index
    %c0_59 = arith.constant 0 : index
    %c80 = arith.constant 80 : index
    %34 = vector.load %arg8[%c0_57, %c0_58, %c0_59, %c80] : memref<2x16x16x144xbf16, #tpu.memory_space<vmem>>, vector<2x16x16x16xbf16>
    tpu.vector_store %arg8[%c0_57, %c0_58, %c0_59, %c80], %33 {strides = array<i32>} : memref<2x16x16x144xbf16, #tpu.memory_space<vmem>>, vector<2x16x16x16xbf16>,
    %c0_60 = arith.constant 0 : index
    %c2_61 = arith.constant 2 : index
    %c0_62 = arith.constant 0 : index
    %c0_63 = arith.constant 0 : index
    %35 = vector.load %arg7[%c0_60, %c2_61, %c0_62, %c0_63] : memref<2x18x18x16xf32, #tpu.memory_space<vmem>>, vector<2x16x16x16xf32>
    %36 = arith.truncf %35 : vector<2x16x16x16xf32> to vector<2x16x16x16xbf16>
    %c0_64 = arith.constant 0 : index
    %c0_65 = arith.constant 0 : index
    %c0_66 = arith.constant 0 : index
    %c96 = arith.constant 96 : index
    %37 = vector.load %arg8[%c0_64, %c0_65, %c0_66, %c96] : memref<2x16x16x144xbf16, #tpu.memory_space<vmem>>, vector<2x16x16x16xbf16>
    tpu.vector_store %arg8[%c0_64, %c0_65, %c0_66, %c96], %36 {strides = array<i32>} : memref<2x16x16x144xbf16, #tpu.memory_space<vmem>>, vector<2x16x16x16xbf16>,
    %c0_67 = arith.constant 0 : index
    %c2_68 = arith.constant 2 : index
    %c1_69 = arith.constant 1 : index
    %c0_70 = arith.constant 0 : index
    %38 = vector.load %arg7[%c0_67, %c2_68, %c1_69, %c0_70] : memref<2x18x18x16xf32, #tpu.memory_space<vmem>>, vector<2x16x16x16xf32>
    %39 = arith.truncf %38 : vector<2x16x16x16xf32> to vector<2x16x16x16xbf16>
    %c0_71 = arith.constant 0 : index
    %c0_72 = arith.constant 0 : index
    %c0_73 = arith.constant 0 : index
    %c112 = arith.constant 112 : index
    %40 = vector.load %arg8[%c0_71, %c0_72, %c0_73, %c112] : memref<2x16x16x144xbf16, #tpu.memory_space<vmem>>, vector<2x16x16x16xbf16>
    tpu.vector_store %arg8[%c0_71, %c0_72, %c0_73, %c112], %39 {strides = array<i32>} : memref<2x16x16x144xbf16, #tpu.memory_space<vmem>>, vector<2x16x16x16xbf16>,
    %c0_74 = arith.constant 0 : index
    %c2_75 = arith.constant 2 : index
    %c2_76 = arith.constant 2 : index
    %c0_77 = arith.constant 0 : index
    %41 = vector.load %arg7[%c0_74, %c2_75, %c2_76, %c0_77] : memref<2x18x18x16xf32, #tpu.memory_space<vmem>>, vector<2x16x16x16xf32>
    %42 = arith.truncf %41 : vector<2x16x16x16xf32> to vector<2x16x16x16xbf16>
    %c0_78 = arith.constant 0 : index
    %c0_79 = arith.constant 0 : index
    %c0_80 = arith.constant 0 : index
    %c128 = arith.constant 128 : index
    %43 = vector.load %arg8[%c0_78, %c0_79, %c0_80, %c128] : memref<2x16x16x144xbf16, #tpu.memory_space<vmem>>, vector<2x16x16x16xbf16>
    tpu.vector_store %arg8[%c0_78, %c0_79, %c0_80, %c128], %42 {strides = array<i32>} : memref<2x16x16x144xbf16, #tpu.memory_space<vmem>>, vector<2x16x16x16xbf16>,
    %c0_81 = arith.constant 0 : index
    %c0_82 = arith.constant 0 : index
    %c0_83 = arith.constant 0 : index
    %c0_84 = arith.constant 0 : index
    %44 = vector.load %arg8[%c0_81, %c0_82, %c0_83, %c0_84] : memref<2x16x16x144xbf16, #tpu.memory_space<vmem>>, vector<2x16x16x144xbf16>
    %45 = vector.shape_cast %44 : vector<2x16x16x144xbf16> to vector<512x144xbf16>
    %c0_85 = arith.constant 0 : index
    %c0_86 = arith.constant 0 : index
    %c0_87 = arith.constant 0 : index
    %46 = vector.load %arg2[%c0_85, %c0_86, %c0_87] : memref<3x144x16xbf16, #tpu.memory_space<vmem>>, vector<1x144x16xbf16>
    %47 = vector.shape_cast %46 : vector<1x144x16xbf16> to vector<144x16xbf16>
    %cst_88 = arith.constant dense<0.000000e+00> : vector<512x16xf32>
    %48 = tpu.matmul %45, %47, %cst_88 {dimension_numbers = #tpu.dot_dimension_numbers<[1], [0], [0], [1], [0, 0, 1, 1], [], []>} : vector<512x144xbf16>, vector<144x16xbf16>, vector<512x16xf32> -> vector<512x16xf32>
    %49 = vector.shape_cast %48 : vector<512x16xf32> to vector<2x16x16x16xf32>
    %c0_89 = arith.constant 0 : index
    %c0_90 = arith.constant 0 : index
    %c0_91 = arith.constant 0 : index
    %c0_92 = arith.constant 0 : index
    %50 = vector.load %arg3[%c0_89, %c0_90, %c0_91, %c0_92] : memref<3x1x1x16xf32, #tpu.memory_space<vmem>>, vector<1x1x1x16xf32>
    %51 = vector.shape_cast %50 : vector<1x1x1x16xf32> to vector<1x1x16xf32>
    %52 = vector.shape_cast %51 : vector<1x1x16xf32> to vector<1x1x1x16xf32>
    %53 = vector.broadcast %52 : vector<1x1x1x16xf32> to vector<2x16x16x16xf32>
    %54 = arith.addf %49, %53 : vector<2x16x16x16xf32>
    %55 = vector.broadcast %2 : f32 to vector<2x16x16x16xf32>
    %56 = arith.mulf %54, %55 : vector<2x16x16x16xf32>
    %57 = arith.addf %56, %7 : vector<2x16x16x16xf32>
    %cst_93 = arith.constant 0.000000e+00 : f32
    %58 = vector.broadcast %cst_93 : f32 to vector<2x16x16x16xf32>
    %59 = arith.cmpf oge, %57, %58 : vector<2x16x16x16xf32>
    %c1_94 = arith.constant 1 : index
    %c0_95 = arith.constant 0 : index
    %c0_96 = arith.constant 0 : index
    %c0_97 = arith.constant 0 : index
    %60 = vector.load %arg4[%c1_94, %c0_95, %c0_96, %c0_97] : memref<3x1x1x16xf32, #tpu.memory_space<vmem>>, vector<1x1x1x16xf32>
    %61 = vector.shape_cast %60 : vector<1x1x1x16xf32> to vector<1x1x16xf32>
    %62 = vector.shape_cast %61 : vector<1x1x16xf32> to vector<1x1x1x16xf32>
    %63 = vector.broadcast %62 : vector<1x1x1x16xf32> to vector<2x16x16x16xf32>
    %64 = arith.mulf %57, %63 : vector<2x16x16x16xf32>
    %65 = arith.select %59, %57, %64 : vector<2x16x16x16xi1>, vector<2x16x16x16xf32>
    %c0_98 = arith.constant 0 : index
    %c1_99 = arith.constant 1 : index
    %c1_100 = arith.constant 1 : index
    %c0_101 = arith.constant 0 : index
    %66 = vector.load %arg7[%c0_98, %c1_99, %c1_100, %c0_101] : memref<2x18x18x16xf32, #tpu.memory_space<vmem>>, vector<2x16x16x16xf32>
    tpu.vector_store %arg7[%c0_98, %c1_99, %c1_100, %c0_101], %65 {strides = array<i32>} : memref<2x18x18x16xf32, #tpu.memory_space<vmem>>, vector<2x16x16x16xf32>,
    %c0_102 = arith.constant 0 : index
    %c0_103 = arith.constant 0 : index
    %c0_104 = arith.constant 0 : index
    %c0_105 = arith.constant 0 : index
    %67 = vector.load %arg7[%c0_102, %c0_103, %c0_104, %c0_105] : memref<2x18x18x16xf32, #tpu.memory_space<vmem>>, vector<2x16x16x16xf32>
    %68 = arith.truncf %67 : vector<2x16x16x16xf32> to vector<2x16x16x16xbf16>
    %c0_106 = arith.constant 0 : index
    %c0_107 = arith.constant 0 : index
    %c0_108 = arith.constant 0 : index
    %c0_109 = arith.constant 0 : index
    %69 = vector.load %arg8[%c0_106, %c0_107, %c0_108, %c0_109] : memref<2x16x16x144xbf16, #tpu.memory_space<vmem>>, vector<2x16x16x16xbf16>
    tpu.vector_store %arg8[%c0_106, %c0_107, %c0_108, %c0_109], %68 {strides = array<i32>} : memref<2x16x16x144xbf16, #tpu.memory_space<vmem>>, vector<2x16x16x16xbf16>,
    %c0_110 = arith.constant 0 : index
    %c0_111 = arith.constant 0 : index
    %c1_112 = arith.constant 1 : index
    %c0_113 = arith.constant 0 : index
    %70 = vector.load %arg7[%c0_110, %c0_111, %c1_112, %c0_113] : memref<2x18x18x16xf32, #tpu.memory_space<vmem>>, vector<2x16x16x16xf32>
    %71 = arith.truncf %70 : vector<2x16x16x16xf32> to vector<2x16x16x16xbf16>
    %c0_114 = arith.constant 0 : index
    %c0_115 = arith.constant 0 : index
    %c0_116 = arith.constant 0 : index
    %c16_117 = arith.constant 16 : index
    %72 = vector.load %arg8[%c0_114, %c0_115, %c0_116, %c16_117] : memref<2x16x16x144xbf16, #tpu.memory_space<vmem>>, vector<2x16x16x16xbf16>
    tpu.vector_store %arg8[%c0_114, %c0_115, %c0_116, %c16_117], %71 {strides = array<i32>} : memref<2x16x16x144xbf16, #tpu.memory_space<vmem>>, vector<2x16x16x16xbf16>,
    %c0_118 = arith.constant 0 : index
    %c0_119 = arith.constant 0 : index
    %c2_120 = arith.constant 2 : index
    %c0_121 = arith.constant 0 : index
    %73 = vector.load %arg7[%c0_118, %c0_119, %c2_120, %c0_121] : memref<2x18x18x16xf32, #tpu.memory_space<vmem>>, vector<2x16x16x16xf32>
    %74 = arith.truncf %73 : vector<2x16x16x16xf32> to vector<2x16x16x16xbf16>
    %c0_122 = arith.constant 0 : index
    %c0_123 = arith.constant 0 : index
    %c0_124 = arith.constant 0 : index
    %c32_125 = arith.constant 32 : index
    %75 = vector.load %arg8[%c0_122, %c0_123, %c0_124, %c32_125] : memref<2x16x16x144xbf16, #tpu.memory_space<vmem>>, vector<2x16x16x16xbf16>
    tpu.vector_store %arg8[%c0_122, %c0_123, %c0_124, %c32_125], %74 {strides = array<i32>} : memref<2x16x16x144xbf16, #tpu.memory_space<vmem>>, vector<2x16x16x16xbf16>,
    %c0_126 = arith.constant 0 : index
    %c1_127 = arith.constant 1 : index
    %c0_128 = arith.constant 0 : index
    %c0_129 = arith.constant 0 : index
    %76 = vector.load %arg7[%c0_126, %c1_127, %c0_128, %c0_129] : memref<2x18x18x16xf32, #tpu.memory_space<vmem>>, vector<2x16x16x16xf32>
    %77 = arith.truncf %76 : vector<2x16x16x16xf32> to vector<2x16x16x16xbf16>
    %c0_130 = arith.constant 0 : index
    %c0_131 = arith.constant 0 : index
    %c0_132 = arith.constant 0 : index
    %c48_133 = arith.constant 48 : index
    %78 = vector.load %arg8[%c0_130, %c0_131, %c0_132, %c48_133] : memref<2x16x16x144xbf16, #tpu.memory_space<vmem>>, vector<2x16x16x16xbf16>
    tpu.vector_store %arg8[%c0_130, %c0_131, %c0_132, %c48_133], %77 {strides = array<i32>} : memref<2x16x16x144xbf16, #tpu.memory_space<vmem>>, vector<2x16x16x16xbf16>,
    %c0_134 = arith.constant 0 : index
    %c1_135 = arith.constant 1 : index
    %c1_136 = arith.constant 1 : index
    %c0_137 = arith.constant 0 : index
    %79 = vector.load %arg7[%c0_134, %c1_135, %c1_136, %c0_137] : memref<2x18x18x16xf32, #tpu.memory_space<vmem>>, vector<2x16x16x16xf32>
    %80 = arith.truncf %79 : vector<2x16x16x16xf32> to vector<2x16x16x16xbf16>
    %c0_138 = arith.constant 0 : index
    %c0_139 = arith.constant 0 : index
    %c0_140 = arith.constant 0 : index
    %c64_141 = arith.constant 64 : index
    %81 = vector.load %arg8[%c0_138, %c0_139, %c0_140, %c64_141] : memref<2x16x16x144xbf16, #tpu.memory_space<vmem>>, vector<2x16x16x16xbf16>
    tpu.vector_store %arg8[%c0_138, %c0_139, %c0_140, %c64_141], %80 {strides = array<i32>} : memref<2x16x16x144xbf16, #tpu.memory_space<vmem>>, vector<2x16x16x16xbf16>,
    %c0_142 = arith.constant 0 : index
    %c1_143 = arith.constant 1 : index
    %c2_144 = arith.constant 2 : index
    %c0_145 = arith.constant 0 : index
    %82 = vector.load %arg7[%c0_142, %c1_143, %c2_144, %c0_145] : memref<2x18x18x16xf32, #tpu.memory_space<vmem>>, vector<2x16x16x16xf32>
    %83 = arith.truncf %82 : vector<2x16x16x16xf32> to vector<2x16x16x16xbf16>
    %c0_146 = arith.constant 0 : index
    %c0_147 = arith.constant 0 : index
    %c0_148 = arith.constant 0 : index
    %c80_149 = arith.constant 80 : index
    %84 = vector.load %arg8[%c0_146, %c0_147, %c0_148, %c80_149] : memref<2x16x16x144xbf16, #tpu.memory_space<vmem>>, vector<2x16x16x16xbf16>
    tpu.vector_store %arg8[%c0_146, %c0_147, %c0_148, %c80_149], %83 {strides = array<i32>} : memref<2x16x16x144xbf16, #tpu.memory_space<vmem>>, vector<2x16x16x16xbf16>,
    %c0_150 = arith.constant 0 : index
    %c2_151 = arith.constant 2 : index
    %c0_152 = arith.constant 0 : index
    %c0_153 = arith.constant 0 : index
    %85 = vector.load %arg7[%c0_150, %c2_151, %c0_152, %c0_153] : memref<2x18x18x16xf32, #tpu.memory_space<vmem>>, vector<2x16x16x16xf32>
    %86 = arith.truncf %85 : vector<2x16x16x16xf32> to vector<2x16x16x16xbf16>
    %c0_154 = arith.constant 0 : index
    %c0_155 = arith.constant 0 : index
    %c0_156 = arith.constant 0 : index
    %c96_157 = arith.constant 96 : index
    %87 = vector.load %arg8[%c0_154, %c0_155, %c0_156, %c96_157] : memref<2x16x16x144xbf16, #tpu.memory_space<vmem>>, vector<2x16x16x16xbf16>
    tpu.vector_store %arg8[%c0_154, %c0_155, %c0_156, %c96_157], %86 {strides = array<i32>} : memref<2x16x16x144xbf16, #tpu.memory_space<vmem>>, vector<2x16x16x16xbf16>,
    %c0_158 = arith.constant 0 : index
    %c2_159 = arith.constant 2 : index
    %c1_160 = arith.constant 1 : index
    %c0_161 = arith.constant 0 : index
    %88 = vector.load %arg7[%c0_158, %c2_159, %c1_160, %c0_161] : memref<2x18x18x16xf32, #tpu.memory_space<vmem>>, vector<2x16x16x16xf32>
    %89 = arith.truncf %88 : vector<2x16x16x16xf32> to vector<2x16x16x16xbf16>
    %c0_162 = arith.constant 0 : index
    %c0_163 = arith.constant 0 : index
    %c0_164 = arith.constant 0 : index
    %c112_165 = arith.constant 112 : index
    %90 = vector.load %arg8[%c0_162, %c0_163, %c0_164, %c112_165] : memref<2x16x16x144xbf16, #tpu.memory_space<vmem>>, vector<2x16x16x16xbf16>
    tpu.vector_store %arg8[%c0_162, %c0_163, %c0_164, %c112_165], %89 {strides = array<i32>} : memref<2x16x16x144xbf16, #tpu.memory_space<vmem>>, vector<2x16x16x16xbf16>,
    %c0_166 = arith.constant 0 : index
    %c2_167 = arith.constant 2 : index
    %c2_168 = arith.constant 2 : index
    %c0_169 = arith.constant 0 : index
    %91 = vector.load %arg7[%c0_166, %c2_167, %c2_168, %c0_169] : memref<2x18x18x16xf32, #tpu.memory_space<vmem>>, vector<2x16x16x16xf32>
    %92 = arith.truncf %91 : vector<2x16x16x16xf32> to vector<2x16x16x16xbf16>
    %c0_170 = arith.constant 0 : index
    %c0_171 = arith.constant 0 : index
    %c0_172 = arith.constant 0 : index
    %c128_173 = arith.constant 128 : index
    %93 = vector.load %arg8[%c0_170, %c0_171, %c0_172, %c128_173] : memref<2x16x16x144xbf16, #tpu.memory_space<vmem>>, vector<2x16x16x16xbf16>
    tpu.vector_store %arg8[%c0_170, %c0_171, %c0_172, %c128_173], %92 {strides = array<i32>} : memref<2x16x16x144xbf16, #tpu.memory_space<vmem>>, vector<2x16x16x16xbf16>,
    %c0_174 = arith.constant 0 : index
    %c0_175 = arith.constant 0 : index
    %c0_176 = arith.constant 0 : index
    %c0_177 = arith.constant 0 : index
    %94 = vector.load %arg8[%c0_174, %c0_175, %c0_176, %c0_177] : memref<2x16x16x144xbf16, #tpu.memory_space<vmem>>, vector<2x16x16x144xbf16>
    %95 = vector.shape_cast %94 : vector<2x16x16x144xbf16> to vector<512x144xbf16>
    %c1_178 = arith.constant 1 : index
    %c0_179 = arith.constant 0 : index
    %c0_180 = arith.constant 0 : index
    %96 = vector.load %arg2[%c1_178, %c0_179, %c0_180] : memref<3x144x16xbf16, #tpu.memory_space<vmem>>, vector<1x144x16xbf16>
    %97 = vector.shape_cast %96 : vector<1x144x16xbf16> to vector<144x16xbf16>
    %cst_181 = arith.constant dense<0.000000e+00> : vector<512x16xf32>
    %98 = tpu.matmul %95, %97, %cst_181 {dimension_numbers = #tpu.dot_dimension_numbers<[1], [0], [0], [1], [0, 0, 1, 1], [], []>} : vector<512x144xbf16>, vector<144x16xbf16>, vector<512x16xf32> -> vector<512x16xf32>
    %99 = vector.shape_cast %98 : vector<512x16xf32> to vector<2x16x16x16xf32>
    %c1_182 = arith.constant 1 : index
    %c0_183 = arith.constant 0 : index
    %c0_184 = arith.constant 0 : index
    %c0_185 = arith.constant 0 : index
    %100 = vector.load %arg3[%c1_182, %c0_183, %c0_184, %c0_185] : memref<3x1x1x16xf32, #tpu.memory_space<vmem>>, vector<1x1x1x16xf32>
    %101 = vector.shape_cast %100 : vector<1x1x1x16xf32> to vector<1x1x16xf32>
    %102 = vector.shape_cast %101 : vector<1x1x16xf32> to vector<1x1x1x16xf32>
    %103 = vector.broadcast %102 : vector<1x1x1x16xf32> to vector<2x16x16x16xf32>
    %104 = arith.addf %99, %103 : vector<2x16x16x16xf32>
    %105 = vector.broadcast %3 : f32 to vector<2x16x16x16xf32>
    %106 = arith.mulf %105, %104 : vector<2x16x16x16xf32>
    %107 = arith.addf %7, %106 : vector<2x16x16x16xf32>
    %108 = vector.broadcast %4 : f32 to vector<2x16x16x16xf32>
    %109 = arith.mulf %54, %108 : vector<2x16x16x16xf32>
    %110 = arith.addf %107, %109 : vector<2x16x16x16xf32>
    %cst_186 = arith.constant 0.000000e+00 : f32
    %111 = vector.broadcast %cst_186 : f32 to vector<2x16x16x16xf32>
    %112 = arith.cmpf oge, %110, %111 : vector<2x16x16x16xf32>
    %c2_187 = arith.constant 2 : index
    %c0_188 = arith.constant 0 : index
    %c0_189 = arith.constant 0 : index
    %c0_190 = arith.constant 0 : index
    %113 = vector.load %arg4[%c2_187, %c0_188, %c0_189, %c0_190] : memref<3x1x1x16xf32, #tpu.memory_space<vmem>>, vector<1x1x1x16xf32>
    %114 = vector.shape_cast %113 : vector<1x1x1x16xf32> to vector<1x1x16xf32>
    %115 = vector.shape_cast %114 : vector<1x1x16xf32> to vector<1x1x1x16xf32>
    %116 = vector.broadcast %115 : vector<1x1x1x16xf32> to vector<2x16x16x16xf32>
    %117 = arith.mulf %110, %116 : vector<2x16x16x16xf32>
    %118 = arith.select %112, %110, %117 : vector<2x16x16x16xi1>, vector<2x16x16x16xf32>
    %c0_191 = arith.constant 0 : index
    %c1_192 = arith.constant 1 : index
    %c1_193 = arith.constant 1 : index
    %c0_194 = arith.constant 0 : index
    %119 = vector.load %arg7[%c0_191, %c1_192, %c1_193, %c0_194] : memref<2x18x18x16xf32, #tpu.memory_space<vmem>>, vector<2x16x16x16xf32>
    tpu.vector_store %arg7[%c0_191, %c1_192, %c1_193, %c0_194], %118 {strides = array<i32>} : memref<2x18x18x16xf32, #tpu.memory_space<vmem>>, vector<2x16x16x16xf32>,
    %c0_195 = arith.constant 0 : index
    %c0_196 = arith.constant 0 : index
    %c0_197 = arith.constant 0 : index
    %c0_198 = arith.constant 0 : index
    %120 = vector.load %arg7[%c0_195, %c0_196, %c0_197, %c0_198] : memref<2x18x18x16xf32, #tpu.memory_space<vmem>>, vector<2x16x16x16xf32>
    %121 = arith.truncf %120 : vector<2x16x16x16xf32> to vector<2x16x16x16xbf16>
    %c0_199 = arith.constant 0 : index
    %c0_200 = arith.constant 0 : index
    %c0_201 = arith.constant 0 : index
    %c0_202 = arith.constant 0 : index
    %122 = vector.load %arg8[%c0_199, %c0_200, %c0_201, %c0_202] : memref<2x16x16x144xbf16, #tpu.memory_space<vmem>>, vector<2x16x16x16xbf16>
    tpu.vector_store %arg8[%c0_199, %c0_200, %c0_201, %c0_202], %121 {strides = array<i32>} : memref<2x16x16x144xbf16, #tpu.memory_space<vmem>>, vector<2x16x16x16xbf16>,
    %c0_203 = arith.constant 0 : index
    %c0_204 = arith.constant 0 : index
    %c1_205 = arith.constant 1 : index
    %c0_206 = arith.constant 0 : index
    %123 = vector.load %arg7[%c0_203, %c0_204, %c1_205, %c0_206] : memref<2x18x18x16xf32, #tpu.memory_space<vmem>>, vector<2x16x16x16xf32>
    %124 = arith.truncf %123 : vector<2x16x16x16xf32> to vector<2x16x16x16xbf16>
    %c0_207 = arith.constant 0 : index
    %c0_208 = arith.constant 0 : index
    %c0_209 = arith.constant 0 : index
    %c16_210 = arith.constant 16 : index
    %125 = vector.load %arg8[%c0_207, %c0_208, %c0_209, %c16_210] : memref<2x16x16x144xbf16, #tpu.memory_space<vmem>>, vector<2x16x16x16xbf16>
    tpu.vector_store %arg8[%c0_207, %c0_208, %c0_209, %c16_210], %124 {strides = array<i32>} : memref<2x16x16x144xbf16, #tpu.memory_space<vmem>>, vector<2x16x16x16xbf16>,
    %c0_211 = arith.constant 0 : index
    %c0_212 = arith.constant 0 : index
    %c2_213 = arith.constant 2 : index
    %c0_214 = arith.constant 0 : index
    %126 = vector.load %arg7[%c0_211, %c0_212, %c2_213, %c0_214] : memref<2x18x18x16xf32, #tpu.memory_space<vmem>>, vector<2x16x16x16xf32>
    %127 = arith.truncf %126 : vector<2x16x16x16xf32> to vector<2x16x16x16xbf16>
    %c0_215 = arith.constant 0 : index
    %c0_216 = arith.constant 0 : index
    %c0_217 = arith.constant 0 : index
    %c32_218 = arith.constant 32 : index
    %128 = vector.load %arg8[%c0_215, %c0_216, %c0_217, %c32_218] : memref<2x16x16x144xbf16, #tpu.memory_space<vmem>>, vector<2x16x16x16xbf16>
    tpu.vector_store %arg8[%c0_215, %c0_216, %c0_217, %c32_218], %127 {strides = array<i32>} : memref<2x16x16x144xbf16, #tpu.memory_space<vmem>>, vector<2x16x16x16xbf16>,
    %c0_219 = arith.constant 0 : index
    %c1_220 = arith.constant 1 : index
    %c0_221 = arith.constant 0 : index
    %c0_222 = arith.constant 0 : index
    %129 = vector.load %arg7[%c0_219, %c1_220, %c0_221, %c0_222] : memref<2x18x18x16xf32, #tpu.memory_space<vmem>>, vector<2x16x16x16xf32>
    %130 = arith.truncf %129 : vector<2x16x16x16xf32> to vector<2x16x16x16xbf16>
    %c0_223 = arith.constant 0 : index
    %c0_224 = arith.constant 0 : index
    %c0_225 = arith.constant 0 : index
    %c48_226 = arith.constant 48 : index
    %131 = vector.load %arg8[%c0_223, %c0_224, %c0_225, %c48_226] : memref<2x16x16x144xbf16, #tpu.memory_space<vmem>>, vector<2x16x16x16xbf16>
    tpu.vector_store %arg8[%c0_223, %c0_224, %c0_225, %c48_226], %130 {strides = array<i32>} : memref<2x16x16x144xbf16, #tpu.memory_space<vmem>>, vector<2x16x16x16xbf16>,
    %c0_227 = arith.constant 0 : index
    %c1_228 = arith.constant 1 : index
    %c1_229 = arith.constant 1 : index
    %c0_230 = arith.constant 0 : index
    %132 = vector.load %arg7[%c0_227, %c1_228, %c1_229, %c0_230] : memref<2x18x18x16xf32, #tpu.memory_space<vmem>>, vector<2x16x16x16xf32>
    %133 = arith.truncf %132 : vector<2x16x16x16xf32> to vector<2x16x16x16xbf16>
    %c0_231 = arith.constant 0 : index
    %c0_232 = arith.constant 0 : index
    %c0_233 = arith.constant 0 : index
    %c64_234 = arith.constant 64 : index
    %134 = vector.load %arg8[%c0_231, %c0_232, %c0_233, %c64_234] : memref<2x16x16x144xbf16, #tpu.memory_space<vmem>>, vector<2x16x16x16xbf16>
    tpu.vector_store %arg8[%c0_231, %c0_232, %c0_233, %c64_234], %133 {strides = array<i32>} : memref<2x16x16x144xbf16, #tpu.memory_space<vmem>>, vector<2x16x16x16xbf16>,
    %c0_235 = arith.constant 0 : index
    %c1_236 = arith.constant 1 : index
    %c2_237 = arith.constant 2 : index
    %c0_238 = arith.constant 0 : index
    %135 = vector.load %arg7[%c0_235, %c1_236, %c2_237, %c0_238] : memref<2x18x18x16xf32, #tpu.memory_space<vmem>>, vector<2x16x16x16xf32>
    %136 = arith.truncf %135 : vector<2x16x16x16xf32> to vector<2x16x16x16xbf16>
    %c0_239 = arith.constant 0 : index
    %c0_240 = arith.constant 0 : index
    %c0_241 = arith.constant 0 : index
    %c80_242 = arith.constant 80 : index
    %137 = vector.load %arg8[%c0_239, %c0_240, %c0_241, %c80_242] : memref<2x16x16x144xbf16, #tpu.memory_space<vmem>>, vector<2x16x16x16xbf16>
    tpu.vector_store %arg8[%c0_239, %c0_240, %c0_241, %c80_242], %136 {strides = array<i32>} : memref<2x16x16x144xbf16, #tpu.memory_space<vmem>>, vector<2x16x16x16xbf16>,
    %c0_243 = arith.constant 0 : index
    %c2_244 = arith.constant 2 : index
    %c0_245 = arith.constant 0 : index
    %c0_246 = arith.constant 0 : index
    %138 = vector.load %arg7[%c0_243, %c2_244, %c0_245, %c0_246] : memref<2x18x18x16xf32, #tpu.memory_space<vmem>>, vector<2x16x16x16xf32>
    %139 = arith.truncf %138 : vector<2x16x16x16xf32> to vector<2x16x16x16xbf16>
    %c0_247 = arith.constant 0 : index
    %c0_248 = arith.constant 0 : index
    %c0_249 = arith.constant 0 : index
    %c96_250 = arith.constant 96 : index
    %140 = vector.load %arg8[%c0_247, %c0_248, %c0_249, %c96_250] : memref<2x16x16x144xbf16, #tpu.memory_space<vmem>>, vector<2x16x16x16xbf16>
    tpu.vector_store %arg8[%c0_247, %c0_248, %c0_249, %c96_250], %139 {strides = array<i32>} : memref<2x16x16x144xbf16, #tpu.memory_space<vmem>>, vector<2x16x16x16xbf16>,
    %c0_251 = arith.constant 0 : index
    %c2_252 = arith.constant 2 : index
    %c1_253 = arith.constant 1 : index
    %c0_254 = arith.constant 0 : index
    %141 = vector.load %arg7[%c0_251, %c2_252, %c1_253, %c0_254] : memref<2x18x18x16xf32, #tpu.memory_space<vmem>>, vector<2x16x16x16xf32>
    %142 = arith.truncf %141 : vector<2x16x16x16xf32> to vector<2x16x16x16xbf16>
    %c0_255 = arith.constant 0 : index
    %c0_256 = arith.constant 0 : index
    %c0_257 = arith.constant 0 : index
    %c112_258 = arith.constant 112 : index
    %143 = vector.load %arg8[%c0_255, %c0_256, %c0_257, %c112_258] : memref<2x16x16x144xbf16, #tpu.memory_space<vmem>>, vector<2x16x16x16xbf16>
    tpu.vector_store %arg8[%c0_255, %c0_256, %c0_257, %c112_258], %142 {strides = array<i32>} : memref<2x16x16x144xbf16, #tpu.memory_space<vmem>>, vector<2x16x16x16xbf16>,
    %c0_259 = arith.constant 0 : index
    %c2_260 = arith.constant 2 : index
    %c2_261 = arith.constant 2 : index
    %c0_262 = arith.constant 0 : index
    %144 = vector.load %arg7[%c0_259, %c2_260, %c2_261, %c0_262] : memref<2x18x18x16xf32, #tpu.memory_space<vmem>>, vector<2x16x16x16xf32>
    %145 = arith.truncf %144 : vector<2x16x16x16xf32> to vector<2x16x16x16xbf16>
    %c0_263 = arith.constant 0 : index
    %c0_264 = arith.constant 0 : index
    %c0_265 = arith.constant 0 : index
    %c128_266 = arith.constant 128 : index
    %146 = vector.load %arg8[%c0_263, %c0_264, %c0_265, %c128_266] : memref<2x16x16x144xbf16, #tpu.memory_space<vmem>>, vector<2x16x16x16xbf16>
    tpu.vector_store %arg8[%c0_263, %c0_264, %c0_265, %c128_266], %145 {strides = array<i32>} : memref<2x16x16x144xbf16, #tpu.memory_space<vmem>>, vector<2x16x16x16xbf16>,
    %c0_267 = arith.constant 0 : index
    %c0_268 = arith.constant 0 : index
    %c0_269 = arith.constant 0 : index
    %c0_270 = arith.constant 0 : index
    %147 = vector.load %arg8[%c0_267, %c0_268, %c0_269, %c0_270] : memref<2x16x16x144xbf16, #tpu.memory_space<vmem>>, vector<2x16x16x144xbf16>
    %148 = vector.shape_cast %147 : vector<2x16x16x144xbf16> to vector<512x144xbf16>
    %c2_271 = arith.constant 2 : index
    %c0_272 = arith.constant 0 : index
    %c0_273 = arith.constant 0 : index
    %149 = vector.load %arg2[%c2_271, %c0_272, %c0_273] : memref<3x144x16xbf16, #tpu.memory_space<vmem>>, vector<1x144x16xbf16>
    %150 = vector.shape_cast %149 : vector<1x144x16xbf16> to vector<144x16xbf16>
    %cst_274 = arith.constant dense<0.000000e+00> : vector<512x16xf32>
    %151 = tpu.matmul %148, %150, %cst_274 {dimension_numbers = #tpu.dot_dimension_numbers<[1], [0], [0], [1], [0, 0, 1, 1], [], []>} : vector<512x144xbf16>, vector<144x16xbf16>, vector<512x16xf32> -> vector<512x16xf32>
    %152 = vector.shape_cast %151 : vector<512x16xf32> to vector<2x16x16x16xf32>
    %c2_275 = arith.constant 2 : index
    %c0_276 = arith.constant 0 : index
    %c0_277 = arith.constant 0 : index
    %c0_278 = arith.constant 0 : index
    %153 = vector.load %arg3[%c2_275, %c0_276, %c0_277, %c0_278] : memref<3x1x1x16xf32, #tpu.memory_space<vmem>>, vector<1x1x1x16xf32>
    %154 = vector.shape_cast %153 : vector<1x1x1x16xf32> to vector<1x1x16xf32>
    %155 = vector.shape_cast %154 : vector<1x1x16xf32> to vector<1x1x1x16xf32>
    %156 = vector.broadcast %155 : vector<1x1x1x16xf32> to vector<2x16x16x16xf32>
    %157 = arith.addf %152, %156 : vector<2x16x16x16xf32>
    %158 = vector.broadcast %5 : f32 to vector<2x16x16x16xf32>
    %159 = arith.mulf %104, %158 : vector<2x16x16x16xf32>
    %160 = arith.addf %157, %159 : vector<2x16x16x16xf32>
    %161 = arith.addf %160, %54 : vector<2x16x16x16xf32>
    %162 = vector.broadcast %6 : f32 to vector<2x16x16x16xf32>
    %163 = arith.mulf %161, %162 : vector<2x16x16x16xf32>
    %164 = arith.addf %163, %7 : vector<2x16x16x16xf32>
    %c0_279 = arith.constant 0 : index
    %c0_280 = arith.constant 0 : index
    %c0_281 = arith.constant 0 : index
    %c0_282 = arith.constant 0 : index
    %165 = vector.load %arg6[%c0_279, %c0_280, %c0_281, %c0_282] : memref<2x16x16x16xf32, #tpu.memory_space<vmem>>, vector<2x16x16x16xf32>
    tpu.vector_store %arg6[%c0_279, %c0_280, %c0_281, %c0_282], %164 {strides = array<i32>} : memref<2x16x16x16xf32, #tpu.memory_space<vmem>>, vector<2x16x16x16xf32>,
    return
  }
  func.func @transform_0(%arg0: i32) -> (i32, i32, i32, i32) {
    %c0_i32 = arith.constant 0 : i32
    %c0_i32_0 = arith.constant 0 : i32
    %c0_i32_1 = arith.constant 0 : i32
    %c0_i32_2 = arith.constant 0 : i32
    return %arg0, %c0_i32, %c0_i32_0, %c0_i32_1 : i32, i32, i32, i32
  }
  func.func @transform_1(%arg0: i32) -> (i32, i32, i32) {
    %c0_i32 = arith.constant 0 : i32
    %c0_i32_0 = arith.constant 0 : i32
    %c0_i32_1 = arith.constant 0 : i32
    %c0_i32_2 = arith.constant 0 : i32
    return %c0_i32, %c0_i32_0, %c0_i32_1 : i32, i32, i32
  }
  func.func @transform_2(%arg0: i32) -> (i32, i32, i32, i32) {
    %c0_i32 = arith.constant 0 : i32
    %c0_i32_0 = arith.constant 0 : i32
    %c0_i32_1 = arith.constant 0 : i32
    %c0_i32_2 = arith.constant 0 : i32
    %c0_i32_3 = arith.constant 0 : i32
    return %c0_i32, %c0_i32_0, %c0_i32_1, %c0_i32_2 : i32, i32, i32, i32
  }
  func.func @transform_3(%arg0: i32) -> (i32, i32, i32, i32) {
    %c0_i32 = arith.constant 0 : i32
    %c0_i32_0 = arith.constant 0 : i32
    %c0_i32_1 = arith.constant 0 : i32
    %c0_i32_2 = arith.constant 0 : i32
    %c0_i32_3 = arith.constant 0 : i32
    return %c0_i32, %c0_i32_0, %c0_i32_1, %c0_i32_2 : i32, i32, i32, i32
  }
  func.func @transform_4(%arg0: i32) -> i32 {
    %c0_i32 = arith.constant 0 : i32
    %c0_i32_0 = arith.constant 0 : i32
    return %c0_i32 : i32
  }
  func.func @transform_5(%arg0: i32) -> (i32, i32, i32, i32) {
    %c0_i32 = arith.constant 0 : i32
    %c0_i32_0 = arith.constant 0 : i32
    %c0_i32_1 = arith.constant 0 : i32
    %c0_i32_2 = arith.constant 0 : i32
    return %arg0, %c0_i32, %c0_i32_0, %c0_i32_1 : i32, i32, i32, i32
  }
}

</mosaic_0001>

<llo_original>
// kernel: tpu_custom_call.1
$region0: #{tpu_custom_call.1}
  #allocation0 [shape = 'u32[]', space=smem, size = 0x4, offset = 0x4, fixed_abs, tag = 'smem constant byte address 0x4 - core index']
  #allocation1 [shape = 'u32[144,128]{1,0:T(1,128)}', space=vmem, size = 0x12000, scoped, tag = 'internal scratch']
  #allocation2 [shape = 'f32[2,18,18,16]{3,2,1,0:T(8,128)}', space=vmem, size = 0x6c000, scoped, tag = 'scratch operand']
  #allocation3 [shape = 'bf16[2,16,16,144]{3,2,1,0:T(16,128)(2,1)}', space=vmem, size = 0x40000, scoped, tag = 'scratch operand']
  %s0 = inlined_call_operand.hbm [shape: f32[2,16,16,16], index: 0, kind: input, shape index: {}]
  %s1 = inlined_call_operand.vmem [shape: bf16[3,144,16], index: 1, kind: input, shape index: {}]
  %s2 = inlined_call_operand.vmem [shape: f32[3,1,1,16], index: 2, kind: input, shape index: {}]
  %s3 = inlined_call_operand.vmem [shape: f32[3,1,1,16], index: 3, kind: input, shape index: {}]
  %s4 = inlined_call_operand.vmem [shape: f32[5], index: 4, kind: input, shape index: {}]
  %s5 = inlined_call_operand.hbm [shape: f32[2,16,16,16], index: 5, kind: output, shape index: {}]
  %s6 = sld [smem:[#allocation0]]
  $region38: #{tpu_custom_call.1} parent=0
    _
  %s8 = ssub.s32 1, %s6
  %s9 = scalar_select 0, %s8, %s6
  $region1: #{tpu_custom_call.1} parent=0
    #allocation4 [shape = 'u8[262144]{0}', space=vmem, size = 0x40000, scoped, tag = 'input window, operand 0, single buffered']
    #allocation5 [shape = 's32[1]{0}', space=sflag, size = 0x4, scoped, tag = 'scoped memory for tpu_custom_call.1']
    #allocation6 [shape = 's32[1]{0}', space=sflag, size = 0x4, scoped, tag = 'scoped memory for tpu_custom_call.1']
    #allocation7 [shape = 's32[1]{0}', space=sflag, size = 0x4, scoped, tag = 'scoped memory for tpu_custom_call.1']
    #allocation8 [shape = 'u8[512]{0}', space=smem, size = 0x200, scoped, tag = 'input window, operand 4, single buffered']
    #allocation9 [shape = 'u8[262144]{0}', space=vmem, size = 0x40000, scoped, tag = 'output window, operand 0, single buffered']
    %10 = vsyncpa [#allocation5], 0
    %11 = vsyncpa [#allocation7], 0
    %12 = vsyncpa [#allocation6], 0
    // Predicated region
    $region2: #{tpu_custom_call.1} parent=1 // pred_check
      _
    $region3: #{tpu_custom_call.1} parent=1 // pred_check_branch
      %14 = sbr.rel (0) target = $region5
    $region4: #{tpu_custom_call.1} parent=1 // pred_region
      %s16 = ssub.s32 8192, 8192
      %17 = vsyncadd [#allocation5], %s16
      %s18 = sshll.u32 [#allocation4], 4
      %s19 = int_to_ptr.vmem [resolvable:$true] %s18
      %24 = dma.hbm_to_vmem [thread:$0]  %s0, 8192, %s19, [#allocation5], 128, 128, 8
    $region5: #{tpu_custom_call.1} parent=1 // pred_fallthru
      _
    // Predicated region
    $region6: #{tpu_custom_call.1} parent=1 // pred_check
      _
    $region7: #{tpu_custom_call.1} parent=1 // pred_check_branch
      %26 = sbr.rel (0) target = $region9
    $region8: #{tpu_custom_call.1} parent=1 // pred_region
      _
    $region9: #{tpu_custom_call.1} parent=1 // pred_fallthru
      _
    // Predicated region
    $region10: #{tpu_custom_call.1} parent=1 // pred_check
      _
    $region11: #{tpu_custom_call.1} parent=1 // pred_check_branch
      %28 = sbr.rel (0) target = $region13
    $region12: #{tpu_custom_call.1} parent=1 // pred_region
      _
    $region13: #{tpu_custom_call.1} parent=1 // pred_fallthru
      _
    // Predicated region
    $region14: #{tpu_custom_call.1} parent=1 // pred_check
      _
    $region15: #{tpu_custom_call.1} parent=1 // pred_check_branch
      %30 = sbr.rel (0) target = $region17
    $region16: #{tpu_custom_call.1} parent=1 // pred_region
      _
    $region17: #{tpu_custom_call.1} parent=1 // pred_fallthru
      _
    // Predicated region
    $region18: #{tpu_custom_call.1} parent=1 // pred_check
      _
    $region19: #{tpu_custom_call.1} parent=1 // pred_check_branch
      %32 = sbr.rel (0) target = $region21
    $region20: #{tpu_custom_call.1} parent=1 // pred_region
      %s34 = ssub.s32 16, 16
      %35 = vsyncadd [#allocation7], %s34
      %s37 = sshll.u32 %s4, 4
      %s38 = int_to_ptr.vmem [resolvable:$true] %s37
      %40 = dma.vmem_to_smem %s38, 16, [#allocation8], [#allocation7]
    $region21: #{tpu_custom_call.1} parent=1 // pred_fallthru
      _
    // Predicated region
    $region22: #{tpu_custom_call.1} parent=1 // pred_check
      _
    $region23: #{tpu_custom_call.1} parent=1 // pred_check_branch
      %42 = sbr.rel (0) target = $region25
    $region24: #{tpu_custom_call.1} parent=1 // pred_region
      %43 = dma.done [#allocation5], 8192
    $region25: #{tpu_custom_call.1} parent=1 // pred_fallthru
      _
    // Predicated region
    $region26: #{tpu_custom_call.1} parent=1 // pred_check
      _
    $region27: #{tpu_custom_call.1} parent=1 // pred_check_branch
      %45 = sbr.rel (0) target = $region29
    $region28: #{tpu_custom_call.1} parent=1 // pred_region
      %46 = dma.done [#allocation7], 16
    $region29: #{tpu_custom_call.1} parent=1 // pred_fallthru
      _
    %47 = sfence
    %vm49 = vcmask 130048
    %50 = vst.msk [vmem:[#allocation2] sm:$0xff] %vm49, 0.0
    %51 = vst.msk [vmem:[#allocation2 + $0x8] sm:$0xff] %vm49, 0.0
    %vm52 = vcmask 123904
    %53 = vst.msk [vmem:[#allocation2 + $0x10] sm:$0x3] %vm52, 0.0
    %54 = vst.msk [vmem:[#allocation2 + $0x18] sm:$0xff] %vm49, 0.0
    %55 = vst.msk [vmem:[#allocation2 + $0x20] sm:$0xff] %vm49, 0.0
    %56 = vst.msk [vmem:[#allocation2 + $0x28] sm:$0x3] %vm52, 0.0
    %57 = vst.msk [vmem:[#allocation2 + $0x30] sm:$0xff] %vm49, 0.0
    %58 = vst.msk [vmem:[#allocation2 + $0x38] sm:$0xff] %vm49, 0.0
    %59 = vst.msk [vmem:[#allocation2 + $0x40] sm:$0x3] %vm52, 0.0
    %60 = vst.msk [vmem:[#allocation2 + $0x48] sm:$0xff] %vm49, 0.0
    %61 = vst.msk [vmem:[#allocation2 + $0x50] sm:$0xff] %vm49, 0.0
    %62 = vst.msk [vmem:[#allocation2 + $0x58] sm:$0x3] %vm52, 0.0
    %63 = vst.msk [vmem:[#allocation2 + $0x60] sm:$0xff] %vm49, 0.0
    %64 = vst.msk [vmem:[#allocation2 + $0x68] sm:$0xff] %vm49, 0.0
    %65 = vst.msk [vmem:[#allocation2 + $0x70] sm:$0x3] %vm52, 0.0
    %66 = vst.msk [vmem:[#allocation2 + $0x78] sm:$0xff] %vm49, 0.0
    %67 = vst.msk [vmem:[#allocation2 + $0x80] sm:$0xff] %vm49, 0.0
    %68 = vst.msk [vmem:[#allocation2 + $0x88] sm:$0x3] %vm52, 0.0
    %69 = vst.msk [vmem:[#allocation2 + $0x90] sm:$0xff] %vm49, 0.0
    %70 = vst.msk [vmem:[#allocation2 + $0x98] sm:$0xff] %vm49, 0.0
    %71 = vst.msk [vmem:[#allocation2 + $0xa0] sm:$0x3] %vm52, 0.0
    %72 = vst.msk [vmem:[#allocation2 + $0xa8] sm:$0xff] %vm49, 0.0
    %73 = vst.msk [vmem:[#allocation2 + $0xb0] sm:$0xff] %vm49, 0.0
    %74 = vst.msk [vmem:[#allocation2 + $0xb8] sm:$0x3] %vm52, 0.0
    %75 = vst.msk [vmem:[#allocation2 + $0xc0] sm:$0xff] %vm49, 0.0
    %76 = vst.msk [vmem:[#allocation2 + $0xc8] sm:$0xff] %vm49, 0.0
    %77 = vst.msk [vmem:[#allocation2 + $0xd0] sm:$0x3] %vm52, 0.0
    %78 = vst.msk [vmem:[#allocation2 + $0xd8] sm:$0xff] %vm49, 0.0
    %79 = vst.msk [vmem:[#allocation2 + $0xe0] sm:$0xff] %vm49, 0.0
    %80 = vst.msk [vmem:[#allocation2 + $0xe8] sm:$0x3] %vm52, 0.0
    %81 = vst.msk [vmem:[#allocation2 + $0xf0] sm:$0xff] %vm49, 0.0
    %82 = vst.msk [vmem:[#allocation2 + $0xf8] sm:$0xff] %vm49, 0.0
    %83 = vst.msk [vmem:[#allocation2 + $0x100] sm:$0x3] %vm52, 0.0
    %84 = vst.msk [vmem:[#allocation2 + $0x108] sm:$0xff] %vm49, 0.0
    %85 = vst.msk [vmem:[#allocation2 + $0x110] sm:$0xff] %vm49, 0.0
    %86 = vst.msk [vmem:[#allocation2 + $0x118] sm:$0x3] %vm52, 0.0
    %87 = vst.msk [vmem:[#allocation2 + $0x120] sm:$0xff] %vm49, 0.0
    %88 = vst.msk [vmem:[#allocation2 + $0x128] sm:$0xff] %vm49, 0.0
    %89 = vst.msk [vmem:[#allocation2 + $0x130] sm:$0x3] %vm52, 0.0
    %90 = vst.msk [vmem:[#allocation2 + $0x138] sm:$0xff] %vm49, 0.0
    %91 = vst.msk [vmem:[#allocation2 + $0x140] sm:$0xff] %vm49, 0.0
    %92 = vst.msk [vmem:[#allocation2 + $0x148] sm:$0x3] %vm52, 0.0
    %93 = vst.msk [vmem:[#allocation2 + $0x150] sm:$0xff] %vm49, 0.0
    %94 = vst.msk [vmem:[#allocation2 + $0x158] sm:$0xff] %vm49, 0.0
    %95 = vst.msk [vmem:[#allocation2 + $0x160] sm:$0x3] %vm52, 0.0
    %96 = vst.msk [vmem:[#allocation2 + $0x168] sm:$0xff] %vm49, 0.0
    %97 = vst.msk [vmem:[#allocation2 + $0x170] sm:$0xff] %vm49, 0.0
    %98 = vst.msk [vmem:[#allocation2 + $0x178] sm:$0x3] %vm52, 0.0
    %99 = vst.msk [vmem:[#allocation2 + $0x180] sm:$0xff] %vm49, 0.0
    %100 = vst.msk [vmem:[#allocation2 + $0x188] sm:$0xff] %vm49, 0.0
    %101 = vst.msk [vmem:[#allocation2 + $0x190] sm:$0x3] %vm52, 0.0
    %102 = vst.msk [vmem:[#allocation2 + $0x198] sm:$0xff] %vm49, 0.0
    %103 = vst.msk [vmem:[#allocation2 + $0x1a0] sm:$0xff] %vm49, 0.0
    %104 = vst.msk [vmem:[#allocation2 + $0x1a8] sm:$0x3] %vm52, 0.0
    %105 = vst.msk [vmem:[#allocation2 + $0x1b0] sm:$0xff] %vm49, 0.0
    %106 = vst.msk [vmem:[#allocation2 + $0x1b8] sm:$0xff] %vm49, 0.0
    %107 = vst.msk [vmem:[#allocation2 + $0x1c0] sm:$0x3] %vm52, 0.0
    %108 = vst.msk [vmem:[#allocation2 + $0x1c8] sm:$0xff] %vm49, 0.0
    %109 = vst.msk [vmem:[#allocation2 + $0x1d0] sm:$0xff] %vm49, 0.0
    %110 = vst.msk [vmem:[#allocation2 + $0x1d8] sm:$0x3] %vm52, 0.0
    %111 = vst.msk [vmem:[#allocation2 + $0x1e0] sm:$0xff] %vm49, 0.0
    %112 = vst.msk [vmem:[#allocation2 + $0x1e8] sm:$0xff] %vm49, 0.0
    %113 = vst.msk [vmem:[#allocation2 + $0x1f0] sm:$0x3] %vm52, 0.0
    %114 = vst.msk [vmem:[#allocation2 + $0x1f8] sm:$0xff] %vm49, 0.0
    %115 = vst.msk [vmem:[#allocation2 + $0x200] sm:$0xff] %vm49, 0.0
    %116 = vst.msk [vmem:[#allocation2 + $0x208] sm:$0x3] %vm52, 0.0
    %117 = vst.msk [vmem:[#allocation2 + $0x210] sm:$0xff] %vm49, 0.0
    %118 = vst.msk [vmem:[#allocation2 + $0x218] sm:$0xff] %vm49, 0.0
    %119 = vst.msk [vmem:[#allocation2 + $0x220] sm:$0x3] %vm52, 0.0
    %120 = vst.msk [vmem:[#allocation2 + $0x228] sm:$0xff] %vm49, 0.0
    %121 = vst.msk [vmem:[#allocation2 + $0x230] sm:$0xff] %vm49, 0.0
    %122 = vst.msk [vmem:[#allocation2 + $0x238] sm:$0x3] %vm52, 0.0
    %123 = vst.msk [vmem:[#allocation2 + $0x240] sm:$0xff] %vm49, 0.0
    %124 = vst.msk [vmem:[#allocation2 + $0x248] sm:$0xff] %vm49, 0.0
    %125 = vst.msk [vmem:[#allocation2 + $0x250] sm:$0x3] %vm52, 0.0
    %126 = vst.msk [vmem:[#allocation2 + $0x258] sm:$0xff] %vm49, 0.0
    %127 = vst.msk [vmem:[#allocation2 + $0x260] sm:$0xff] %vm49, 0.0
    %128 = vst.msk [vmem:[#allocation2 + $0x268] sm:$0x3] %vm52, 0.0
    %129 = vst.msk [vmem:[#allocation2 + $0x270] sm:$0xff] %vm49, 0.0
    %130 = vst.msk [vmem:[#allocation2 + $0x278] sm:$0xff] %vm49, 0.0
    %131 = vst.msk [vmem:[#allocation2 + $0x280] sm:$0x3] %vm52, 0.0
    %132 = vst.msk [vmem:[#allocation2 + $0x288] sm:$0xff] %vm49, 0.0
    %133 = vst.msk [vmem:[#allocation2 + $0x290] sm:$0xff] %vm49, 0.0
    %134 = vst.msk [vmem:[#allocation2 + $0x298] sm:$0x3] %vm52, 0.0
    %135 = vst.msk [vmem:[#allocation2 + $0x2a0] sm:$0xff] %vm49, 0.0
    %136 = vst.msk [vmem:[#allocation2 + $0x2a8] sm:$0xff] %vm49, 0.0
    %137 = vst.msk [vmem:[#allocation2 + $0x2b0] sm:$0x3] %vm52, 0.0
    %138 = vst.msk [vmem:[#allocation2 + $0x2b8] sm:$0xff] %vm49, 0.0
    %139 = vst.msk [vmem:[#allocation2 + $0x2c0] sm:$0xff] %vm49, 0.0
    %140 = vst.msk [vmem:[#allocation2 + $0x2c8] sm:$0x3] %vm52, 0.0
    %141 = vst.msk [vmem:[#allocation2 + $0x2d0] sm:$0xff] %vm49, 0.0
    %142 = vst.msk [vmem:[#allocation2 + $0x2d8] sm:$0xff] %vm49, 0.0
    %143 = vst.msk [vmem:[#allocation2 + $0x2e0] sm:$0x3] %vm52, 0.0
    %144 = vst.msk [vmem:[#allocation2 + $0x2e8] sm:$0xff] %vm49, 0.0
    %145 = vst.msk [vmem:[#allocation2 + $0x2f0] sm:$0xff] %vm49, 0.0
    %146 = vst.msk [vmem:[#allocation2 + $0x2f8] sm:$0x3] %vm52, 0.0
    %147 = vst.msk [vmem:[#allocation2 + $0x300] sm:$0xff] %vm49, 0.0
    %148 = vst.msk [vmem:[#allocation2 + $0x308] sm:$0xff] %vm49, 0.0
    %149 = vst.msk [vmem:[#allocation2 + $0x310] sm:$0x3] %vm52, 0.0
    %150 = vst.msk [vmem:[#allocation2 + $0x318] sm:$0xff] %vm49, 0.0
    %151 = vst.msk [vmem:[#allocation2 + $0x320] sm:$0xff] %vm49, 0.0
    %152 = vst.msk [vmem:[#allocation2 + $0x328] sm:$0x3] %vm52, 0.0
    %153 = vst.msk [vmem:[#allocation2 + $0x330] sm:$0xff] %vm49, 0.0
    %154 = vst.msk [vmem:[#allocation2 + $0x338] sm:$0xff] %vm49, 0.0
    %155 = vst.msk [vmem:[#allocation2 + $0x340] sm:$0x3] %vm52, 0.0
    %156 = vst.msk [vmem:[#allocation2 + $0x348] sm:$0xff] %vm49, 0.0
    %157 = vst.msk [vmem:[#allocation2 + $0x350] sm:$0xff] %vm49, 0.0
    %158 = vst.msk [vmem:[#allocation2 + $0x358] sm:$0x3] %vm52, 0.0
    %s159 = sld [smem:[#allocation8]]
    %s160 = sld [smem:[#allocation8 + $0x1]]
    %s161 = sld [smem:[#allocation8 + $0x2]]
    %s162 = sld [smem:[#allocation8 + $0x3]]
    %s163 = sld [smem:[#allocation8 + $0x4]]
    %v164 = vld [vmem:[#allocation4] sm:$0xff]
    %v165 = vld [vmem:[#allocation4 + $0x8] sm:$0xff]
    %v166 = vld [vmem:[#allocation4 + $0x10] sm:$0xff]
    %v167 = vld [vmem:[#allocation4 + $0x18] sm:$0xff]
    %v168 = vld [vmem:[#allocation4 + $0x20] sm:$0xff]
    %v169 = vld [vmem:[#allocation4 + $0x28] sm:$0xff]
    %v170 = vld [vmem:[#allocation4 + $0x30] sm:$0xff]
    %v171 = vld [vmem:[#allocation4 + $0x38] sm:$0xff]
    %v172 = vld [vmem:[#allocation4 + $0x40] sm:$0xff]
    %v173 = vld [vmem:[#allocation4 + $0x48] sm:$0xff]
    %v174 = vld [vmem:[#allocation4 + $0x50] sm:$0xff]
    %v175 = vld [vmem:[#allocation4 + $0x58] sm:$0xff]
    %v176 = vld [vmem:[#allocation4 + $0x60] sm:$0xff]
    %v177 = vld [vmem:[#allocation4 + $0x68] sm:$0xff]
    %v178 = vld [vmem:[#allocation4 + $0x70] sm:$0xff]
    %v179 = vld [vmem:[#allocation4 + $0x78] sm:$0xff]
    %v180 = vld [vmem:[#allocation4 + $0x80] sm:$0xff]
    %v181 = vld [vmem:[#allocation4 + $0x88] sm:$0xff]
    %v182 = vld [vmem:[#allocation4 + $0x90] sm:$0xff]
    %v183 = vld [vmem:[#allocation4 + $0x98] sm:$0xff]
    %v184 = vld [vmem:[#allocation4 + $0xa0] sm:$0xff]
    %v185 = vld [vmem:[#allocation4 + $0xa8] sm:$0xff]
    %v186 = vld [vmem:[#allocation4 + $0xb0] sm:$0xff]
    %v187 = vld [vmem:[#allocation4 + $0xb8] sm:$0xff]
    %v188 = vld [vmem:[#allocation4 + $0xc0] sm:$0xff]
    %v189 = vld [vmem:[#allocation4 + $0xc8] sm:$0xff]
    %v190 = vld [vmem:[#allocation4 + $0xd0] sm:$0xff]
    %v191 = vld [vmem:[#allocation4 + $0xd8] sm:$0xff]
    %v192 = vld [vmem:[#allocation4 + $0xe0] sm:$0xff]
    %v193 = vld [vmem:[#allocation4 + $0xe8] sm:$0xff]
    %v194 = vld [vmem:[#allocation4 + $0xf0] sm:$0xff]
    %v195 = vld [vmem:[#allocation4 + $0xf8] sm:$0xff]
    %v196 = vld [vmem:[#allocation4 + $0x100] sm:$0xff]
    %v197 = vld [vmem:[#allocation4 + $0x108] sm:$0xff]
    %v198 = vld [vmem:[#allocation4 + $0x110] sm:$0xff]
    %v199 = vld [vmem:[#allocation4 + $0x118] sm:$0xff]
    %v200 = vld [vmem:[#allocation4 + $0x120] sm:$0xff]
    %v201 = vld [vmem:[#allocation4 + $0x128] sm:$0xff]
    %v202 = vld [vmem:[#allocation4 + $0x130] sm:$0xff]
    %v203 = vld [vmem:[#allocation4 + $0x138] sm:$0xff]
    %v204 = vld [vmem:[#allocation4 + $0x140] sm:$0xff]
    %v205 = vld [vmem:[#allocation4 + $0x148] sm:$0xff]
    %v206 = vld [vmem:[#allocation4 + $0x150] sm:$0xff]
    %v207 = vld [vmem:[#allocation4 + $0x158] sm:$0xff]
    %v208 = vld [vmem:[#allocation4 + $0x160] sm:$0xff]
    %v209 = vld [vmem:[#allocation4 + $0x168] sm:$0xff]
    %v210 = vld [vmem:[#allocation4 + $0x170] sm:$0xff]
    %v211 = vld [vmem:[#allocation4 + $0x178] sm:$0xff]
    %v212 = vld [vmem:[#allocation4 + $0x180] sm:$0xff]
    %v213 = vld [vmem:[#allocation4 + $0x188] sm:$0xff]
    %v214 = vld [vmem:[#allocation4 + $0x190] sm:$0xff]
    %v215 = vld [vmem:[#allocation4 + $0x198] sm:$0xff]
    %v216 = vld [vmem:[#allocation4 + $0x1a0] sm:$0xff]
    %v217 = vld [vmem:[#allocation4 + $0x1a8] sm:$0xff]
    %v218 = vld [vmem:[#allocation4 + $0x1b0] sm:$0xff]
    %v219 = vld [vmem:[#allocation4 + $0x1b8] sm:$0xff]
    %v220 = vld [vmem:[#allocation4 + $0x1c0] sm:$0xff]
    %v221 = vld [vmem:[#allocation4 + $0x1c8] sm:$0xff]
    %v222 = vld [vmem:[#allocation4 + $0x1d0] sm:$0xff]
    %v223 = vld [vmem:[#allocation4 + $0x1d8] sm:$0xff]
    %v224 = vld [vmem:[#allocation4 + $0x1e0] sm:$0xff]
    %v225 = vld [vmem:[#allocation4 + $0x1e8] sm:$0xff]
    %v226 = vld [vmem:[#allocation4 + $0x1f0] sm:$0xff]
    %v227 = vld [vmem:[#allocation4 + $0x1f8] sm:$0xff]
    %vm228 = vcmp.ge.f32.partialorder %v164, 0.0
    %vm229 = vcmp.ge.f32.partialorder %v165, 0.0
    %vm230 = vcmp.ge.f32.partialorder %v166, 0.0
    %vm231 = vcmp.ge.f32.partialorder %v167, 0.0
    %vm232 = vcmp.ge.f32.partialorder %v168, 0.0
    %vm233 = vcmp.ge.f32.partialorder %v169, 0.0
    %vm234 = vcmp.ge.f32.partialorder %v170, 0.0
    %vm235 = vcmp.ge.f32.partialorder %v171, 0.0
    %vm236 = vcmp.ge.f32.partialorder %v172, 0.0
    %vm237 = vcmp.ge.f32.partialorder %v173, 0.0
    %vm238 = vcmp.ge.f32.partialorder %v174, 0.0
    %vm239 = vcmp.ge.f32.partialorder %v175, 0.0
    %vm240 = vcmp.ge.f32.partialorder %v176, 0.0
    %vm241 = vcmp.ge.f32.partialorder %v177, 0.0
    %vm242 = vcmp.ge.f32.partialorder %v178, 0.0
    %vm243 = vcmp.ge.f32.partialorder %v179, 0.0
    %vm244 = vcmp.ge.f32.partialorder %v180, 0.0
    %vm245 = vcmp.ge.f32.partialorder %v181, 0.0
    %vm246 = vcmp.ge.f32.partialorder %v182, 0.0
    %vm247 = vcmp.ge.f32.partialorder %v183, 0.0
    %vm248 = vcmp.ge.f32.partialorder %v184, 0.0
    %vm249 = vcmp.ge.f32.partialorder %v185, 0.0
    %vm250 = vcmp.ge.f32.partialorder %v186, 0.0
    %vm251 = vcmp.ge.f32.partialorder %v187, 0.0
    %vm252 = vcmp.ge.f32.partialorder %v188, 0.0
    %vm253 = vcmp.ge.f32.partialorder %v189, 0.0
    %vm254 = vcmp.ge.f32.partialorder %v190, 0.0
    %vm255 = vcmp.ge.f32.partialorder %v191, 0.0
    %vm256 = vcmp.ge.f32.partialorder %v192, 0.0
    %vm257 = vcmp.ge.f32.partialorder %v193, 0.0
    %vm258 = vcmp.ge.f32.partialorder %v194, 0.0
    %vm259 = vcmp.ge.f32.partialorder %v195, 0.0
    %vm260 = vcmp.ge.f32.partialorder %v196, 0.0
    %vm261 = vcmp.ge.f32.partialorder %v197, 0.0
    %vm262 = vcmp.ge.f32.partialorder %v198, 0.0
    %vm263 = vcmp.ge.f32.partialorder %v199, 0.0
    %vm264 = vcmp.ge.f32.partialorder %v200, 0.0
    %vm265 = vcmp.ge.f32.partialorder %v201, 0.0
    %vm266 = vcmp.ge.f32.partialorder %v202, 0.0
    %vm267 = vcmp.ge.f32.partialorder %v203, 0.0
    %vm268 = vcmp.ge.f32.partialorder %v204, 0.0
    %vm269 = vcmp.ge.f32.partialorder %v205, 0.0
    %vm270 = vcmp.ge.f32.partialorder %v206, 0.0
    %vm271 = vcmp.ge.f32.partialorder %v207, 0.0
    %vm272 = vcmp.ge.f32.partialorder %v208, 0.0
    %vm273 = vcmp.ge.f32.partialorder %v209, 0.0
    %vm274 = vcmp.ge.f32.partialorder %v210, 0.0
    %vm275 = vcmp.ge.f32.partialorder %v211, 0.0
    %vm276 = vcmp.ge.f32.partialorder %v212, 0.0
    %vm277 = vcmp.ge.f32.partialorder %v213, 0.0
    %vm278 = vcmp.ge.f32.partialorder %v214, 0.0
    %vm279 = vcmp.ge.f32.partialorder %v215, 0.0
    %vm280 = vcmp.ge.f32.partialorder %v216, 0.0
    %vm281 = vcmp.ge.f32.partialorder %v217, 0.0
    %vm282 = vcmp.ge.f32.partialorder %v218, 0.0
    %vm283 = vcmp.ge.f32.partialorder %v219, 0.0
    %vm284 = vcmp.ge.f32.partialorder %v220, 0.0
    %vm285 = vcmp.ge.f32.partialorder %v221, 0.0
    %vm286 = vcmp.ge.f32.partialorder %v222, 0.0
    %vm287 = vcmp.ge.f32.partialorder %v223, 0.0
    %vm288 = vcmp.ge.f32.partialorder %v224, 0.0
    %vm289 = vcmp.ge.f32.partialorder %v225, 0.0
    %vm290 = vcmp.ge.f32.partialorder %v226, 0.0
    %vm291 = vcmp.ge.f32.partialorder %v227, 0.0
    %v292 = vld [vmem:[%s3] sm:$0x1]
    %v294 = vlaneseq
    %v295 = vshrl.u32 %v294, 7
    %v296 = vsub.s32 0, %v295
    %v297 = vrot.slane %v292, %v296
    %v299 = vmul.f32 %v164, %v297
    %v300 = vmul.f32 %v165, %v297
    %v301 = vmul.f32 %v166, %v297
    %v302 = vmul.f32 %v167, %v297
    %v303 = vmul.f32 %v168, %v297
    %v304 = vmul.f32 %v169, %v297
    %v305 = vmul.f32 %v170, %v297
    %v306 = vmul.f32 %v171, %v297
    %v307 = vmul.f32 %v172, %v297
    %v308 = vmul.f32 %v173, %v297
    %v309 = vmul.f32 %v174, %v297
    %v310 = vmul.f32 %v175, %v297
    %v311 = vmul.f32 %v176, %v297
    %v312 = vmul.f32 %v177, %v297
    %v313 = vmul.f32 %v178, %v297
    %v314 = vmul.f32 %v179, %v297
    %v315 = vmul.f32 %v180, %v297
    %v316 = vmul.f32 %v181, %v297
    %v317 = vmul.f32 %v182, %v297
    %v318 = vmul.f32 %v183, %v297
    %v319 = vmul.f32 %v184, %v297
    %v320 = vmul.f32 %v185, %v297
    %v321 = vmul.f32 %v186, %v297
    %v322 = vmul.f32 %v187, %v297
    %v323 = vmul.f32 %v188, %v297
    %v324 = vmul.f32 %v189, %v297
    %v325 = vmul.f32 %v190, %v297
    %v326 = vmul.f32 %v191, %v297
    %v327 = vmul.f32 %v192, %v297
    %v328 = vmul.f32 %v193, %v297
    %v329 = vmul.f32 %v194, %v297
    %v330 = vmul.f32 %v195, %v297
    %v331 = vmul.f32 %v196, %v297
    %v332 = vmul.f32 %v197, %v297
    %v333 = vmul.f32 %v198, %v297
    %v334 = vmul.f32 %v199, %v297
    %v335 = vmul.f32 %v200, %v297
    %v336 = vmul.f32 %v201, %v297
    %v337 = vmul.f32 %v202, %v297
    %v338 = vmul.f32 %v203, %v297
    %v339 = vmul.f32 %v204, %v297
    %v340 = vmul.f32 %v205, %v297
    %v341 = vmul.f32 %v206, %v297
    %v342 = vmul.f32 %v207, %v297
    %v343 = vmul.f32 %v208, %v297
    %v344 = vmul.f32 %v209, %v297
    %v345 = vmul.f32 %v210, %v297
    %v346 = vmul.f32 %v211, %v297
    %v347 = vmul.f32 %v212, %v297
    %v348 = vmul.f32 %v213, %v297
    %v349 = vmul.f32 %v214, %v297
    %v350 = vmul.f32 %v215, %v297
    %v351 = vmul.f32 %v216, %v297
    %v352 = vmul.f32 %v217, %v297
    %v353 = vmul.f32 %v218, %v297
    %v354 = vmul.f32 %v219, %v297
    %v355 = vmul.f32 %v220, %v297
    %v356 = vmul.f32 %v221, %v297
    %v357 = vmul.f32 %v222, %v297
    %v358 = vmul.f32 %v223, %v297
    %v359 = vmul.f32 %v224, %v297
    %v360 = vmul.f32 %v225, %v297
    %v361 = vmul.f32 %v226, %v297
    %v362 = vmul.f32 %v227, %v297
    %v363 = vsel %vm228, %v164, %v299
    %v364 = vsel %vm229, %v165, %v300
    %v365 = vsel %vm230, %v166, %v301
    %v366 = vsel %vm231, %v167, %v302
    %v367 = vsel %vm232, %v168, %v303
    %v368 = vsel %vm233, %v169, %v304
    %v369 = vsel %vm234, %v170, %v305
    %v370 = vsel %vm235, %v171, %v306
    %v371 = vsel %vm236, %v172, %v307
    %v372 = vsel %vm237, %v173, %v308
    %v373 = vsel %vm238, %v174, %v309
    %v374 = vsel %vm239, %v175, %v310
    %v375 = vsel %vm240, %v176, %v311
    %v376 = vsel %vm241, %v177, %v312
    %v377 = vsel %vm242, %v178, %v313
    %v378 = vsel %vm243, %v179, %v314
    %v379 = vsel %vm244, %v180, %v315
    %v380 = vsel %vm245, %v181, %v316
    %v381 = vsel %vm246, %v182, %v317
    %v382 = vsel %vm247, %v183, %v318
    %v383 = vsel %vm248, %v184, %v319
    %v384 = vsel %vm249, %v185, %v320
    %v385 = vsel %vm250, %v186, %v321
    %v386 = vsel %vm251, %v187, %v322
    %v387 = vsel %vm252, %v188, %v323
    %v388 = vsel %vm253, %v189, %v324
    %v389 = vsel %vm254, %v190, %v325
    %v390 = vsel %vm255, %v191, %v326
    %v391 = vsel %vm256, %v192, %v327
    %v392 = vsel %vm257, %v193, %v328
    %v393 = vsel %vm258, %v194, %v329
    %v394 = vsel %vm259, %v195, %v330
    %v395 = vsel %vm260, %v196, %v331
    %v396 = vsel %vm261, %v197, %v332
    %v397 = vsel %vm262, %v198, %v333
    %v398 = vsel %vm263, %v199, %v334
    %v399 = vsel %vm264, %v200, %v335
    %v400 = vsel %vm265, %v201, %v336
    %v401 = vsel %vm266, %v202, %v337
    %v402 = vsel %vm267, %v203, %v338
    %v403 = vsel %vm268, %v204, %v339
    %v404 = vsel %vm269, %v205, %v340
    %v405 = vsel %vm270, %v206, %v341
    %v406 = vsel %vm271, %v207, %v342
    %v407 = vsel %vm272, %v208, %v343
    %v408 = vsel %vm273, %v209, %v344
    %v409 = vsel %vm274, %v210, %v345
    %v410 = vsel %vm275, %v211, %v346
    %v411 = vsel %vm276, %v212, %v347
    %v412 = vsel %vm277, %v213, %v348
    %v413 = vsel %vm278, %v214, %v349
    %v414 = vsel %vm279, %v215, %v350
    %v415 = vsel %vm280, %v216, %v351
    %v416 = vsel %vm281, %v217, %v352
    %v417 = vsel %vm282, %v218, %v353
    %v418 = vsel %vm283, %v219, %v354
    %v419 = vsel %vm284, %v220, %v355
    %v420 = vsel %vm285, %v221, %v356
    %v421 = vsel %vm286, %v222, %v357
    %v422 = vsel %vm287, %v223, %v358
    %v423 = vsel %vm288, %v224, %v359
    %v424 = vsel %vm289, %v225, %v360
    %v425 = vsel %vm290, %v226, %v361
    %v426 = vsel %vm291, %v227, %v362
    %s427 = scalar_lea.vmem [#allocation2], 24
    %428 = vst.msk [vmem:[%s427 + $0x1] sm:$0xff] %vm49, %v363
    %429 = vst.msk [vmem:[%s427 + $0x9] sm:$0xff] %vm49, %v364
    %430 = vst.msk [vmem:[%s427 + $0x19] sm:$0xff] %vm49, %v365
    %431 = vst.msk [vmem:[%s427 + $0x21] sm:$0xff] %vm49, %v366
    %432 = vst.msk [vmem:[%s427 + $0x31] sm:$0xff] %vm49, %v367
    %433 = vst.msk [vmem:[%s427 + $0x39] sm:$0xff] %vm49, %v368
    %434 = vst.msk [vmem:[%s427 + $0x49] sm:$0xff] %vm49, %v369
    %435 = vst.msk [vmem:[%s427 + $0x51] sm:$0xff] %vm49, %v370
    %436 = vst.msk [vmem:[%s427 + $0x61] sm:$0xff] %vm49, %v371
    %437 = vst.msk [vmem:[%s427 + $0x69] sm:$0xff] %vm49, %v372
    %438 = vst.msk [vmem:[%s427 + $0x79] sm:$0xff] %vm49, %v373
    %439 = vst.msk [vmem:[%s427 + $0x81] sm:$0xff] %vm49, %v374
    %440 = vst.msk [vmem:[%s427 + $0x91] sm:$0xff] %vm49, %v375
    %441 = vst.msk [vmem:[%s427 + $0x99] sm:$0xff] %vm49, %v376
    %442 = vst.msk [vmem:[%s427 + $0xa9] sm:$0xff] %vm49, %v377
    %443 = vst.msk [vmem:[%s427 + $0xb1] sm:$0xff] %vm49, %v378
    %444 = vst.msk [vmem:[%s427 + $0xc1] sm:$0xff] %vm49, %v379
    %445 = vst.msk [vmem:[%s427 + $0xc9] sm:$0xff] %vm49, %v380
    %446 = vst.msk [vmem:[%s427 + $0xd9] sm:$0xff] %vm49, %v381
    %447 = vst.msk [vmem:[%s427 + $0xe1] sm:$0xff] %vm49, %v382
    %448 = vst.msk [vmem:[%s427 + $0xf1] sm:$0xff] %vm49, %v383
    %449 = vst.msk [vmem:[%s427 + $0xf9] sm:$0xff] %vm49, %v384
    %450 = vst.msk [vmem:[%s427 + $0x109] sm:$0xff] %vm49, %v385
    %451 = vst.msk [vmem:[%s427 + $0x111] sm:$0xff] %vm49, %v386
    %452 = vst.msk [vmem:[%s427 + $0x121] sm:$0xff] %vm49, %v387
    %453 = vst.msk [vmem:[%s427 + $0x129] sm:$0xff] %vm49, %v388
    %454 = vst.msk [vmem:[%s427 + $0x139] sm:$0xff] %vm49, %v389
    %455 = vst.msk [vmem:[%s427 + $0x141] sm:$0xff] %vm49, %v390
    %456 = vst.msk [vmem:[%s427 + $0x151] sm:$0xff] %vm49, %v391
    %457 = vst.msk [vmem:[%s427 + $0x159] sm:$0xff] %vm49, %v392
    %458 = vst.msk [vmem:[%s427 + $0x169] sm:$0xff] %vm49, %v393
    %459 = vst.msk [vmem:[%s427 + $0x171] sm:$0xff] %vm49, %v394
    %460 = vst.msk [vmem:[%s427 + $0x1b1] sm:$0xff] %vm49, %v395
    %461 = vst.msk [vmem:[%s427 + $0x1b9] sm:$0xff] %vm49, %v396
    %462 = vst.msk [vmem:[%s427 + $0x1c9] sm:$0xff] %vm49, %v397
    %463 = vst.msk [vmem:[%s427 + $0x1d1] sm:$0xff] %vm49, %v398
    %464 = vst.msk [vmem:[%s427 + $0x1e1] sm:$0xff] %vm49, %v399
    %465 = vst.msk [vmem:[%s427 + $0x1e9] sm:$0xff] %vm49, %v400
    %466 = vst.msk [vmem:[%s427 + $0x1f9] sm:$0xff] %vm49, %v401
    %467 = vst.msk [vmem:[%s427 + $0x201] sm:$0xff] %vm49, %v402
    %468 = vst.msk [vmem:[%s427 + $0x211] sm:$0xff] %vm49, %v403
    %469 = vst.msk [vmem:[%s427 + $0x219] sm:$0xff] %vm49, %v404
    %470 = vst.msk [vmem:[%s427 + $0x229] sm:$0xff] %vm49, %v405
    %471 = vst.msk [vmem:[%s427 + $0x231] sm:$0xff] %vm49, %v406
    %472 = vst.msk [vmem:[%s427 + $0x241] sm:$0xff] %vm49, %v407
    %473 = vst.msk [vmem:[%s427 + $0x249] sm:$0xff] %vm49, %v408
    %474 = vst.msk [vmem:[%s427 + $0x259] sm:$0xff] %vm49, %v409
    %475 = vst.msk [vmem:[%s427 + $0x261] sm:$0xff] %vm49, %v410
    %476 = vst.msk [vmem:[%s427 + $0x271] sm:$0xff] %vm49, %v411
    %477 = vst.msk [vmem:[%s427 + $0x279] sm:$0xff] %vm49, %v412
    %478 = vst.msk [vmem:[%s427 + $0x289] sm:$0xff] %vm49, %v413
    %479 = vst.msk [vmem:[%s427 + $0x291] sm:$0xff] %vm49, %v414
    %480 = vst.msk [vmem:[%s427 + $0x2a1] sm:$0xff] %vm49, %v415
    %481 = vst.msk [vmem:[%s427 + $0x2a9] sm:$0xff] %vm49, %v416
    %482 = vst.msk [vmem:[%s427 + $0x2b9] sm:$0xff] %vm49, %v417
    %483 = vst.msk [vmem:[%s427 + $0x2c1] sm:$0xff] %vm49, %v418
    %484 = vst.msk [vmem:[%s427 + $0x2d1] sm:$0xff] %vm49, %v419
    %485 = vst.msk [vmem:[%s427 + $0x2d9] sm:$0xff] %vm49, %v420
    %486 = vst.msk [vmem:[%s427 + $0x2e9] sm:$0xff] %vm49, %v421
    %487 = vst.msk [vmem:[%s427 + $0x2f1] sm:$0xff] %vm49, %v422
    %488 = vst.msk [vmem:[%s427 + $0x301] sm:$0xff] %vm49, %v423
    %489 = vst.msk [vmem:[%s427 + $0x309] sm:$0xff] %vm49, %v424
    %490 = vst.msk [vmem:[%s427 + $0x319] sm:$0xff] %vm49, %v425
    %491 = vst.msk [vmem:[%s427 + $0x321] sm:$0xff] %vm49, %v426
    %v492 = vld [vmem:[#allocation2] sm:$0xff]
    %v493 = vld [vmem:[#allocation2 + $0x8] sm:$0xff]
    %v494 = vld [vmem:[#allocation2 + $0x18] sm:$0xff]
    %v495 = vld [vmem:[#allocation2 + $0x20] sm:$0xff]
    %v496 = vld [vmem:[#allocation2 + $0x30] sm:$0xff]
    %v497 = vld [vmem:[#allocation2 + $0x38] sm:$0xff]
    %v498 = vld [vmem:[#allocation2 + $0x48] sm:$0xff]
    %v499 = vld [vmem:[#allocation2 + $0x50] sm:$0xff]
    %v500 = vld [vmem:[#allocation2 + $0x60] sm:$0xff]
    %v501 = vld [vmem:[#allocation2 + $0x68] sm:$0xff]
    %v502 = vld [vmem:[#allocation2 + $0x78] sm:$0xff]
    %v503 = vld [vmem:[#allocation2 + $0x80] sm:$0xff]
    %v504 = vld [vmem:[#allocation2 + $0x90] sm:$0xff]
    %v505 = vld [vmem:[#allocation2 + $0x98] sm:$0xff]
    %v506 = vld [vmem:[#allocation2 + $0xa8] sm:$0xff]
    %v507 = vld [vmem:[#allocation2 + $0xb0] sm:$0xff]
    %v508 = vld [vmem:[#allocation2 + $0xc0] sm:$0xff]
    %v509 = vld [vmem:[#allocation2 + $0xc8] sm:$0xff]
    %v510 = vld [vmem:[#allocation2 + $0xd8] sm:$0xff]
    %v511 = vld [vmem:[#allocation2 + $0xe0] sm:$0xff]
    %v512 = vld [vmem:[#allocation2 + $0xf0] sm:$0xff]
    %v513 = vld [vmem:[#allocation2 + $0xf8] sm:$0xff]
    %v514 = vld [vmem:[#allocation2 + $0x108] sm:$0xff]
    %v515 = vld [vmem:[#allocation2 + $0x110] sm:$0xff]
    %v516 = vld [vmem:[#allocation2 + $0x120] sm:$0xff]
    %v517 = vld [vmem:[#allocation2 + $0x128] sm:$0xff]
    %v518 = vld [vmem:[#allocation2 + $0x138] sm:$0xff]
    %v519 = vld [vmem:[#allocation2 + $0x140] sm:$0xff]
    %v520 = vld [vmem:[#allocation2 + $0x150] sm:$0xff]
    %v521 = vld [vmem:[#allocation2 + $0x158] sm:$0xff]
    %v522 = vld [vmem:[#allocation2 + $0x168] sm:$0xff]
    %v523 = vld [vmem:[#allocation2 + $0x170] sm:$0xff]
    %v524 = vld [vmem:[#allocation2 + $0x1b0] sm:$0xff]
    %v525 = vld [vmem:[#allocation2 + $0x1b8] sm:$0xff]
    %v526 = vld [vmem:[#allocation2 + $0x1c8] sm:$0xff]
    %v527 = vld [vmem:[#allocation2 + $0x1d0] sm:$0xff]
    %v528 = vld [vmem:[#allocation2 + $0x1e0] sm:$0xff]
    %v529 = vld [vmem:[#allocation2 + $0x1e8] sm:$0xff]
    %v530 = vld [vmem:[#allocation2 + $0x1f8] sm:$0xff]
    %v531 = vld [vmem:[#allocation2 + $0x200] sm:$0xff]
    %v532 = vld [vmem:[#allocation2 + $0x210] sm:$0xff]
    %v533 = vld [vmem:[#allocation2 + $0x218] sm:$0xff]
    %v534 = vld [vmem:[#allocation2 + $0x228] sm:$0xff]
    %v535 = vld [vmem:[#allocation2 + $0x230] sm:$0xff]
    %v536 = vld [vmem:[#allocation2 + $0x240] sm:$0xff]
    %v537 = vld [vmem:[#allocation2 + $0x248] sm:$0xff]
    %v538 = vld [vmem:[#allocation2 + $0x258] sm:$0xff]
    %v539 = vld [vmem:[#allocation2 + $0x260] sm:$0xff]
    %v540 = vld [vmem:[#allocation2 + $0x270] sm:$0xff]
    %v541 = vld [vmem:[#allocation2 + $0x278] sm:$0xff]
    %v542 = vld [vmem:[#allocation2 + $0x288] sm:$0xff]
    %v543 = vld [vmem:[#allocation2 + $0x290] sm:$0xff]
    %v544 = vld [vmem:[#allocation2 + $0x2a0] sm:$0xff]
    %v545 = vld [vmem:[#allocation2 + $0x2a8] sm:$0xff]
    %v546 = vld [vmem:[#allocation2 + $0x2b8] sm:$0xff]
    %v547 = vld [vmem:[#allocation2 + $0x2c0] sm:$0xff]
    %v548 = vld [vmem:[#allocation2 + $0x2d0] sm:$0xff]
    %v549 = vld [vmem:[#allocation2 + $0x2d8] sm:$0xff]
    %v550 = vld [vmem:[#allocation2 + $0x2e8] sm:$0xff]
    %v551 = vld [vmem:[#allocation2 + $0x2f0] sm:$0xff]
    %v552 = vld [vmem:[#allocation2 + $0x300] sm:$0xff]
    %v553 = vld [vmem:[#allocation2 + $0x308] sm:$0xff]
    %v554 = vld [vmem:[#allocation2 + $0x318] sm:$0xff]
    %v555 = vld [vmem:[#allocation2 + $0x320] sm:$0xff]
    %v556 = vpack.c.bf16 %v493, %v492
    %v557 = vpack.c.bf16 %v495, %v494
    %v558 = vpack.c.bf16 %v497, %v496
    %v559 = vpack.c.bf16 %v499, %v498
    %v560 = vpack.c.bf16 %v501, %v500
    %v561 = vpack.c.bf16 %v503, %v502
    %v562 = vpack.c.bf16 %v505, %v504
    %v563 = vpack.c.bf16 %v507, %v506
    %v564 = vpack.c.bf16 %v509, %v508
    %v565 = vpack.c.bf16 %v511, %v510
    %v566 = vpack.c.bf16 %v513, %v512
    %v567 = vpack.c.bf16 %v515, %v514
    %v568 = vpack.c.bf16 %v517, %v516
    %v569 = vpack.c.bf16 %v519, %v518
    %v570 = vpack.c.bf16 %v521, %v520
    %v571 = vpack.c.bf16 %v523, %v522
    %v572 = vpack.c.bf16 %v525, %v524
    %v573 = vpack.c.bf16 %v527, %v526
    %v574 = vpack.c.bf16 %v529, %v528
    %v575 = vpack.c.bf16 %v531, %v530
    %v576 = vpack.c.bf16 %v533, %v532
    %v577 = vpack.c.bf16 %v535, %v534
    %v578 = vpack.c.bf16 %v537, %v536
    %v579 = vpack.c.bf16 %v539, %v538
    %v580 = vpack.c.bf16 %v541, %v540
    %v581 = vpack.c.bf16 %v543, %v542
    %v582 = vpack.c.bf16 %v545, %v544
    %v583 = vpack.c.bf16 %v547, %v546
    %v584 = vpack.c.bf16 %v549, %v548
    %v585 = vpack.c.bf16 %v551, %v550
    %v586 = vpack.c.bf16 %v553, %v552
    %v587 = vpack.c.bf16 %v555, %v554
    %588 = vst.msk [vmem:[#allocation3] sm:$0xff] %vm49, %v556
    %589 = vst.msk [vmem:[#allocation3 + $0x10] sm:$0xff] %vm49, %v557
    %590 = vst.msk [vmem:[#allocation3 + $0x20] sm:$0xff] %vm49, %v558
    %591 = vst.msk [vmem:[#allocation3 + $0x30] sm:$0xff] %vm49, %v559
    %592 = vst.msk [vmem:[#allocation3 + $0x40] sm:$0xff] %vm49, %v560
    %593 = vst.msk [vmem:[#allocation3 + $0x50] sm:$0xff] %vm49, %v561
    %594 = vst.msk [vmem:[#allocation3 + $0x60] sm:$0xff] %vm49, %v562
    %595 = vst.msk [vmem:[#allocation3 + $0x70] sm:$0xff] %vm49, %v563
    %596 = vst.msk [vmem:[#allocation3 + $0x80] sm:$0xff] %vm49, %v564
    %597 = vst.msk [vmem:[#allocation3 + $0x90] sm:$0xff] %vm49, %v565
    %598 = vst.msk [vmem:[#allocation3 + $0xa0] sm:$0xff] %vm49, %v566
    %599 = vst.msk [vmem:[#allocation3 + $0xb0] sm:$0xff] %vm49, %v567
    %600 = vst.msk [vmem:[#allocation3 + $0xc0] sm:$0xff] %vm49, %v568
    %601 = vst.msk [vmem:[#allocation3 + $0xd0] sm:$0xff] %vm49, %v569
    %602 = vst.msk [vmem:[#allocation3 + $0xe0] sm:$0xff] %vm49, %v570
    %603 = vst.msk [vmem:[#allocation3 + $0xf0] sm:$0xff] %vm49, %v571
    %604 = vst.msk [vmem:[#allocation3 + $0x100] sm:$0xff] %vm49, %v572
    %605 = vst.msk [vmem:[#allocation3 + $0x110] sm:$0xff] %vm49, %v573
    %606 = vst.msk [vmem:[#allocation3 + $0x120] sm:$0xff] %vm49, %v574
    %607 = vst.msk [vmem:[#allocation3 + $0x130] sm:$0xff] %vm49, %v575
    %608 = vst.msk [vmem:[#allocation3 + $0x140] sm:$0xff] %vm49, %v576
    %609 = vst.msk [vmem:[#allocation3 + $0x150] sm:$0xff] %vm49, %v577
    %610 = vst.msk [vmem:[#allocation3 + $0x160] sm:$0xff] %vm49, %v578
    %611 = vst.msk [vmem:[#allocation3 + $0x170] sm:$0xff] %vm49, %v579
    %612 = vst.msk [vmem:[#allocation3 + $0x180] sm:$0xff] %vm49, %v580
    %613 = vst.msk [vmem:[#allocation3 + $0x190] sm:$0xff] %vm49, %v581
    %614 = vst.msk [vmem:[#allocation3 + $0x1a0] sm:$0xff] %vm49, %v582
    %615 = vst.msk [vmem:[#allocation3 + $0x1b0] sm:$0xff] %vm49, %v583
    %616 = vst.msk [vmem:[#allocation3 + $0x1c0] sm:$0xff] %vm49, %v584
    %617 = vst.msk [vmem:[#allocation3 + $0x1d0] sm:$0xff] %vm49, %v585
    %618 = vst.msk [vmem:[#allocation3 + $0x1e0] sm:$0xff] %vm49, %v586
    %619 = vst.msk [vmem:[#allocation3 + $0x1f0] sm:$0xff] %vm49, %v587
    %v620 = vld [vmem:[#allocation2 + $0x1] sm:$0xff]
    %v621 = vld [vmem:[#allocation2 + $0x9] sm:$0xff]
    %v622 = vld [vmem:[#allocation2 + $0x19] sm:$0xff]
    %v623 = vld [vmem:[#allocation2 + $0x21] sm:$0xff]
    %v624 = vld [vmem:[#allocation2 + $0x31] sm:$0xff]
    %v625 = vld [vmem:[#allocation2 + $0x39] sm:$0xff]
    %v626 = vld [vmem:[#allocation2 + $0x49] sm:$0xff]
    %v627 = vld [vmem:[#allocation2 + $0x51] sm:$0xff]
    %v628 = vld [vmem:[#allocation2 + $0x61] sm:$0xff]
    %v629 = vld [vmem:[#allocation2 + $0x69] sm:$0xff]
    %v630 = vld [vmem:[#allocation2 + $0x79] sm:$0xff]
    %v631 = vld [vmem:[#allocation2 + $0x81] sm:$0xff]
    %v632 = vld [vmem:[#allocation2 + $0x91] sm:$0xff]
    %v633 = vld [vmem:[#allocation2 + $0x99] sm:$0xff]
    %v634 = vld [vmem:[#allocation2 + $0xa9] sm:$0xff]
    %v635 = vld [vmem:[#allocation2 + $0xb1] sm:$0xff]
    %v636 = vld [vmem:[#allocation2 + $0xc1] sm:$0xff]
    %v637 = vld [vmem:[#allocation2 + $0xc9] sm:$0xff]
    %v638 = vld [vmem:[#allocation2 + $0xd9] sm:$0xff]
    %v639 = vld [vmem:[#allocation2 + $0xe1] sm:$0xff]
    %v640 = vld [vmem:[#allocation2 + $0xf1] sm:$0xff]
    %v641 = vld [vmem:[#allocation2 + $0xf9] sm:$0xff]
    %v642 = vld [vmem:[#allocation2 + $0x109] sm:$0xff]
    %v643 = vld [vmem:[#allocation2 + $0x111] sm:$0xff]
    %v644 = vld [vmem:[#allocation2 + $0x121] sm:$0xff]
    %v645 = vld [vmem:[#allocation2 + $0x129] sm:$0xff]
    %v646 = vld [vmem:[#allocation2 + $0x139] sm:$0xff]
    %v647 = vld [vmem:[#allocation2 + $0x141] sm:$0xff]
    %v648 = vld [vmem:[#allocation2 + $0x151] sm:$0xff]
    %v649 = vld [vmem:[#allocation2 + $0x159] sm:$0xff]
    %v650 = vld [vmem:[#allocation2 + $0x169] sm:$0xff]
    %v651 = vld [vmem:[#allocation2 + $0x171] sm:$0xff]
    %v652 = vld [vmem:[#allocation2 + $0x1b1] sm:$0xff]
    %v653 = vld [vmem:[#allocation2 + $0x1b9] sm:$0xff]
    %v654 = vld [vmem:[#allocation2 + $0x1c9] sm:$0xff]
    %v655 = vld [vmem:[#allocation2 + $0x1d1] sm:$0xff]
    %v656 = vld [vmem:[#allocation2 + $0x1e1] sm:$0xff]
    %v657 = vld [vmem:[#allocation2 + $0x1e9] sm:$0xff]
    %v658 = vld [vmem:[#allocation2 + $0x1f9] sm:$0xff]
    %v659 = vld [vmem:[#allocation2 + $0x201] sm:$0xff]
    %v660 = vld [vmem:[#allocation2 + $0x211] sm:$0xff]
    %v661 = vld [vmem:[#allocation2 + $0x219] sm:$0xff]
    %v662 = vld [vmem:[#allocation2 + $0x229] sm:$0xff]
    %v663 = vld [vmem:[#allocation2 + $0x231] sm:$0xff]
    %v664 = vld [vmem:[#allocation2 + $0x241] sm:$0xff]
    %v665 = vld [vmem:[#allocation2 + $0x249] sm:$0xff]
    %v666 = vld [vmem:[#allocation2 + $0x259] sm:$0xff]
    %v667 = vld [vmem:[#allocation2 + $0x261] sm:$0xff]
    %v668 = vld [vmem:[#allocation2 + $0x271] sm:$0xff]
    %v669 = vld [vmem:[#allocation2 + $0x279] sm:$0xff]
    %v670 = vld [vmem:[#allocation2 + $0x289] sm:$0xff]
    %v671 = vld [vmem:[#allocation2 + $0x291] sm:$0xff]
    %v672 = vld [vmem:[#allocation2 + $0x2a1] sm:$0xff]
    %v673 = vld [vmem:[#allocation2 + $0x2a9] sm:$0xff]
    %v674 = vld [vmem:[#allocation2 + $0x2b9] sm:$0xff]
    %v675 = vld [vmem:[#allocation2 + $0x2c1] sm:$0xff]
    %v676 = vld [vmem:[#allocation2 + $0x2d1] sm:$0xff]
    %v677 = vld [vmem:[#allocation2 + $0x2d9] sm:$0xff]
    %v678 = vld [vmem:[#allocation2 + $0x2e9] sm:$0xff]
    %v679 = vld [vmem:[#allocation2 + $0x2f1] sm:$0xff]
    %v680 = vld [vmem:[#allocation2 + $0x301] sm:$0xff]
    %v681 = vld [vmem:[#allocation2 + $0x309] sm:$0xff]
    %v682 = vld [vmem:[#allocation2 + $0x319] sm:$0xff]
    %v683 = vld [vmem:[#allocation2 + $0x321] sm:$0xff]
    %v684 = vpack.c.bf16 %v621, %v620
    %v685 = vpack.c.bf16 %v623, %v622
    %v686 = vpack.c.bf16 %v625, %v624
    %v687 = vpack.c.bf16 %v627, %v626
    %v688 = vpack.c.bf16 %v629, %v628
    %v689 = vpack.c.bf16 %v631, %v630
    %v690 = vpack.c.bf16 %v633, %v632
    %v691 = vpack.c.bf16 %v635, %v634
    %v692 = vpack.c.bf16 %v637, %v636
    %v693 = vpack.c.bf16 %v639, %v638
    %v694 = vpack.c.bf16 %v641, %v640
    %v695 = vpack.c.bf16 %v643, %v642
    %v696 = vpack.c.bf16 %v645, %v644
    %v697 = vpack.c.bf16 %v647, %v646
    %v698 = vpack.c.bf16 %v649, %v648
    %v699 = vpack.c.bf16 %v651, %v650
    %v700 = vpack.c.bf16 %v653, %v652
    %v701 = vpack.c.bf16 %v655, %v654
    %v702 = vpack.c.bf16 %v657, %v656
    %v703 = vpack.c.bf16 %v659, %v658
    %v704 = vpack.c.bf16 %v661, %v660
    %v705 = vpack.c.bf16 %v663, %v662
    %v706 = vpack.c.bf16 %v665, %v664
    %v707 = vpack.c.bf16 %v667, %v666
    %v708 = vpack.c.bf16 %v669, %v668
    %v709 = vpack.c.bf16 %v671, %v670
    %v710 = vpack.c.bf16 %v673, %v672
    %v711 = vpack.c.bf16 %v675, %v674
    %v712 = vpack.c.bf16 %v677, %v676
    %v713 = vpack.c.bf16 %v679, %v678
    %v714 = vpack.c.bf16 %v681, %v680
    %v715 = vpack.c.bf16 %v683, %v682
    %748 = vrot.lane.b32.xlu0 %v684, 16
    %v749 = vpop.permute.xlu0 %748
    %750 = vrot.lane.b32.xlu0 %v685, 16
    %v751 = vpop.permute.xlu0 %750
    %752 = vrot.lane.b32.xlu0 %v686, 16
    %v753 = vpop.permute.xlu0 %752
    %754 = vrot.lane.b32.xlu0 %v687, 16
    %v755 = vpop.permute.xlu0 %754
    %756 = vrot.lane.b32.xlu0 %v688, 16
    %v757 = vpop.permute.xlu0 %756
    %758 = vrot.lane.b32.xlu0 %v689, 16
    %v759 = vpop.permute.xlu0 %758
    %760 = vrot.lane.b32.xlu0 %v690, 16
    %v761 = vpop.permute.xlu0 %760
    %762 = vrot.lane.b32.xlu0 %v691, 16
    %v763 = vpop.permute.xlu0 %762
    %764 = vrot.lane.b32.xlu0 %v692, 16
    %v765 = vpop.permute.xlu0 %764
    %766 = vrot.lane.b32.xlu0 %v693, 16
    %v767 = vpop.permute.xlu0 %766
    %768 = vrot.lane.b32.xlu0 %v694, 16
    %v769 = vpop.permute.xlu0 %768
    %770 = vrot.lane.b32.xlu0 %v695, 16
    %v771 = vpop.permute.xlu0 %770
    %772 = vrot.lane.b32.xlu0 %v696, 16
    %v773 = vpop.permute.xlu0 %772
    %774 = vrot.lane.b32.xlu0 %v697, 16
    %v775 = vpop.permute.xlu0 %774
    %776 = vrot.lane.b32.xlu0 %v698, 16
    %v777 = vpop.permute.xlu0 %776
    %778 = vrot.lane.b32.xlu0 %v699, 16
    %v779 = vpop.permute.xlu0 %778
    %780 = vrot.lane.b32.xlu0 %v700, 16
    %v781 = vpop.permute.xlu0 %780
    %782 = vrot.lane.b32.xlu0 %v701, 16
    %v783 = vpop.permute.xlu0 %782
    %784 = vrot.lane.b32.xlu0 %v702, 16
    %v785 = vpop.permute.xlu0 %784
    %786 = vrot.lane.b32.xlu0 %v703, 16
    %v787 = vpop.permute.xlu0 %786
    %788 = vrot.lane.b32.xlu0 %v704, 16
    %v789 = vpop.permute.xlu0 %788
    %790 = vrot.lane.b32.xlu0 %v705, 16
    %v791 = vpop.permute.xlu0 %790
    %792 = vrot.lane.b32.xlu0 %v706, 16
    %v793 = vpop.permute.xlu0 %792
    %794 = vrot.lane.b32.xlu0 %v707, 16
    %v795 = vpop.permute.xlu0 %794
    %796 = vrot.lane.b32.xlu0 %v708, 16
    %v797 = vpop.permute.xlu0 %796
    %798 = vrot.lane.b32.xlu0 %v709, 16
    %v799 = vpop.permute.xlu0 %798
    %800 = vrot.lane.b32.xlu0 %v710, 16
    %v801 = vpop.permute.xlu0 %800
    %802 = vrot.lane.b32.xlu0 %v711, 16
    %v803 = vpop.permute.xlu0 %802
    %804 = vrot.lane.b32.xlu0 %v712, 16
    %v805 = vpop.permute.xlu0 %804
    %806 = vrot.lane.b32.xlu0 %v713, 16
    %v807 = vpop.permute.xlu0 %806
    %808 = vrot.lane.b32.xlu0 %v714, 16
    %v809 = vpop.permute.xlu0 %808
    %810 = vrot.lane.b32.xlu0 %v715, 16
    %v811 = vpop.permute.xlu0 %810
    %vm844 = vcmask 261248
    %845 = vst.msk [vmem:[#allocation3] sm:$0xff] %vm844, %v749
    %846 = vst.msk [vmem:[#allocation3 + $0x10] sm:$0xff] %vm844, %v751
    %847 = vst.msk [vmem:[#allocation3 + $0x20] sm:$0xff] %vm844, %v753
    %848 = vst.msk [vmem:[#allocation3 + $0x30] sm:$0xff] %vm844, %v755
    %849 = vst.msk [vmem:[#allocation3 + $0x40] sm:$0xff] %vm844, %v757
    %850 = vst.msk [vmem:[#allocation3 + $0x50] sm:$0xff] %vm844, %v759
    %851 = vst.msk [vmem:[#allocation3 + $0x60] sm:$0xff] %vm844, %v761
    %852 = vst.msk [vmem:[#allocation3 + $0x70] sm:$0xff] %vm844, %v763
    %853 = vst.msk [vmem:[#allocation3 + $0x80] sm:$0xff] %vm844, %v765
    %854 = vst.msk [vmem:[#allocation3 + $0x90] sm:$0xff] %vm844, %v767
    %855 = vst.msk [vmem:[#allocation3 + $0xa0] sm:$0xff] %vm844, %v769
    %856 = vst.msk [vmem:[#allocation3 + $0xb0] sm:$0xff] %vm844, %v771
    %857 = vst.msk [vmem:[#allocation3 + $0xc0] sm:$0xff] %vm844, %v773
    %858 = vst.msk [vmem:[#allocation3 + $0xd0] sm:$0xff] %vm844, %v775
    %859 = vst.msk [vmem:[#allocation3 + $0xe0] sm:$0xff] %vm844, %v777
    %860 = vst.msk [vmem:[#allocation3 + $0xf0] sm:$0xff] %vm844, %v779
    %861 = vst.msk [vmem:[#allocation3 + $0x100] sm:$0xff] %vm844, %v781
    %862 = vst.msk [vmem:[#allocation3 + $0x110] sm:$0xff] %vm844, %v783
    %863 = vst.msk [vmem:[#allocation3 + $0x120] sm:$0xff] %vm844, %v785
    %864 = vst.msk [vmem:[#allocation3 + $0x130] sm:$0xff] %vm844, %v787
    %865 = vst.msk [vmem:[#allocation3 + $0x140] sm:$0xff] %vm844, %v789
    %866 = vst.msk [vmem:[#allocation3 + $0x150] sm:$0xff] %vm844, %v791
    %867 = vst.msk [vmem:[#allocation3 + $0x160] sm:$0xff] %vm844, %v793
    %868 = vst.msk [vmem:[#allocation3 + $0x170] sm:$0xff] %vm844, %v795
    %869 = vst.msk [vmem:[#allocation3 + $0x180] sm:$0xff] %vm844, %v797
    %870 = vst.msk [vmem:[#allocation3 + $0x190] sm:$0xff] %vm844, %v799
    %871 = vst.msk [vmem:[#allocation3 + $0x1a0] sm:$0xff] %vm844, %v801
    %872 = vst.msk [vmem:[#allocation3 + $0x1b0] sm:$0xff] %vm844, %v803
    %873 = vst.msk [vmem:[#allocation3 + $0x1c0] sm:$0xff] %vm844, %v805
    %874 = vst.msk [vmem:[#allocation3 + $0x1d0] sm:$0xff] %vm844, %v807
    %875 = vst.msk [vmem:[#allocation3 + $0x1e0] sm:$0xff] %vm844, %v809
    %876 = vst.msk [vmem:[#allocation3 + $0x1f0] sm:$0xff] %vm844, %v811
    %v877 = vld [vmem:[#allocation2 + $0x2] sm:$0xff]
    %v878 = vld [vmem:[#allocation2 + $0xa] sm:$0xff]
    %v879 = vld [vmem:[#allocation2 + $0x1a] sm:$0xff]
    %v880 = vld [vmem:[#allocation2 + $0x22] sm:$0xff]
    %v881 = vld [vmem:[#allocation2 + $0x32] sm:$0xff]
    %v882 = vld [vmem:[#allocation2 + $0x3a] sm:$0xff]
    %v883 = vld [vmem:[#allocation2 + $0x4a] sm:$0xff]
    %v884 = vld [vmem:[#allocation2 + $0x52] sm:$0xff]
    %v885 = vld [vmem:[#allocation2 + $0x62] sm:$0xff]
    %v886 = vld [vmem:[#allocation2 + $0x6a] sm:$0xff]
    %v887 = vld [vmem:[#allocation2 + $0x7a] sm:$0xff]
    %v888 = vld [vmem:[#allocation2 + $0x82] sm:$0xff]
    %v889 = vld [vmem:[#allocation2 + $0x92] sm:$0xff]
    %v890 = vld [vmem:[#allocation2 + $0x9a] sm:$0xff]
    %v891 = vld [vmem:[#allocation2 + $0xaa] sm:$0xff]
    %v892 = vld [vmem:[#allocation2 + $0xb2] sm:$0xff]
    %v893 = vld [vmem:[#allocation2 + $0xc2] sm:$0xff]
    %v894 = vld [vmem:[#allocation2 + $0xca] sm:$0xff]
    %v895 = vld [vmem:[#allocation2 + $0xda] sm:$0xff]
    %v896 = vld [vmem:[#allocation2 + $0xe2] sm:$0xff]
    %v897 = vld [vmem:[#allocation2 + $0xf2] sm:$0xff]
    %v898 = vld [vmem:[#allocation2 + $0xfa] sm:$0xff]
    %v899 = vld [vmem:[#allocation2 + $0x10a] sm:$0xff]
    %v900 = vld [vmem:[#allocation2 + $0x112] sm:$0xff]
    %v901 = vld [vmem:[#allocation2 + $0x122] sm:$0xff]
    %v902 = vld [vmem:[#allocation2 + $0x12a] sm:$0xff]
    %v903 = vld [vmem:[#allocation2 + $0x13a] sm:$0xff]
    %v904 = vld [vmem:[#allocation2 + $0x142] sm:$0xff]
    %v905 = vld [vmem:[#allocation2 + $0x152] sm:$0xff]
    %v906 = vld [vmem:[#allocation2 + $0x15a] sm:$0xff]
    %v907 = vld [vmem:[#allocation2 + $0x16a] sm:$0xff]
    %v908 = vld [vmem:[#allocation2 + $0x172] sm:$0xff]
    %v909 = vld [vmem:[#allocation2 + $0x1b2] sm:$0xff]
    %v910 = vld [vmem:[#allocation2 + $0x1ba] sm:$0xff]
    %v911 = vld [vmem:[#allocation2 + $0x1ca] sm:$0xff]
    %v912 = vld [vmem:[#allocation2 + $0x1d2] sm:$0xff]
    %v913 = vld [vmem:[#allocation2 + $0x1e2] sm:$0xff]
    %v914 = vld [vmem:[#allocation2 + $0x1ea] sm:$0xff]
    %v915 = vld [vmem:[#allocation2 + $0x1fa] sm:$0xff]
    %v916 = vld [vmem:[#allocation2 + $0x202] sm:$0xff]
    %v917 = vld [vmem:[#allocation2 + $0x212] sm:$0xff]
    %v918 = vld [vmem:[#allocation2 + $0x21a] sm:$0xff]
    %v919 = vld [vmem:[#allocation2 + $0x22a] sm:$0xff]
    %v920 = vld [vmem:[#allocation2 + $0x232] sm:$0xff]
    %v921 = vld [vmem:[#allocation2 + $0x242] sm:$0xff]
    %v922 = vld [vmem:[#allocation2 + $0x24a] sm:$0xff]
    %v923 = vld [vmem:[#allocation2 + $0x25a] sm:$0xff]
    %v924 = vld [vmem:[#allocation2 + $0x262] sm:$0xff]
    %v925 = vld [vmem:[#allocation2 + $0x272] sm:$0xff]
    %v926 = vld [vmem:[#allocation2 + $0x27a] sm:$0xff]
    %v927 = vld [vmem:[#allocation2 + $0x28a] sm:$0xff]
    %v928 = vld [vmem:[#allocation2 + $0x292] sm:$0xff]
    %v929 = vld [vmem:[#allocation2 + $0x2a2] sm:$0xff]
    %v930 = vld [vmem:[#allocation2 + $0x2aa] sm:$0xff]
    %v931 = vld [vmem:[#allocation2 + $0x2ba] sm:$0xff]
    %v932 = vld [vmem:[#allocation2 + $0x2c2] sm:$0xff]
    %v933 = vld [vmem:[#allocation2 + $0x2d2] sm:$0xff]
    %v934 = vld [vmem:[#allocation2 + $0x2da] sm:$0xff]
    %v935 = vld [vmem:[#allocation2 + $0x2ea] sm:$0xff]
    %v936 = vld [vmem:[#allocation2 + $0x2f2] sm:$0xff]
    %v937 = vld [vmem:[#allocation2 + $0x302] sm:$0xff]
    %v938 = vld [vmem:[#allocation2 + $0x30a] sm:$0xff]
    %v939 = vld [vmem:[#allocation2 + $0x31a] sm:$0xff]
    %v940 = vld [vmem:[#allocation2 + $0x322] sm:$0xff]
    %v941 = vpack.c.bf16 %v878, %v877
    %v942 = vpack.c.bf16 %v880, %v879
    %v943 = vpack.c.bf16 %v882, %v881
    %v944 = vpack.c.bf16 %v884, %v883
    %v945 = vpack.c.bf16 %v886, %v885
    %v946 = vpack.c.bf16 %v888, %v887
    %v947 = vpack.c.bf16 %v890, %v889
    %v948 = vpack.c.bf16 %v892, %v891
    %v949 = vpack.c.bf16 %v894, %v893
    %v950 = vpack.c.bf16 %v896, %v895
    %v951 = vpack.c.bf16 %v898, %v897
    %v952 = vpack.c.bf16 %v900, %v899
    %v953 = vpack.c.bf16 %v902, %v901
    %v954 = vpack.c.bf16 %v904, %v903
    %v955 = vpack.c.bf16 %v906, %v905
    %v956 = vpack.c.bf16 %v908, %v907
    %v957 = vpack.c.bf16 %v910, %v909
    %v958 = vpack.c.bf16 %v912, %v911
    %v959 = vpack.c.bf16 %v914, %v913
    %v960 = vpack.c.bf16 %v916, %v915
    %v961 = vpack.c.bf16 %v918, %v917
    %v962 = vpack.c.bf16 %v920, %v919
    %v963 = vpack.c.bf16 %v922, %v921
    %v964 = vpack.c.bf16 %v924, %v923
    %v965 = vpack.c.bf16 %v926, %v925
    %v966 = vpack.c.bf16 %v928, %v927
    %v967 = vpack.c.bf16 %v930, %v929
    %v968 = vpack.c.bf16 %v932, %v931
    %v969 = vpack.c.bf16 %v934, %v933
    %v970 = vpack.c.bf16 %v936, %v935
    %v971 = vpack.c.bf16 %v938, %v937
    %v972 = vpack.c.bf16 %v940, %v939
    %1005 = vrot.lane.b32.xlu0 %v941, 32
    %v1006 = vpop.permute.xlu0 %1005
    %1007 = vrot.lane.b32.xlu0 %v942, 32
    %v1008 = vpop.permute.xlu0 %1007
    %1009 = vrot.lane.b32.xlu0 %v943, 32
    %v1010 = vpop.permute.xlu0 %1009
    %1011 = vrot.lane.b32.xlu0 %v944, 32
    %v1012 = vpop.permute.xlu0 %1011
    %1013 = vrot.lane.b32.xlu0 %v945, 32
    %v1014 = vpop.permute.xlu0 %1013
    %1015 = vrot.lane.b32.xlu0 %v946, 32
    %v1016 = vpop.permute.xlu0 %1015
    %1017 = vrot.lane.b32.xlu0 %v947, 32
    %v1018 = vpop.permute.xlu0 %1017
    %1019 = vrot.lane.b32.xlu0 %v948, 32
    %v1020 = vpop.permute.xlu0 %1019
    %1021 = vrot.lane.b32.xlu0 %v949, 32
    %v1022 = vpop.permute.xlu0 %1021
    %1023 = vrot.lane.b32.xlu0 %v950, 32
    %v1024 = vpop.permute.xlu0 %1023
    %1025 = vrot.lane.b32.xlu0 %v951, 32
    %v1026 = vpop.permute.xlu0 %1025
    %1027 = vrot.lane.b32.xlu0 %v952, 32
    %v1028 = vpop.permute.xlu0 %1027
    %1029 = vrot.lane.b32.xlu0 %v953, 32
    %v1030 = vpop.permute.xlu0 %1029
    %1031 = vrot.lane.b32.xlu0 %v954, 32
    %v1032 = vpop.permute.xlu0 %1031
    %1033 = vrot.lane.b32.xlu0 %v955, 32
    %v1034 = vpop.permute.xlu0 %1033
    %1035 = vrot.lane.b32.xlu0 %v956, 32
    %v1036 = vpop.permute.xlu0 %1035
    %1037 = vrot.lane.b32.xlu0 %v957, 32
    %v1038 = vpop.permute.xlu0 %1037
    %1039 = vrot.lane.b32.xlu0 %v958, 32
    %v1040 = vpop.permute.xlu0 %1039
    %1041 = vrot.lane.b32.xlu0 %v959, 32
    %v1042 = vpop.permute.xlu0 %1041
    %1043 = vrot.lane.b32.xlu0 %v960, 32
    %v1044 = vpop.permute.xlu0 %1043
    %1045 = vrot.lane.b32.xlu0 %v961, 32
    %v1046 = vpop.permute.xlu0 %1045
    %1047 = vrot.lane.b32.xlu0 %v962, 32
    %v1048 = vpop.permute.xlu0 %1047
    %1049 = vrot.lane.b32.xlu0 %v963, 32
    %v1050 = vpop.permute.xlu0 %1049
    %1051 = vrot.lane.b32.xlu0 %v964, 32
    %v1052 = vpop.permute.xlu0 %1051
    %1053 = vrot.lane.b32.xlu0 %v965, 32
    %v1054 = vpop.permute.xlu0 %1053
    %1055 = vrot.lane.b32.xlu0 %v966, 32
    %v1056 = vpop.permute.xlu0 %1055
    %1057 = vrot.lane.b32.xlu0 %v967, 32
    %v1058 = vpop.permute.xlu0 %1057
    %1059 = vrot.lane.b32.xlu0 %v968, 32
    %v1060 = vpop.permute.xlu0 %1059
    %1061 = vrot.lane.b32.xlu0 %v969, 32
    %v1062 = vpop.permute.xlu0 %1061
    %1063 = vrot.lane.b32.xlu0 %v970, 32
    %v1064 = vpop.permute.xlu0 %1063
    %1065 = vrot.lane.b32.xlu0 %v971, 32
    %v1066 = vpop.permute.xlu0 %1065
    %1067 = vrot.lane.b32.xlu0 %v972, 32
    %v1068 = vpop.permute.xlu0 %1067
    %vm1101 = vcmask 392448
    %1102 = vst.msk [vmem:[#allocation3] sm:$0xff] %vm1101, %v1006
    %1103 = vst.msk [vmem:[#allocation3 + $0x10] sm:$0xff] %vm1101, %v1008
    %1104 = vst.msk [vmem:[#allocation3 + $0x20] sm:$0xff] %vm1101, %v1010
    %1105 = vst.msk [vmem:[#allocation3 + $0x30] sm:$0xff] %vm1101, %v1012
    %1106 = vst.msk [vmem:[#allocation3 + $0x40] sm:$0xff] %vm1101, %v1014
    %1107 = vst.msk [vmem:[#allocation3 + $0x50] sm:$0xff] %vm1101, %v1016
    %1108 = vst.msk [vmem:[#allocation3 + $0x60] sm:$0xff] %vm1101, %v1018
    %1109 = vst.msk [vmem:[#allocation3 + $0x70] sm:$0xff] %vm1101, %v1020
    %1110 = vst.msk [vmem:[#allocation3 + $0x80] sm:$0xff] %vm1101, %v1022
    %1111 = vst.msk [vmem:[#allocation3 + $0x90] sm:$0xff] %vm1101, %v1024
    %1112 = vst.msk [vmem:[#allocation3 + $0xa0] sm:$0xff] %vm1101, %v1026
    %1113 = vst.msk [vmem:[#allocation3 + $0xb0] sm:$0xff] %vm1101, %v1028
    %1114 = vst.msk [vmem:[#allocation3 + $0xc0] sm:$0xff] %vm1101, %v1030
    %1115 = vst.msk [vmem:[#allocation3 + $0xd0] sm:$0xff] %vm1101, %v1032
    %1116 = vst.msk [vmem:[#allocation3 + $0xe0] sm:$0xff] %vm1101, %v1034
    %1117 = vst.msk [vmem:[#allocation3 + $0xf0] sm:$0xff] %vm1101, %v1036
    %1118 = vst.msk [vmem:[#allocation3 + $0x100] sm:$0xff] %vm1101, %v1038
    %1119 = vst.msk [vmem:[#allocation3 + $0x110] sm:$0xff] %vm1101, %v1040
    %1120 = vst.msk [vmem:[#allocation3 + $0x120] sm:$0xff] %vm1101, %v1042
    %1121 = vst.msk [vmem:[#allocation3 + $0x130] sm:$0xff] %vm1101, %v1044
    %1122 = vst.msk [vmem:[#allocation3 + $0x140] sm:$0xff] %vm1101, %v1046
    %1123 = vst.msk [vmem:[#allocation3 + $0x150] sm:$0xff] %vm1101, %v1048
    %1124 = vst.msk [vmem:[#allocation3 + $0x160] sm:$0xff] %vm1101, %v1050
    %1125 = vst.msk [vmem:[#allocation3 + $0x170] sm:$0xff] %vm1101, %v1052
    %1126 = vst.msk [vmem:[#allocation3 + $0x180] sm:$0xff] %vm1101, %v1054
    %1127 = vst.msk [vmem:[#allocation3 + $0x190] sm:$0xff] %vm1101, %v1056
    %1128 = vst.msk [vmem:[#allocation3 + $0x1a0] sm:$0xff] %vm1101, %v1058
    %1129 = vst.msk [vmem:[#allocation3 + $0x1b0] sm:$0xff] %vm1101, %v1060
    %1130 = vst.msk [vmem:[#allocation3 + $0x1c0] sm:$0xff] %vm1101, %v1062
    %1131 = vst.msk [vmem:[#allocation3 + $0x1d0] sm:$0xff] %vm1101, %v1064
    %1132 = vst.msk [vmem:[#allocation3 + $0x1e0] sm:$0xff] %vm1101, %v1066
    %1133 = vst.msk [vmem:[#allocation3 + $0x1f0] sm:$0xff] %vm1101, %v1068
    %v1134 = vld [vmem:[%s427] sm:$0xff]
    %v1135 = vld [vmem:[%s427 + $0x8] sm:$0xff]
    %v1136 = vld [vmem:[%s427 + $0x18] sm:$0xff]
    %v1137 = vld [vmem:[%s427 + $0x20] sm:$0xff]
    %v1138 = vld [vmem:[%s427 + $0x30] sm:$0xff]
    %v1139 = vld [vmem:[%s427 + $0x38] sm:$0xff]
    %v1140 = vld [vmem:[%s427 + $0x48] sm:$0xff]
    %v1141 = vld [vmem:[%s427 + $0x50] sm:$0xff]
    %v1142 = vld [vmem:[%s427 + $0x60] sm:$0xff]
    %v1143 = vld [vmem:[%s427 + $0x68] sm:$0xff]
    %v1144 = vld [vmem:[%s427 + $0x78] sm:$0xff]
    %v1145 = vld [vmem:[%s427 + $0x80] sm:$0xff]
    %v1146 = vld [vmem:[%s427 + $0x90] sm:$0xff]
    %v1147 = vld [vmem:[%s427 + $0x98] sm:$0xff]
    %v1148 = vld [vmem:[%s427 + $0xa8] sm:$0xff]
    %v1149 = vld [vmem:[%s427 + $0xb0] sm:$0xff]
    %v1150 = vld [vmem:[%s427 + $0xc0] sm:$0xff]
    %v1151 = vld [vmem:[%s427 + $0xc8] sm:$0xff]
    %v1152 = vld [vmem:[%s427 + $0xd8] sm:$0xff]
    %v1153 = vld [vmem:[%s427 + $0xe0] sm:$0xff]
    %v1154 = vld [vmem:[%s427 + $0xf0] sm:$0xff]
    %v1155 = vld [vmem:[%s427 + $0xf8] sm:$0xff]
    %v1156 = vld [vmem:[%s427 + $0x108] sm:$0xff]
    %v1157 = vld [vmem:[%s427 + $0x110] sm:$0xff]
    %v1158 = vld [vmem:[%s427 + $0x120] sm:$0xff]
    %v1159 = vld [vmem:[%s427 + $0x128] sm:$0xff]
    %v1160 = vld [vmem:[%s427 + $0x138] sm:$0xff]
    %v1161 = vld [vmem:[%s427 + $0x140] sm:$0xff]
    %v1162 = vld [vmem:[%s427 + $0x150] sm:$0xff]
    %v1163 = vld [vmem:[%s427 + $0x158] sm:$0xff]
    %v1164 = vld [vmem:[%s427 + $0x168] sm:$0xff]
    %v1165 = vld [vmem:[%s427 + $0x170] sm:$0xff]
    %v1166 = vld [vmem:[%s427 + $0x1b0] sm:$0xff]
    %v1167 = vld [vmem:[%s427 + $0x1b8] sm:$0xff]
    %v1168 = vld [vmem:[%s427 + $0x1c8] sm:$0xff]
    %v1169 = vld [vmem:[%s427 + $0x1d0] sm:$0xff]
    %v1170 = vld [vmem:[%s427 + $0x1e0] sm:$0xff]
    %v1171 = vld [vmem:[%s427 + $0x1e8] sm:$0xff]
    %v1172 = vld [vmem:[%s427 + $0x1f8] sm:$0xff]
    %v1173 = vld [vmem:[%s427 + $0x200] sm:$0xff]
    %v1174 = vld [vmem:[%s427 + $0x210] sm:$0xff]
    %v1175 = vld [vmem:[%s427 + $0x218] sm:$0xff]
    %v1176 = vld [vmem:[%s427 + $0x228] sm:$0xff]
    %v1177 = vld [vmem:[%s427 + $0x230] sm:$0xff]
    %v1178 = vld [vmem:[%s427 + $0x240] sm:$0xff]
    %v1179 = vld [vmem:[%s427 + $0x248] sm:$0xff]
    %v1180 = vld [vmem:[%s427 + $0x258] sm:$0xff]
    %v1181 = vld [vmem:[%s427 + $0x260] sm:$0xff]
    %v1182 = vld [vmem:[%s427 + $0x270] sm:$0xff]
    %v1183 = vld [vmem:[%s427 + $0x278] sm:$0xff]
    %v1184 = vld [vmem:[%s427 + $0x288] sm:$0xff]
    %v1185 = vld [vmem:[%s427 + $0x290] sm:$0xff]
    %v1186 = vld [vmem:[%s427 + $0x2a0] sm:$0xff]
    %v1187 = vld [vmem:[%s427 + $0x2a8] sm:$0xff]
    %v1188 = vld [vmem:[%s427 + $0x2b8] sm:$0xff]
    %v1189 = vld [vmem:[%s427 + $0x2c0] sm:$0xff]
    %v1190 = vld [vmem:[%s427 + $0x2d0] sm:$0xff]
    %v1191 = vld [vmem:[%s427 + $0x2d8] sm:$0xff]
    %v1192 = vld [vmem:[%s427 + $0x2e8] sm:$0xff]
    %v1193 = vld [vmem:[%s427 + $0x2f0] sm:$0xff]
    %v1194 = vld [vmem:[%s427 + $0x300] sm:$0xff]
    %v1195 = vld [vmem:[%s427 + $0x308] sm:$0xff]
    %v1196 = vld [vmem:[%s427 + $0x318] sm:$0xff]
    %v1197 = vld [vmem:[%s427 + $0x320] sm:$0xff]
    %v1198 = vpack.c.bf16 %v1135, %v1134
    %v1199 = vpack.c.bf16 %v1137, %v1136
    %v1200 = vpack.c.bf16 %v1139, %v1138
    %v1201 = vpack.c.bf16 %v1141, %v1140
    %v1202 = vpack.c.bf16 %v1143, %v1142
    %v1203 = vpack.c.bf16 %v1145, %v1144
    %v1204 = vpack.c.bf16 %v1147, %v1146
    %v1205 = vpack.c.bf16 %v1149, %v1148
    %v1206 = vpack.c.bf16 %v1151, %v1150
    %v1207 = vpack.c.bf16 %v1153, %v1152
    %v1208 = vpack.c.bf16 %v1155, %v1154
    %v1209 = vpack.c.bf16 %v1157, %v1156
    %v1210 = vpack.c.bf16 %v1159, %v1158
    %v1211 = vpack.c.bf16 %v1161, %v1160
    %v1212 = vpack.c.bf16 %v1163, %v1162
    %v1213 = vpack.c.bf16 %v1165, %v1164
    %v1214 = vpack.c.bf16 %v1167, %v1166
    %v1215 = vpack.c.bf16 %v1169, %v1168
    %v1216 = vpack.c.bf16 %v1171, %v1170
    %v1217 = vpack.c.bf16 %v1173, %v1172
    %v1218 = vpack.c.bf16 %v1175, %v1174
    %v1219 = vpack.c.bf16 %v1177, %v1176
    %v1220 = vpack.c.bf16 %v1179, %v1178
    %v1221 = vpack.c.bf16 %v1181, %v1180
    %v1222 = vpack.c.bf16 %v1183, %v1182
    %v1223 = vpack.c.bf16 %v1185, %v1184
    %v1224 = vpack.c.bf16 %v1187, %v1186
    %v1225 = vpack.c.bf16 %v1189, %v1188
    %v1226 = vpack.c.bf16 %v1191, %v1190
    %v1227 = vpack.c.bf16 %v1193, %v1192
    %v1228 = vpack.c.bf16 %v1195, %v1194
    %v1229 = vpack.c.bf16 %v1197, %v1196
    %1262 = vrot.lane.b32.xlu0 %v1198, 48
    %v1263 = vpop.permute.xlu0 %1262
    %1264 = vrot.lane.b32.xlu0 %v1199, 48
    %v1265 = vpop.permute.xlu0 %1264
    %1266 = vrot.lane.b32.xlu0 %v1200, 48
    %v1267 = vpop.permute.xlu0 %1266
    %1268 = vrot.lane.b32.xlu0 %v1201, 48
    %v1269 = vpop.permute.xlu0 %1268
    %1270 = vrot.lane.b32.xlu0 %v1202, 48
    %v1271 = vpop.permute.xlu0 %1270
    %1272 = vrot.lane.b32.xlu0 %v1203, 48
    %v1273 = vpop.permute.xlu0 %1272
    %1274 = vrot.lane.b32.xlu0 %v1204, 48
    %v1275 = vpop.permute.xlu0 %1274
    %1276 = vrot.lane.b32.xlu0 %v1205, 48
    %v1277 = vpop.permute.xlu0 %1276
    %1278 = vrot.lane.b32.xlu0 %v1206, 48
    %v1279 = vpop.permute.xlu0 %1278
    %1280 = vrot.lane.b32.xlu0 %v1207, 48
    %v1281 = vpop.permute.xlu0 %1280
    %1282 = vrot.lane.b32.xlu0 %v1208, 48
    %v1283 = vpop.permute.xlu0 %1282
    %1284 = vrot.lane.b32.xlu0 %v1209, 48
    %v1285 = vpop.permute.xlu0 %1284
    %1286 = vrot.lane.b32.xlu0 %v1210, 48
    %v1287 = vpop.permute.xlu0 %1286
    %1288 = vrot.lane.b32.xlu0 %v1211, 48
    %v1289 = vpop.permute.xlu0 %1288
    %1290 = vrot.lane.b32.xlu0 %v1212, 48
    %v1291 = vpop.permute.xlu0 %1290
    %1292 = vrot.lane.b32.xlu0 %v1213, 48
    %v1293 = vpop.permute.xlu0 %1292
    %1294 = vrot.lane.b32.xlu0 %v1214, 48
    %v1295 = vpop.permute.xlu0 %1294
    %1296 = vrot.lane.b32.xlu0 %v1215, 48
    %v1297 = vpop.permute.xlu0 %1296
    %1298 = vrot.lane.b32.xlu0 %v1216, 48
    %v1299 = vpop.permute.xlu0 %1298
    %1300 = vrot.lane.b32.xlu0 %v1217, 48
    %v1301 = vpop.permute.xlu0 %1300
    %1302 = vrot.lane.b32.xlu0 %v1218, 48
    %v1303 = vpop.permute.xlu0 %1302
    %1304 = vrot.lane.b32.xlu0 %v1219, 48
    %v1305 = vpop.permute.xlu0 %1304
    %1306 = vrot.lane.b32.xlu0 %v1220, 48
    %v1307 = vpop.permute.xlu0 %1306
    %1308 = vrot.lane.b32.xlu0 %v1221, 48
    %v1309 = vpop.permute.xlu0 %1308
    %1310 = vrot.lane.b32.xlu0 %v1222, 48
    %v1311 = vpop.permute.xlu0 %1310
    %1312 = vrot.lane.b32.xlu0 %v1223, 48
    %v1313 = vpop.permute.xlu0 %1312
    %1314 = vrot.lane.b32.xlu0 %v1224, 48
    %v1315 = vpop.permute.xlu0 %1314
    %1316 = vrot.lane.b32.xlu0 %v1225, 48
    %v1317 = vpop.permute.xlu0 %1316
    %1318 = vrot.lane.b32.xlu0 %v1226, 48
    %v1319 = vpop.permute.xlu0 %1318
    %1320 = vrot.lane.b32.xlu0 %v1227, 48
    %v1321 = vpop.permute.xlu0 %1320
    %1322 = vrot.lane.b32.xlu0 %v1228, 48
    %v1323 = vpop.permute.xlu0 %1322
    %1324 = vrot.lane.b32.xlu0 %v1229, 48
    %v1325 = vpop.permute.xlu0 %1324
    %vm1358 = vcmask 523648
    %1359 = vst.msk [vmem:[#allocation3] sm:$0xff] %vm1358, %v1263
    %1360 = vst.msk [vmem:[#allocation3 + $0x10] sm:$0xff] %vm1358, %v1265
    %1361 = vst.msk [vmem:[#allocation3 + $0x20] sm:$0xff] %vm1358, %v1267
    %1362 = vst.msk [vmem:[#allocation3 + $0x30] sm:$0xff] %vm1358, %v1269
    %1363 = vst.msk [vmem:[#allocation3 + $0x40] sm:$0xff] %vm1358, %v1271
    %1364 = vst.msk [vmem:[#allocation3 + $0x50] sm:$0xff] %vm1358, %v1273
    %1365 = vst.msk [vmem:[#allocation3 + $0x60] sm:$0xff] %vm1358, %v1275
    %1366 = vst.msk [vmem:[#allocation3 + $0x70] sm:$0xff] %vm1358, %v1277
    %1367 = vst.msk [vmem:[#allocation3 + $0x80] sm:$0xff] %vm1358, %v1279
    %1368 = vst.msk [vmem:[#allocation3 + $0x90] sm:$0xff] %vm1358, %v1281
    %1369 = vst.msk [vmem:[#allocation3 + $0xa0] sm:$0xff] %vm1358, %v1283
    %1370 = vst.msk [vmem:[#allocation3 + $0xb0] sm:$0xff] %vm1358, %v1285
    %1371 = vst.msk [vmem:[#allocation3 + $0xc0] sm:$0xff] %vm1358, %v1287
    %1372 = vst.msk [vmem:[#allocation3 + $0xd0] sm:$0xff] %vm1358, %v1289
    %1373 = vst.msk [vmem:[#allocation3 + $0xe0] sm:$0xff] %vm1358, %v1291
    %1374 = vst.msk [vmem:[#allocation3 + $0xf0] sm:$0xff] %vm1358, %v1293
    %1375 = vst.msk [vmem:[#allocation3 + $0x100] sm:$0xff] %vm1358, %v1295
    %1376 = vst.msk [vmem:[#allocation3 + $0x110] sm:$0xff] %vm1358, %v1297
    %1377 = vst.msk [vmem:[#allocation3 + $0x120] sm:$0xff] %vm1358, %v1299
    %1378 = vst.msk [vmem:[#allocation3 + $0x130] sm:$0xff] %vm1358, %v1301
    %1379 = vst.msk [vmem:[#allocation3 + $0x140] sm:$0xff] %vm1358, %v1303
    %1380 = vst.msk [vmem:[#allocation3 + $0x150] sm:$0xff] %vm1358, %v1305
    %1381 = vst.msk [vmem:[#allocation3 + $0x160] sm:$0xff] %vm1358, %v1307
    %1382 = vst.msk [vmem:[#allocation3 + $0x170] sm:$0xff] %vm1358, %v1309
    %1383 = vst.msk [vmem:[#allocation3 + $0x180] sm:$0xff] %vm1358, %v1311
    %1384 = vst.msk [vmem:[#allocation3 + $0x190] sm:$0xff] %vm1358, %v1313
    %1385 = vst.msk [vmem:[#allocation3 + $0x1a0] sm:$0xff] %vm1358, %v1315
    %1386 = vst.msk [vmem:[#allocation3 + $0x1b0] sm:$0xff] %vm1358, %v1317
    %1387 = vst.msk [vmem:[#allocation3 + $0x1c0] sm:$0xff] %vm1358, %v1319
    %1388 = vst.msk [vmem:[#allocation3 + $0x1d0] sm:$0xff] %vm1358, %v1321
    %1389 = vst.msk [vmem:[#allocation3 + $0x1e0] sm:$0xff] %vm1358, %v1323
    %1390 = vst.msk [vmem:[#allocation3 + $0x1f0] sm:$0xff] %vm1358, %v1325
    %v1391 = vld [vmem:[%s427 + $0x1] sm:$0xff]
    %v1392 = vld [vmem:[%s427 + $0x9] sm:$0xff]
    %v1393 = vld [vmem:[%s427 + $0x19] sm:$0xff]
    %v1394 = vld [vmem:[%s427 + $0x21] sm:$0xff]
    %v1395 = vld [vmem:[%s427 + $0x31] sm:$0xff]
    %v1396 = vld [vmem:[%s427 + $0x39] sm:$0xff]
    %v1397 = vld [vmem:[%s427 + $0x49] sm:$0xff]
    %v1398 = vld [vmem:[%s427 + $0x51] sm:$0xff]
    %v1399 = vld [vmem:[%s427 + $0x61] sm:$0xff]
    %v1400 = vld [vmem:[%s427 + $0x69] sm:$0xff]
    %v1401 = vld [vmem:[%s427 + $0x79] sm:$0xff]
    %v1402 = vld [vmem:[%s427 + $0x81] sm:$0xff]
    %v1403 = vld [vmem:[%s427 + $0x91] sm:$0xff]
    %v1404 = vld [vmem:[%s427 + $0x99] sm:$0xff]
    %v1405 = vld [vmem:[%s427 + $0xa9] sm:$0xff]
    %v1406 = vld [vmem:[%s427 + $0xb1] sm:$0xff]
    %v1407 = vld [vmem:[%s427 + $0xc1] sm:$0xff]
    %v1408 = vld [vmem:[%s427 + $0xc9] sm:$0xff]
    %v1409 = vld [vmem:[%s427 + $0xd9] sm:$0xff]
    %v1410 = vld [vmem:[%s427 + $0xe1] sm:$0xff]
    %v1411 = vld [vmem:[%s427 + $0xf1] sm:$0xff]
    %v1412 = vld [vmem:[%s427 + $0xf9] sm:$0xff]
    %v1413 = vld [vmem:[%s427 + $0x109] sm:$0xff]
    %v1414 = vld [vmem:[%s427 + $0x111] sm:$0xff]
    %v1415 = vld [vmem:[%s427 + $0x121] sm:$0xff]
    %v1416 = vld [vmem:[%s427 + $0x129] sm:$0xff]
    %v1417 = vld [vmem:[%s427 + $0x139] sm:$0xff]
    %v1418 = vld [vmem:[%s427 + $0x141] sm:$0xff]
    %v1419 = vld [vmem:[%s427 + $0x151] sm:$0xff]
    %v1420 = vld [vmem:[%s427 + $0x159] sm:$0xff]
    %v1421 = vld [vmem:[%s427 + $0x169] sm:$0xff]
    %v1422 = vld [vmem:[%s427 + $0x171] sm:$0xff]
    %v1423 = vld [vmem:[%s427 + $0x1b1] sm:$0xff]
    %v1424 = vld [vmem:[%s427 + $0x1b9] sm:$0xff]
    %v1425 = vld [vmem:[%s427 + $0x1c9] sm:$0xff]
    %v1426 = vld [vmem:[%s427 + $0x1d1] sm:$0xff]
    %v1427 = vld [vmem:[%s427 + $0x1e1] sm:$0xff]
    %v1428 = vld [vmem:[%s427 + $0x1e9] sm:$0xff]
    %v1429 = vld [vmem:[%s427 + $0x1f9] sm:$0xff]
    %v1430 = vld [vmem:[%s427 + $0x201] sm:$0xff]
    %v1431 = vld [vmem:[%s427 + $0x211] sm:$0xff]
    %v1432 = vld [vmem:[%s427 + $0x219] sm:$0xff]
    %v1433 = vld [vmem:[%s427 + $0x229] sm:$0xff]
    %v1434 = vld [vmem:[%s427 + $0x231] sm:$0xff]
    %v1435 = vld [vmem:[%s427 + $0x241] sm:$0xff]
    %v1436 = vld [vmem:[%s427 + $0x249] sm:$0xff]
    %v1437 = vld [vmem:[%s427 + $0x259] sm:$0xff]
    %v1438 = vld [vmem:[%s427 + $0x261] sm:$0xff]
    %v1439 = vld [vmem:[%s427 + $0x271] sm:$0xff]
    %v1440 = vld [vmem:[%s427 + $0x279] sm:$0xff]
    %v1441 = vld [vmem:[%s427 + $0x289] sm:$0xff]
    %v1442 = vld [vmem:[%s427 + $0x291] sm:$0xff]
    %v1443 = vld [vmem:[%s427 + $0x2a1] sm:$0xff]
    %v1444 = vld [vmem:[%s427 + $0x2a9] sm:$0xff]
    %v1445 = vld [vmem:[%s427 + $0x2b9] sm:$0xff]
    %v1446 = vld [vmem:[%s427 + $0x2c1] sm:$0xff]
    %v1447 = vld [vmem:[%s427 + $0x2d1] sm:$0xff]
    %v1448 = vld [vmem:[%s427 + $0x2d9] sm:$0xff]
    %v1449 = vld [vmem:[%s427 + $0x2e9] sm:$0xff]
    %v1450 = vld [vmem:[%s427 + $0x2f1] sm:$0xff]
    %v1451 = vld [vmem:[%s427 + $0x301] sm:$0xff]
    %v1452 = vld [vmem:[%s427 + $0x309] sm:$0xff]
    %v1453 = vld [vmem:[%s427 + $0x319] sm:$0xff]
    %v1454 = vld [vmem:[%s427 + $0x321] sm:$0xff]
    %v1455 = vpack.c.bf16 %v1392, %v1391
    %v1456 = vpack.c.bf16 %v1394, %v1393
    %v1457 = vpack.c.bf16 %v1396, %v1395
    %v1458 = vpack.c.bf16 %v1398, %v1397
    %v1459 = vpack.c.bf16 %v1400, %v1399
    %v1460 = vpack.c.bf16 %v1402, %v1401
    %v1461 = vpack.c.bf16 %v1404, %v1403
    %v1462 = vpack.c.bf16 %v1406, %v1405
    %v1463 = vpack.c.bf16 %v1408, %v1407
    %v1464 = vpack.c.bf16 %v1410, %v1409
    %v1465 = vpack.c.bf16 %v1412, %v1411
    %v1466 = vpack.c.bf16 %v1414, %v1413
    %v1467 = vpack.c.bf16 %v1416, %v1415
    %v1468 = vpack.c.bf16 %v1418, %v1417
    %v1469 = vpack.c.bf16 %v1420, %v1419
    %v1470 = vpack.c.bf16 %v1422, %v1421
    %v1471 = vpack.c.bf16 %v1424, %v1423
    %v1472 = vpack.c.bf16 %v1426, %v1425
    %v1473 = vpack.c.bf16 %v1428, %v1427
    %v1474 = vpack.c.bf16 %v1430, %v1429
    %v1475 = vpack.c.bf16 %v1432, %v1431
    %v1476 = vpack.c.bf16 %v1434, %v1433
    %v1477 = vpack.c.bf16 %v1436, %v1435
    %v1478 = vpack.c.bf16 %v1438, %v1437
    %v1479 = vpack.c.bf16 %v1440, %v1439
    %v1480 = vpack.c.bf16 %v1442, %v1441
    %v1481 = vpack.c.bf16 %v1444, %v1443
    %v1482 = vpack.c.bf16 %v1446, %v1445
    %v1483 = vpack.c.bf16 %v1448, %v1447
    %v1484 = vpack.c.bf16 %v1450, %v1449
    %v1485 = vpack.c.bf16 %v1452, %v1451
    %v1486 = vpack.c.bf16 %v1454, %v1453
    %1519 = vrot.lane.b32.xlu0 %v1455, 64
    %v1520 = vpop.permute.xlu0 %1519
    %1521 = vrot.lane.b32.xlu0 %v1456, 64
    %v1522 = vpop.permute.xlu0 %1521
    %1523 = vrot.lane.b32.xlu0 %v1457, 64
    %v1524 = vpop.permute.xlu0 %1523
    %1525 = vrot.lane.b32.xlu0 %v1458, 64
    %v1526 = vpop.permute.xlu0 %1525
    %1527 = vrot.lane.b32.xlu0 %v1459, 64
    %v1528 = vpop.permute.xlu0 %1527
    %1529 = vrot.lane.b32.xlu0 %v1460, 64
    %v1530 = vpop.permute.xlu0 %1529
    %1531 = vrot.lane.b32.xlu0 %v1461, 64
    %v1532 = vpop.permute.xlu0 %1531
    %1533 = vrot.lane.b32.xlu0 %v1462, 64
    %v1534 = vpop.permute.xlu0 %1533
    %1535 = vrot.lane.b32.xlu0 %v1463, 64
    %v1536 = vpop.permute.xlu0 %1535
    %1537 = vrot.lane.b32.xlu0 %v1464, 64
    %v1538 = vpop.permute.xlu0 %1537
    %1539 = vrot.lane.b32.xlu0 %v1465, 64
    %v1540 = vpop.permute.xlu0 %1539
    %1541 = vrot.lane.b32.xlu0 %v1466, 64
    %v1542 = vpop.permute.xlu0 %1541
    %1543 = vrot.lane.b32.xlu0 %v1467, 64
    %v1544 = vpop.permute.xlu0 %1543
    %1545 = vrot.lane.b32.xlu0 %v1468, 64
    %v1546 = vpop.permute.xlu0 %1545
    %1547 = vrot.lane.b32.xlu0 %v1469, 64
    %v1548 = vpop.permute.xlu0 %1547
    %1549 = vrot.lane.b32.xlu0 %v1470, 64
    %v1550 = vpop.permute.xlu0 %1549
    %1551 = vrot.lane.b32.xlu0 %v1471, 64
    %v1552 = vpop.permute.xlu0 %1551
    %1553 = vrot.lane.b32.xlu0 %v1472, 64
    %v1554 = vpop.permute.xlu0 %1553
    %1555 = vrot.lane.b32.xlu0 %v1473, 64
    %v1556 = vpop.permute.xlu0 %1555
    %1557 = vrot.lane.b32.xlu0 %v1474, 64
    %v1558 = vpop.permute.xlu0 %1557
    %1559 = vrot.lane.b32.xlu0 %v1475, 64
    %v1560 = vpop.permute.xlu0 %1559
    %1561 = vrot.lane.b32.xlu0 %v1476, 64
    %v1562 = vpop.permute.xlu0 %1561
    %1563 = vrot.lane.b32.xlu0 %v1477, 64
    %v1564 = vpop.permute.xlu0 %1563
    %1565 = vrot.lane.b32.xlu0 %v1478, 64
    %v1566 = vpop.permute.xlu0 %1565
    %1567 = vrot.lane.b32.xlu0 %v1479, 64
    %v1568 = vpop.permute.xlu0 %1567
    %1569 = vrot.lane.b32.xlu0 %v1480, 64
    %v1570 = vpop.permute.xlu0 %1569
    %1571 = vrot.lane.b32.xlu0 %v1481, 64
    %v1572 = vpop.permute.xlu0 %1571
    %1573 = vrot.lane.b32.xlu0 %v1482, 64
    %v1574 = vpop.permute.xlu0 %1573
    %1575 = vrot.lane.b32.xlu0 %v1483, 64
    %v1576 = vpop.permute.xlu0 %1575
    %1577 = vrot.lane.b32.xlu0 %v1484, 64
    %v1578 = vpop.permute.xlu0 %1577
    %1579 = vrot.lane.b32.xlu0 %v1485, 64
    %v1580 = vpop.permute.xlu0 %1579
    %1581 = vrot.lane.b32.xlu0 %v1486, 64
    %v1582 = vpop.permute.xlu0 %1581
    %vm1615 = vcmask 654848
    %1616 = vst.msk [vmem:[#allocation3] sm:$0xff] %vm1615, %v1520
    %1617 = vst.msk [vmem:[#allocation3 + $0x10] sm:$0xff] %vm1615, %v1522
    %1618 = vst.msk [vmem:[#allocation3 + $0x20] sm:$0xff] %vm1615, %v1524
    %1619 = vst.msk [vmem:[#allocation3 + $0x30] sm:$0xff] %vm1615, %v1526
    %1620 = vst.msk [vmem:[#allocation3 + $0x40] sm:$0xff] %vm1615, %v1528
    %1621 = vst.msk [vmem:[#allocation3 + $0x50] sm:$0xff] %vm1615, %v1530
    %1622 = vst.msk [vmem:[#allocation3 + $0x60] sm:$0xff] %vm1615, %v1532
    %1623 = vst.msk [vmem:[#allocation3 + $0x70] sm:$0xff] %vm1615, %v1534
    %1624 = vst.msk [vmem:[#allocation3 + $0x80] sm:$0xff] %vm1615, %v1536
    %1625 = vst.msk [vmem:[#allocation3 + $0x90] sm:$0xff] %vm1615, %v1538
    %1626 = vst.msk [vmem:[#allocation3 + $0xa0] sm:$0xff] %vm1615, %v1540
    %1627 = vst.msk [vmem:[#allocation3 + $0xb0] sm:$0xff] %vm1615, %v1542
    %1628 = vst.msk [vmem:[#allocation3 + $0xc0] sm:$0xff] %vm1615, %v1544
    %1629 = vst.msk [vmem:[#allocation3 + $0xd0] sm:$0xff] %vm1615, %v1546
    %1630 = vst.msk [vmem:[#allocation3 + $0xe0] sm:$0xff] %vm1615, %v1548
    %1631 = vst.msk [vmem:[#allocation3 + $0xf0] sm:$0xff] %vm1615, %v1550
    %1632 = vst.msk [vmem:[#allocation3 + $0x100] sm:$0xff] %vm1615, %v1552
    %1633 = vst.msk [vmem:[#allocation3 + $0x110] sm:$0xff] %vm1615, %v1554
    %1634 = vst.msk [vmem:[#allocation3 + $0x120] sm:$0xff] %vm1615, %v1556
    %1635 = vst.msk [vmem:[#allocation3 + $0x130] sm:$0xff] %vm1615, %v1558
    %1636 = vst.msk [vmem:[#allocation3 + $0x140] sm:$0xff] %vm1615, %v1560
    %1637 = vst.msk [vmem:[#allocation3 + $0x150] sm:$0xff] %vm1615, %v1562
    %1638 = vst.msk [vmem:[#allocation3 + $0x160] sm:$0xff] %vm1615, %v1564
    %1639 = vst.msk [vmem:[#allocation3 + $0x170] sm:$0xff] %vm1615, %v1566
    %1640 = vst.msk [vmem:[#allocation3 + $0x180] sm:$0xff] %vm1615, %v1568
    %1641 = vst.msk [vmem:[#allocation3 + $0x190] sm:$0xff] %vm1615, %v1570
    %1642 = vst.msk [vmem:[#allocation3 + $0x1a0] sm:$0xff] %vm1615, %v1572
    %1643 = vst.msk [vmem:[#allocation3 + $0x1b0] sm:$0xff] %vm1615, %v1574
    %1644 = vst.msk [vmem:[#allocation3 + $0x1c0] sm:$0xff] %vm1615, %v1576
    %1645 = vst.msk [vmem:[#allocation3 + $0x1d0] sm:$0xff] %vm1615, %v1578
    %1646 = vst.msk [vmem:[#allocation3 + $0x1e0] sm:$0xff] %vm1615, %v1580
    %1647 = vst.msk [vmem:[#allocation3 + $0x1f0] sm:$0xff] %vm1615, %v1582
    %v1648 = vld [vmem:[%s427 + $0x2] sm:$0xff]
    %v1649 = vld [vmem:[%s427 + $0xa] sm:$0xff]
    %v1650 = vld [vmem:[%s427 + $0x1a] sm:$0xff]
    %v1651 = vld [vmem:[%s427 + $0x22] sm:$0xff]
    %v1652 = vld [vmem:[%s427 + $0x32] sm:$0xff]
    %v1653 = vld [vmem:[%s427 + $0x3a] sm:$0xff]
    %v1654 = vld [vmem:[%s427 + $0x4a] sm:$0xff]
    %v1655 = vld [vmem:[%s427 + $0x52] sm:$0xff]
    %v1656 = vld [vmem:[%s427 + $0x62] sm:$0xff]
    %v1657 = vld [vmem:[%s427 + $0x6a] sm:$0xff]
    %v1658 = vld [vmem:[%s427 + $0x7a] sm:$0xff]
    %v1659 = vld [vmem:[%s427 + $0x82] sm:$0xff]
    %v1660 = vld [vmem:[%s427 + $0x92] sm:$0xff]
    %v1661 = vld [vmem:[%s427 + $0x9a] sm:$0xff]
    %v1662 = vld [vmem:[%s427 + $0xaa] sm:$0xff]
    %v1663 = vld [vmem:[%s427 + $0xb2] sm:$0xff]
    %v1664 = vld [vmem:[%s427 + $0xc2] sm:$0xff]
    %v1665 = vld [vmem:[%s427 + $0xca] sm:$0xff]
    %v1666 = vld [vmem:[%s427 + $0xda] sm:$0xff]
    %v1667 = vld [vmem:[%s427 + $0xe2] sm:$0xff]
    %v1668 = vld [vmem:[%s427 + $0xf2] sm:$0xff]
    %v1669 = vld [vmem:[%s427 + $0xfa] sm:$0xff]
    %v1670 = vld [vmem:[%s427 + $0x10a] sm:$0xff]
    %v1671 = vld [vmem:[%s427 + $0x112] sm:$0xff]
    %v1672 = vld [vmem:[%s427 + $0x122] sm:$0xff]
    %v1673 = vld [vmem:[%s427 + $0x12a] sm:$0xff]
    %v1674 = vld [vmem:[%s427 + $0x13a] sm:$0xff]
    %v1675 = vld [vmem:[%s427 + $0x142] sm:$0xff]
    %v1676 = vld [vmem:[%s427 + $0x152] sm:$0xff]
    %v1677 = vld [vmem:[%s427 + $0x15a] sm:$0xff]
    %v1678 = vld [vmem:[%s427 + $0x16a] sm:$0xff]
    %v1679 = vld [vmem:[%s427 + $0x172] sm:$0xff]
    %v1680 = vld [vmem:[%s427 + $0x1b2] sm:$0xff]
    %v1681 = vld [vmem:[%s427 + $0x1ba] sm:$0xff]
    %v1682 = vld [vmem:[%s427 + $0x1ca] sm:$0xff]
    %v1683 = vld [vmem:[%s427 + $0x1d2] sm:$0xff]
    %v1684 = vld [vmem:[%s427 + $0x1e2] sm:$0xff]
    %v1685 = vld [vmem:[%s427 + $0x1ea] sm:$0xff]
    %v1686 = vld [vmem:[%s427 + $0x1fa] sm:$0xff]
    %v1687 = vld [vmem:[%s427 + $0x202] sm:$0xff]
    %v1688 = vld [vmem:[%s427 + $0x212] sm:$0xff]
    %v1689 = vld [vmem:[%s427 + $0x21a] sm:$0xff]
    %v1690 = vld [vmem:[%s427 + $0x22a] sm:$0xff]
    %v1691 = vld [vmem:[%s427 + $0x232] sm:$0xff]
    %v1692 = vld [vmem:[%s427 + $0x242] sm:$0xff]
    %v1693 = vld [vmem:[%s427 + $0x24a] sm:$0xff]
    %v1694 = vld [vmem:[%s427 + $0x25a] sm:$0xff]
    %v1695 = vld [vmem:[%s427 + $0x262] sm:$0xff]
    %v1696 = vld [vmem:[%s427 + $0x272] sm:$0xff]
    %v1697 = vld [vmem:[%s427 + $0x27a] sm:$0xff]
    %v1698 = vld [vmem:[%s427 + $0x28a] sm:$0xff]
    %v1699 = vld [vmem:[%s427 + $0x292] sm:$0xff]
    %v1700 = vld [vmem:[%s427 + $0x2a2] sm:$0xff]
    %v1701 = vld [vmem:[%s427 + $0x2aa] sm:$0xff]
    %v1702 = vld [vmem:[%s427 + $0x2ba] sm:$0xff]
    %v1703 = vld [vmem:[%s427 + $0x2c2] sm:$0xff]
    %v1704 = vld [vmem:[%s427 + $0x2d2] sm:$0xff]
    %v1705 = vld [vmem:[%s427 + $0x2da] sm:$0xff]
    %v1706 = vld [vmem:[%s427 + $0x2ea] sm:$0xff]
    %v1707 = vld [vmem:[%s427 + $0x2f2] sm:$0xff]
    %v1708 = vld [vmem:[%s427 + $0x302] sm:$0xff]
    %v1709 = vld [vmem:[%s427 + $0x30a] sm:$0xff]
    %v1710 = vld [vmem:[%s427 + $0x31a] sm:$0xff]
    %v1711 = vld [vmem:[%s427 + $0x322] sm:$0xff]
    %v1712 = vpack.c.bf16 %v1649, %v1648
    %v1713 = vpack.c.bf16 %v1651, %v1650
    %v1714 = vpack.c.bf16 %v1653, %v1652
    %v1715 = vpack.c.bf16 %v1655, %v1654
    %v1716 = vpack.c.bf16 %v1657, %v1656
    %v1717 = vpack.c.bf16 %v1659, %v1658
    %v1718 = vpack.c.bf16 %v1661, %v1660
    %v1719 = vpack.c.bf16 %v1663, %v1662
    %v1720 = vpack.c.bf16 %v1665, %v1664
    %v1721 = vpack.c.bf16 %v1667, %v1666
    %v1722 = vpack.c.bf16 %v1669, %v1668
    %v1723 = vpack.c.bf16 %v1671, %v1670
    %v1724 = vpack.c.bf16 %v1673, %v1672
    %v1725 = vpack.c.bf16 %v1675, %v1674
    %v1726 = vpack.c.bf16 %v1677, %v1676
    %v1727 = vpack.c.bf16 %v1679, %v1678
    %v1728 = vpack.c.bf16 %v1681, %v1680
    %v1729 = vpack.c.bf16 %v1683, %v1682
    %v1730 = vpack.c.bf16 %v1685, %v1684
    %v1731 = vpack.c.bf16 %v1687, %v1686
    %v1732 = vpack.c.bf16 %v1689, %v1688
    %v1733 = vpack.c.bf16 %v1691, %v1690
    %v1734 = vpack.c.bf16 %v1693, %v1692
    %v1735 = vpack.c.bf16 %v1695, %v1694
    %v1736 = vpack.c.bf16 %v1697, %v1696
    %v1737 = vpack.c.bf16 %v1699, %v1698
    %v1738 = vpack.c.bf16 %v1701, %v1700
    %v1739 = vpack.c.bf16 %v1703, %v1702
    %v1740 = vpack.c.bf16 %v1705, %v1704
    %v1741 = vpack.c.bf16 %v1707, %v1706
    %v1742 = vpack.c.bf16 %v1709, %v1708
    %v1743 = vpack.c.bf16 %v1711, %v1710
    %1776 = vrot.lane.b32.xlu0 %v1712, 80
    %v1777 = vpop.permute.xlu0 %1776
    %1778 = vrot.lane.b32.xlu0 %v1713, 80
    %v1779 = vpop.permute.xlu0 %1778
    %1780 = vrot.lane.b32.xlu0 %v1714, 80
    %v1781 = vpop.permute.xlu0 %1780
    %1782 = vrot.lane.b32.xlu0 %v1715, 80
    %v1783 = vpop.permute.xlu0 %1782
    %1784 = vrot.lane.b32.xlu0 %v1716, 80
    %v1785 = vpop.permute.xlu0 %1784
    %1786 = vrot.lane.b32.xlu0 %v1717, 80
    %v1787 = vpop.permute.xlu0 %1786
    %1788 = vrot.lane.b32.xlu0 %v1718, 80
    %v1789 = vpop.permute.xlu0 %1788
    %1790 = vrot.lane.b32.xlu0 %v1719, 80
    %v1791 = vpop.permute.xlu0 %1790
    %1792 = vrot.lane.b32.xlu0 %v1720, 80
    %v1793 = vpop.permute.xlu0 %1792
    %1794 = vrot.lane.b32.xlu0 %v1721, 80
    %v1795 = vpop.permute.xlu0 %1794
    %1796 = vrot.lane.b32.xlu0 %v1722, 80
    %v1797 = vpop.permute.xlu0 %1796
    %1798 = vrot.lane.b32.xlu0 %v1723, 80
    %v1799 = vpop.permute.xlu0 %1798
    %1800 = vrot.lane.b32.xlu0 %v1724, 80
    %v1801 = vpop.permute.xlu0 %1800
    %1802 = vrot.lane.b32.xlu0 %v1725, 80
    %v1803 = vpop.permute.xlu0 %1802
    %1804 = vrot.lane.b32.xlu0 %v1726, 80
    %v1805 = vpop.permute.xlu0 %1804
    %1806 = vrot.lane.b32.xlu0 %v1727, 80
    %v1807 = vpop.permute.xlu0 %1806
    %1808 = vrot.lane.b32.xlu0 %v1728, 80
    %v1809 = vpop.permute.xlu0 %1808
    %1810 = vrot.lane.b32.xlu0 %v1729, 80
    %v1811 = vpop.permute.xlu0 %1810
    %1812 = vrot.lane.b32.xlu0 %v1730, 80
    %v1813 = vpop.permute.xlu0 %1812
    %1814 = vrot.lane.b32.xlu0 %v1731, 80
    %v1815 = vpop.permute.xlu0 %1814
    %1816 = vrot.lane.b32.xlu0 %v1732, 80
    %v1817 = vpop.permute.xlu0 %1816
    %1818 = vrot.lane.b32.xlu0 %v1733, 80
    %v1819 = vpop.permute.xlu0 %1818
    %1820 = vrot.lane.b32.xlu0 %v1734, 80
    %v1821 = vpop.permute.xlu0 %1820
    %1822 = vrot.lane.b32.xlu0 %v1735, 80
    %v1823 = vpop.permute.xlu0 %1822
    %1824 = vrot.lane.b32.xlu0 %v1736, 80
    %v1825 = vpop.permute.xlu0 %1824
    %1826 = vrot.lane.b32.xlu0 %v1737, 80
    %v1827 = vpop.permute.xlu0 %1826
    %1828 = vrot.lane.b32.xlu0 %v1738, 80
    %v1829 = vpop.permute.xlu0 %1828
    %1830 = vrot.lane.b32.xlu0 %v1739, 80
    %v1831 = vpop.permute.xlu0 %1830
    %1832 = vrot.lane.b32.xlu0 %v1740, 80
    %v1833 = vpop.permute.xlu0 %1832
    %1834 = vrot.lane.b32.xlu0 %v1741, 80
    %v1835 = vpop.permute.xlu0 %1834
    %1836 = vrot.lane.b32.xlu0 %v1742, 80
    %v1837 = vpop.permute.xlu0 %1836
    %1838 = vrot.lane.b32.xlu0 %v1743, 80
    %v1839 = vpop.permute.xlu0 %1838
    %vm1872 = vcmask 786048
    %1873 = vst.msk [vmem:[#allocation3] sm:$0xff] %vm1872, %v1777
    %1874 = vst.msk [vmem:[#allocation3 + $0x10] sm:$0xff] %vm1872, %v1779
    %1875 = vst.msk [vmem:[#allocation3 + $0x20] sm:$0xff] %vm1872, %v1781
    %1876 = vst.msk [vmem:[#allocation3 + $0x30] sm:$0xff] %vm1872, %v1783
    %1877 = vst.msk [vmem:[#allocation3 + $0x40] sm:$0xff] %vm1872, %v1785
    %1878 = vst.msk [vmem:[#allocation3 + $0x50] sm:$0xff] %vm1872, %v1787
    %1879 = vst.msk [vmem:[#allocation3 + $0x60] sm:$0xff] %vm1872, %v1789
    %1880 = vst.msk [vmem:[#allocation3 + $0x70] sm:$0xff] %vm1872, %v1791
    %1881 = vst.msk [vmem:[#allocation3 + $0x80] sm:$0xff] %vm1872, %v1793
    %1882 = vst.msk [vmem:[#allocation3 + $0x90] sm:$0xff] %vm1872, %v1795
    %1883 = vst.msk [vmem:[#allocation3 + $0xa0] sm:$0xff] %vm1872, %v1797
    %1884 = vst.msk [vmem:[#allocation3 + $0xb0] sm:$0xff] %vm1872, %v1799
    %1885 = vst.msk [vmem:[#allocation3 + $0xc0] sm:$0xff] %vm1872, %v1801
    %1886 = vst.msk [vmem:[#allocation3 + $0xd0] sm:$0xff] %vm1872, %v1803
    %1887 = vst.msk [vmem:[#allocation3 + $0xe0] sm:$0xff] %vm1872, %v1805
    %1888 = vst.msk [vmem:[#allocation3 + $0xf0] sm:$0xff] %vm1872, %v1807
    %1889 = vst.msk [vmem:[#allocation3 + $0x100] sm:$0xff] %vm1872, %v1809
    %1890 = vst.msk [vmem:[#allocation3 + $0x110] sm:$0xff] %vm1872, %v1811
    %1891 = vst.msk [vmem:[#allocation3 + $0x120] sm:$0xff] %vm1872, %v1813
    %1892 = vst.msk [vmem:[#allocation3 + $0x130] sm:$0xff] %vm1872, %v1815
    %1893 = vst.msk [vmem:[#allocation3 + $0x140] sm:$0xff] %vm1872, %v1817
    %1894 = vst.msk [vmem:[#allocation3 + $0x150] sm:$0xff] %vm1872, %v1819
    %1895 = vst.msk [vmem:[#allocation3 + $0x160] sm:$0xff] %vm1872, %v1821
    %1896 = vst.msk [vmem:[#allocation3 + $0x170] sm:$0xff] %vm1872, %v1823
    %1897 = vst.msk [vmem:[#allocation3 + $0x180] sm:$0xff] %vm1872, %v1825
    %1898 = vst.msk [vmem:[#allocation3 + $0x190] sm:$0xff] %vm1872, %v1827
    %1899 = vst.msk [vmem:[#allocation3 + $0x1a0] sm:$0xff] %vm1872, %v1829
    %1900 = vst.msk [vmem:[#allocation3 + $0x1b0] sm:$0xff] %vm1872, %v1831
    %1901 = vst.msk [vmem:[#allocation3 + $0x1c0] sm:$0xff] %vm1872, %v1833
    %1902 = vst.msk [vmem:[#allocation3 + $0x1d0] sm:$0xff] %vm1872, %v1835
    %1903 = vst.msk [vmem:[#allocation3 + $0x1e0] sm:$0xff] %vm1872, %v1837
    %1904 = vst.msk [vmem:[#allocation3 + $0x1f0] sm:$0xff] %vm1872, %v1839
    %s1905 = scalar_lea.vmem [#allocation2], 48
    %v1906 = vld [vmem:[%s1905] sm:$0xff]
    %v1907 = vld [vmem:[%s1905 + $0x8] sm:$0xff]
    %v1908 = vld [vmem:[%s1905 + $0x18] sm:$0xff]
    %v1909 = vld [vmem:[%s1905 + $0x20] sm:$0xff]
    %v1910 = vld [vmem:[%s1905 + $0x30] sm:$0xff]
    %v1911 = vld [vmem:[%s1905 + $0x38] sm:$0xff]
    %v1912 = vld [vmem:[%s1905 + $0x48] sm:$0xff]
    %v1913 = vld [vmem:[%s1905 + $0x50] sm:$0xff]
    %v1914 = vld [vmem:[%s1905 + $0x60] sm:$0xff]
    %v1915 = vld [vmem:[%s1905 + $0x68] sm:$0xff]
    %v1916 = vld [vmem:[%s1905 + $0x78] sm:$0xff]
    %v1917 = vld [vmem:[%s1905 + $0x80] sm:$0xff]
    %v1918 = vld [vmem:[%s1905 + $0x90] sm:$0xff]
    %v1919 = vld [vmem:[%s1905 + $0x98] sm:$0xff]
    %v1920 = vld [vmem:[%s1905 + $0xa8] sm:$0xff]
    %v1921 = vld [vmem:[%s1905 + $0xb0] sm:$0xff]
    %v1922 = vld [vmem:[%s1905 + $0xc0] sm:$0xff]
    %v1923 = vld [vmem:[%s1905 + $0xc8] sm:$0xff]
    %v1924 = vld [vmem:[%s1905 + $0xd8] sm:$0xff]
    %v1925 = vld [vmem:[%s1905 + $0xe0] sm:$0xff]
    %v1926 = vld [vmem:[%s1905 + $0xf0] sm:$0xff]
    %v1927 = vld [vmem:[%s1905 + $0xf8] sm:$0xff]
    %v1928 = vld [vmem:[%s1905 + $0x108] sm:$0xff]
    %v1929 = vld [vmem:[%s1905 + $0x110] sm:$0xff]
    %v1930 = vld [vmem:[%s1905 + $0x120] sm:$0xff]
    %v1931 = vld [vmem:[%s1905 + $0x128] sm:$0xff]
    %v1932 = vld [vmem:[%s1905 + $0x138] sm:$0xff]
    %v1933 = vld [vmem:[%s1905 + $0x140] sm:$0xff]
    %v1934 = vld [vmem:[%s1905 + $0x150] sm:$0xff]
    %v1935 = vld [vmem:[%s1905 + $0x158] sm:$0xff]
    %v1936 = vld [vmem:[%s1905 + $0x168] sm:$0xff]
    %v1937 = vld [vmem:[%s1905 + $0x170] sm:$0xff]
    %v1938 = vld [vmem:[%s1905 + $0x1b0] sm:$0xff]
    %v1939 = vld [vmem:[%s1905 + $0x1b8] sm:$0xff]
    %v1940 = vld [vmem:[%s1905 + $0x1c8] sm:$0xff]
    %v1941 = vld [vmem:[%s1905 + $0x1d0] sm:$0xff]
    %v1942 = vld [vmem:[%s1905 + $0x1e0] sm:$0xff]
    %v1943 = vld [vmem:[%s1905 + $0x1e8] sm:$0xff]
    %v1944 = vld [vmem:[%s1905 + $0x1f8] sm:$0xff]
    %v1945 = vld [vmem:[%s1905 + $0x200] sm:$0xff]
    %v1946 = vld [vmem:[%s1905 + $0x210] sm:$0xff]
    %v1947 = vld [vmem:[%s1905 + $0x218] sm:$0xff]
    %v1948 = vld [vmem:[%s1905 + $0x228] sm:$0xff]
    %v1949 = vld [vmem:[%s1905 + $0x230] sm:$0xff]
    %v1950 = vld [vmem:[%s1905 + $0x240] sm:$0xff]
    %v1951 = vld [vmem:[%s1905 + $0x248] sm:$0xff]
    %v1952 = vld [vmem:[%s1905 + $0x258] sm:$0xff]
    %v1953 = vld [vmem:[%s1905 + $0x260] sm:$0xff]
    %v1954 = vld [vmem:[%s1905 + $0x270] sm:$0xff]
    %v1955 = vld [vmem:[%s1905 + $0x278] sm:$0xff]
    %v1956 = vld [vmem:[%s1905 + $0x288] sm:$0xff]
    %v1957 = vld [vmem:[%s1905 + $0x290] sm:$0xff]
    %v1958 = vld [vmem:[%s1905 + $0x2a0] sm:$0xff]
    %v1959 = vld [vmem:[%s1905 + $0x2a8] sm:$0xff]
    %v1960 = vld [vmem:[%s1905 + $0x2b8] sm:$0xff]
    %v1961 = vld [vmem:[%s1905 + $0x2c0] sm:$0xff]
    %v1962 = vld [vmem:[%s1905 + $0x2d0] sm:$0xff]
    %v1963 = vld [vmem:[%s1905 + $0x2d8] sm:$0xff]
    %v1964 = vld [vmem:[%s1905 + $0x2e8] sm:$0xff]
    %v1965 = vld [vmem:[%s1905 + $0x2f0] sm:$0xff]
    %v1966 = vld [vmem:[%s1905 + $0x300] sm:$0xff]
    %v1967 = vld [vmem:[%s1905 + $0x308] sm:$0xff]
    %v1968 = vld [vmem:[%s1905 + $0x318] sm:$0xff]
    %v1969 = vld [vmem:[%s1905 + $0x320] sm:$0xff]
    %v1970 = vpack.c.bf16 %v1907, %v1906
    %v1971 = vpack.c.bf16 %v1909, %v1908
    %v1972 = vpack.c.bf16 %v1911, %v1910
    %v1973 = vpack.c.bf16 %v1913, %v1912
    %v1974 = vpack.c.bf16 %v1915, %v1914
    %v1975 = vpack.c.bf16 %v1917, %v1916
    %v1976 = vpack.c.bf16 %v1919, %v1918
    %v1977 = vpack.c.bf16 %v1921, %v1920
    %v1978 = vpack.c.bf16 %v1923, %v1922
    %v1979 = vpack.c.bf16 %v1925, %v1924
    %v1980 = vpack.c.bf16 %v1927, %v1926
    %v1981 = vpack.c.bf16 %v1929, %v1928
    %v1982 = vpack.c.bf16 %v1931, %v1930
    %v1983 = vpack.c.bf16 %v1933, %v1932
    %v1984 = vpack.c.bf16 %v1935, %v1934
    %v1985 = vpack.c.bf16 %v1937, %v1936
    %v1986 = vpack.c.bf16 %v1939, %v1938
    %v1987 = vpack.c.bf16 %v1941, %v1940
    %v1988 = vpack.c.bf16 %v1943, %v1942
    %v1989 = vpack.c.bf16 %v1945, %v1944
    %v1990 = vpack.c.bf16 %v1947, %v1946
    %v1991 = vpack.c.bf16 %v1949, %v1948
    %v1992 = vpack.c.bf16 %v1951, %v1950
    %v1993 = vpack.c.bf16 %v1953, %v1952
    %v1994 = vpack.c.bf16 %v1955, %v1954
    %v1995 = vpack.c.bf16 %v1957, %v1956
    %v1996 = vpack.c.bf16 %v1959, %v1958
    %v1997 = vpack.c.bf16 %v1961, %v1960
    %v1998 = vpack.c.bf16 %v1963, %v1962
    %v1999 = vpack.c.bf16 %v1965, %v1964
    %v2000 = vpack.c.bf16 %v1967, %v1966
    %v2001 = vpack.c.bf16 %v1969, %v1968
    %2034 = vrot.lane.b32.xlu0 %v1970, 96
    %v2035 = vpop.permute.xlu0 %2034
    %2036 = vrot.lane.b32.xlu0 %v1971, 96
    %v2037 = vpop.permute.xlu0 %2036
    %2038 = vrot.lane.b32.xlu0 %v1972, 96
    %v2039 = vpop.permute.xlu0 %2038
    %2040 = vrot.lane.b32.xlu0 %v1973, 96
    %v2041 = vpop.permute.xlu0 %2040
    %2042 = vrot.lane.b32.xlu0 %v1974, 96
    %v2043 = vpop.permute.xlu0 %2042
    %2044 = vrot.lane.b32.xlu0 %v1975, 96
    %v2045 = vpop.permute.xlu0 %2044
    %2046 = vrot.lane.b32.xlu0 %v1976, 96
    %v2047 = vpop.permute.xlu0 %2046
    %2048 = vrot.lane.b32.xlu0 %v1977, 96
    %v2049 = vpop.permute.xlu0 %2048
    %2050 = vrot.lane.b32.xlu0 %v1978, 96
    %v2051 = vpop.permute.xlu0 %2050
    %2052 = vrot.lane.b32.xlu0 %v1979, 96
    %v2053 = vpop.permute.xlu0 %2052
    %2054 = vrot.lane.b32.xlu0 %v1980, 96
    %v2055 = vpop.permute.xlu0 %2054
    %2056 = vrot.lane.b32.xlu0 %v1981, 96
    %v2057 = vpop.permute.xlu0 %2056
    %2058 = vrot.lane.b32.xlu0 %v1982, 96
    %v2059 = vpop.permute.xlu0 %2058
    %2060 = vrot.lane.b32.xlu0 %v1983, 96
    %v2061 = vpop.permute.xlu0 %2060
    %2062 = vrot.lane.b32.xlu0 %v1984, 96
    %v2063 = vpop.permute.xlu0 %2062
    %2064 = vrot.lane.b32.xlu0 %v1985, 96
    %v2065 = vpop.permute.xlu0 %2064
    %2066 = vrot.lane.b32.xlu0 %v1986, 96
    %v2067 = vpop.permute.xlu0 %2066
    %2068 = vrot.lane.b32.xlu0 %v1987, 96
    %v2069 = vpop.permute.xlu0 %2068
    %2070 = vrot.lane.b32.xlu0 %v1988, 96
    %v2071 = vpop.permute.xlu0 %2070
    %2072 = vrot.lane.b32.xlu0 %v1989, 96
    %v2073 = vpop.permute.xlu0 %2072
    %2074 = vrot.lane.b32.xlu0 %v1990, 96
    %v2075 = vpop.permute.xlu0 %2074
    %2076 = vrot.lane.b32.xlu0 %v1991, 96
    %v2077 = vpop.permute.xlu0 %2076
    %2078 = vrot.lane.b32.xlu0 %v1992, 96
    %v2079 = vpop.permute.xlu0 %2078
    %2080 = vrot.lane.b32.xlu0 %v1993, 96
    %v2081 = vpop.permute.xlu0 %2080
    %2082 = vrot.lane.b32.xlu0 %v1994, 96
    %v2083 = vpop.permute.xlu0 %2082
    %2084 = vrot.lane.b32.xlu0 %v1995, 96
    %v2085 = vpop.permute.xlu0 %2084
    %2086 = vrot.lane.b32.xlu0 %v1996, 96
    %v2087 = vpop.permute.xlu0 %2086
    %2088 = vrot.lane.b32.xlu0 %v1997, 96
    %v2089 = vpop.permute.xlu0 %2088
    %2090 = vrot.lane.b32.xlu0 %v1998, 96
    %v2091 = vpop.permute.xlu0 %2090
    %2092 = vrot.lane.b32.xlu0 %v1999, 96
    %v2093 = vpop.permute.xlu0 %2092
    %2094 = vrot.lane.b32.xlu0 %v2000, 96
    %v2095 = vpop.permute.xlu0 %2094
    %2096 = vrot.lane.b32.xlu0 %v2001, 96
    %v2097 = vpop.permute.xlu0 %2096
    %vm2130 = vcmask 917248
    %2131 = vst.msk [vmem:[#allocation3] sm:$0xff] %vm2130, %v2035
    %2132 = vst.msk [vmem:[#allocation3 + $0x10] sm:$0xff] %vm2130, %v2037
    %2133 = vst.msk [vmem:[#allocation3 + $0x20] sm:$0xff] %vm2130, %v2039
    %2134 = vst.msk [vmem:[#allocation3 + $0x30] sm:$0xff] %vm2130, %v2041
    %2135 = vst.msk [vmem:[#allocation3 + $0x40] sm:$0xff] %vm2130, %v2043
    %2136 = vst.msk [vmem:[#allocation3 + $0x50] sm:$0xff] %vm2130, %v2045
    %2137 = vst.msk [vmem:[#allocation3 + $0x60] sm:$0xff] %vm2130, %v2047
    %2138 = vst.msk [vmem:[#allocation3 + $0x70] sm:$0xff] %vm2130, %v2049
    %2139 = vst.msk [vmem:[#allocation3 + $0x80] sm:$0xff] %vm2130, %v2051
    %2140 = vst.msk [vmem:[#allocation3 + $0x90] sm:$0xff] %vm2130, %v2053
    %2141 = vst.msk [vmem:[#allocation3 + $0xa0] sm:$0xff] %vm2130, %v2055
    %2142 = vst.msk [vmem:[#allocation3 + $0xb0] sm:$0xff] %vm2130, %v2057
    %2143 = vst.msk [vmem:[#allocation3 + $0xc0] sm:$0xff] %vm2130, %v2059
    %2144 = vst.msk [vmem:[#allocation3 + $0xd0] sm:$0xff] %vm2130, %v2061
    %2145 = vst.msk [vmem:[#allocation3 + $0xe0] sm:$0xff] %vm2130, %v2063
    %2146 = vst.msk [vmem:[#allocation3 + $0xf0] sm:$0xff] %vm2130, %v2065
    %2147 = vst.msk [vmem:[#allocation3 + $0x100] sm:$0xff] %vm2130, %v2067
    %2148 = vst.msk [vmem:[#allocation3 + $0x110] sm:$0xff] %vm2130, %v2069
    %2149 = vst.msk [vmem:[#allocation3 + $0x120] sm:$0xff] %vm2130, %v2071
    %2150 = vst.msk [vmem:[#allocation3 + $0x130] sm:$0xff] %vm2130, %v2073
    %2151 = vst.msk [vmem:[#allocation3 + $0x140] sm:$0xff] %vm2130, %v2075
    %2152 = vst.msk [vmem:[#allocation3 + $0x150] sm:$0xff] %vm2130, %v2077
    %2153 = vst.msk [vmem:[#allocation3 + $0x160] sm:$0xff] %vm2130, %v2079
    %2154 = vst.msk [vmem:[#allocation3 + $0x170] sm:$0xff] %vm2130, %v2081
    %2155 = vst.msk [vmem:[#allocation3 + $0x180] sm:$0xff] %vm2130, %v2083
    %2156 = vst.msk [vmem:[#allocation3 + $0x190] sm:$0xff] %vm2130, %v2085
    %2157 = vst.msk [vmem:[#allocation3 + $0x1a0] sm:$0xff] %vm2130, %v2087
    %2158 = vst.msk [vmem:[#allocation3 + $0x1b0] sm:$0xff] %vm2130, %v2089
    %2159 = vst.msk [vmem:[#allocation3 + $0x1c0] sm:$0xff] %vm2130, %v2091
    %2160 = vst.msk [vmem:[#allocation3 + $0x1d0] sm:$0xff] %vm2130, %v2093
    %2161 = vst.msk [vmem:[#allocation3 + $0x1e0] sm:$0xff] %vm2130, %v2095
    %2162 = vst.msk [vmem:[#allocation3 + $0x1f0] sm:$0xff] %vm2130, %v2097
    %v2163 = vld [vmem:[%s1905 + $0x1] sm:$0xff]
    %v2164 = vld [vmem:[%s1905 + $0x9] sm:$0xff]
    %v2165 = vld [vmem:[%s1905 + $0x19] sm:$0xff]
    %v2166 = vld [vmem:[%s1905 + $0x21] sm:$0xff]
    %v2167 = vld [vmem:[%s1905 + $0x31] sm:$0xff]
    %v2168 = vld [vmem:[%s1905 + $0x39] sm:$0xff]
    %v2169 = vld [vmem:[%s1905 + $0x49] sm:$0xff]
    %v2170 = vld [vmem:[%s1905 + $0x51] sm:$0xff]
    %v2171 = vld [vmem:[%s1905 + $0x61] sm:$0xff]
    %v2172 = vld [vmem:[%s1905 + $0x69] sm:$0xff]
    %v2173 = vld [vmem:[%s1905 + $0x79] sm:$0xff]
    %v2174 = vld [vmem:[%s1905 + $0x81] sm:$0xff]
    %v2175 = vld [vmem:[%s1905 + $0x91] sm:$0xff]
    %v2176 = vld [vmem:[%s1905 + $0x99] sm:$0xff]
    %v2177 = vld [vmem:[%s1905 + $0xa9] sm:$0xff]
    %v2178 = vld [vmem:[%s1905 + $0xb1] sm:$0xff]
    %v2179 = vld [vmem:[%s1905 + $0xc1] sm:$0xff]
    %v2180 = vld [vmem:[%s1905 + $0xc9] sm:$0xff]
    %v2181 = vld [vmem:[%s1905 + $0xd9] sm:$0xff]
    %v2182 = vld [vmem:[%s1905 + $0xe1] sm:$0xff]
    %v2183 = vld [vmem:[%s1905 + $0xf1] sm:$0xff]
    %v2184 = vld [vmem:[%s1905 + $0xf9] sm:$0xff]
    %v2185 = vld [vmem:[%s1905 + $0x109] sm:$0xff]
    %v2186 = vld [vmem:[%s1905 + $0x111] sm:$0xff]
    %v2187 = vld [vmem:[%s1905 + $0x121] sm:$0xff]
    %v2188 = vld [vmem:[%s1905 + $0x129] sm:$0xff]
    %v2189 = vld [vmem:[%s1905 + $0x139] sm:$0xff]
    %v2190 = vld [vmem:[%s1905 + $0x141] sm:$0xff]
    %v2191 = vld [vmem:[%s1905 + $0x151] sm:$0xff]
    %v2192 = vld [vmem:[%s1905 + $0x159] sm:$0xff]
    %v2193 = vld [vmem:[%s1905 + $0x169] sm:$0xff]
    %v2194 = vld [vmem:[%s1905 + $0x171] sm:$0xff]
    %v2195 = vld [vmem:[%s1905 + $0x1b1] sm:$0xff]
    %v2196 = vld [vmem:[%s1905 + $0x1b9] sm:$0xff]
    %v2197 = vld [vmem:[%s1905 + $0x1c9] sm:$0xff]
    %v2198 = vld [vmem:[%s1905 + $0x1d1] sm:$0xff]
    %v2199 = vld [vmem:[%s1905 + $0x1e1] sm:$0xff]
    %v2200 = vld [vmem:[%s1905 + $0x1e9] sm:$0xff]
    %v2201 = vld [vmem:[%s1905 + $0x1f9] sm:$0xff]
    %v2202 = vld [vmem:[%s1905 + $0x201] sm:$0xff]
    %v2203 = vld [vmem:[%s1905 + $0x211] sm:$0xff]
    %v2204 = vld [vmem:[%s1905 + $0x219] sm:$0xff]
    %v2205 = vld [vmem:[%s1905 + $0x229] sm:$0xff]
    %v2206 = vld [vmem:[%s1905 + $0x231] sm:$0xff]
    %v2207 = vld [vmem:[%s1905 + $0x241] sm:$0xff]
    %v2208 = vld [vmem:[%s1905 + $0x249] sm:$0xff]
    %v2209 = vld [vmem:[%s1905 + $0x259] sm:$0xff]
    %v2210 = vld [vmem:[%s1905 + $0x261] sm:$0xff]
    %v2211 = vld [vmem:[%s1905 + $0x271] sm:$0xff]
    %v2212 = vld [vmem:[%s1905 + $0x279] sm:$0xff]
    %v2213 = vld [vmem:[%s1905 + $0x289] sm:$0xff]
    %v2214 = vld [vmem:[%s1905 + $0x291] sm:$0xff]
    %v2215 = vld [vmem:[%s1905 + $0x2a1] sm:$0xff]
    %v2216 = vld [vmem:[%s1905 + $0x2a9] sm:$0xff]
    %v2217 = vld [vmem:[%s1905 + $0x2b9] sm:$0xff]
    %v2218 = vld [vmem:[%s1905 + $0x2c1] sm:$0xff]
    %v2219 = vld [vmem:[%s1905 + $0x2d1] sm:$0xff]
    %v2220 = vld [vmem:[%s1905 + $0x2d9] sm:$0xff]
    %v2221 = vld [vmem:[%s1905 + $0x2e9] sm:$0xff]
    %v2222 = vld [vmem:[%s1905 + $0x2f1] sm:$0xff]
    %v2223 = vld [vmem:[%s1905 + $0x301] sm:$0xff]
    %v2224 = vld [vmem:[%s1905 + $0x309] sm:$0xff]
    %v2225 = vld [vmem:[%s1905 + $0x319] sm:$0xff]
    %v2226 = vld [vmem:[%s1905 + $0x321] sm:$0xff]
    %v2227 = vpack.c.bf16 %v2164, %v2163
    %v2228 = vpack.c.bf16 %v2166, %v2165
    %v2229 = vpack.c.bf16 %v2168, %v2167
    %v2230 = vpack.c.bf16 %v2170, %v2169
    %v2231 = vpack.c.bf16 %v2172, %v2171
    %v2232 = vpack.c.bf16 %v2174, %v2173
    %v2233 = vpack.c.bf16 %v2176, %v2175
    %v2234 = vpack.c.bf16 %v2178, %v2177
    %v2235 = vpack.c.bf16 %v2180, %v2179
    %v2236 = vpack.c.bf16 %v2182, %v2181
    %v2237 = vpack.c.bf16 %v2184, %v2183
    %v2238 = vpack.c.bf16 %v2186, %v2185
    %v2239 = vpack.c.bf16 %v2188, %v2187
    %v2240 = vpack.c.bf16 %v2190, %v2189
    %v2241 = vpack.c.bf16 %v2192, %v2191
    %v2242 = vpack.c.bf16 %v2194, %v2193
    %v2243 = vpack.c.bf16 %v2196, %v2195
    %v2244 = vpack.c.bf16 %v2198, %v2197
    %v2245 = vpack.c.bf16 %v2200, %v2199
    %v2246 = vpack.c.bf16 %v2202, %v2201
    %v2247 = vpack.c.bf16 %v2204, %v2203
    %v2248 = vpack.c.bf16 %v2206, %v2205
    %v2249 = vpack.c.bf16 %v2208, %v2207
    %v2250 = vpack.c.bf16 %v2210, %v2209
    %v2251 = vpack.c.bf16 %v2212, %v2211
    %v2252 = vpack.c.bf16 %v2214, %v2213
    %v2253 = vpack.c.bf16 %v2216, %v2215
    %v2254 = vpack.c.bf16 %v2218, %v2217
    %v2255 = vpack.c.bf16 %v2220, %v2219
    %v2256 = vpack.c.bf16 %v2222, %v2221
    %v2257 = vpack.c.bf16 %v2224, %v2223
    %v2258 = vpack.c.bf16 %v2226, %v2225
    %2291 = vrot.lane.b32.xlu0 %v2227, 112
    %v2292 = vpop.permute.xlu0 %2291
    %2293 = vrot.lane.b32.xlu0 %v2228, 112
    %v2294 = vpop.permute.xlu0 %2293
    %2295 = vrot.lane.b32.xlu0 %v2229, 112
    %v2296 = vpop.permute.xlu0 %2295
    %2297 = vrot.lane.b32.xlu0 %v2230, 112
    %v2298 = vpop.permute.xlu0 %2297
    %2299 = vrot.lane.b32.xlu0 %v2231, 112
    %v2300 = vpop.permute.xlu0 %2299
    %2301 = vrot.lane.b32.xlu0 %v2232, 112
    %v2302 = vpop.permute.xlu0 %2301
    %2303 = vrot.lane.b32.xlu0 %v2233, 112
    %v2304 = vpop.permute.xlu0 %2303
    %2305 = vrot.lane.b32.xlu0 %v2234, 112
    %v2306 = vpop.permute.xlu0 %2305
    %2307 = vrot.lane.b32.xlu0 %v2235, 112
    %v2308 = vpop.permute.xlu0 %2307
    %2309 = vrot.lane.b32.xlu0 %v2236, 112
    %v2310 = vpop.permute.xlu0 %2309
    %2311 = vrot.lane.b32.xlu0 %v2237, 112
    %v2312 = vpop.permute.xlu0 %2311
    %2313 = vrot.lane.b32.xlu0 %v2238, 112
    %v2314 = vpop.permute.xlu0 %2313
    %2315 = vrot.lane.b32.xlu0 %v2239, 112
    %v2316 = vpop.permute.xlu0 %2315
    %2317 = vrot.lane.b32.xlu0 %v2240, 112
    %v2318 = vpop.permute.xlu0 %2317
    %2319 = vrot.lane.b32.xlu0 %v2241, 112
    %v2320 = vpop.permute.xlu0 %2319
    %2321 = vrot.lane.b32.xlu0 %v2242, 112
    %v2322 = vpop.permute.xlu0 %2321
    %2323 = vrot.lane.b32.xlu0 %v2243, 112
    %v2324 = vpop.permute.xlu0 %2323
    %2325 = vrot.lane.b32.xlu0 %v2244, 112
    %v2326 = vpop.permute.xlu0 %2325
    %2327 = vrot.lane.b32.xlu0 %v2245, 112
    %v2328 = vpop.permute.xlu0 %2327
    %2329 = vrot.lane.b32.xlu0 %v2246, 112
    %v2330 = vpop.permute.xlu0 %2329
    %2331 = vrot.lane.b32.xlu0 %v2247, 112
    %v2332 = vpop.permute.xlu0 %2331
    %2333 = vrot.lane.b32.xlu0 %v2248, 112
    %v2334 = vpop.permute.xlu0 %2333
    %2335 = vrot.lane.b32.xlu0 %v2249, 112
    %v2336 = vpop.permute.xlu0 %2335
    %2337 = vrot.lane.b32.xlu0 %v2250, 112
    %v2338 = vpop.permute.xlu0 %2337
    %2339 = vrot.lane.b32.xlu0 %v2251, 112
    %v2340 = vpop.permute.xlu0 %2339
    %2341 = vrot.lane.b32.xlu0 %v2252, 112
    %v2342 = vpop.permute.xlu0 %2341
    %2343 = vrot.lane.b32.xlu0 %v2253, 112
    %v2344 = vpop.permute.xlu0 %2343
    %2345 = vrot.lane.b32.xlu0 %v2254, 112
    %v2346 = vpop.permute.xlu0 %2345
    %2347 = vrot.lane.b32.xlu0 %v2255, 112
    %v2348 = vpop.permute.xlu0 %2347
    %2349 = vrot.lane.b32.xlu0 %v2256, 112
    %v2350 = vpop.permute.xlu0 %2349
    %2351 = vrot.lane.b32.xlu0 %v2257, 112
    %v2352 = vpop.permute.xlu0 %2351
    %2353 = vrot.lane.b32.xlu0 %v2258, 112
    %v2354 = vpop.permute.xlu0 %2353
    %vm2387 = vcmask 1048448
    %2388 = vst.msk [vmem:[#allocation3] sm:$0xff] %vm2387, %v2292
    %2389 = vst.msk [vmem:[#allocation3 + $0x10] sm:$0xff] %vm2387, %v2294
    %2390 = vst.msk [vmem:[#allocation3 + $0x20] sm:$0xff] %vm2387, %v2296
    %2391 = vst.msk [vmem:[#allocation3 + $0x30] sm:$0xff] %vm2387, %v2298
    %2392 = vst.msk [vmem:[#allocation3 + $0x40] sm:$0xff] %vm2387, %v2300
    %2393 = vst.msk [vmem:[#allocation3 + $0x50] sm:$0xff] %vm2387, %v2302
    %2394 = vst.msk [vmem:[#allocation3 + $0x60] sm:$0xff] %vm2387, %v2304
    %2395 = vst.msk [vmem:[#allocation3 + $0x70] sm:$0xff] %vm2387, %v2306
    %2396 = vst.msk [vmem:[#allocation3 + $0x80] sm:$0xff] %vm2387, %v2308
    %2397 = vst.msk [vmem:[#allocation3 + $0x90] sm:$0xff] %vm2387, %v2310
    %2398 = vst.msk [vmem:[#allocation3 + $0xa0] sm:$0xff] %vm2387, %v2312
    %2399 = vst.msk [vmem:[#allocation3 + $0xb0] sm:$0xff] %vm2387, %v2314
    %2400 = vst.msk [vmem:[#allocation3 + $0xc0] sm:$0xff] %vm2387, %v2316
    %2401 = vst.msk [vmem:[#allocation3 + $0xd0] sm:$0xff] %vm2387, %v2318
    %2402 = vst.msk [vmem:[#allocation3 + $0xe0] sm:$0xff] %vm2387, %v2320
    %2403 = vst.msk [vmem:[#allocation3 + $0xf0] sm:$0xff] %vm2387, %v2322
    %2404 = vst.msk [vmem:[#allocation3 + $0x100] sm:$0xff] %vm2387, %v2324
    %2405 = vst.msk [vmem:[#allocation3 + $0x110] sm:$0xff] %vm2387, %v2326
    %2406 = vst.msk [vmem:[#allocation3 + $0x120] sm:$0xff] %vm2387, %v2328
    %2407 = vst.msk [vmem:[#allocation3 + $0x130] sm:$0xff] %vm2387, %v2330
    %2408 = vst.msk [vmem:[#allocation3 + $0x140] sm:$0xff] %vm2387, %v2332
    %2409 = vst.msk [vmem:[#allocation3 + $0x150] sm:$0xff] %vm2387, %v2334
    %2410 = vst.msk [vmem:[#allocation3 + $0x160] sm:$0xff] %vm2387, %v2336
    %2411 = vst.msk [vmem:[#allocation3 + $0x170] sm:$0xff] %vm2387, %v2338
    %2412 = vst.msk [vmem:[#allocation3 + $0x180] sm:$0xff] %vm2387, %v2340
    %2413 = vst.msk [vmem:[#allocation3 + $0x190] sm:$0xff] %vm2387, %v2342
    %2414 = vst.msk [vmem:[#allocation3 + $0x1a0] sm:$0xff] %vm2387, %v2344
    %2415 = vst.msk [vmem:[#allocation3 + $0x1b0] sm:$0xff] %vm2387, %v2346
    %2416 = vst.msk [vmem:[#allocation3 + $0x1c0] sm:$0xff] %vm2387, %v2348
    %2417 = vst.msk [vmem:[#allocation3 + $0x1d0] sm:$0xff] %vm2387, %v2350
    %2418 = vst.msk [vmem:[#allocation3 + $0x1e0] sm:$0xff] %vm2387, %v2352
    %2419 = vst.msk [vmem:[#allocation3 + $0x1f0] sm:$0xff] %vm2387, %v2354
    %v2420 = vld [vmem:[%s1905 + $0x2] sm:$0xff]
    %v2421 = vld [vmem:[%s1905 + $0xa] sm:$0xff]
    %v2422 = vld [vmem:[%s1905 + $0x1a] sm:$0xff]
    %v2423 = vld [vmem:[%s1905 + $0x22] sm:$0xff]
    %v2424 = vld [vmem:[%s1905 + $0x32] sm:$0xff]
    %v2425 = vld [vmem:[%s1905 + $0x3a] sm:$0xff]
    %v2426 = vld [vmem:[%s1905 + $0x4a] sm:$0xff]
    %v2427 = vld [vmem:[%s1905 + $0x52] sm:$0xff]
    %v2428 = vld [vmem:[%s1905 + $0x62] sm:$0xff]
    %v2429 = vld [vmem:[%s1905 + $0x6a] sm:$0xff]
    %v2430 = vld [vmem:[%s1905 + $0x7a] sm:$0xff]
    %v2431 = vld [vmem:[%s1905 + $0x82] sm:$0xff]
    %v2432 = vld [vmem:[%s1905 + $0x92] sm:$0xff]
    %v2433 = vld [vmem:[%s1905 + $0x9a] sm:$0xff]
    %v2434 = vld [vmem:[%s1905 + $0xaa] sm:$0xff]
    %v2435 = vld [vmem:[%s1905 + $0xb2] sm:$0xff]
    %v2436 = vld [vmem:[%s1905 + $0xc2] sm:$0xff]
    %v2437 = vld [vmem:[%s1905 + $0xca] sm:$0xff]
    %v2438 = vld [vmem:[%s1905 + $0xda] sm:$0xff]
    %v2439 = vld [vmem:[%s1905 + $0xe2] sm:$0xff]
    %v2440 = vld [vmem:[%s1905 + $0xf2] sm:$0xff]
    %v2441 = vld [vmem:[%s1905 + $0xfa] sm:$0xff]
    %v2442 = vld [vmem:[%s1905 + $0x10a] sm:$0xff]
    %v2443 = vld [vmem:[%s1905 + $0x112] sm:$0xff]
    %v2444 = vld [vmem:[%s1905 + $0x122] sm:$0xff]
    %v2445 = vld [vmem:[%s1905 + $0x12a] sm:$0xff]
    %v2446 = vld [vmem:[%s1905 + $0x13a] sm:$0xff]
    %v2447 = vld [vmem:[%s1905 + $0x142] sm:$0xff]
    %v2448 = vld [vmem:[%s1905 + $0x152] sm:$0xff]
    %v2449 = vld [vmem:[%s1905 + $0x15a] sm:$0xff]
    %v2450 = vld [vmem:[%s1905 + $0x16a] sm:$0xff]
    %v2451 = vld [vmem:[%s1905 + $0x172] sm:$0xff]
    %v2452 = vld [vmem:[%s1905 + $0x1b2] sm:$0xff]
    %v2453 = vld [vmem:[%s1905 + $0x1ba] sm:$0xff]
    %v2454 = vld [vmem:[%s1905 + $0x1ca] sm:$0xff]
    %v2455 = vld [vmem:[%s1905 + $0x1d2] sm:$0xff]
    %v2456 = vld [vmem:[%s1905 + $0x1e2] sm:$0xff]
    %v2457 = vld [vmem:[%s1905 + $0x1ea] sm:$0xff]
    %v2458 = vld [vmem:[%s1905 + $0x1fa] sm:$0xff]
    %v2459 = vld [vmem:[%s1905 + $0x202] sm:$0xff]
    %v2460 = vld [vmem:[%s1905 + $0x212] sm:$0xff]
    %v2461 = vld [vmem:[%s1905 + $0x21a] sm:$0xff]
    %v2462 = vld [vmem:[%s1905 + $0x22a] sm:$0xff]
    %v2463 = vld [vmem:[%s1905 + $0x232] sm:$0xff]
    %v2464 = vld [vmem:[%s1905 + $0x242] sm:$0xff]
    %v2465 = vld [vmem:[%s1905 + $0x24a] sm:$0xff]
    %v2466 = vld [vmem:[%s1905 + $0x25a] sm:$0xff]
    %v2467 = vld [vmem:[%s1905 + $0x262] sm:$0xff]
    %v2468 = vld [vmem:[%s1905 + $0x272] sm:$0xff]
    %v2469 = vld [vmem:[%s1905 + $0x27a] sm:$0xff]
    %v2470 = vld [vmem:[%s1905 + $0x28a] sm:$0xff]
    %v2471 = vld [vmem:[%s1905 + $0x292] sm:$0xff]
    %v2472 = vld [vmem:[%s1905 + $0x2a2] sm:$0xff]
    %v2473 = vld [vmem:[%s1905 + $0x2aa] sm:$0xff]
    %v2474 = vld [vmem:[%s1905 + $0x2ba] sm:$0xff]
    %v2475 = vld [vmem:[%s1905 + $0x2c2] sm:$0xff]
    %v2476 = vld [vmem:[%s1905 + $0x2d2] sm:$0xff]
    %v2477 = vld [vmem:[%s1905 + $0x2da] sm:$0xff]
    %v2478 = vld [vmem:[%s1905 + $0x2ea] sm:$0xff]
    %v2479 = vld [vmem:[%s1905 + $0x2f2] sm:$0xff]
    %v2480 = vld [vmem:[%s1905 + $0x302] sm:$0xff]
    %v2481 = vld [vmem:[%s1905 + $0x30a] sm:$0xff]
    %v2482 = vld [vmem:[%s1905 + $0x31a] sm:$0xff]
    %v2483 = vld [vmem:[%s1905 + $0x322] sm:$0xff]
    %v2484 = vpack.c.bf16 %v2421, %v2420
    %v2485 = vpack.c.bf16 %v2423, %v2422
    %v2486 = vpack.c.bf16 %v2425, %v2424
    %v2487 = vpack.c.bf16 %v2427, %v2426
    %v2488 = vpack.c.bf16 %v2429, %v2428
    %v2489 = vpack.c.bf16 %v2431, %v2430
    %v2490 = vpack.c.bf16 %v2433, %v2432
    %v2491 = vpack.c.bf16 %v2435, %v2434
    %v2492 = vpack.c.bf16 %v2437, %v2436
    %v2493 = vpack.c.bf16 %v2439, %v2438
    %v2494 = vpack.c.bf16 %v2441, %v2440
    %v2495 = vpack.c.bf16 %v2443, %v2442
    %v2496 = vpack.c.bf16 %v2445, %v2444
    %v2497 = vpack.c.bf16 %v2447, %v2446
    %v2498 = vpack.c.bf16 %v2449, %v2448
    %v2499 = vpack.c.bf16 %v2451, %v2450
    %v2500 = vpack.c.bf16 %v2453, %v2452
    %v2501 = vpack.c.bf16 %v2455, %v2454
    %v2502 = vpack.c.bf16 %v2457, %v2456
    %v2503 = vpack.c.bf16 %v2459, %v2458
    %v2504 = vpack.c.bf16 %v2461, %v2460
    %v2505 = vpack.c.bf16 %v2463, %v2462
    %v2506 = vpack.c.bf16 %v2465, %v2464
    %v2507 = vpack.c.bf16 %v2467, %v2466
    %v2508 = vpack.c.bf16 %v2469, %v2468
    %v2509 = vpack.c.bf16 %v2471, %v2470
    %v2510 = vpack.c.bf16 %v2473, %v2472
    %v2511 = vpack.c.bf16 %v2475, %v2474
    %v2512 = vpack.c.bf16 %v2477, %v2476
    %v2513 = vpack.c.bf16 %v2479, %v2478
    %v2514 = vpack.c.bf16 %v2481, %v2480
    %v2515 = vpack.c.bf16 %v2483, %v2482
    %2516 = vst.msk [vmem:[#allocation3 + $0x8] sm:$0xff] %vm49, %v2484
    %2517 = vst.msk [vmem:[#allocation3 + $0x18] sm:$0xff] %vm49, %v2485
    %2518 = vst.msk [vmem:[#allocation3 + $0x28] sm:$0xff] %vm49, %v2486
    %2519 = vst.msk [vmem:[#allocation3 + $0x38] sm:$0xff] %vm49, %v2487
    %2520 = vst.msk [vmem:[#allocation3 + $0x48] sm:$0xff] %vm49, %v2488
    %2521 = vst.msk [vmem:[#allocation3 + $0x58] sm:$0xff] %vm49, %v2489
    %2522 = vst.msk [vmem:[#allocation3 + $0x68] sm:$0xff] %vm49, %v2490
    %2523 = vst.msk [vmem:[#allocation3 + $0x78] sm:$0xff] %vm49, %v2491
    %2524 = vst.msk [vmem:[#allocation3 + $0x88] sm:$0xff] %vm49, %v2492
    %2525 = vst.msk [vmem:[#allocation3 + $0x98] sm:$0xff] %vm49, %v2493
    %2526 = vst.msk [vmem:[#allocation3 + $0xa8] sm:$0xff] %vm49, %v2494
    %2527 = vst.msk [vmem:[#allocation3 + $0xb8] sm:$0xff] %vm49, %v2495
    %2528 = vst.msk [vmem:[#allocation3 + $0xc8] sm:$0xff] %vm49, %v2496
    %2529 = vst.msk [vmem:[#allocation3 + $0xd8] sm:$0xff] %vm49, %v2497
    %2530 = vst.msk [vmem:[#allocation3 + $0xe8] sm:$0xff] %vm49, %v2498
    %2531 = vst.msk [vmem:[#allocation3 + $0xf8] sm:$0xff] %vm49, %v2499
    %2532 = vst.msk [vmem:[#allocation3 + $0x108] sm:$0xff] %vm49, %v2500
    %2533 = vst.msk [vmem:[#allocation3 + $0x118] sm:$0xff] %vm49, %v2501
    %2534 = vst.msk [vmem:[#allocation3 + $0x128] sm:$0xff] %vm49, %v2502
    %2535 = vst.msk [vmem:[#allocation3 + $0x138] sm:$0xff] %vm49, %v2503
    %2536 = vst.msk [vmem:[#allocation3 + $0x148] sm:$0xff] %vm49, %v2504
    %2537 = vst.msk [vmem:[#allocation3 + $0x158] sm:$0xff] %vm49, %v2505
    %2538 = vst.msk [vmem:[#allocation3 + $0x168] sm:$0xff] %vm49, %v2506
    %2539 = vst.msk [vmem:[#allocation3 + $0x178] sm:$0xff] %vm49, %v2507
    %2540 = vst.msk [vmem:[#allocation3 + $0x188] sm:$0xff] %vm49, %v2508
    %2541 = vst.msk [vmem:[#allocation3 + $0x198] sm:$0xff] %vm49, %v2509
    %2542 = vst.msk [vmem:[#allocation3 + $0x1a8] sm:$0xff] %vm49, %v2510
    %2543 = vst.msk [vmem:[#allocation3 + $0x1b8] sm:$0xff] %vm49, %v2511
    %2544 = vst.msk [vmem:[#allocation3 + $0x1c8] sm:$0xff] %vm49, %v2512
    %2545 = vst.msk [vmem:[#allocation3 + $0x1d8] sm:$0xff] %vm49, %v2513
    %2546 = vst.msk [vmem:[#allocation3 + $0x1e8] sm:$0xff] %vm49, %v2514
    %2547 = vst.msk [vmem:[#allocation3 + $0x1f8] sm:$0xff] %vm49, %v2515
    %v2548 = vld [vmem:[#allocation3] sm:$0xff]
    %v2549 = vld [vmem:[#allocation3 + $0x8] sm:$0xff]
    %v2550 = vld [vmem:[#allocation3 + $0x10] sm:$0xff]
    %v2551 = vld [vmem:[#allocation3 + $0x18] sm:$0xff]
    %v2552 = vld [vmem:[#allocation3 + $0x20] sm:$0xff]
    %v2553 = vld [vmem:[#allocation3 + $0x28] sm:$0xff]
    %v2554 = vld [vmem:[#allocation3 + $0x30] sm:$0xff]
    %v2555 = vld [vmem:[#allocation3 + $0x38] sm:$0xff]
    %v2556 = vld [vmem:[#allocation3 + $0x40] sm:$0xff]
    %v2557 = vld [vmem:[#allocation3 + $0x48] sm:$0xff]
    %v2558 = vld [vmem:[#allocation3 + $0x50] sm:$0xff]
    %v2559 = vld [vmem:[#allocation3 + $0x58] sm:$0xff]
    %v2560 = vld [vmem:[#allocation3 + $0x60] sm:$0xff]
    %v2561 = vld [vmem:[#allocation3 + $0x68] sm:$0xff]
    %v2562 = vld [vmem:[#allocation3 + $0x70] sm:$0xff]
    %v2563 = vld [vmem:[#allocation3 + $0x78] sm:$0xff]
    %v2564 = vld [vmem:[#allocation3 + $0x80] sm:$0xff]
    %v2565 = vld [vmem:[#allocation3 + $0x88] sm:$0xff]
    %v2566 = vld [vmem:[#allocation3 + $0x90] sm:$0xff]
    %v2567 = vld [vmem:[#allocation3 + $0x98] sm:$0xff]
    %v2568 = vld [vmem:[#allocation3 + $0xa0] sm:$0xff]
    %v2569 = vld [vmem:[#allocation3 + $0xa8] sm:$0xff]
    %v2570 = vld [vmem:[#allocation3 + $0xb0] sm:$0xff]
    %v2571 = vld [vmem:[#allocation3 + $0xb8] sm:$0xff]
    %v2572 = vld [vmem:[#allocation3 + $0xc0] sm:$0xff]
    %v2573 = vld [vmem:[#allocation3 + $0xc8] sm:$0xff]
    %v2574 = vld [vmem:[#allocation3 + $0xd0] sm:$0xff]
    %v2575 = vld [vmem:[#allocation3 + $0xd8] sm:$0xff]
    %v2576 = vld [vmem:[#allocation3 + $0xe0] sm:$0xff]
    %v2577 = vld [vmem:[#allocation3 + $0xe8] sm:$0xff]
    %v2578 = vld [vmem:[#allocation3 + $0xf0] sm:$0xff]
    %v2579 = vld [vmem:[#allocation3 + $0xf8] sm:$0xff]
    %v2580 = vld [vmem:[#allocation3 + $0x100] sm:$0xff]
    %v2581 = vld [vmem:[#allocation3 + $0x108] sm:$0xff]
    %v2582 = vld [vmem:[#allocation3 + $0x110] sm:$0xff]
    %v2583 = vld [vmem:[#allocation3 + $0x118] sm:$0xff]
    %v2584 = vld [vmem:[#allocation3 + $0x120] sm:$0xff]
    %v2585 = vld [vmem:[#allocation3 + $0x128] sm:$0xff]
    %v2586 = vld [vmem:[#allocation3 + $0x130] sm:$0xff]
    %v2587 = vld [vmem:[#allocation3 + $0x138] sm:$0xff]
    %v2588 = vld [vmem:[#allocation3 + $0x140] sm:$0xff]
    %v2589 = vld [vmem:[#allocation3 + $0x148] sm:$0xff]
    %v2590 = vld [vmem:[#allocation3 + $0x150] sm:$0xff]
    %v2591 = vld [vmem:[#allocation3 + $0x158] sm:$0xff]
    %v2592 = vld [vmem:[#allocation3 + $0x160] sm:$0xff]
    %v2593 = vld [vmem:[#allocation3 + $0x168] sm:$0xff]
    %v2594 = vld [vmem:[#allocation3 + $0x170] sm:$0xff]
    %v2595 = vld [vmem:[#allocation3 + $0x178] sm:$0xff]
    %v2596 = vld [vmem:[#allocation3 + $0x180] sm:$0xff]
    %v2597 = vld [vmem:[#allocation3 + $0x188] sm:$0xff]
    %v2598 = vld [vmem:[#allocation3 + $0x190] sm:$0xff]
    %v2599 = vld [vmem:[#allocation3 + $0x198] sm:$0xff]
    %v2600 = vld [vmem:[#allocation3 + $0x1a0] sm:$0xff]
    %v2601 = vld [vmem:[#allocation3 + $0x1a8] sm:$0xff]
    %v2602 = vld [vmem:[#allocation3 + $0x1b0] sm:$0xff]
    %v2603 = vld [vmem:[#allocation3 + $0x1b8] sm:$0xff]
    %v2604 = vld [vmem:[#allocation3 + $0x1c0] sm:$0xff]
    %v2605 = vld [vmem:[#allocation3 + $0x1c8] sm:$0xff]
    %v2606 = vld [vmem:[#allocation3 + $0x1d0] sm:$0xff]
    %v2607 = vld [vmem:[#allocation3 + $0x1d8] sm:$0xff]
    %v2608 = vld [vmem:[#allocation3 + $0x1e0] sm:$0xff]
    %v2609 = vld [vmem:[#allocation3 + $0x1e8] sm:$0xff]
    %v2610 = vld [vmem:[#allocation3 + $0x1f0] sm:$0xff]
    %v2611 = vld [vmem:[#allocation3 + $0x1f8] sm:$0xff]
    %v2612 = vld [vmem:[%s1] sm:$0xf]
    %v2613 = vld [vmem:[%s1 + $0x4] sm:$0xf]
    %v2614 = vld [vmem:[%s1 + $0x8] sm:$0xf]
    %v2615 = vld [vmem:[%s1 + $0xc] sm:$0xf]
    %v2616 = vld [vmem:[%s1 + $0x10] sm:$0xf]
    %v2617 = vld [vmem:[%s1 + $0x14] sm:$0xf]
    %v2618 = vld [vmem:[%s1 + $0x18] sm:$0xf]
    %v2619 = vld [vmem:[%s1 + $0x1c] sm:$0xf]
    %v2620 = vld [vmem:[%s1 + $0x20] sm:$0xf]
    %v2621 = vld [vmem:[%s1 + $0x24] sm:$0xf]
    %v2622 = vld [vmem:[%s1 + $0x28] sm:$0xf]
    %v2623 = vld [vmem:[%s1 + $0x2c] sm:$0xf]
    %v2624 = vld [vmem:[%s1 + $0x30] sm:$0xf]
    %v2625 = vld [vmem:[%s1 + $0x34] sm:$0xf]
    %v2626 = vld [vmem:[%s1 + $0x38] sm:$0xf]
    %v2627 = vld [vmem:[%s1 + $0x3c] sm:$0xf]
    %v2628 = vld [vmem:[%s1 + $0x40] sm:$0xf]
    %v2629 = vld [vmem:[%s1 + $0x44] sm:$0xf]
    %v2648 = vunpack.c.l.b16 %v2612
    %v2649 = vunpack.c.l.b16 %v2613
    %v2650 = vunpack.c.l.b16 %v2614
    %v2651 = vunpack.c.l.b16 %v2615
    %v2652 = vunpack.c.l.b16 %v2616
    %v2653 = vunpack.c.l.b16 %v2617
    %v2654 = vunpack.c.l.b16 %v2618
    %v2655 = vunpack.c.l.b16 %v2619
    %v2656 = vunpack.c.l.b16 %v2620
    %v2657 = vunpack.c.l.b16 %v2621
    %v2658 = vunpack.c.l.b16 %v2622
    %v2659 = vunpack.c.l.b16 %v2623
    %v2660 = vunpack.c.l.b16 %v2624
    %v2661 = vunpack.c.l.b16 %v2625
    %v2662 = vunpack.c.l.b16 %v2626
    %v2663 = vunpack.c.l.b16 %v2627
    %v2664 = vunpack.c.l.b16 %v2628
    %v2665 = vunpack.c.l.b16 %v2629
    %v2666 = vpack.c.b16 %v2649, %v2648
    %v2667 = vpack.c.b16 %v2651, %v2650
    %v2668 = vpack.c.b16 %v2653, %v2652
    %v2669 = vpack.c.b16 %v2655, %v2654
    %v2670 = vpack.c.b16 %v2657, %v2656
    %v2671 = vpack.c.b16 %v2659, %v2658
    %v2672 = vpack.c.b16 %v2661, %v2660
    %v2673 = vpack.c.b16 %v2663, %v2662
    %v2674 = vpack.c.b16 %v2665, %v2664
    %v2685 = vsel %vm49, %v2549, 0
    %v2688 = vsel %vm49, %v2551, 0
    %v2691 = vsel %vm49, %v2553, 0
    %v2694 = vsel %vm49, %v2555, 0
    %v2697 = vsel %vm49, %v2557, 0
    %v2700 = vsel %vm49, %v2559, 0
    %v2703 = vsel %vm49, %v2561, 0
    %v2706 = vsel %vm49, %v2563, 0
    %v2709 = vsel %vm49, %v2565, 0
    %v2712 = vsel %vm49, %v2567, 0
    %v2715 = vsel %vm49, %v2569, 0
    %v2718 = vsel %vm49, %v2571, 0
    %v2721 = vsel %vm49, %v2573, 0
    %v2724 = vsel %vm49, %v2575, 0
    %v2727 = vsel %vm49, %v2577, 0
    %v2730 = vsel %vm49, %v2579, 0
    %v2733 = vsel %vm49, %v2581, 0
    %v2736 = vsel %vm49, %v2583, 0
    %v2739 = vsel %vm49, %v2585, 0
    %v2742 = vsel %vm49, %v2587, 0
    %v2745 = vsel %vm49, %v2589, 0
    %v2748 = vsel %vm49, %v2591, 0
    %v2751 = vsel %vm49, %v2593, 0
    %v2754 = vsel %vm49, %v2595, 0
    %v2757 = vsel %vm49, %v2597, 0
    %v2760 = vsel %vm49, %v2599, 0
    %v2763 = vsel %vm49, %v2601, 0
    %v2766 = vsel %vm49, %v2603, 0
    %v2769 = vsel %vm49, %v2605, 0
    %v2772 = vsel %vm49, %v2607, 0
    %v2775 = vsel %vm49, %v2609, 0
    %v2778 = vsel %vm49, %v2611, 0
    %2780 = vmatprep.subr.bf16.mxu0 0
    %2781 = vmatpush1.bf16.msra.mxu0 %v2666
    %2782 = vmatprep.subr.bf16.mxu0 0
    %2783 = vmatpush1.bf16.msra.mxu0 %v2667
    %2784 = vmatprep.subr.bf16.mxu0 0
    %2785 = vmatpush1.bf16.msra.mxu0 %v2668
    %2786 = vmatprep.subr.bf16.mxu0 0
    %2787 = vmatpush1.bf16.msra.mxu0 %v2669
    %2788 = vmatprep.subr.bf16.mxu0 0
    %2789 = vmatpush1.bf16.msra.mxu0 %v2670
    %2790 = vmatprep.subr.bf16.mxu0 0
    %2791 = vmatpush1.bf16.msra.mxu0 %v2671
    %2792 = vmatprep.subr.bf16.mxu0 0
    %2793 = vmatpush1.bf16.msra.mxu0 %v2672
    %2794 = vmatprep.subr.bf16.mxu0 0
    %2795 = vmatpush1.bf16.msra.mxu0 %v2673
    %2796 = vmatprep.subr.bf16.mxu0 0
    %2797 = vmatpush1.bf16.msra.mxu0 %v2674
    %2798 = vmatprep.subr.bf16.mxu0 0
    %2799 = vmatpush1.bf16.msra.mxu0 0
    %2800 = vmatprep.subr.bf16.mxu0 0
    %2801 = vmatpush1.bf16.msra.mxu0 0
    %2802 = vmatprep.subr.bf16.mxu0 0
    %2803 = vmatpush1.bf16.msra.mxu0 0
    %2804 = vmatprep.subr.bf16.mxu0 0
    %2805 = vmatpush1.bf16.msra.mxu0 0
    %2806 = vmatprep.subr.bf16.mxu0 0
    %2807 = vmatpush1.bf16.msra.mxu0 0
    %2808 = vmatprep.subr.bf16.mxu0 0
    %2809 = vmatpush1.bf16.msra.mxu0 0
    %2810 = vmatprep.subr.bf16.mxu0 0
    %2811 = vmatpush1.bf16.msra.mxu0 0
    %2812 = vmatprep.mubr.bf16.mxu0 %v2685
    %2813 = vmatmul.mubr.bf16.gmra.mrb[0].mxu0 %v2548
    %v2814 = vpop.f32.mrb[0].mxu0
    %v2815 = vadd.f32 0.0, %v2814
    %v2816 = vpop.f32.mrb[0].mxu0
    %v2817 = vpop.f32.mrb[0].mxu0
    %v2818 = vadd.f32 0.0, %v2817
    %v2819 = vpop.f32.mrb[0].mxu0
    %2820 = vmatprep.mubr.bf16.mxu0 %v2688
    %2821 = vmatmul.mubr.bf16.gmra.mrb[0].mxu0 %v2550
    %v2822 = vpop.f32.mrb[0].mxu0
    %v2823 = vadd.f32 0.0, %v2822
    %v2824 = vpop.f32.mrb[0].mxu0
    %v2825 = vpop.f32.mrb[0].mxu0
    %v2826 = vadd.f32 0.0, %v2825
    %v2827 = vpop.f32.mrb[0].mxu0
    %2828 = vmatprep.mubr.bf16.mxu0 %v2691
    %2829 = vmatmul.mubr.bf16.gmra.mrb[0].mxu0 %v2552
    %v2830 = vpop.f32.mrb[0].mxu0
    %v2831 = vadd.f32 0.0, %v2830
    %v2832 = vpop.f32.mrb[0].mxu0
    %v2833 = vpop.f32.mrb[0].mxu0
    %v2834 = vadd.f32 0.0, %v2833
    %v2835 = vpop.f32.mrb[0].mxu0
    %2836 = vmatprep.mubr.bf16.mxu0 %v2694
    %2837 = vmatmul.mubr.bf16.gmra.mrb[0].mxu0 %v2554
    %v2838 = vpop.f32.mrb[0].mxu0
    %v2839 = vadd.f32 0.0, %v2838
    %v2840 = vpop.f32.mrb[0].mxu0
    %v2841 = vpop.f32.mrb[0].mxu0
    %v2842 = vadd.f32 0.0, %v2841
    %v2843 = vpop.f32.mrb[0].mxu0
    %2844 = vmatprep.mubr.bf16.mxu0 %v2697
    %2845 = vmatmul.mubr.bf16.gmra.mrb[0].mxu0 %v2556
    %v2846 = vpop.f32.mrb[0].mxu0
    %v2847 = vadd.f32 0.0, %v2846
    %v2848 = vpop.f32.mrb[0].mxu0
    %v2849 = vpop.f32.mrb[0].mxu0
    %v2850 = vadd.f32 0.0, %v2849
    %v2851 = vpop.f32.mrb[0].mxu0
    %2852 = vmatprep.mubr.bf16.mxu0 %v2700
    %2853 = vmatmul.mubr.bf16.gmra.mrb[0].mxu0 %v2558
    %v2854 = vpop.f32.mrb[0].mxu0
    %v2855 = vadd.f32 0.0, %v2854
    %v2856 = vpop.f32.mrb[0].mxu0
    %v2857 = vpop.f32.mrb[0].mxu0
    %v2858 = vadd.f32 0.0, %v2857
    %v2859 = vpop.f32.mrb[0].mxu0
    %2860 = vmatprep.mubr.bf16.mxu0 %v2703
    %2861 = vmatmul.mubr.bf16.gmra.mrb[0].mxu0 %v2560
    %v2862 = vpop.f32.mrb[0].mxu0
    %v2863 = vadd.f32 0.0, %v2862
    %v2864 = vpop.f32.mrb[0].mxu0
    %v2865 = vpop.f32.mrb[0].mxu0
    %v2866 = vadd.f32 0.0, %v2865
    %v2867 = vpop.f32.mrb[0].mxu0
    %2868 = vmatprep.mubr.bf16.mxu0 %v2706
    %2869 = vmatmul.mubr.bf16.gmra.mrb[0].mxu0 %v2562
    %v2870 = vpop.f32.mrb[0].mxu0
    %v2871 = vadd.f32 0.0, %v2870
    %v2872 = vpop.f32.mrb[0].mxu0
    %v2873 = vpop.f32.mrb[0].mxu0
    %v2874 = vadd.f32 0.0, %v2873
    %v2875 = vpop.f32.mrb[0].mxu0
    %2876 = vmatprep.mubr.bf16.mxu0 %v2709
    %2877 = vmatmul.mubr.bf16.gmra.mrb[0].mxu0 %v2564
    %v2878 = vpop.f32.mrb[0].mxu0
    %v2879 = vadd.f32 0.0, %v2878
    %v2880 = vpop.f32.mrb[0].mxu0
    %v2881 = vpop.f32.mrb[0].mxu0
    %v2882 = vadd.f32 0.0, %v2881
    %v2883 = vpop.f32.mrb[0].mxu0
    %2884 = vmatprep.mubr.bf16.mxu0 %v2712
    %2885 = vmatmul.mubr.bf16.gmra.mrb[0].mxu0 %v2566
    %v2886 = vpop.f32.mrb[0].mxu0
    %v2887 = vadd.f32 0.0, %v2886
    %v2888 = vpop.f32.mrb[0].mxu0
    %v2889 = vpop.f32.mrb[0].mxu0
    %v2890 = vadd.f32 0.0, %v2889
    %v2891 = vpop.f32.mrb[0].mxu0
    %2892 = vmatprep.mubr.bf16.mxu0 %v2715
    %2893 = vmatmul.mubr.bf16.gmra.mrb[0].mxu0 %v2568
    %v2894 = vpop.f32.mrb[0].mxu0
    %v2895 = vadd.f32 0.0, %v2894
    %v2896 = vpop.f32.mrb[0].mxu0
    %v2897 = vpop.f32.mrb[0].mxu0
    %v2898 = vadd.f32 0.0, %v2897
    %v2899 = vpop.f32.mrb[0].mxu0
    %2900 = vmatprep.mubr.bf16.mxu0 %v2718
    %2901 = vmatmul.mubr.bf16.gmra.mrb[0].mxu0 %v2570
    %v2902 = vpop.f32.mrb[0].mxu0
    %v2903 = vadd.f32 0.0, %v2902
    %v2904 = vpop.f32.mrb[0].mxu0
    %v2905 = vpop.f32.mrb[0].mxu0
    %v2906 = vadd.f32 0.0, %v2905
    %v2907 = vpop.f32.mrb[0].mxu0
    %2908 = vmatprep.mubr.bf16.mxu0 %v2721
    %2909 = vmatmul.mubr.bf16.gmra.mrb[0].mxu0 %v2572
    %v2910 = vpop.f32.mrb[0].mxu0
    %v2911 = vadd.f32 0.0, %v2910
    %v2912 = vpop.f32.mrb[0].mxu0
    %v2913 = vpop.f32.mrb[0].mxu0
    %v2914 = vadd.f32 0.0, %v2913
    %v2915 = vpop.f32.mrb[0].mxu0
    %2916 = vmatprep.mubr.bf16.mxu0 %v2724
    %2917 = vmatmul.mubr.bf16.gmra.mrb[0].mxu0 %v2574
    %v2918 = vpop.f32.mrb[0].mxu0
    %v2919 = vadd.f32 0.0, %v2918
    %v2920 = vpop.f32.mrb[0].mxu0
    %v2921 = vpop.f32.mrb[0].mxu0
    %v2922 = vadd.f32 0.0, %v2921
    %v2923 = vpop.f32.mrb[0].mxu0
    %2924 = vmatprep.mubr.bf16.mxu0 %v2727
    %2925 = vmatmul.mubr.bf16.gmra.mrb[0].mxu0 %v2576
    %v2926 = vpop.f32.mrb[0].mxu0
    %v2927 = vadd.f32 0.0, %v2926
    %v2928 = vpop.f32.mrb[0].mxu0
    %v2929 = vpop.f32.mrb[0].mxu0
    %v2930 = vadd.f32 0.0, %v2929
    %v2931 = vpop.f32.mrb[0].mxu0
    %2932 = vmatprep.mubr.bf16.mxu0 %v2730
    %2933 = vmatmul.mubr.bf16.gmra.mrb[0].mxu0 %v2578
    %v2934 = vpop.f32.mrb[0].mxu0
    %v2935 = vadd.f32 0.0, %v2934
    %v2936 = vpop.f32.mrb[0].mxu0
    %v2937 = vpop.f32.mrb[0].mxu0
    %v2938 = vadd.f32 0.0, %v2937
    %v2939 = vpop.f32.mrb[0].mxu0
    %2940 = vmatprep.mubr.bf16.mxu0 %v2733
    %2941 = vmatmul.mubr.bf16.gmra.mrb[0].mxu0 %v2580
    %v2942 = vpop.f32.mrb[0].mxu0
    %v2943 = vadd.f32 0.0, %v2942
    %v2944 = vpop.f32.mrb[0].mxu0
    %v2945 = vpop.f32.mrb[0].mxu0
    %v2946 = vadd.f32 0.0, %v2945
    %v2947 = vpop.f32.mrb[0].mxu0
    %2948 = vmatprep.mubr.bf16.mxu0 %v2736
    %2949 = vmatmul.mubr.bf16.gmra.mrb[0].mxu0 %v2582
    %v2950 = vpop.f32.mrb[0].mxu0
    %v2951 = vadd.f32 0.0, %v2950
    %v2952 = vpop.f32.mrb[0].mxu0
    %v2953 = vpop.f32.mrb[0].mxu0
    %v2954 = vadd.f32 0.0, %v2953
    %v2955 = vpop.f32.mrb[0].mxu0
    %2956 = vmatprep.mubr.bf16.mxu0 %v2739
    %2957 = vmatmul.mubr.bf16.gmra.mrb[0].mxu0 %v2584
    %v2958 = vpop.f32.mrb[0].mxu0
    %v2959 = vadd.f32 0.0, %v2958
    %v2960 = vpop.f32.mrb[0].mxu0
    %v2961 = vpop.f32.mrb[0].mxu0
    %v2962 = vadd.f32 0.0, %v2961
    %v2963 = vpop.f32.mrb[0].mxu0
    %2964 = vmatprep.mubr.bf16.mxu0 %v2742
    %2965 = vmatmul.mubr.bf16.gmra.mrb[0].mxu0 %v2586
    %v2966 = vpop.f32.mrb[0].mxu0
    %v2967 = vadd.f32 0.0, %v2966
    %v2968 = vpop.f32.mrb[0].mxu0
    %v2969 = vpop.f32.mrb[0].mxu0
    %v2970 = vadd.f32 0.0, %v2969
    %v2971 = vpop.f32.mrb[0].mxu0
    %2972 = vmatprep.mubr.bf16.mxu0 %v2745
    %2973 = vmatmul.mubr.bf16.gmra.mrb[0].mxu0 %v2588
    %v2974 = vpop.f32.mrb[0].mxu0
    %v2975 = vadd.f32 0.0, %v2974
    %v2976 = vpop.f32.mrb[0].mxu0
    %v2977 = vpop.f32.mrb[0].mxu0
    %v2978 = vadd.f32 0.0, %v2977
    %v2979 = vpop.f32.mrb[0].mxu0
    %2980 = vmatprep.mubr.bf16.mxu0 %v2748
    %2981 = vmatmul.mubr.bf16.gmra.mrb[0].mxu0 %v2590
    %v2982 = vpop.f32.mrb[0].mxu0
    %v2983 = vadd.f32 0.0, %v2982
    %v2984 = vpop.f32.mrb[0].mxu0
    %v2985 = vpop.f32.mrb[0].mxu0
    %v2986 = vadd.f32 0.0, %v2985
    %v2987 = vpop.f32.mrb[0].mxu0
    %2988 = vmatprep.mubr.bf16.mxu0 %v2751
    %2989 = vmatmul.mubr.bf16.gmra.mrb[0].mxu0 %v2592
    %v2990 = vpop.f32.mrb[0].mxu0
    %v2991 = vadd.f32 0.0, %v2990
    %v2992 = vpop.f32.mrb[0].mxu0
    %v2993 = vpop.f32.mrb[0].mxu0
    %v2994 = vadd.f32 0.0, %v2993
    %v2995 = vpop.f32.mrb[0].mxu0
    %2996 = vmatprep.mubr.bf16.mxu0 %v2754
    %2997 = vmatmul.mubr.bf16.gmra.mrb[0].mxu0 %v2594
    %v2998 = vpop.f32.mrb[0].mxu0
    %v2999 = vadd.f32 0.0, %v2998
    %v3000 = vpop.f32.mrb[0].mxu0
    %v3001 = vpop.f32.mrb[0].mxu0
    %v3002 = vadd.f32 0.0, %v3001
    %v3003 = vpop.f32.mrb[0].mxu0
    %3004 = vmatprep.mubr.bf16.mxu0 %v2757
    %3005 = vmatmul.mubr.bf16.gmra.mrb[0].mxu0 %v2596
    %v3006 = vpop.f32.mrb[0].mxu0
    %v3007 = vadd.f32 0.0, %v3006
    %v3008 = vpop.f32.mrb[0].mxu0
    %v3009 = vpop.f32.mrb[0].mxu0
    %v3010 = vadd.f32 0.0, %v3009
    %v3011 = vpop.f32.mrb[0].mxu0
    %3012 = vmatprep.mubr.bf16.mxu0 %v2760
    %3013 = vmatmul.mubr.bf16.gmra.mrb[0].mxu0 %v2598
    %v3014 = vpop.f32.mrb[0].mxu0
    %v3015 = vadd.f32 0.0, %v3014
    %v3016 = vpop.f32.mrb[0].mxu0
    %v3017 = vpop.f32.mrb[0].mxu0
    %v3018 = vadd.f32 0.0, %v3017
    %v3019 = vpop.f32.mrb[0].mxu0
    %3020 = vmatprep.mubr.bf16.mxu0 %v2763
    %3021 = vmatmul.mubr.bf16.gmra.mrb[0].mxu0 %v2600
    %v3022 = vpop.f32.mrb[0].mxu0
    %v3023 = vadd.f32 0.0, %v3022
    %v3024 = vpop.f32.mrb[0].mxu0
    %v3025 = vpop.f32.mrb[0].mxu0
    %v3026 = vadd.f32 0.0, %v3025
    %v3027 = vpop.f32.mrb[0].mxu0
    %3028 = vmatprep.mubr.bf16.mxu0 %v2766
    %3029 = vmatmul.mubr.bf16.gmra.mrb[0].mxu0 %v2602
    %v3030 = vpop.f32.mrb[0].mxu0
    %v3031 = vadd.f32 0.0, %v3030
    %v3032 = vpop.f32.mrb[0].mxu0
    %v3033 = vpop.f32.mrb[0].mxu0
    %v3034 = vadd.f32 0.0, %v3033
    %v3035 = vpop.f32.mrb[0].mxu0
    %3036 = vmatprep.mubr.bf16.mxu0 %v2769
    %3037 = vmatmul.mubr.bf16.gmra.mrb[0].mxu0 %v2604
    %v3038 = vpop.f32.mrb[0].mxu0
    %v3039 = vadd.f32 0.0, %v3038
    %v3040 = vpop.f32.mrb[0].mxu0
    %v3041 = vpop.f32.mrb[0].mxu0
    %v3042 = vadd.f32 0.0, %v3041
    %v3043 = vpop.f32.mrb[0].mxu0
    %3044 = vmatprep.mubr.bf16.mxu0 %v2772
    %3045 = vmatmul.mubr.bf16.gmra.mrb[0].mxu0 %v2606
    %v3046 = vpop.f32.mrb[0].mxu0
    %v3047 = vadd.f32 0.0, %v3046
    %v3048 = vpop.f32.mrb[0].mxu0
    %v3049 = vpop.f32.mrb[0].mxu0
    %v3050 = vadd.f32 0.0, %v3049
    %v3051 = vpop.f32.mrb[0].mxu0
    %3052 = vmatprep.mubr.bf16.mxu0 %v2775
    %3053 = vmatmul.mubr.bf16.gmra.mrb[0].mxu0 %v2608
    %v3054 = vpop.f32.mrb[0].mxu0
    %v3055 = vadd.f32 0.0, %v3054
    %v3056 = vpop.f32.mrb[0].mxu0
    %v3057 = vpop.f32.mrb[0].mxu0
    %v3058 = vadd.f32 0.0, %v3057
    %v3059 = vpop.f32.mrb[0].mxu0
    %3060 = vmatprep.mubr.bf16.mxu0 %v2778
    %3061 = vmatmul.mubr.bf16.gmra.mrb[0].mxu0 %v2610
    %v3062 = vpop.f32.mrb[0].mxu0
    %v3063 = vadd.f32 0.0, %v3062
    %v3064 = vpop.f32.mrb[0].mxu0
    %v3065 = vpop.f32.mrb[0].mxu0
    %v3066 = vadd.f32 0.0, %v3065
    %v3067 = vpop.f32.mrb[0].mxu0
    %3068 = vdwg.mxu0
    %v3069 = vld [vmem:[%s2] sm:$0x1]
    %v3071 = vlaneseq
    %v3072 = vshrl.u32 %v3071, 7
    %v3073 = vsub.s32 0, %v3072
    %v3074 = vrot.slane %v3069, %v3073
    %v3076 = vadd.f32 %v2815, %v3074
    %v3077 = vadd.f32 %v2818, %v3074
    %v3078 = vadd.f32 %v2823, %v3074
    %v3079 = vadd.f32 %v2826, %v3074
    %v3080 = vadd.f32 %v2831, %v3074
    %v3081 = vadd.f32 %v2834, %v3074
    %v3082 = vadd.f32 %v2839, %v3074
    %v3083 = vadd.f32 %v2842, %v3074
    %v3084 = vadd.f32 %v2847, %v3074
    %v3085 = vadd.f32 %v2850, %v3074
    %v3086 = vadd.f32 %v2855, %v3074
    %v3087 = vadd.f32 %v2858, %v3074
    %v3088 = vadd.f32 %v2863, %v3074
    %v3089 = vadd.f32 %v2866, %v3074
    %v3090 = vadd.f32 %v2871, %v3074
    %v3091 = vadd.f32 %v2874, %v3074
    %v3092 = vadd.f32 %v2879, %v3074
    %v3093 = vadd.f32 %v2882, %v3074
    %v3094 = vadd.f32 %v2887, %v3074
    %v3095 = vadd.f32 %v2890, %v3074
    %v3096 = vadd.f32 %v2895, %v3074
    %v3097 = vadd.f32 %v2898, %v3074
    %v3098 = vadd.f32 %v2903, %v3074
    %v3099 = vadd.f32 %v2906, %v3074
    %v3100 = vadd.f32 %v2911, %v3074
    %v3101 = vadd.f32 %v2914, %v3074
    %v3102 = vadd.f32 %v2919, %v3074
    %v3103 = vadd.f32 %v2922, %v3074
    %v3104 = vadd.f32 %v2927, %v3074
    %v3105 = vadd.f32 %v2930, %v3074
    %v3106 = vadd.f32 %v2935, %v3074
    %v3107 = vadd.f32 %v2938, %v3074
    %v3108 = vadd.f32 %v2943, %v3074
    %v3109 = vadd.f32 %v2946, %v3074
    %v3110 = vadd.f32 %v2951, %v3074
    %v3111 = vadd.f32 %v2954, %v3074
    %v3112 = vadd.f32 %v2959, %v3074
    %v3113 = vadd.f32 %v2962, %v3074
    %v3114 = vadd.f32 %v2967, %v3074
    %v3115 = vadd.f32 %v2970, %v3074
    %v3116 = vadd.f32 %v2975, %v3074
    %v3117 = vadd.f32 %v2978, %v3074
    %v3118 = vadd.f32 %v2983, %v3074
    %v3119 = vadd.f32 %v2986, %v3074
    %v3120 = vadd.f32 %v2991, %v3074
    %v3121 = vadd.f32 %v2994, %v3074
    %v3122 = vadd.f32 %v2999, %v3074
    %v3123 = vadd.f32 %v3002, %v3074
    %v3124 = vadd.f32 %v3007, %v3074
    %v3125 = vadd.f32 %v3010, %v3074
    %v3126 = vadd.f32 %v3015, %v3074
    %v3127 = vadd.f32 %v3018, %v3074
    %v3128 = vadd.f32 %v3023, %v3074
    %v3129 = vadd.f32 %v3026, %v3074
    %v3130 = vadd.f32 %v3031, %v3074
    %v3131 = vadd.f32 %v3034, %v3074
    %v3132 = vadd.f32 %v3039, %v3074
    %v3133 = vadd.f32 %v3042, %v3074
    %v3134 = vadd.f32 %v3047, %v3074
    %v3135 = vadd.f32 %v3050, %v3074
    %v3136 = vadd.f32 %v3055, %v3074
    %v3137 = vadd.f32 %v3058, %v3074
    %v3138 = vadd.f32 %v3063, %v3074
    %v3139 = vadd.f32 %v3066, %v3074
    %v3140 = vstv %s159
    %v3141 = vmul.f32 %v3076, %v3140
    %v3142 = vmul.f32 %v3077, %v3140
    %v3143 = vmul.f32 %v3078, %v3140
    %v3144 = vmul.f32 %v3079, %v3140
    %v3145 = vmul.f32 %v3080, %v3140
    %v3146 = vmul.f32 %v3081, %v3140
    %v3147 = vmul.f32 %v3082, %v3140
    %v3148 = vmul.f32 %v3083, %v3140
    %v3149 = vmul.f32 %v3084, %v3140
    %v3150 = vmul.f32 %v3085, %v3140
    %v3151 = vmul.f32 %v3086, %v3140
    %v3152 = vmul.f32 %v3087, %v3140
    %v3153 = vmul.f32 %v3088, %v3140
    %v3154 = vmul.f32 %v3089, %v3140
    %v3155 = vmul.f32 %v3090, %v3140
    %v3156 = vmul.f32 %v3091, %v3140
    %v3157 = vmul.f32 %v3092, %v3140
    %v3158 = vmul.f32 %v3093, %v3140
    %v3159 = vmul.f32 %v3094, %v3140
    %v3160 = vmul.f32 %v3095, %v3140
    %v3161 = vmul.f32 %v3096, %v3140
    %v3162 = vmul.f32 %v3097, %v3140
    %v3163 = vmul.f32 %v3098, %v3140
    %v3164 = vmul.f32 %v3099, %v3140
    %v3165 = vmul.f32 %v3100, %v3140
    %v3166 = vmul.f32 %v3101, %v3140
    %v3167 = vmul.f32 %v3102, %v3140
    %v3168 = vmul.f32 %v3103, %v3140
    %v3169 = vmul.f32 %v3104, %v3140
    %v3170 = vmul.f32 %v3105, %v3140
    %v3171 = vmul.f32 %v3106, %v3140
    %v3172 = vmul.f32 %v3107, %v3140
    %v3173 = vmul.f32 %v3108, %v3140
    %v3174 = vmul.f32 %v3109, %v3140
    %v3175 = vmul.f32 %v3110, %v3140
    %v3176 = vmul.f32 %v3111, %v3140
    %v3177 = vmul.f32 %v3112, %v3140
    %v3178 = vmul.f32 %v3113, %v3140
    %v3179 = vmul.f32 %v3114, %v3140
    %v3180 = vmul.f32 %v3115, %v3140
    %v3181 = vmul.f32 %v3116, %v3140
    %v3182 = vmul.f32 %v3117, %v3140
    %v3183 = vmul.f32 %v3118, %v3140
    %v3184 = vmul.f32 %v3119, %v3140
    %v3185 = vmul.f32 %v3120, %v3140
    %v3186 = vmul.f32 %v3121, %v3140
    %v3187 = vmul.f32 %v3122, %v3140
    %v3188 = vmul.f32 %v3123, %v3140
    %v3189 = vmul.f32 %v3124, %v3140
    %v3190 = vmul.f32 %v3125, %v3140
    %v3191 = vmul.f32 %v3126, %v3140
    %v3192 = vmul.f32 %v3127, %v3140
    %v3193 = vmul.f32 %v3128, %v3140
    %v3194 = vmul.f32 %v3129, %v3140
    %v3195 = vmul.f32 %v3130, %v3140
    %v3196 = vmul.f32 %v3131, %v3140
    %v3197 = vmul.f32 %v3132, %v3140
    %v3198 = vmul.f32 %v3133, %v3140
    %v3199 = vmul.f32 %v3134, %v3140
    %v3200 = vmul.f32 %v3135, %v3140
    %v3201 = vmul.f32 %v3136, %v3140
    %v3202 = vmul.f32 %v3137, %v3140
    %v3203 = vmul.f32 %v3138, %v3140
    %v3204 = vmul.f32 %v3139, %v3140
    %v3205 = vadd.f32 %v3141, %v164
    %v3206 = vadd.f32 %v3142, %v165
    %v3207 = vadd.f32 %v3143, %v166
    %v3208 = vadd.f32 %v3144, %v167
    %v3209 = vadd.f32 %v3145, %v168
    %v3210 = vadd.f32 %v3146, %v169
    %v3211 = vadd.f32 %v3147, %v170
    %v3212 = vadd.f32 %v3148, %v171
    %v3213 = vadd.f32 %v3149, %v172
    %v3214 = vadd.f32 %v3150, %v173
    %v3215 = vadd.f32 %v3151, %v174
    %v3216 = vadd.f32 %v3152, %v175
    %v3217 = vadd.f32 %v3153, %v176
    %v3218 = vadd.f32 %v3154, %v177
    %v3219 = vadd.f32 %v3155, %v178
    %v3220 = vadd.f32 %v3156, %v179
    %v3221 = vadd.f32 %v3157, %v180
    %v3222 = vadd.f32 %v3158, %v181
    %v3223 = vadd.f32 %v3159, %v182
    %v3224 = vadd.f32 %v3160, %v183
    %v3225 = vadd.f32 %v3161, %v184
    %v3226 = vadd.f32 %v3162, %v185
    %v3227 = vadd.f32 %v3163, %v186
    %v3228 = vadd.f32 %v3164, %v187
    %v3229 = vadd.f32 %v3165, %v188
    %v3230 = vadd.f32 %v3166, %v189
    %v3231 = vadd.f32 %v3167, %v190
    %v3232 = vadd.f32 %v3168, %v191
    %v3233 = vadd.f32 %v3169, %v192
    %v3234 = vadd.f32 %v3170, %v193
    %v3235 = vadd.f32 %v3171, %v194
    %v3236 = vadd.f32 %v3172, %v195
    %v3237 = vadd.f32 %v3173, %v196
    %v3238 = vadd.f32 %v3174, %v197
    %v3239 = vadd.f32 %v3175, %v198
    %v3240 = vadd.f32 %v3176, %v199
    %v3241 = vadd.f32 %v3177, %v200
    %v3242 = vadd.f32 %v3178, %v201
    %v3243 = vadd.f32 %v3179, %v202
    %v3244 = vadd.f32 %v3180, %v203
    %v3245 = vadd.f32 %v3181, %v204
    %v3246 = vadd.f32 %v3182, %v205
    %v3247 = vadd.f32 %v3183, %v206
    %v3248 = vadd.f32 %v3184, %v207
    %v3249 = vadd.f32 %v3185, %v208
    %v3250 = vadd.f32 %v3186, %v209
    %v3251 = vadd.f32 %v3187, %v210
    %v3252 = vadd.f32 %v3188, %v211
    %v3253 = vadd.f32 %v3189, %v212
    %v3254 = vadd.f32 %v3190, %v213
    %v3255 = vadd.f32 %v3191, %v214
    %v3256 = vadd.f32 %v3192, %v215
    %v3257 = vadd.f32 %v3193, %v216
    %v3258 = vadd.f32 %v3194, %v217
    %v3259 = vadd.f32 %v3195, %v218
    %v3260 = vadd.f32 %v3196, %v219
    %v3261 = vadd.f32 %v3197, %v220
    %v3262 = vadd.f32 %v3198, %v221
    %v3263 = vadd.f32 %v3199, %v222
    %v3264 = vadd.f32 %v3200, %v223
    %v3265 = vadd.f32 %v3201, %v224
    %v3266 = vadd.f32 %v3202, %v225
    %v3267 = vadd.f32 %v3203, %v226
    %v3268 = vadd.f32 %v3204, %v227
    %vm3269 = vcmp.ge.f32.partialorder %v3205, 0.0
    %vm3270 = vcmp.ge.f32.partialorder %v3206, 0.0
    %vm3271 = vcmp.ge.f32.partialorder %v3207, 0.0
    %vm3272 = vcmp.ge.f32.partialorder %v3208, 0.0
    %vm3273 = vcmp.ge.f32.partialorder %v3209, 0.0
    %vm3274 = vcmp.ge.f32.partialorder %v3210, 0.0
    %vm3275 = vcmp.ge.f32.partialorder %v3211, 0.0
    %vm3276 = vcmp.ge.f32.partialorder %v3212, 0.0
    %vm3277 = vcmp.ge.f32.partialorder %v3213, 0.0
    %vm3278 = vcmp.ge.f32.partialorder %v3214, 0.0
    %vm3279 = vcmp.ge.f32.partialorder %v3215, 0.0
    %vm3280 = vcmp.ge.f32.partialorder %v3216, 0.0
    %vm3281 = vcmp.ge.f32.partialorder %v3217, 0.0
    %vm3282 = vcmp.ge.f32.partialorder %v3218, 0.0
    %vm3283 = vcmp.ge.f32.partialorder %v3219, 0.0
    %vm3284 = vcmp.ge.f32.partialorder %v3220, 0.0
    %vm3285 = vcmp.ge.f32.partialorder %v3221, 0.0
    %vm3286 = vcmp.ge.f32.partialorder %v3222, 0.0
    %vm3287 = vcmp.ge.f32.partialorder %v3223, 0.0
    %vm3288 = vcmp.ge.f32.partialorder %v3224, 0.0
    %vm3289 = vcmp.ge.f32.partialorder %v3225, 0.0
    %vm3290 = vcmp.ge.f32.partialorder %v3226, 0.0
    %vm3291 = vcmp.ge.f32.partialorder %v3227, 0.0
    %vm3292 = vcmp.ge.f32.partialorder %v3228, 0.0
    %vm3293 = vcmp.ge.f32.partialorder %v3229, 0.0
    %vm3294 = vcmp.ge.f32.partialorder %v3230, 0.0
    %vm3295 = vcmp.ge.f32.partialorder %v3231, 0.0
    %vm3296 = vcmp.ge.f32.partialorder %v3232, 0.0
    %vm3297 = vcmp.ge.f32.partialorder %v3233, 0.0
    %vm3298 = vcmp.ge.f32.partialorder %v3234, 0.0
    %vm3299 = vcmp.ge.f32.partialorder %v3235, 0.0
    %vm3300 = vcmp.ge.f32.partialorder %v3236, 0.0
    %vm3301 = vcmp.ge.f32.partialorder %v3237, 0.0
    %vm3302 = vcmp.ge.f32.partialorder %v3238, 0.0
    %vm3303 = vcmp.ge.f32.partialorder %v3239, 0.0
    %vm3304 = vcmp.ge.f32.partialorder %v3240, 0.0
    %vm3305 = vcmp.ge.f32.partialorder %v3241, 0.0
    %vm3306 = vcmp.ge.f32.partialorder %v3242, 0.0
    %vm3307 = vcmp.ge.f32.partialorder %v3243, 0.0
    %vm3308 = vcmp.ge.f32.partialorder %v3244, 0.0
    %vm3309 = vcmp.ge.f32.partialorder %v3245, 0.0
    %vm3310 = vcmp.ge.f32.partialorder %v3246, 0.0
    %vm3311 = vcmp.ge.f32.partialorder %v3247, 0.0
    %vm3312 = vcmp.ge.f32.partialorder %v3248, 0.0
    %vm3313 = vcmp.ge.f32.partialorder %v3249, 0.0
    %vm3314 = vcmp.ge.f32.partialorder %v3250, 0.0
    %vm3315 = vcmp.ge.f32.partialorder %v3251, 0.0
    %vm3316 = vcmp.ge.f32.partialorder %v3252, 0.0
    %vm3317 = vcmp.ge.f32.partialorder %v3253, 0.0
    %vm3318 = vcmp.ge.f32.partialorder %v3254, 0.0
    %vm3319 = vcmp.ge.f32.partialorder %v3255, 0.0
    %vm3320 = vcmp.ge.f32.partialorder %v3256, 0.0
    %vm3321 = vcmp.ge.f32.partialorder %v3257, 0.0
    %vm3322 = vcmp.ge.f32.partialorder %v3258, 0.0
    %vm3323 = vcmp.ge.f32.partialorder %v3259, 0.0
    %vm3324 = vcmp.ge.f32.partialorder %v3260, 0.0
    %vm3325 = vcmp.ge.f32.partialorder %v3261, 0.0
    %vm3326 = vcmp.ge.f32.partialorder %v3262, 0.0
    %vm3327 = vcmp.ge.f32.partialorder %v3263, 0.0
    %vm3328 = vcmp.ge.f32.partialorder %v3264, 0.0
    %vm3329 = vcmp.ge.f32.partialorder %v3265, 0.0
    %vm3330 = vcmp.ge.f32.partialorder %v3266, 0.0
    %vm3331 = vcmp.ge.f32.partialorder %v3267, 0.0
    %vm3332 = vcmp.ge.f32.partialorder %v3268, 0.0
    %s3333 = scalar_lea.vmem %s3, 1
    %v3334 = vld [vmem:[%s3333] sm:$0x1]
    %v3336 = vlaneseq
    %v3337 = vshrl.u32 %v3336, 7
    %v3338 = vsub.s32 0, %v3337
    %v3339 = vrot.slane %v3334, %v3338
    %v3341 = vmul.f32 %v3205, %v3339
    %v3342 = vmul.f32 %v3206, %v3339
    %v3343 = vmul.f32 %v3207, %v3339
    %v3344 = vmul.f32 %v3208, %v3339
    %v3345 = vmul.f32 %v3209, %v3339
    %v3346 = vmul.f32 %v3210, %v3339
    %v3347 = vmul.f32 %v3211, %v3339
    %v3348 = vmul.f32 %v3212, %v3339
    %v3349 = vmul.f32 %v3213, %v3339
    %v3350 = vmul.f32 %v3214, %v3339
    %v3351 = vmul.f32 %v3215, %v3339
    %v3352 = vmul.f32 %v3216, %v3339
    %v3353 = vmul.f32 %v3217, %v3339
    %v3354 = vmul.f32 %v3218, %v3339
    %v3355 = vmul.f32 %v3219, %v3339
    %v3356 = vmul.f32 %v3220, %v3339
    %v3357 = vmul.f32 %v3221, %v3339
    %v3358 = vmul.f32 %v3222, %v3339
    %v3359 = vmul.f32 %v3223, %v3339
    %v3360 = vmul.f32 %v3224, %v3339
    %v3361 = vmul.f32 %v3225, %v3339
    %v3362 = vmul.f32 %v3226, %v3339
    %v3363 = vmul.f32 %v3227, %v3339
    %v3364 = vmul.f32 %v3228, %v3339
    %v3365 = vmul.f32 %v3229, %v3339
    %v3366 = vmul.f32 %v3230, %v3339
    %v3367 = vmul.f32 %v3231, %v3339
    %v3368 = vmul.f32 %v3232, %v3339
    %v3369 = vmul.f32 %v3233, %v3339
    %v3370 = vmul.f32 %v3234, %v3339
    %v3371 = vmul.f32 %v3235, %v3339
    %v3372 = vmul.f32 %v3236, %v3339
    %v3373 = vmul.f32 %v3237, %v3339
    %v3374 = vmul.f32 %v3238, %v3339
    %v3375 = vmul.f32 %v3239, %v3339
    %v3376 = vmul.f32 %v3240, %v3339
    %v3377 = vmul.f32 %v3241, %v3339
    %v3378 = vmul.f32 %v3242, %v3339
    %v3379 = vmul.f32 %v3243, %v3339
    %v3380 = vmul.f32 %v3244, %v3339
    %v3381 = vmul.f32 %v3245, %v3339
    %v3382 = vmul.f32 %v3246, %v3339
    %v3383 = vmul.f32 %v3247, %v3339
    %v3384 = vmul.f32 %v3248, %v3339
    %v3385 = vmul.f32 %v3249, %v3339
    %v3386 = vmul.f32 %v3250, %v3339
    %v3387 = vmul.f32 %v3251, %v3339
    %v3388 = vmul.f32 %v3252, %v3339
    %v3389 = vmul.f32 %v3253, %v3339
    %v3390 = vmul.f32 %v3254, %v3339
    %v3391 = vmul.f32 %v3255, %v3339
    %v3392 = vmul.f32 %v3256, %v3339
    %v3393 = vmul.f32 %v3257, %v3339
    %v3394 = vmul.f32 %v3258, %v3339
    %v3395 = vmul.f32 %v3259, %v3339
    %v3396 = vmul.f32 %v3260, %v3339
    %v3397 = vmul.f32 %v3261, %v3339
    %v3398 = vmul.f32 %v3262, %v3339
    %v3399 = vmul.f32 %v3263, %v3339
    %v3400 = vmul.f32 %v3264, %v3339
    %v3401 = vmul.f32 %v3265, %v3339
    %v3402 = vmul.f32 %v3266, %v3339
    %v3403 = vmul.f32 %v3267, %v3339
    %v3404 = vmul.f32 %v3268, %v3339
    %v3405 = vsel %vm3269, %v3205, %v3341
    %v3406 = vsel %vm3270, %v3206, %v3342
    %v3407 = vsel %vm3271, %v3207, %v3343
    %v3408 = vsel %vm3272, %v3208, %v3344
    %v3409 = vsel %vm3273, %v3209, %v3345
    %v3410 = vsel %vm3274, %v3210, %v3346
    %v3411 = vsel %vm3275, %v3211, %v3347
    %v3412 = vsel %vm3276, %v3212, %v3348
    %v3413 = vsel %vm3277, %v3213, %v3349
    %v3414 = vsel %vm3278, %v3214, %v3350
    %v3415 = vsel %vm3279, %v3215, %v3351
    %v3416 = vsel %vm3280, %v3216, %v3352
    %v3417 = vsel %vm3281, %v3217, %v3353
    %v3418 = vsel %vm3282, %v3218, %v3354
    %v3419 = vsel %vm3283, %v3219, %v3355
    %v3420 = vsel %vm3284, %v3220, %v3356
    %v3421 = vsel %vm3285, %v3221, %v3357
    %v3422 = vsel %vm3286, %v3222, %v3358
    %v3423 = vsel %vm3287, %v3223, %v3359
    %v3424 = vsel %vm3288, %v3224, %v3360
    %v3425 = vsel %vm3289, %v3225, %v3361
    %v3426 = vsel %vm3290, %v3226, %v3362
    %v3427 = vsel %vm3291, %v3227, %v3363
    %v3428 = vsel %vm3292, %v3228, %v3364
    %v3429 = vsel %vm3293, %v3229, %v3365
    %v3430 = vsel %vm3294, %v3230, %v3366
    %v3431 = vsel %vm3295, %v3231, %v3367
    %v3432 = vsel %vm3296, %v3232, %v3368
    %v3433 = vsel %vm3297, %v3233, %v3369
    %v3434 = vsel %vm3298, %v3234, %v3370
    %v3435 = vsel %vm3299, %v3235, %v3371
    %v3436 = vsel %vm3300, %v3236, %v3372
    %v3437 = vsel %vm3301, %v3237, %v3373
    %v3438 = vsel %vm3302, %v3238, %v3374
    %v3439 = vsel %vm3303, %v3239, %v3375
    %v3440 = vsel %vm3304, %v3240, %v3376
    %v3441 = vsel %vm3305, %v3241, %v3377
    %v3442 = vsel %vm3306, %v3242, %v3378
    %v3443 = vsel %vm3307, %v3243, %v3379
    %v3444 = vsel %vm3308, %v3244, %v3380
    %v3445 = vsel %vm3309, %v3245, %v3381
    %v3446 = vsel %vm3310, %v3246, %v3382
    %v3447 = vsel %vm3311, %v3247, %v3383
    %v3448 = vsel %vm3312, %v3248, %v3384
    %v3449 = vsel %vm3313, %v3249, %v3385
    %v3450 = vsel %vm3314, %v3250, %v3386
    %v3451 = vsel %vm3315, %v3251, %v3387
    %v3452 = vsel %vm3316, %v3252, %v3388
    %v3453 = vsel %vm3317, %v3253, %v3389
    %v3454 = vsel %vm3318, %v3254, %v3390
    %v3455 = vsel %vm3319, %v3255, %v3391
    %v3456 = vsel %vm3320, %v3256, %v3392
    %v3457 = vsel %vm3321, %v3257, %v3393
    %v3458 = vsel %vm3322, %v3258, %v3394
    %v3459 = vsel %vm3323, %v3259, %v3395
    %v3460 = vsel %vm3324, %v3260, %v3396
    %v3461 = vsel %vm3325, %v3261, %v3397
    %v3462 = vsel %vm3326, %v3262, %v3398
    %v3463 = vsel %vm3327, %v3263, %v3399
    %v3464 = vsel %vm3328, %v3264, %v3400
    %v3465 = vsel %vm3329, %v3265, %v3401
    %v3466 = vsel %vm3330, %v3266, %v3402
    %v3467 = vsel %vm3331, %v3267, %v3403
    %v3468 = vsel %vm3332, %v3268, %v3404
    %3469 = vst.msk [vmem:[%s427 + $0x1] sm:$0xff] %vm49, %v3405
    %3470 = vst.msk [vmem:[%s427 + $0x9] sm:$0xff] %vm49, %v3406
    %3471 = vst.msk [vmem:[%s427 + $0x19] sm:$0xff] %vm49, %v3407
    %3472 = vst.msk [vmem:[%s427 + $0x21] sm:$0xff] %vm49, %v3408
    %3473 = vst.msk [vmem:[%s427 + $0x31] sm:$0xff] %vm49, %v3409
    %3474 = vst.msk [vmem:[%s427 + $0x39] sm:$0xff] %vm49, %v3410
    %3475 = vst.msk [vmem:[%s427 + $0x49] sm:$0xff] %vm49, %v3411
    %3476 = vst.msk [vmem:[%s427 + $0x51] sm:$0xff] %vm49, %v3412
    %3477 = vst.msk [vmem:[%s427 + $0x61] sm:$0xff] %vm49, %v3413
    %3478 = vst.msk [vmem:[%s427 + $0x69] sm:$0xff] %vm49, %v3414
    %3479 = vst.msk [vmem:[%s427 + $0x79] sm:$0xff] %vm49, %v3415
    %3480 = vst.msk [vmem:[%s427 + $0x81] sm:$0xff] %vm49, %v3416
    %3481 = vst.msk [vmem:[%s427 + $0x91] sm:$0xff] %vm49, %v3417
    %3482 = vst.msk [vmem:[%s427 + $0x99] sm:$0xff] %vm49, %v3418
    %3483 = vst.msk [vmem:[%s427 + $0xa9] sm:$0xff] %vm49, %v3419
    %3484 = vst.msk [vmem:[%s427 + $0xb1] sm:$0xff] %vm49, %v3420
    %3485 = vst.msk [vmem:[%s427 + $0xc1] sm:$0xff] %vm49, %v3421
    %3486 = vst.msk [vmem:[%s427 + $0xc9] sm:$0xff] %vm49, %v3422
    %3487 = vst.msk [vmem:[%s427 + $0xd9] sm:$0xff] %vm49, %v3423
    %3488 = vst.msk [vmem:[%s427 + $0xe1] sm:$0xff] %vm49, %v3424
    %3489 = vst.msk [vmem:[%s427 + $0xf1] sm:$0xff] %vm49, %v3425
    %3490 = vst.msk [vmem:[%s427 + $0xf9] sm:$0xff] %vm49, %v3426
    %3491 = vst.msk [vmem:[%s427 + $0x109] sm:$0xff] %vm49, %v3427
    %3492 = vst.msk [vmem:[%s427 + $0x111] sm:$0xff] %vm49, %v3428
    %3493 = vst.msk [vmem:[%s427 + $0x121] sm:$0xff] %vm49, %v3429
    %3494 = vst.msk [vmem:[%s427 + $0x129] sm:$0xff] %vm49, %v3430
    %3495 = vst.msk [vmem:[%s427 + $0x139] sm:$0xff] %vm49, %v3431
    %3496 = vst.msk [vmem:[%s427 + $0x141] sm:$0xff] %vm49, %v3432
    %3497 = vst.msk [vmem:[%s427 + $0x151] sm:$0xff] %vm49, %v3433
    %3498 = vst.msk [vmem:[%s427 + $0x159] sm:$0xff] %vm49, %v3434
    %3499 = vst.msk [vmem:[%s427 + $0x169] sm:$0xff] %vm49, %v3435
    %3500 = vst.msk [vmem:[%s427 + $0x171] sm:$0xff] %vm49, %v3436
    %3501 = vst.msk [vmem:[%s427 + $0x1b1] sm:$0xff] %vm49, %v3437
    %3502 = vst.msk [vmem:[%s427 + $0x1b9] sm:$0xff] %vm49, %v3438
    %3503 = vst.msk [vmem:[%s427 + $0x1c9] sm:$0xff] %vm49, %v3439
    %3504 = vst.msk [vmem:[%s427 + $0x1d1] sm:$0xff] %vm49, %v3440
    %3505 = vst.msk [vmem:[%s427 + $0x1e1] sm:$0xff] %vm49, %v3441
    %3506 = vst.msk [vmem:[%s427 + $0x1e9] sm:$0xff] %vm49, %v3442
    %3507 = vst.msk [vmem:[%s427 + $0x1f9] sm:$0xff] %vm49, %v3443
    %3508 = vst.msk [vmem:[%s427 + $0x201] sm:$0xff] %vm49, %v3444
    %3509 = vst.msk [vmem:[%s427 + $0x211] sm:$0xff] %vm49, %v3445
    %3510 = vst.msk [vmem:[%s427 + $0x219] sm:$0xff] %vm49, %v3446
    %3511 = vst.msk [vmem:[%s427 + $0x229] sm:$0xff] %vm49, %v3447
    %3512 = vst.msk [vmem:[%s427 + $0x231] sm:$0xff] %vm49, %v3448
    %3513 = vst.msk [vmem:[%s427 + $0x241] sm:$0xff] %vm49, %v3449
    %3514 = vst.msk [vmem:[%s427 + $0x249] sm:$0xff] %vm49, %v3450
    %3515 = vst.msk [vmem:[%s427 + $0x259] sm:$0xff] %vm49, %v3451
    %3516 = vst.msk [vmem:[%s427 + $0x261] sm:$0xff] %vm49, %v3452
    %3517 = vst.msk [vmem:[%s427 + $0x271] sm:$0xff] %vm49, %v3453
    %3518 = vst.msk [vmem:[%s427 + $0x279] sm:$0xff] %vm49, %v3454
    %3519 = vst.msk [vmem:[%s427 + $0x289] sm:$0xff] %vm49, %v3455
    %3520 = vst.msk [vmem:[%s427 + $0x291] sm:$0xff] %vm49, %v3456
    %3521 = vst.msk [vmem:[%s427 + $0x2a1] sm:$0xff] %vm49, %v3457
    %3522 = vst.msk [vmem:[%s427 + $0x2a9] sm:$0xff] %vm49, %v3458
    %3523 = vst.msk [vmem:[%s427 + $0x2b9] sm:$0xff] %vm49, %v3459
    %3524 = vst.msk [vmem:[%s427 + $0x2c1] sm:$0xff] %vm49, %v3460
    %3525 = vst.msk [vmem:[%s427 + $0x2d1] sm:$0xff] %vm49, %v3461
    %3526 = vst.msk [vmem:[%s427 + $0x2d9] sm:$0xff] %vm49, %v3462
    %3527 = vst.msk [vmem:[%s427 + $0x2e9] sm:$0xff] %vm49, %v3463
    %3528 = vst.msk [vmem:[%s427 + $0x2f1] sm:$0xff] %vm49, %v3464
    %3529 = vst.msk [vmem:[%s427 + $0x301] sm:$0xff] %vm49, %v3465
    %3530 = vst.msk [vmem:[%s427 + $0x309] sm:$0xff] %vm49, %v3466
    %3531 = vst.msk [vmem:[%s427 + $0x319] sm:$0xff] %vm49, %v3467
    %3532 = vst.msk [vmem:[%s427 + $0x321] sm:$0xff] %vm49, %v3468
    %v3533 = vld [vmem:[#allocation2] sm:$0xff]
    %v3534 = vld [vmem:[#allocation2 + $0x8] sm:$0xff]
    %v3535 = vld [vmem:[#allocation2 + $0x18] sm:$0xff]
    %v3536 = vld [vmem:[#allocation2 + $0x20] sm:$0xff]
    %v3537 = vld [vmem:[#allocation2 + $0x30] sm:$0xff]
    %v3538 = vld [vmem:[#allocation2 + $0x38] sm:$0xff]
    %v3539 = vld [vmem:[#allocation2 + $0x48] sm:$0xff]
    %v3540 = vld [vmem:[#allocation2 + $0x50] sm:$0xff]
    %v3541 = vld [vmem:[#allocation2 + $0x60] sm:$0xff]
    %v3542 = vld [vmem:[#allocation2 + $0x68] sm:$0xff]
    %v3543 = vld [vmem:[#allocation2 + $0x78] sm:$0xff]
    %v3544 = vld [vmem:[#allocation2 + $0x80] sm:$0xff]
    %v3545 = vld [vmem:[#allocation2 + $0x90] sm:$0xff]
    %v3546 = vld [vmem:[#allocation2 + $0x98] sm:$0xff]
    %v3547 = vld [vmem:[#allocation2 + $0xa8] sm:$0xff]
    %v3548 = vld [vmem:[#allocation2 + $0xb0] sm:$0xff]
    %v3549 = vld [vmem:[#allocation2 + $0xc0] sm:$0xff]
    %v3550 = vld [vmem:[#allocation2 + $0xc8] sm:$0xff]
    %v3551 = vld [vmem:[#allocation2 + $0xd8] sm:$0xff]
    %v3552 = vld [vmem:[#allocation2 + $0xe0] sm:$0xff]
    %v3553 = vld [vmem:[#allocation2 + $0xf0] sm:$0xff]
    %v3554 = vld [vmem:[#allocation2 + $0xf8] sm:$0xff]
    %v3555 = vld [vmem:[#allocation2 + $0x108] sm:$0xff]
    %v3556 = vld [vmem:[#allocation2 + $0x110] sm:$0xff]
    %v3557 = vld [vmem:[#allocation2 + $0x120] sm:$0xff]
    %v3558 = vld [vmem:[#allocation2 + $0x128] sm:$0xff]
    %v3559 = vld [vmem:[#allocation2 + $0x138] sm:$0xff]
    %v3560 = vld [vmem:[#allocation2 + $0x140] sm:$0xff]
    %v3561 = vld [vmem:[#allocation2 + $0x150] sm:$0xff]
    %v3562 = vld [vmem:[#allocation2 + $0x158] sm:$0xff]
    %v3563 = vld [vmem:[#allocation2 + $0x168] sm:$0xff]
    %v3564 = vld [vmem:[#allocation2 + $0x170] sm:$0xff]
    %v3565 = vld [vmem:[#allocation2 + $0x1b0] sm:$0xff]
    %v3566 = vld [vmem:[#allocation2 + $0x1b8] sm:$0xff]
    %v3567 = vld [vmem:[#allocation2 + $0x1c8] sm:$0xff]
    %v3568 = vld [vmem:[#allocation2 + $0x1d0] sm:$0xff]
    %v3569 = vld [vmem:[#allocation2 + $0x1e0] sm:$0xff]
    %v3570 = vld [vmem:[#allocation2 + $0x1e8] sm:$0xff]
    %v3571 = vld [vmem:[#allocation2 + $0x1f8] sm:$0xff]
    %v3572 = vld [vmem:[#allocation2 + $0x200] sm:$0xff]
    %v3573 = vld [vmem:[#allocation2 + $0x210] sm:$0xff]
    %v3574 = vld [vmem:[#allocation2 + $0x218] sm:$0xff]
    %v3575 = vld [vmem:[#allocation2 + $0x228] sm:$0xff]
    %v3576 = vld [vmem:[#allocation2 + $0x230] sm:$0xff]
    %v3577 = vld [vmem:[#allocation2 + $0x240] sm:$0xff]
    %v3578 = vld [vmem:[#allocation2 + $0x248] sm:$0xff]
    %v3579 = vld [vmem:[#allocation2 + $0x258] sm:$0xff]
    %v3580 = vld [vmem:[#allocation2 + $0x260] sm:$0xff]
    %v3581 = vld [vmem:[#allocation2 + $0x270] sm:$0xff]
    %v3582 = vld [vmem:[#allocation2 + $0x278] sm:$0xff]
    %v3583 = vld [vmem:[#allocation2 + $0x288] sm:$0xff]
    %v3584 = vld [vmem:[#allocation2 + $0x290] sm:$0xff]
    %v3585 = vld [vmem:[#allocation2 + $0x2a0] sm:$0xff]
    %v3586 = vld [vmem:[#allocation2 + $0x2a8] sm:$0xff]
    %v3587 = vld [vmem:[#allocation2 + $0x2b8] sm:$0xff]
    %v3588 = vld [vmem:[#allocation2 + $0x2c0] sm:$0xff]
    %v3589 = vld [vmem:[#allocation2 + $0x2d0] sm:$0xff]
    %v3590 = vld [vmem:[#allocation2 + $0x2d8] sm:$0xff]
    %v3591 = vld [vmem:[#allocation2 + $0x2e8] sm:$0xff]
    %v3592 = vld [vmem:[#allocation2 + $0x2f0] sm:$0xff]
    %v3593 = vld [vmem:[#allocation2 + $0x300] sm:$0xff]
    %v3594 = vld [vmem:[#allocation2 + $0x308] sm:$0xff]
    %v3595 = vld [vmem:[#allocation2 + $0x318] sm:$0xff]
    %v3596 = vld [vmem:[#allocation2 + $0x320] sm:$0xff]
    %v3597 = vpack.c.bf16 %v3534, %v3533
    %v3598 = vpack.c.bf16 %v3536, %v3535
    %v3599 = vpack.c.bf16 %v3538, %v3537
    %v3600 = vpack.c.bf16 %v3540, %v3539
    %v3601 = vpack.c.bf16 %v3542, %v3541
    %v3602 = vpack.c.bf16 %v3544, %v3543
    %v3603 = vpack.c.bf16 %v3546, %v3545
    %v3604 = vpack.c.bf16 %v3548, %v3547
    %v3605 = vpack.c.bf16 %v3550, %v3549
    %v3606 = vpack.c.bf16 %v3552, %v3551
    %v3607 = vpack.c.bf16 %v3554, %v3553
    %v3608 = vpack.c.bf16 %v3556, %v3555
    %v3609 = vpack.c.bf16 %v3558, %v3557
    %v3610 = vpack.c.bf16 %v3560, %v3559
    %v3611 = vpack.c.bf16 %v3562, %v3561
    %v3612 = vpack.c.bf16 %v3564, %v3563
    %v3613 = vpack.c.bf16 %v3566, %v3565
    %v3614 = vpack.c.bf16 %v3568, %v3567
    %v3615 = vpack.c.bf16 %v3570, %v3569
    %v3616 = vpack.c.bf16 %v3572, %v3571
    %v3617 = vpack.c.bf16 %v3574, %v3573
    %v3618 = vpack.c.bf16 %v3576, %v3575
    %v3619 = vpack.c.bf16 %v3578, %v3577
    %v3620 = vpack.c.bf16 %v3580, %v3579
    %v3621 = vpack.c.bf16 %v3582, %v3581
    %v3622 = vpack.c.bf16 %v3584, %v3583
    %v3623 = vpack.c.bf16 %v3586, %v3585
    %v3624 = vpack.c.bf16 %v3588, %v3587
    %v3625 = vpack.c.bf16 %v3590, %v3589
    %v3626 = vpack.c.bf16 %v3592, %v3591
    %v3627 = vpack.c.bf16 %v3594, %v3593
    %v3628 = vpack.c.bf16 %v3596, %v3595
    %3629 = vst.msk [vmem:[#allocation3] sm:$0xff] %vm49, %v3597
    %3630 = vst.msk [vmem:[#allocation3 + $0x10] sm:$0xff] %vm49, %v3598
    %3631 = vst.msk [vmem:[#allocation3 + $0x20] sm:$0xff] %vm49, %v3599
    %3632 = vst.msk [vmem:[#allocation3 + $0x30] sm:$0xff] %vm49, %v3600
    %3633 = vst.msk [vmem:[#allocation3 + $0x40] sm:$0xff] %vm49, %v3601
    %3634 = vst.msk [vmem:[#allocation3 + $0x50] sm:$0xff] %vm49, %v3602
    %3635 = vst.msk [vmem:[#allocation3 + $0x60] sm:$0xff] %vm49, %v3603
    %3636 = vst.msk [vmem:[#allocation3 + $0x70] sm:$0xff] %vm49, %v3604
    %3637 = vst.msk [vmem:[#allocation3 + $0x80] sm:$0xff] %vm49, %v3605
    %3638 = vst.msk [vmem:[#allocation3 + $0x90] sm:$0xff] %vm49, %v3606
    %3639 = vst.msk [vmem:[#allocation3 + $0xa0] sm:$0xff] %vm49, %v3607
    %3640 = vst.msk [vmem:[#allocation3 + $0xb0] sm:$0xff] %vm49, %v3608
    %3641 = vst.msk [vmem:[#allocation3 + $0xc0] sm:$0xff] %vm49, %v3609
    %3642 = vst.msk [vmem:[#allocation3 + $0xd0] sm:$0xff] %vm49, %v3610
    %3643 = vst.msk [vmem:[#allocation3 + $0xe0] sm:$0xff] %vm49, %v3611
    %3644 = vst.msk [vmem:[#allocation3 + $0xf0] sm:$0xff] %vm49, %v3612
    %3645 = vst.msk [vmem:[#allocation3 + $0x100] sm:$0xff] %vm49, %v3613
    %3646 = vst.msk [vmem:[#allocation3 + $0x110] sm:$0xff] %vm49, %v3614
    %3647 = vst.msk [vmem:[#allocation3 + $0x120] sm:$0xff] %vm49, %v3615
    %3648 = vst.msk [vmem:[#allocation3 + $0x130] sm:$0xff] %vm49, %v3616
    %3649 = vst.msk [vmem:[#allocation3 + $0x140] sm:$0xff] %vm49, %v3617
    %3650 = vst.msk [vmem:[#allocation3 + $0x150] sm:$0xff] %vm49, %v3618
    %3651 = vst.msk [vmem:[#allocation3 + $0x160] sm:$0xff] %vm49, %v3619
    %3652 = vst.msk [vmem:[#allocation3 + $0x170] sm:$0xff] %vm49, %v3620
    %3653 = vst.msk [vmem:[#allocation3 + $0x180] sm:$0xff] %vm49, %v3621
    %3654 = vst.msk [vmem:[#allocation3 + $0x190] sm:$0xff] %vm49, %v3622
    %3655 = vst.msk [vmem:[#allocation3 + $0x1a0] sm:$0xff] %vm49, %v3623
    %3656 = vst.msk [vmem:[#allocation3 + $0x1b0] sm:$0xff] %vm49, %v3624
    %3657 = vst.msk [vmem:[#allocation3 + $0x1c0] sm:$0xff] %vm49, %v3625
    %3658 = vst.msk [vmem:[#allocation3 + $0x1d0] sm:$0xff] %vm49, %v3626
    %3659 = vst.msk [vmem:[#allocation3 + $0x1e0] sm:$0xff] %vm49, %v3627
    %3660 = vst.msk [vmem:[#allocation3 + $0x1f0] sm:$0xff] %vm49, %v3628
    %v3661 = vld [vmem:[#allocation2 + $0x1] sm:$0xff]
    %v3662 = vld [vmem:[#allocation2 + $0x9] sm:$0xff]
    %v3663 = vld [vmem:[#allocation2 + $0x19] sm:$0xff]
    %v3664 = vld [vmem:[#allocation2 + $0x21] sm:$0xff]
    %v3665 = vld [vmem:[#allocation2 + $0x31] sm:$0xff]
    %v3666 = vld [vmem:[#allocation2 + $0x39] sm:$0xff]
    %v3667 = vld [vmem:[#allocation2 + $0x49] sm:$0xff]
    %v3668 = vld [vmem:[#allocation2 + $0x51] sm:$0xff]
    %v3669 = vld [vmem:[#allocation2 + $0x61] sm:$0xff]
    %v3670 = vld [vmem:[#allocation2 + $0x69] sm:$0xff]
    %v3671 = vld [vmem:[#allocation2 + $0x79] sm:$0xff]
    %v3672 = vld [vmem:[#allocation2 + $0x81] sm:$0xff]
    %v3673 = vld [vmem:[#allocation2 + $0x91] sm:$0xff]
    %v3674 = vld [vmem:[#allocation2 + $0x99] sm:$0xff]
    %v3675 = vld [vmem:[#allocation2 + $0xa9] sm:$0xff]
    %v3676 = vld [vmem:[#allocation2 + $0xb1] sm:$0xff]
    %v3677 = vld [vmem:[#allocation2 + $0xc1] sm:$0xff]
    %v3678 = vld [vmem:[#allocation2 + $0xc9] sm:$0xff]
    %v3679 = vld [vmem:[#allocation2 + $0xd9] sm:$0xff]
    %v3680 = vld [vmem:[#allocation2 + $0xe1] sm:$0xff]
    %v3681 = vld [vmem:[#allocation2 + $0xf1] sm:$0xff]
    %v3682 = vld [vmem:[#allocation2 + $0xf9] sm:$0xff]
    %v3683 = vld [vmem:[#allocation2 + $0x109] sm:$0xff]
    %v3684 = vld [vmem:[#allocation2 + $0x111] sm:$0xff]
    %v3685 = vld [vmem:[#allocation2 + $0x121] sm:$0xff]
    %v3686 = vld [vmem:[#allocation2 + $0x129] sm:$0xff]
    %v3687 = vld [vmem:[#allocation2 + $0x139] sm:$0xff]
    %v3688 = vld [vmem:[#allocation2 + $0x141] sm:$0xff]
    %v3689 = vld [vmem:[#allocation2 + $0x151] sm:$0xff]
    %v3690 = vld [vmem:[#allocation2 + $0x159] sm:$0xff]
    %v3691 = vld [vmem:[#allocation2 + $0x169] sm:$0xff]
    %v3692 = vld [vmem:[#allocation2 + $0x171] sm:$0xff]
    %v3693 = vld [vmem:[#allocation2 + $0x1b1] sm:$0xff]
    %v3694 = vld [vmem:[#allocation2 + $0x1b9] sm:$0xff]
    %v3695 = vld [vmem:[#allocation2 + $0x1c9] sm:$0xff]
    %v3696 = vld [vmem:[#allocation2 + $0x1d1] sm:$0xff]
    %v3697 = vld [vmem:[#allocation2 + $0x1e1] sm:$0xff]
    %v3698 = vld [vmem:[#allocation2 + $0x1e9] sm:$0xff]
    %v3699 = vld [vmem:[#allocation2 + $0x1f9] sm:$0xff]
    %v3700 = vld [vmem:[#allocation2 + $0x201] sm:$0xff]
    %v3701 = vld [vmem:[#allocation2 + $0x211] sm:$0xff]
    %v3702 = vld [vmem:[#allocation2 + $0x219] sm:$0xff]
    %v3703 = vld [vmem:[#allocation2 + $0x229] sm:$0xff]
    %v3704 = vld [vmem:[#allocation2 + $0x231] sm:$0xff]
    %v3705 = vld [vmem:[#allocation2 + $0x241] sm:$0xff]
    %v3706 = vld [vmem:[#allocation2 + $0x249] sm:$0xff]
    %v3707 = vld [vmem:[#allocation2 + $0x259] sm:$0xff]
    %v3708 = vld [vmem:[#allocation2 + $0x261] sm:$0xff]
    %v3709 = vld [vmem:[#allocation2 + $0x271] sm:$0xff]
    %v3710 = vld [vmem:[#allocation2 + $0x279] sm:$0xff]
    %v3711 = vld [vmem:[#allocation2 + $0x289] sm:$0xff]
    %v3712 = vld [vmem:[#allocation2 + $0x291] sm:$0xff]
    %v3713 = vld [vmem:[#allocation2 + $0x2a1] sm:$0xff]
    %v3714 = vld [vmem:[#allocation2 + $0x2a9] sm:$0xff]
    %v3715 = vld [vmem:[#allocation2 + $0x2b9] sm:$0xff]
    %v3716 = vld [vmem:[#allocation2 + $0x2c1] sm:$0xff]
    %v3717 = vld [vmem:[#allocation2 + $0x2d1] sm:$0xff]
    %v3718 = vld [vmem:[#allocation2 + $0x2d9] sm:$0xff]
    %v3719 = vld [vmem:[#allocation2 + $0x2e9] sm:$0xff]
    %v3720 = vld [vmem:[#allocation2 + $0x2f1] sm:$0xff]
    %v3721 = vld [vmem:[#allocation2 + $0x301] sm:$0xff]
    %v3722 = vld [vmem:[#allocation2 + $0x309] sm:$0xff]
    %v3723 = vld [vmem:[#allocation2 + $0x319] sm:$0xff]
    %v3724 = vld [vmem:[#allocation2 + $0x321] sm:$0xff]
    %v3725 = vpack.c.bf16 %v3662, %v3661
    %v3726 = vpack.c.bf16 %v3664, %v3663
    %v3727 = vpack.c.bf16 %v3666, %v3665
    %v3728 = vpack.c.bf16 %v3668, %v3667
    %v3729 = vpack.c.bf16 %v3670, %v3669
    %v3730 = vpack.c.bf16 %v3672, %v3671
    %v3731 = vpack.c.bf16 %v3674, %v3673
    %v3732 = vpack.c.bf16 %v3676, %v3675
    %v3733 = vpack.c.bf16 %v3678, %v3677
    %v3734 = vpack.c.bf16 %v3680, %v3679
    %v3735 = vpack.c.bf16 %v3682, %v3681
    %v3736 = vpack.c.bf16 %v3684, %v3683
    %v3737 = vpack.c.bf16 %v3686, %v3685
    %v3738 = vpack.c.bf16 %v3688, %v3687
    %v3739 = vpack.c.bf16 %v3690, %v3689
    %v3740 = vpack.c.bf16 %v3692, %v3691
    %v3741 = vpack.c.bf16 %v3694, %v3693
    %v3742 = vpack.c.bf16 %v3696, %v3695
    %v3743 = vpack.c.bf16 %v3698, %v3697
    %v3744 = vpack.c.bf16 %v3700, %v3699
    %v3745 = vpack.c.bf16 %v3702, %v3701
    %v3746 = vpack.c.bf16 %v3704, %v3703
    %v3747 = vpack.c.bf16 %v3706, %v3705
    %v3748 = vpack.c.bf16 %v3708, %v3707
    %v3749 = vpack.c.bf16 %v3710, %v3709
    %v3750 = vpack.c.bf16 %v3712, %v3711
    %v3751 = vpack.c.bf16 %v3714, %v3713
    %v3752 = vpack.c.bf16 %v3716, %v3715
    %v3753 = vpack.c.bf16 %v3718, %v3717
    %v3754 = vpack.c.bf16 %v3720, %v3719
    %v3755 = vpack.c.bf16 %v3722, %v3721
    %v3756 = vpack.c.bf16 %v3724, %v3723
    %3789 = vrot.lane.b32.xlu0 %v3725, 16
    %v3790 = vpop.permute.xlu0 %3789
    %3791 = vrot.lane.b32.xlu0 %v3726, 16
    %v3792 = vpop.permute.xlu0 %3791
    %3793 = vrot.lane.b32.xlu0 %v3727, 16
    %v3794 = vpop.permute.xlu0 %3793
    %3795 = vrot.lane.b32.xlu0 %v3728, 16
    %v3796 = vpop.permute.xlu0 %3795
    %3797 = vrot.lane.b32.xlu0 %v3729, 16
    %v3798 = vpop.permute.xlu0 %3797
    %3799 = vrot.lane.b32.xlu0 %v3730, 16
    %v3800 = vpop.permute.xlu0 %3799
    %3801 = vrot.lane.b32.xlu0 %v3731, 16
    %v3802 = vpop.permute.xlu0 %3801
    %3803 = vrot.lane.b32.xlu0 %v3732, 16
    %v3804 = vpop.permute.xlu0 %3803
    %3805 = vrot.lane.b32.xlu0 %v3733, 16
    %v3806 = vpop.permute.xlu0 %3805
    %3807 = vrot.lane.b32.xlu0 %v3734, 16
    %v3808 = vpop.permute.xlu0 %3807
    %3809 = vrot.lane.b32.xlu0 %v3735, 16
    %v3810 = vpop.permute.xlu0 %3809
    %3811 = vrot.lane.b32.xlu0 %v3736, 16
    %v3812 = vpop.permute.xlu0 %3811
    %3813 = vrot.lane.b32.xlu0 %v3737, 16
    %v3814 = vpop.permute.xlu0 %3813
    %3815 = vrot.lane.b32.xlu0 %v3738, 16
    %v3816 = vpop.permute.xlu0 %3815
    %3817 = vrot.lane.b32.xlu0 %v3739, 16
    %v3818 = vpop.permute.xlu0 %3817
    %3819 = vrot.lane.b32.xlu0 %v3740, 16
    %v3820 = vpop.permute.xlu0 %3819
    %3821 = vrot.lane.b32.xlu0 %v3741, 16
    %v3822 = vpop.permute.xlu0 %3821
    %3823 = vrot.lane.b32.xlu0 %v3742, 16
    %v3824 = vpop.permute.xlu0 %3823
    %3825 = vrot.lane.b32.xlu0 %v3743, 16
    %v3826 = vpop.permute.xlu0 %3825
    %3827 = vrot.lane.b32.xlu0 %v3744, 16
    %v3828 = vpop.permute.xlu0 %3827
    %3829 = vrot.lane.b32.xlu0 %v3745, 16
    %v3830 = vpop.permute.xlu0 %3829
    %3831 = vrot.lane.b32.xlu0 %v3746, 16
    %v3832 = vpop.permute.xlu0 %3831
    %3833 = vrot.lane.b32.xlu0 %v3747, 16
    %v3834 = vpop.permute.xlu0 %3833
    %3835 = vrot.lane.b32.xlu0 %v3748, 16
    %v3836 = vpop.permute.xlu0 %3835
    %3837 = vrot.lane.b32.xlu0 %v3749, 16
    %v3838 = vpop.permute.xlu0 %3837
    %3839 = vrot.lane.b32.xlu0 %v3750, 16
    %v3840 = vpop.permute.xlu0 %3839
    %3841 = vrot.lane.b32.xlu0 %v3751, 16
    %v3842 = vpop.permute.xlu0 %3841
    %3843 = vrot.lane.b32.xlu0 %v3752, 16
    %v3844 = vpop.permute.xlu0 %3843
    %3845 = vrot.lane.b32.xlu0 %v3753, 16
    %v3846 = vpop.permute.xlu0 %3845
    %3847 = vrot.lane.b32.xlu0 %v3754, 16
    %v3848 = vpop.permute.xlu0 %3847
    %3849 = vrot.lane.b32.xlu0 %v3755, 16
    %v3850 = vpop.permute.xlu0 %3849
    %3851 = vrot.lane.b32.xlu0 %v3756, 16
    %v3852 = vpop.permute.xlu0 %3851
    %3885 = vst.msk [vmem:[#allocation3] sm:$0xff] %vm844, %v3790
    %3886 = vst.msk [vmem:[#allocation3 + $0x10] sm:$0xff] %vm844, %v3792
    %3887 = vst.msk [vmem:[#allocation3 + $0x20] sm:$0xff] %vm844, %v3794
    %3888 = vst.msk [vmem:[#allocation3 + $0x30] sm:$0xff] %vm844, %v3796
    %3889 = vst.msk [vmem:[#allocation3 + $0x40] sm:$0xff] %vm844, %v3798
    %3890 = vst.msk [vmem:[#allocation3 + $0x50] sm:$0xff] %vm844, %v3800
    %3891 = vst.msk [vmem:[#allocation3 + $0x60] sm:$0xff] %vm844, %v3802
    %3892 = vst.msk [vmem:[#allocation3 + $0x70] sm:$0xff] %vm844, %v3804
    %3893 = vst.msk [vmem:[#allocation3 + $0x80] sm:$0xff] %vm844, %v3806
    %3894 = vst.msk [vmem:[#allocation3 + $0x90] sm:$0xff] %vm844, %v3808
    %3895 = vst.msk [vmem:[#allocation3 + $0xa0] sm:$0xff] %vm844, %v3810
    %3896 = vst.msk [vmem:[#allocation3 + $0xb0] sm:$0xff] %vm844, %v3812
    %3897 = vst.msk [vmem:[#allocation3 + $0xc0] sm:$0xff] %vm844, %v3814
    %3898 = vst.msk [vmem:[#allocation3 + $0xd0] sm:$0xff] %vm844, %v3816
    %3899 = vst.msk [vmem:[#allocation3 + $0xe0] sm:$0xff] %vm844, %v3818
    %3900 = vst.msk [vmem:[#allocation3 + $0xf0] sm:$0xff] %vm844, %v3820
    %3901 = vst.msk [vmem:[#allocation3 + $0x100] sm:$0xff] %vm844, %v3822
    %3902 = vst.msk [vmem:[#allocation3 + $0x110] sm:$0xff] %vm844, %v3824
    %3903 = vst.msk [vmem:[#allocation3 + $0x120] sm:$0xff] %vm844, %v3826
    %3904 = vst.msk [vmem:[#allocation3 + $0x130] sm:$0xff] %vm844, %v3828
    %3905 = vst.msk [vmem:[#allocation3 + $0x140] sm:$0xff] %vm844, %v3830
    %3906 = vst.msk [vmem:[#allocation3 + $0x150] sm:$0xff] %vm844, %v3832
    %3907 = vst.msk [vmem:[#allocation3 + $0x160] sm:$0xff] %vm844, %v3834
    %3908 = vst.msk [vmem:[#allocation3 + $0x170] sm:$0xff] %vm844, %v3836
    %3909 = vst.msk [vmem:[#allocation3 + $0x180] sm:$0xff] %vm844, %v3838
    %3910 = vst.msk [vmem:[#allocation3 + $0x190] sm:$0xff] %vm844, %v3840
    %3911 = vst.msk [vmem:[#allocation3 + $0x1a0] sm:$0xff] %vm844, %v3842
    %3912 = vst.msk [vmem:[#allocation3 + $0x1b0] sm:$0xff] %vm844, %v3844
    %3913 = vst.msk [vmem:[#allocation3 + $0x1c0] sm:$0xff] %vm844, %v3846
    %3914 = vst.msk [vmem:[#allocation3 + $0x1d0] sm:$0xff] %vm844, %v3848
    %3915 = vst.msk [vmem:[#allocation3 + $0x1e0] sm:$0xff] %vm844, %v3850
    %3916 = vst.msk [vmem:[#allocation3 + $0x1f0] sm:$0xff] %vm844, %v3852
    %v3917 = vld [vmem:[#allocation2 + $0x2] sm:$0xff]
    %v3918 = vld [vmem:[#allocation2 + $0xa] sm:$0xff]
    %v3919 = vld [vmem:[#allocation2 + $0x1a] sm:$0xff]
    %v3920 = vld [vmem:[#allocation2 + $0x22] sm:$0xff]
    %v3921 = vld [vmem:[#allocation2 + $0x32] sm:$0xff]
    %v3922 = vld [vmem:[#allocation2 + $0x3a] sm:$0xff]
    %v3923 = vld [vmem:[#allocation2 + $0x4a] sm:$0xff]
    %v3924 = vld [vmem:[#allocation2 + $0x52] sm:$0xff]
    %v3925 = vld [vmem:[#allocation2 + $0x62] sm:$0xff]
    %v3926 = vld [vmem:[#allocation2 + $0x6a] sm:$0xff]
    %v3927 = vld [vmem:[#allocation2 + $0x7a] sm:$0xff]
    %v3928 = vld [vmem:[#allocation2 + $0x82] sm:$0xff]
    %v3929 = vld [vmem:[#allocation2 + $0x92] sm:$0xff]
    %v3930 = vld [vmem:[#allocation2 + $0x9a] sm:$0xff]
    %v3931 = vld [vmem:[#allocation2 + $0xaa] sm:$0xff]
    %v3932 = vld [vmem:[#allocation2 + $0xb2] sm:$0xff]
    %v3933 = vld [vmem:[#allocation2 + $0xc2] sm:$0xff]
    %v3934 = vld [vmem:[#allocation2 + $0xca] sm:$0xff]
    %v3935 = vld [vmem:[#allocation2 + $0xda] sm:$0xff]
    %v3936 = vld [vmem:[#allocation2 + $0xe2] sm:$0xff]
    %v3937 = vld [vmem:[#allocation2 + $0xf2] sm:$0xff]
    %v3938 = vld [vmem:[#allocation2 + $0xfa] sm:$0xff]
    %v3939 = vld [vmem:[#allocation2 + $0x10a] sm:$0xff]
    %v3940 = vld [vmem:[#allocation2 + $0x112] sm:$0xff]
    %v3941 = vld [vmem:[#allocation2 + $0x122] sm:$0xff]
    %v3942 = vld [vmem:[#allocation2 + $0x12a] sm:$0xff]
    %v3943 = vld [vmem:[#allocation2 + $0x13a] sm:$0xff]
    %v3944 = vld [vmem:[#allocation2 + $0x142] sm:$0xff]
    %v3945 = vld [vmem:[#allocation2 + $0x152] sm:$0xff]
    %v3946 = vld [vmem:[#allocation2 + $0x15a] sm:$0xff]
    %v3947 = vld [vmem:[#allocation2 + $0x16a] sm:$0xff]
    %v3948 = vld [vmem:[#allocation2 + $0x172] sm:$0xff]
    %v3949 = vld [vmem:[#allocation2 + $0x1b2] sm:$0xff]
    %v3950 = vld [vmem:[#allocation2 + $0x1ba] sm:$0xff]
    %v3951 = vld [vmem:[#allocation2 + $0x1ca] sm:$0xff]
    %v3952 = vld [vmem:[#allocation2 + $0x1d2] sm:$0xff]
    %v3953 = vld [vmem:[#allocation2 + $0x1e2] sm:$0xff]
    %v3954 = vld [vmem:[#allocation2 + $0x1ea] sm:$0xff]
    %v3955 = vld [vmem:[#allocation2 + $0x1fa] sm:$0xff]
    %v3956 = vld [vmem:[#allocation2 + $0x202] sm:$0xff]
    %v3957 = vld [vmem:[#allocation2 + $0x212] sm:$0xff]
    %v3958 = vld [vmem:[#allocation2 + $0x21a] sm:$0xff]
    %v3959 = vld [vmem:[#allocation2 + $0x22a] sm:$0xff]
    %v3960 = vld [vmem:[#allocation2 + $0x232] sm:$0xff]
    %v3961 = vld [vmem:[#allocation2 + $0x242] sm:$0xff]
    %v3962 = vld [vmem:[#allocation2 + $0x24a] sm:$0xff]
    %v3963 = vld [vmem:[#allocation2 + $0x25a] sm:$0xff]
    %v3964 = vld [vmem:[#allocation2 + $0x262] sm:$0xff]
    %v3965 = vld [vmem:[#allocation2 + $0x272] sm:$0xff]
    %v3966 = vld [vmem:[#allocation2 + $0x27a] sm:$0xff]
    %v3967 = vld [vmem:[#allocation2 + $0x28a] sm:$0xff]
    %v3968 = vld [vmem:[#allocation2 + $0x292] sm:$0xff]
    %v3969 = vld [vmem:[#allocation2 + $0x2a2] sm:$0xff]
    %v3970 = vld [vmem:[#allocation2 + $0x2aa] sm:$0xff]
    %v3971 = vld [vmem:[#allocation2 + $0x2ba] sm:$0xff]
    %v3972 = vld [vmem:[#allocation2 + $0x2c2] sm:$0xff]
    %v3973 = vld [vmem:[#allocation2 + $0x2d2] sm:$0xff]
    %v3974 = vld [vmem:[#allocation2 + $0x2da] sm:$0xff]
    %v3975 = vld [vmem:[#allocation2 + $0x2ea] sm:$0xff]
    %v3976 = vld [vmem:[#allocation2 + $0x2f2] sm:$0xff]
    %v3977 = vld [vmem:[#allocation2 + $0x302] sm:$0xff]
    %v3978 = vld [vmem:[#allocation2 + $0x30a] sm:$0xff]
    %v3979 = vld [vmem:[#allocation2 + $0x31a] sm:$0xff]
    %v3980 = vld [vmem:[#allocation2 + $0x322] sm:$0xff]
    %v3981 = vpack.c.bf16 %v3918, %v3917
    %v3982 = vpack.c.bf16 %v3920, %v3919
    %v3983 = vpack.c.bf16 %v3922, %v3921
    %v3984 = vpack.c.bf16 %v3924, %v3923
    %v3985 = vpack.c.bf16 %v3926, %v3925
    %v3986 = vpack.c.bf16 %v3928, %v3927
    %v3987 = vpack.c.bf16 %v3930, %v3929
    %v3988 = vpack.c.bf16 %v3932, %v3931
    %v3989 = vpack.c.bf16 %v3934, %v3933
    %v3990 = vpack.c.bf16 %v3936, %v3935
    %v3991 = vpack.c.bf16 %v3938, %v3937
    %v3992 = vpack.c.bf16 %v3940, %v3939
    %v3993 = vpack.c.bf16 %v3942, %v3941
    %v3994 = vpack.c.bf16 %v3944, %v3943
    %v3995 = vpack.c.bf16 %v3946, %v3945
    %v3996 = vpack.c.bf16 %v3948, %v3947
    %v3997 = vpack.c.bf16 %v3950, %v3949
    %v3998 = vpack.c.bf16 %v3952, %v3951
    %v3999 = vpack.c.bf16 %v3954, %v3953
    %v4000 = vpack.c.bf16 %v3956, %v3955
    %v4001 = vpack.c.bf16 %v3958, %v3957
    %v4002 = vpack.c.bf16 %v3960, %v3959
    %v4003 = vpack.c.bf16 %v3962, %v3961
    %v4004 = vpack.c.bf16 %v3964, %v3963
    %v4005 = vpack.c.bf16 %v3966, %v3965
    %v4006 = vpack.c.bf16 %v3968, %v3967
    %v4007 = vpack.c.bf16 %v3970, %v3969
    %v4008 = vpack.c.bf16 %v3972, %v3971
    %v4009 = vpack.c.bf16 %v3974, %v3973
    %v4010 = vpack.c.bf16 %v3976, %v3975
    %v4011 = vpack.c.bf16 %v3978, %v3977
    %v4012 = vpack.c.bf16 %v3980, %v3979
    %4045 = vrot.lane.b32.xlu0 %v3981, 32
    %v4046 = vpop.permute.xlu0 %4045
    %4047 = vrot.lane.b32.xlu0 %v3982, 32
    %v4048 = vpop.permute.xlu0 %4047
    %4049 = vrot.lane.b32.xlu0 %v3983, 32
    %v4050 = vpop.permute.xlu0 %4049
    %4051 = vrot.lane.b32.xlu0 %v3984, 32
    %v4052 = vpop.permute.xlu0 %4051
    %4053 = vrot.lane.b32.xlu0 %v3985, 32
    %v4054 = vpop.permute.xlu0 %4053
    %4055 = vrot.lane.b32.xlu0 %v3986, 32
    %v4056 = vpop.permute.xlu0 %4055
    %4057 = vrot.lane.b32.xlu0 %v3987, 32
    %v4058 = vpop.permute.xlu0 %4057
    %4059 = vrot.lane.b32.xlu0 %v3988, 32
    %v4060 = vpop.permute.xlu0 %4059
    %4061 = vrot.lane.b32.xlu0 %v3989, 32
    %v4062 = vpop.permute.xlu0 %4061
    %4063 = vrot.lane.b32.xlu0 %v3990, 32
    %v4064 = vpop.permute.xlu0 %4063
    %4065 = vrot.lane.b32.xlu0 %v3991, 32
    %v4066 = vpop.permute.xlu0 %4065
    %4067 = vrot.lane.b32.xlu0 %v3992, 32
    %v4068 = vpop.permute.xlu0 %4067
    %4069 = vrot.lane.b32.xlu0 %v3993, 32
    %v4070 = vpop.permute.xlu0 %4069
    %4071 = vrot.lane.b32.xlu0 %v3994, 32
    %v4072 = vpop.permute.xlu0 %4071
    %4073 = vrot.lane.b32.xlu0 %v3995, 32
    %v4074 = vpop.permute.xlu0 %4073
    %4075 = vrot.lane.b32.xlu0 %v3996, 32
    %v4076 = vpop.permute.xlu0 %4075
    %4077 = vrot.lane.b32.xlu0 %v3997, 32
    %v4078 = vpop.permute.xlu0 %4077
    %4079 = vrot.lane.b32.xlu0 %v3998, 32
    %v4080 = vpop.permute.xlu0 %4079
    %4081 = vrot.lane.b32.xlu0 %v3999, 32
    %v4082 = vpop.permute.xlu0 %4081
    %4083 = vrot.lane.b32.xlu0 %v4000, 32
    %v4084 = vpop.permute.xlu0 %4083
    %4085 = vrot.lane.b32.xlu0 %v4001, 32
    %v4086 = vpop.permute.xlu0 %4085
    %4087 = vrot.lane.b32.xlu0 %v4002, 32
    %v4088 = vpop.permute.xlu0 %4087
    %4089 = vrot.lane.b32.xlu0 %v4003, 32
    %v4090 = vpop.permute.xlu0 %4089
    %4091 = vrot.lane.b32.xlu0 %v4004, 32
    %v4092 = vpop.permute.xlu0 %4091
    %4093 = vrot.lane.b32.xlu0 %v4005, 32
    %v4094 = vpop.permute.xlu0 %4093
    %4095 = vrot.lane.b32.xlu0 %v4006, 32
    %v4096 = vpop.permute.xlu0 %4095
    %4097 = vrot.lane.b32.xlu0 %v4007, 32
    %v4098 = vpop.permute.xlu0 %4097
    %4099 = vrot.lane.b32.xlu0 %v4008, 32
    %v4100 = vpop.permute.xlu0 %4099
    %4101 = vrot.lane.b32.xlu0 %v4009, 32
    %v4102 = vpop.permute.xlu0 %4101
    %4103 = vrot.lane.b32.xlu0 %v4010, 32
    %v4104 = vpop.permute.xlu0 %4103
    %4105 = vrot.lane.b32.xlu0 %v4011, 32
    %v4106 = vpop.permute.xlu0 %4105
    %4107 = vrot.lane.b32.xlu0 %v4012, 32
    %v4108 = vpop.permute.xlu0 %4107
    %4141 = vst.msk [vmem:[#allocation3] sm:$0xff] %vm1101, %v4046
    %4142 = vst.msk [vmem:[#allocation3 + $0x10] sm:$0xff] %vm1101, %v4048
    %4143 = vst.msk [vmem:[#allocation3 + $0x20] sm:$0xff] %vm1101, %v4050
    %4144 = vst.msk [vmem:[#allocation3 + $0x30] sm:$0xff] %vm1101, %v4052
    %4145 = vst.msk [vmem:[#allocation3 + $0x40] sm:$0xff] %vm1101, %v4054
    %4146 = vst.msk [vmem:[#allocation3 + $0x50] sm:$0xff] %vm1101, %v4056
    %4147 = vst.msk [vmem:[#allocation3 + $0x60] sm:$0xff] %vm1101, %v4058
    %4148 = vst.msk [vmem:[#allocation3 + $0x70] sm:$0xff] %vm1101, %v4060
    %4149 = vst.msk [vmem:[#allocation3 + $0x80] sm:$0xff] %vm1101, %v4062
    %4150 = vst.msk [vmem:[#allocation3 + $0x90] sm:$0xff] %vm1101, %v4064
    %4151 = vst.msk [vmem:[#allocation3 + $0xa0] sm:$0xff] %vm1101, %v4066
    %4152 = vst.msk [vmem:[#allocation3 + $0xb0] sm:$0xff] %vm1101, %v4068
    %4153 = vst.msk [vmem:[#allocation3 + $0xc0] sm:$0xff] %vm1101, %v4070
    %4154 = vst.msk [vmem:[#allocation3 + $0xd0] sm:$0xff] %vm1101, %v4072
    %4155 = vst.msk [vmem:[#allocation3 + $0xe0] sm:$0xff] %vm1101, %v4074
    %4156 = vst.msk [vmem:[#allocation3 + $0xf0] sm:$0xff] %vm1101, %v4076
    %4157 = vst.msk [vmem:[#allocation3 + $0x100] sm:$0xff] %vm1101, %v4078
    %4158 = vst.msk [vmem:[#allocation3 + $0x110] sm:$0xff] %vm1101, %v4080
    %4159 = vst.msk [vmem:[#allocation3 + $0x120] sm:$0xff] %vm1101, %v4082
    %4160 = vst.msk [vmem:[#allocation3 + $0x130] sm:$0xff] %vm1101, %v4084
    %4161 = vst.msk [vmem:[#allocation3 + $0x140] sm:$0xff] %vm1101, %v4086
    %4162 = vst.msk [vmem:[#allocation3 + $0x150] sm:$0xff] %vm1101, %v4088
    %4163 = vst.msk [vmem:[#allocation3 + $0x160] sm:$0xff] %vm1101, %v4090
    %4164 = vst.msk [vmem:[#allocation3 + $0x170] sm:$0xff] %vm1101, %v4092
    %4165 = vst.msk [vmem:[#allocation3 + $0x180] sm:$0xff] %vm1101, %v4094
    %4166 = vst.msk [vmem:[#allocation3 + $0x190] sm:$0xff] %vm1101, %v4096
    %4167 = vst.msk [vmem:[#allocation3 + $0x1a0] sm:$0xff] %vm1101, %v4098
    %4168 = vst.msk [vmem:[#allocation3 + $0x1b0] sm:$0xff] %vm1101, %v4100
    %4169 = vst.msk [vmem:[#allocation3 + $0x1c0] sm:$0xff] %vm1101, %v4102
    %4170 = vst.msk [vmem:[#allocation3 + $0x1d0] sm:$0xff] %vm1101, %v4104
    %4171 = vst.msk [vmem:[#allocation3 + $0x1e0] sm:$0xff] %vm1101, %v4106
    %4172 = vst.msk [vmem:[#allocation3 + $0x1f0] sm:$0xff] %vm1101, %v4108
    %v4173 = vld [vmem:[%s427] sm:$0xff]
    %v4174 = vld [vmem:[%s427 + $0x8] sm:$0xff]
    %v4175 = vld [vmem:[%s427 + $0x18] sm:$0xff]
    %v4176 = vld [vmem:[%s427 + $0x20] sm:$0xff]
    %v4177 = vld [vmem:[%s427 + $0x30] sm:$0xff]
    %v4178 = vld [vmem:[%s427 + $0x38] sm:$0xff]
    %v4179 = vld [vmem:[%s427 + $0x48] sm:$0xff]
    %v4180 = vld [vmem:[%s427 + $0x50] sm:$0xff]
    %v4181 = vld [vmem:[%s427 + $0x60] sm:$0xff]
    %v4182 = vld [vmem:[%s427 + $0x68] sm:$0xff]
    %v4183 = vld [vmem:[%s427 + $0x78] sm:$0xff]
    %v4184 = vld [vmem:[%s427 + $0x80] sm:$0xff]
    %v4185 = vld [vmem:[%s427 + $0x90] sm:$0xff]
    %v4186 = vld [vmem:[%s427 + $0x98] sm:$0xff]
    %v4187 = vld [vmem:[%s427 + $0xa8] sm:$0xff]
    %v4188 = vld [vmem:[%s427 + $0xb0] sm:$0xff]
    %v4189 = vld [vmem:[%s427 + $0xc0] sm:$0xff]
    %v4190 = vld [vmem:[%s427 + $0xc8] sm:$0xff]
    %v4191 = vld [vmem:[%s427 + $0xd8] sm:$0xff]
    %v4192 = vld [vmem:[%s427 + $0xe0] sm:$0xff]
    %v4193 = vld [vmem:[%s427 + $0xf0] sm:$0xff]
    %v4194 = vld [vmem:[%s427 + $0xf8] sm:$0xff]
    %v4195 = vld [vmem:[%s427 + $0x108] sm:$0xff]
    %v4196 = vld [vmem:[%s427 + $0x110] sm:$0xff]
    %v4197 = vld [vmem:[%s427 + $0x120] sm:$0xff]
    %v4198 = vld [vmem:[%s427 + $0x128] sm:$0xff]
    %v4199 = vld [vmem:[%s427 + $0x138] sm:$0xff]
    %v4200 = vld [vmem:[%s427 + $0x140] sm:$0xff]
    %v4201 = vld [vmem:[%s427 + $0x150] sm:$0xff]
    %v4202 = vld [vmem:[%s427 + $0x158] sm:$0xff]
    %v4203 = vld [vmem:[%s427 + $0x168] sm:$0xff]
    %v4204 = vld [vmem:[%s427 + $0x170] sm:$0xff]
    %v4205 = vld [vmem:[%s427 + $0x1b0] sm:$0xff]
    %v4206 = vld [vmem:[%s427 + $0x1b8] sm:$0xff]
    %v4207 = vld [vmem:[%s427 + $0x1c8] sm:$0xff]
    %v4208 = vld [vmem:[%s427 + $0x1d0] sm:$0xff]
    %v4209 = vld [vmem:[%s427 + $0x1e0] sm:$0xff]
    %v4210 = vld [vmem:[%s427 + $0x1e8] sm:$0xff]
    %v4211 = vld [vmem:[%s427 + $0x1f8] sm:$0xff]
    %v4212 = vld [vmem:[%s427 + $0x200] sm:$0xff]
    %v4213 = vld [vmem:[%s427 + $0x210] sm:$0xff]
    %v4214 = vld [vmem:[%s427 + $0x218] sm:$0xff]
    %v4215 = vld [vmem:[%s427 + $0x228] sm:$0xff]
    %v4216 = vld [vmem:[%s427 + $0x230] sm:$0xff]
    %v4217 = vld [vmem:[%s427 + $0x240] sm:$0xff]
    %v4218 = vld [vmem:[%s427 + $0x248] sm:$0xff]
    %v4219 = vld [vmem:[%s427 + $0x258] sm:$0xff]
    %v4220 = vld [vmem:[%s427 + $0x260] sm:$0xff]
    %v4221 = vld [vmem:[%s427 + $0x270] sm:$0xff]
    %v4222 = vld [vmem:[%s427 + $0x278] sm:$0xff]
    %v4223 = vld [vmem:[%s427 + $0x288] sm:$0xff]
    %v4224 = vld [vmem:[%s427 + $0x290] sm:$0xff]
    %v4225 = vld [vmem:[%s427 + $0x2a0] sm:$0xff]
    %v4226 = vld [vmem:[%s427 + $0x2a8] sm:$0xff]
    %v4227 = vld [vmem:[%s427 + $0x2b8] sm:$0xff]
    %v4228 = vld [vmem:[%s427 + $0x2c0] sm:$0xff]
    %v4229 = vld [vmem:[%s427 + $0x2d0] sm:$0xff]
    %v4230 = vld [vmem:[%s427 + $0x2d8] sm:$0xff]
    %v4231 = vld [vmem:[%s427 + $0x2e8] sm:$0xff]
    %v4232 = vld [vmem:[%s427 + $0x2f0] sm:$0xff]
    %v4233 = vld [vmem:[%s427 + $0x300] sm:$0xff]
    %v4234 = vld [vmem:[%s427 + $0x308] sm:$0xff]
    %v4235 = vld [vmem:[%s427 + $0x318] sm:$0xff]
    %v4236 = vld [vmem:[%s427 + $0x320] sm:$0xff]
    %v4237 = vpack.c.bf16 %v4174, %v4173
    %v4238 = vpack.c.bf16 %v4176, %v4175
    %v4239 = vpack.c.bf16 %v4178, %v4177
    %v4240 = vpack.c.bf16 %v4180, %v4179
    %v4241 = vpack.c.bf16 %v4182, %v4181
    %v4242 = vpack.c.bf16 %v4184, %v4183
    %v4243 = vpack.c.bf16 %v4186, %v4185
    %v4244 = vpack.c.bf16 %v4188, %v4187
    %v4245 = vpack.c.bf16 %v4190, %v4189
    %v4246 = vpack.c.bf16 %v4192, %v4191
    %v4247 = vpack.c.bf16 %v4194, %v4193
    %v4248 = vpack.c.bf16 %v4196, %v4195
    %v4249 = vpack.c.bf16 %v4198, %v4197
    %v4250 = vpack.c.bf16 %v4200, %v4199
    %v4251 = vpack.c.bf16 %v4202, %v4201
    %v4252 = vpack.c.bf16 %v4204, %v4203
    %v4253 = vpack.c.bf16 %v4206, %v4205
    %v4254 = vpack.c.bf16 %v4208, %v4207
    %v4255 = vpack.c.bf16 %v4210, %v4209
    %v4256 = vpack.c.bf16 %v4212, %v4211
    %v4257 = vpack.c.bf16 %v4214, %v4213
    %v4258 = vpack.c.bf16 %v4216, %v4215
    %v4259 = vpack.c.bf16 %v4218, %v4217
    %v4260 = vpack.c.bf16 %v4220, %v4219
    %v4261 = vpack.c.bf16 %v4222, %v4221
    %v4262 = vpack.c.bf16 %v4224, %v4223
    %v4263 = vpack.c.bf16 %v4226, %v4225
    %v4264 = vpack.c.bf16 %v4228, %v4227
    %v4265 = vpack.c.bf16 %v4230, %v4229
    %v4266 = vpack.c.bf16 %v4232, %v4231
    %v4267 = vpack.c.bf16 %v4234, %v4233
    %v4268 = vpack.c.bf16 %v4236, %v4235
    %4301 = vrot.lane.b32.xlu0 %v4237, 48
    %v4302 = vpop.permute.xlu0 %4301
    %4303 = vrot.lane.b32.xlu0 %v4238, 48
    %v4304 = vpop.permute.xlu0 %4303
    %4305 = vrot.lane.b32.xlu0 %v4239, 48
    %v4306 = vpop.permute.xlu0 %4305
    %4307 = vrot.lane.b32.xlu0 %v4240, 48
    %v4308 = vpop.permute.xlu0 %4307
    %4309 = vrot.lane.b32.xlu0 %v4241, 48
    %v4310 = vpop.permute.xlu0 %4309
    %4311 = vrot.lane.b32.xlu0 %v4242, 48
    %v4312 = vpop.permute.xlu0 %4311
    %4313 = vrot.lane.b32.xlu0 %v4243, 48
    %v4314 = vpop.permute.xlu0 %4313
    %4315 = vrot.lane.b32.xlu0 %v4244, 48
    %v4316 = vpop.permute.xlu0 %4315
    %4317 = vrot.lane.b32.xlu0 %v4245, 48
    %v4318 = vpop.permute.xlu0 %4317
    %4319 = vrot.lane.b32.xlu0 %v4246, 48
    %v4320 = vpop.permute.xlu0 %4319
    %4321 = vrot.lane.b32.xlu0 %v4247, 48
    %v4322 = vpop.permute.xlu0 %4321
    %4323 = vrot.lane.b32.xlu0 %v4248, 48
    %v4324 = vpop.permute.xlu0 %4323
    %4325 = vrot.lane.b32.xlu0 %v4249, 48
    %v4326 = vpop.permute.xlu0 %4325
    %4327 = vrot.lane.b32.xlu0 %v4250, 48
    %v4328 = vpop.permute.xlu0 %4327
    %4329 = vrot.lane.b32.xlu0 %v4251, 48
    %v4330 = vpop.permute.xlu0 %4329
    %4331 = vrot.lane.b32.xlu0 %v4252, 48
    %v4332 = vpop.permute.xlu0 %4331
    %4333 = vrot.lane.b32.xlu0 %v4253, 48
    %v4334 = vpop.permute.xlu0 %4333
    %4335 = vrot.lane.b32.xlu0 %v4254, 48
    %v4336 = vpop.permute.xlu0 %4335
    %4337 = vrot.lane.b32.xlu0 %v4255, 48
    %v4338 = vpop.permute.xlu0 %4337
    %4339 = vrot.lane.b32.xlu0 %v4256, 48
    %v4340 = vpop.permute.xlu0 %4339
    %4341 = vrot.lane.b32.xlu0 %v4257, 48
    %v4342 = vpop.permute.xlu0 %4341
    %4343 = vrot.lane.b32.xlu0 %v4258, 48
    %v4344 = vpop.permute.xlu0 %4343
    %4345 = vrot.lane.b32.xlu0 %v4259, 48
    %v4346 = vpop.permute.xlu0 %4345
    %4347 = vrot.lane.b32.xlu0 %v4260, 48
    %v4348 = vpop.permute.xlu0 %4347
    %4349 = vrot.lane.b32.xlu0 %v4261, 48
    %v4350 = vpop.permute.xlu0 %4349
    %4351 = vrot.lane.b32.xlu0 %v4262, 48
    %v4352 = vpop.permute.xlu0 %4351
    %4353 = vrot.lane.b32.xlu0 %v4263, 48
    %v4354 = vpop.permute.xlu0 %4353
    %4355 = vrot.lane.b32.xlu0 %v4264, 48
    %v4356 = vpop.permute.xlu0 %4355
    %4357 = vrot.lane.b32.xlu0 %v4265, 48
    %v4358 = vpop.permute.xlu0 %4357
    %4359 = vrot.lane.b32.xlu0 %v4266, 48
    %v4360 = vpop.permute.xlu0 %4359
    %4361 = vrot.lane.b32.xlu0 %v4267, 48
    %v4362 = vpop.permute.xlu0 %4361
    %4363 = vrot.lane.b32.xlu0 %v4268, 48
    %v4364 = vpop.permute.xlu0 %4363
    %4397 = vst.msk [vmem:[#allocation3] sm:$0xff] %vm1358, %v4302
    %4398 = vst.msk [vmem:[#allocation3 + $0x10] sm:$0xff] %vm1358, %v4304
    %4399 = vst.msk [vmem:[#allocation3 + $0x20] sm:$0xff] %vm1358, %v4306
    %4400 = vst.msk [vmem:[#allocation3 + $0x30] sm:$0xff] %vm1358, %v4308
    %4401 = vst.msk [vmem:[#allocation3 + $0x40] sm:$0xff] %vm1358, %v4310
    %4402 = vst.msk [vmem:[#allocation3 + $0x50] sm:$0xff] %vm1358, %v4312
    %4403 = vst.msk [vmem:[#allocation3 + $0x60] sm:$0xff] %vm1358, %v4314
    %4404 = vst.msk [vmem:[#allocation3 + $0x70] sm:$0xff] %vm1358, %v4316
    %4405 = vst.msk [vmem:[#allocation3 + $0x80] sm:$0xff] %vm1358, %v4318
    %4406 = vst.msk [vmem:[#allocation3 + $0x90] sm:$0xff] %vm1358, %v4320
    %4407 = vst.msk [vmem:[#allocation3 + $0xa0] sm:$0xff] %vm1358, %v4322
    %4408 = vst.msk [vmem:[#allocation3 + $0xb0] sm:$0xff] %vm1358, %v4324
    %4409 = vst.msk [vmem:[#allocation3 + $0xc0] sm:$0xff] %vm1358, %v4326
    %4410 = vst.msk [vmem:[#allocation3 + $0xd0] sm:$0xff] %vm1358, %v4328
    %4411 = vst.msk [vmem:[#allocation3 + $0xe0] sm:$0xff] %vm1358, %v4330
    %4412 = vst.msk [vmem:[#allocation3 + $0xf0] sm:$0xff] %vm1358, %v4332
    %4413 = vst.msk [vmem:[#allocation3 + $0x100] sm:$0xff] %vm1358, %v4334
    %4414 = vst.msk [vmem:[#allocation3 + $0x110] sm:$0xff] %vm1358, %v4336
    %4415 = vst.msk [vmem:[#allocation3 + $0x120] sm:$0xff] %vm1358, %v4338
    %4416 = vst.msk [vmem:[#allocation3 + $0x130] sm:$0xff] %vm1358, %v4340
    %4417 = vst.msk [vmem:[#allocation3 + $0x140] sm:$0xff] %vm1358, %v4342
    %4418 = vst.msk [vmem:[#allocation3 + $0x150] sm:$0xff] %vm1358, %v4344
    %4419 = vst.msk [vmem:[#allocation3 + $0x160] sm:$0xff] %vm1358, %v4346
    %4420 = vst.msk [vmem:[#allocation3 + $0x170] sm:$0xff] %vm1358, %v4348
    %4421 = vst.msk [vmem:[#allocation3 + $0x180] sm:$0xff] %vm1358, %v4350
    %4422 = vst.msk [vmem:[#allocation3 + $0x190] sm:$0xff] %vm1358, %v4352
    %4423 = vst.msk [vmem:[#allocation3 + $0x1a0] sm:$0xff] %vm1358, %v4354
    %4424 = vst.msk [vmem:[#allocation3 + $0x1b0] sm:$0xff] %vm1358, %v4356
    %4425 = vst.msk [vmem:[#allocation3 + $0x1c0] sm:$0xff] %vm1358, %v4358
    %4426 = vst.msk [vmem:[#allocation3 + $0x1d0] sm:$0xff] %vm1358, %v4360
    %4427 = vst.msk [vmem:[#allocation3 + $0x1e0] sm:$0xff] %vm1358, %v4362
    %4428 = vst.msk [vmem:[#allocation3 + $0x1f0] sm:$0xff] %vm1358, %v4364
    %v4429 = vld [vmem:[%s427 + $0x1] sm:$0xff]
    %v4430 = vld [vmem:[%s427 + $0x9] sm:$0xff]
    %v4431 = vld [vmem:[%s427 + $0x19] sm:$0xff]
    %v4432 = vld [vmem:[%s427 + $0x21] sm:$0xff]
    %v4433 = vld [vmem:[%s427 + $0x31] sm:$0xff]
    %v4434 = vld [vmem:[%s427 + $0x39] sm:$0xff]
    %v4435 = vld [vmem:[%s427 + $0x49] sm:$0xff]
    %v4436 = vld [vmem:[%s427 + $0x51] sm:$0xff]
    %v4437 = vld [vmem:[%s427 + $0x61] sm:$0xff]
    %v4438 = vld [vmem:[%s427 + $0x69] sm:$0xff]
    %v4439 = vld [vmem:[%s427 + $0x79] sm:$0xff]
    %v4440 = vld [vmem:[%s427 + $0x81] sm:$0xff]
    %v4441 = vld [vmem:[%s427 + $0x91] sm:$0xff]
    %v4442 = vld [vmem:[%s427 + $0x99] sm:$0xff]
    %v4443 = vld [vmem:[%s427 + $0xa9] sm:$0xff]
    %v4444 = vld [vmem:[%s427 + $0xb1] sm:$0xff]
    %v4445 = vld [vmem:[%s427 + $0xc1] sm:$0xff]
    %v4446 = vld [vmem:[%s427 + $0xc9] sm:$0xff]
    %v4447 = vld [vmem:[%s427 + $0xd9] sm:$0xff]
    %v4448 = vld [vmem:[%s427 + $0xe1] sm:$0xff]
    %v4449 = vld [vmem:[%s427 + $0xf1] sm:$0xff]
    %v4450 = vld [vmem:[%s427 + $0xf9] sm:$0xff]
    %v4451 = vld [vmem:[%s427 + $0x109] sm:$0xff]
    %v4452 = vld [vmem:[%s427 + $0x111] sm:$0xff]
    %v4453 = vld [vmem:[%s427 + $0x121] sm:$0xff]
    %v4454 = vld [vmem:[%s427 + $0x129] sm:$0xff]
    %v4455 = vld [vmem:[%s427 + $0x139] sm:$0xff]
    %v4456 = vld [vmem:[%s427 + $0x141] sm:$0xff]
    %v4457 = vld [vmem:[%s427 + $0x151] sm:$0xff]
    %v4458 = vld [vmem:[%s427 + $0x159] sm:$0xff]
    %v4459 = vld [vmem:[%s427 + $0x169] sm:$0xff]
    %v4460 = vld [vmem:[%s427 + $0x171] sm:$0xff]
    %v4461 = vld [vmem:[%s427 + $0x1b1] sm:$0xff]
    %v4462 = vld [vmem:[%s427 + $0x1b9] sm:$0xff]
    %v4463 = vld [vmem:[%s427 + $0x1c9] sm:$0xff]
    %v4464 = vld [vmem:[%s427 + $0x1d1] sm:$0xff]
    %v4465 = vld [vmem:[%s427 + $0x1e1] sm:$0xff]
    %v4466 = vld [vmem:[%s427 + $0x1e9] sm:$0xff]
    %v4467 = vld [vmem:[%s427 + $0x1f9] sm:$0xff]
    %v4468 = vld [vmem:[%s427 + $0x201] sm:$0xff]
    %v4469 = vld [vmem:[%s427 + $0x211] sm:$0xff]
    %v4470 = vld [vmem:[%s427 + $0x219] sm:$0xff]
    %v4471 = vld [vmem:[%s427 + $0x229] sm:$0xff]
    %v4472 = vld [vmem:[%s427 + $0x231] sm:$0xff]
    %v4473 = vld [vmem:[%s427 + $0x241] sm:$0xff]
    %v4474 = vld [vmem:[%s427 + $0x249] sm:$0xff]
    %v4475 = vld [vmem:[%s427 + $0x259] sm:$0xff]
    %v4476 = vld [vmem:[%s427 + $0x261] sm:$0xff]
    %v4477 = vld [vmem:[%s427 + $0x271] sm:$0xff]
    %v4478 = vld [vmem:[%s427 + $0x279] sm:$0xff]
    %v4479 = vld [vmem:[%s427 + $0x289] sm:$0xff]
    %v4480 = vld [vmem:[%s427 + $0x291] sm:$0xff]
    %v4481 = vld [vmem:[%s427 + $0x2a1] sm:$0xff]
    %v4482 = vld [vmem:[%s427 + $0x2a9] sm:$0xff]
    %v4483 = vld [vmem:[%s427 + $0x2b9] sm:$0xff]
    %v4484 = vld [vmem:[%s427 + $0x2c1] sm:$0xff]
    %v4485 = vld [vmem:[%s427 + $0x2d1] sm:$0xff]
    %v4486 = vld [vmem:[%s427 + $0x2d9] sm:$0xff]
    %v4487 = vld [vmem:[%s427 + $0x2e9] sm:$0xff]
    %v4488 = vld [vmem:[%s427 + $0x2f1] sm:$0xff]
    %v4489 = vld [vmem:[%s427 + $0x301] sm:$0xff]
    %v4490 = vld [vmem:[%s427 + $0x309] sm:$0xff]
    %v4491 = vld [vmem:[%s427 + $0x319] sm:$0xff]
    %v4492 = vld [vmem:[%s427 + $0x321] sm:$0xff]
    %v4493 = vpack.c.bf16 %v4430, %v4429
    %v4494 = vpack.c.bf16 %v4432, %v4431
    %v4495 = vpack.c.bf16 %v4434, %v4433
    %v4496 = vpack.c.bf16 %v4436, %v4435
    %v4497 = vpack.c.bf16 %v4438, %v4437
    %v4498 = vpack.c.bf16 %v4440, %v4439
    %v4499 = vpack.c.bf16 %v4442, %v4441
    %v4500 = vpack.c.bf16 %v4444, %v4443
    %v4501 = vpack.c.bf16 %v4446, %v4445
    %v4502 = vpack.c.bf16 %v4448, %v4447
    %v4503 = vpack.c.bf16 %v4450, %v4449
    %v4504 = vpack.c.bf16 %v4452, %v4451
    %v4505 = vpack.c.bf16 %v4454, %v4453
    %v4506 = vpack.c.bf16 %v4456, %v4455
    %v4507 = vpack.c.bf16 %v4458, %v4457
    %v4508 = vpack.c.bf16 %v4460, %v4459
    %v4509 = vpack.c.bf16 %v4462, %v4461
    %v4510 = vpack.c.bf16 %v4464, %v4463
    %v4511 = vpack.c.bf16 %v4466, %v4465
    %v4512 = vpack.c.bf16 %v4468, %v4467
    %v4513 = vpack.c.bf16 %v4470, %v4469
    %v4514 = vpack.c.bf16 %v4472, %v4471
    %v4515 = vpack.c.bf16 %v4474, %v4473
    %v4516 = vpack.c.bf16 %v4476, %v4475
    %v4517 = vpack.c.bf16 %v4478, %v4477
    %v4518 = vpack.c.bf16 %v4480, %v4479
    %v4519 = vpack.c.bf16 %v4482, %v4481
    %v4520 = vpack.c.bf16 %v4484, %v4483
    %v4521 = vpack.c.bf16 %v4486, %v4485
    %v4522 = vpack.c.bf16 %v4488, %v4487
    %v4523 = vpack.c.bf16 %v4490, %v4489
    %v4524 = vpack.c.bf16 %v4492, %v4491
    %4557 = vrot.lane.b32.xlu0 %v4493, 64
    %v4558 = vpop.permute.xlu0 %4557
    %4559 = vrot.lane.b32.xlu0 %v4494, 64
    %v4560 = vpop.permute.xlu0 %4559
    %4561 = vrot.lane.b32.xlu0 %v4495, 64
    %v4562 = vpop.permute.xlu0 %4561
    %4563 = vrot.lane.b32.xlu0 %v4496, 64
    %v4564 = vpop.permute.xlu0 %4563
    %4565 = vrot.lane.b32.xlu0 %v4497, 64
    %v4566 = vpop.permute.xlu0 %4565
    %4567 = vrot.lane.b32.xlu0 %v4498, 64
    %v4568 = vpop.permute.xlu0 %4567
    %4569 = vrot.lane.b32.xlu0 %v4499, 64
    %v4570 = vpop.permute.xlu0 %4569
    %4571 = vrot.lane.b32.xlu0 %v4500, 64
    %v4572 = vpop.permute.xlu0 %4571
    %4573 = vrot.lane.b32.xlu0 %v4501, 64
    %v4574 = vpop.permute.xlu0 %4573
    %4575 = vrot.lane.b32.xlu0 %v4502, 64
    %v4576 = vpop.permute.xlu0 %4575
    %4577 = vrot.lane.b32.xlu0 %v4503, 64
    %v4578 = vpop.permute.xlu0 %4577
    %4579 = vrot.lane.b32.xlu0 %v4504, 64
    %v4580 = vpop.permute.xlu0 %4579
    %4581 = vrot.lane.b32.xlu0 %v4505, 64
    %v4582 = vpop.permute.xlu0 %4581
    %4583 = vrot.lane.b32.xlu0 %v4506, 64
    %v4584 = vpop.permute.xlu0 %4583
    %4585 = vrot.lane.b32.xlu0 %v4507, 64
    %v4586 = vpop.permute.xlu0 %4585
    %4587 = vrot.lane.b32.xlu0 %v4508, 64
    %v4588 = vpop.permute.xlu0 %4587
    %4589 = vrot.lane.b32.xlu0 %v4509, 64
    %v4590 = vpop.permute.xlu0 %4589
    %4591 = vrot.lane.b32.xlu0 %v4510, 64
    %v4592 = vpop.permute.xlu0 %4591
    %4593 = vrot.lane.b32.xlu0 %v4511, 64
    %v4594 = vpop.permute.xlu0 %4593
    %4595 = vrot.lane.b32.xlu0 %v4512, 64
    %v4596 = vpop.permute.xlu0 %4595
    %4597 = vrot.lane.b32.xlu0 %v4513, 64
    %v4598 = vpop.permute.xlu0 %4597
    %4599 = vrot.lane.b32.xlu0 %v4514, 64
    %v4600 = vpop.permute.xlu0 %4599
    %4601 = vrot.lane.b32.xlu0 %v4515, 64
    %v4602 = vpop.permute.xlu0 %4601
    %4603 = vrot.lane.b32.xlu0 %v4516, 64
    %v4604 = vpop.permute.xlu0 %4603
    %4605 = vrot.lane.b32.xlu0 %v4517, 64
    %v4606 = vpop.permute.xlu0 %4605
    %4607 = vrot.lane.b32.xlu0 %v4518, 64
    %v4608 = vpop.permute.xlu0 %4607
    %4609 = vrot.lane.b32.xlu0 %v4519, 64
    %v4610 = vpop.permute.xlu0 %4609
    %4611 = vrot.lane.b32.xlu0 %v4520, 64
    %v4612 = vpop.permute.xlu0 %4611
    %4613 = vrot.lane.b32.xlu0 %v4521, 64
    %v4614 = vpop.permute.xlu0 %4613
    %4615 = vrot.lane.b32.xlu0 %v4522, 64
    %v4616 = vpop.permute.xlu0 %4615
    %4617 = vrot.lane.b32.xlu0 %v4523, 64
    %v4618 = vpop.permute.xlu0 %4617
    %4619 = vrot.lane.b32.xlu0 %v4524, 64
    %v4620 = vpop.permute.xlu0 %4619
    %4653 = vst.msk [vmem:[#allocation3] sm:$0xff] %vm1615, %v4558
    %4654 = vst.msk [vmem:[#allocation3 + $0x10] sm:$0xff] %vm1615, %v4560
    %4655 = vst.msk [vmem:[#allocation3 + $0x20] sm:$0xff] %vm1615, %v4562
    %4656 = vst.msk [vmem:[#allocation3 + $0x30] sm:$0xff] %vm1615, %v4564
    %4657 = vst.msk [vmem:[#allocation3 + $0x40] sm:$0xff] %vm1615, %v4566
    %4658 = vst.msk [vmem:[#allocation3 + $0x50] sm:$0xff] %vm1615, %v4568
    %4659 = vst.msk [vmem:[#allocation3 + $0x60] sm:$0xff] %vm1615, %v4570
    %4660 = vst.msk [vmem:[#allocation3 + $0x70] sm:$0xff] %vm1615, %v4572
    %4661 = vst.msk [vmem:[#allocation3 + $0x80] sm:$0xff] %vm1615, %v4574
    %4662 = vst.msk [vmem:[#allocation3 + $0x90] sm:$0xff] %vm1615, %v4576
    %4663 = vst.msk [vmem:[#allocation3 + $0xa0] sm:$0xff] %vm1615, %v4578
    %4664 = vst.msk [vmem:[#allocation3 + $0xb0] sm:$0xff] %vm1615, %v4580
    %4665 = vst.msk [vmem:[#allocation3 + $0xc0] sm:$0xff] %vm1615, %v4582
    %4666 = vst.msk [vmem:[#allocation3 + $0xd0] sm:$0xff] %vm1615, %v4584
    %4667 = vst.msk [vmem:[#allocation3 + $0xe0] sm:$0xff] %vm1615, %v4586
    %4668 = vst.msk [vmem:[#allocation3 + $0xf0] sm:$0xff] %vm1615, %v4588
    %4669 = vst.msk [vmem:[#allocation3 + $0x100] sm:$0xff] %vm1615, %v4590
    %4670 = vst.msk [vmem:[#allocation3 + $0x110] sm:$0xff] %vm1615, %v4592
    %4671 = vst.msk [vmem:[#allocation3 + $0x120] sm:$0xff] %vm1615, %v4594
    %4672 = vst.msk [vmem:[#allocation3 + $0x130] sm:$0xff] %vm1615, %v4596
    %4673 = vst.msk [vmem:[#allocation3 + $0x140] sm:$0xff] %vm1615, %v4598
    %4674 = vst.msk [vmem:[#allocation3 + $0x150] sm:$0xff] %vm1615, %v4600
    %4675 = vst.msk [vmem:[#allocation3 + $0x160] sm:$0xff] %vm1615, %v4602
    %4676 = vst.msk [vmem:[#allocation3 + $0x170] sm:$0xff] %vm1615, %v4604
    %4677 = vst.msk [vmem:[#allocation3 + $0x180] sm:$0xff] %vm1615, %v4606
    %4678 = vst.msk [vmem:[#allocation3 + $0x190] sm:$0xff] %vm1615, %v4608
    %4679 = vst.msk [vmem:[#allocation3 + $0x1a0] sm:$0xff] %vm1615, %v4610
    %4680 = vst.msk [vmem:[#allocation3 + $0x1b0] sm:$0xff] %vm1615, %v4612
    %4681 = vst.msk [vmem:[#allocation3 + $0x1c0] sm:$0xff] %vm1615, %v4614
    %4682 = vst.msk [vmem:[#allocation3 + $0x1d0] sm:$0xff] %vm1615, %v4616
    %4683 = vst.msk [vmem:[#allocation3 + $0x1e0] sm:$0xff] %vm1615, %v4618
    %4684 = vst.msk [vmem:[#allocation3 + $0x1f0] sm:$0xff] %vm1615, %v4620
    %v4685 = vld [vmem:[%s427 + $0x2] sm:$0xff]
    %v4686 = vld [vmem:[%s427 + $0xa] sm:$0xff]
    %v4687 = vld [vmem:[%s427 + $0x1a] sm:$0xff]
    %v4688 = vld [vmem:[%s427 + $0x22] sm:$0xff]
    %v4689 = vld [vmem:[%s427 + $0x32] sm:$0xff]
    %v4690 = vld [vmem:[%s427 + $0x3a] sm:$0xff]
    %v4691 = vld [vmem:[%s427 + $0x4a] sm:$0xff]
    %v4692 = vld [vmem:[%s427 + $0x52] sm:$0xff]
    %v4693 = vld [vmem:[%s427 + $0x62] sm:$0xff]
    %v4694 = vld [vmem:[%s427 + $0x6a] sm:$0xff]
    %v4695 = vld [vmem:[%s427 + $0x7a] sm:$0xff]
    %v4696 = vld [vmem:[%s427 + $0x82] sm:$0xff]
    %v4697 = vld [vmem:[%s427 + $0x92] sm:$0xff]
    %v4698 = vld [vmem:[%s427 + $0x9a] sm:$0xff]
    %v4699 = vld [vmem:[%s427 + $0xaa] sm:$0xff]
    %v4700 = vld [vmem:[%s427 + $0xb2] sm:$0xff]
    %v4701 = vld [vmem:[%s427 + $0xc2] sm:$0xff]
    %v4702 = vld [vmem:[%s427 + $0xca] sm:$0xff]
    %v4703 = vld [vmem:[%s427 + $0xda] sm:$0xff]
    %v4704 = vld [vmem:[%s427 + $0xe2] sm:$0xff]
    %v4705 = vld [vmem:[%s427 + $0xf2] sm:$0xff]
    %v4706 = vld [vmem:[%s427 + $0xfa] sm:$0xff]
    %v4707 = vld [vmem:[%s427 + $0x10a] sm:$0xff]
    %v4708 = vld [vmem:[%s427 + $0x112] sm:$0xff]
    %v4709 = vld [vmem:[%s427 + $0x122] sm:$0xff]
    %v4710 = vld [vmem:[%s427 + $0x12a] sm:$0xff]
    %v4711 = vld [vmem:[%s427 + $0x13a] sm:$0xff]
    %v4712 = vld [vmem:[%s427 + $0x142] sm:$0xff]
    %v4713 = vld [vmem:[%s427 + $0x152] sm:$0xff]
    %v4714 = vld [vmem:[%s427 + $0x15a] sm:$0xff]
    %v4715 = vld [vmem:[%s427 + $0x16a] sm:$0xff]
    %v4716 = vld [vmem:[%s427 + $0x172] sm:$0xff]
    %v4717 = vld [vmem:[%s427 + $0x1b2] sm:$0xff]
    %v4718 = vld [vmem:[%s427 + $0x1ba] sm:$0xff]
    %v4719 = vld [vmem:[%s427 + $0x1ca] sm:$0xff]
    %v4720 = vld [vmem:[%s427 + $0x1d2] sm:$0xff]
    %v4721 = vld [vmem:[%s427 + $0x1e2] sm:$0xff]
    %v4722 = vld [vmem:[%s427 + $0x1ea] sm:$0xff]
    %v4723 = vld [vmem:[%s427 + $0x1fa] sm:$0xff]
    %v4724 = vld [vmem:[%s427 + $0x202] sm:$0xff]
    %v4725 = vld [vmem:[%s427 + $0x212] sm:$0xff]
    %v4726 = vld [vmem:[%s427 + $0x21a] sm:$0xff]
    %v4727 = vld [vmem:[%s427 + $0x22a] sm:$0xff]
    %v4728 = vld [vmem:[%s427 + $0x232] sm:$0xff]
    %v4729 = vld [vmem:[%s427 + $0x242] sm:$0xff]
    %v4730 = vld [vmem:[%s427 + $0x24a] sm:$0xff]
    %v4731 = vld [vmem:[%s427 + $0x25a] sm:$0xff]
    %v4732 = vld [vmem:[%s427 + $0x262] sm:$0xff]
    %v4733 = vld [vmem:[%s427 + $0x272] sm:$0xff]
    %v4734 = vld [vmem:[%s427 + $0x27a] sm:$0xff]
    %v4735 = vld [vmem:[%s427 + $0x28a] sm:$0xff]
    %v4736 = vld [vmem:[%s427 + $0x292] sm:$0xff]
    %v4737 = vld [vmem:[%s427 + $0x2a2] sm:$0xff]
    %v4738 = vld [vmem:[%s427 + $0x2aa] sm:$0xff]
    %v4739 = vld [vmem:[%s427 + $0x2ba] sm:$0xff]
    %v4740 = vld [vmem:[%s427 + $0x2c2] sm:$0xff]
    %v4741 = vld [vmem:[%s427 + $0x2d2] sm:$0xff]
    %v4742 = vld [vmem:[%s427 + $0x2da] sm:$0xff]
    %v4743 = vld [vmem:[%s427 + $0x2ea] sm:$0xff]
    %v4744 = vld [vmem:[%s427 + $0x2f2] sm:$0xff]
    %v4745 = vld [vmem:[%s427 + $0x302] sm:$0xff]
    %v4746 = vld [vmem:[%s427 + $0x30a] sm:$0xff]
    %v4747 = vld [vmem:[%s427 + $0x31a] sm:$0xff]
    %v4748 = vld [vmem:[%s427 + $0x322] sm:$0xff]
    %v4749 = vpack.c.bf16 %v4686, %v4685
    %v4750 = vpack.c.bf16 %v4688, %v4687
    %v4751 = vpack.c.bf16 %v4690, %v4689
    %v4752 = vpack.c.bf16 %v4692, %v4691
    %v4753 = vpack.c.bf16 %v4694, %v4693
    %v4754 = vpack.c.bf16 %v4696, %v4695
    %v4755 = vpack.c.bf16 %v4698, %v4697
    %v4756 = vpack.c.bf16 %v4700, %v4699
    %v4757 = vpack.c.bf16 %v4702, %v4701
    %v4758 = vpack.c.bf16 %v4704, %v4703
    %v4759 = vpack.c.bf16 %v4706, %v4705
    %v4760 = vpack.c.bf16 %v4708, %v4707
    %v4761 = vpack.c.bf16 %v4710, %v4709
    %v4762 = vpack.c.bf16 %v4712, %v4711
    %v4763 = vpack.c.bf16 %v4714, %v4713
    %v4764 = vpack.c.bf16 %v4716, %v4715
    %v4765 = vpack.c.bf16 %v4718, %v4717
    %v4766 = vpack.c.bf16 %v4720, %v4719
    %v4767 = vpack.c.bf16 %v4722, %v4721
    %v4768 = vpack.c.bf16 %v4724, %v4723
    %v4769 = vpack.c.bf16 %v4726, %v4725
    %v4770 = vpack.c.bf16 %v4728, %v4727
    %v4771 = vpack.c.bf16 %v4730, %v4729
    %v4772 = vpack.c.bf16 %v4732, %v4731
    %v4773 = vpack.c.bf16 %v4734, %v4733
    %v4774 = vpack.c.bf16 %v4736, %v4735
    %v4775 = vpack.c.bf16 %v4738, %v4737
    %v4776 = vpack.c.bf16 %v4740, %v4739
    %v4777 = vpack.c.bf16 %v4742, %v4741
    %v4778 = vpack.c.bf16 %v4744, %v4743
    %v4779 = vpack.c.bf16 %v4746, %v4745
    %v4780 = vpack.c.bf16 %v4748, %v4747
    %4813 = vrot.lane.b32.xlu0 %v4749, 80
    %v4814 = vpop.permute.xlu0 %4813
    %4815 = vrot.lane.b32.xlu0 %v4750, 80
    %v4816 = vpop.permute.xlu0 %4815
    %4817 = vrot.lane.b32.xlu0 %v4751, 80
    %v4818 = vpop.permute.xlu0 %4817
    %4819 = vrot.lane.b32.xlu0 %v4752, 80
    %v4820 = vpop.permute.xlu0 %4819
    %4821 = vrot.lane.b32.xlu0 %v4753, 80
    %v4822 = vpop.permute.xlu0 %4821
    %4823 = vrot.lane.b32.xlu0 %v4754, 80
    %v4824 = vpop.permute.xlu0 %4823
    %4825 = vrot.lane.b32.xlu0 %v4755, 80
    %v4826 = vpop.permute.xlu0 %4825
    %4827 = vrot.lane.b32.xlu0 %v4756, 80
    %v4828 = vpop.permute.xlu0 %4827
    %4829 = vrot.lane.b32.xlu0 %v4757, 80
    %v4830 = vpop.permute.xlu0 %4829
    %4831 = vrot.lane.b32.xlu0 %v4758, 80
    %v4832 = vpop.permute.xlu0 %4831
    %4833 = vrot.lane.b32.xlu0 %v4759, 80
    %v4834 = vpop.permute.xlu0 %4833
    %4835 = vrot.lane.b32.xlu0 %v4760, 80
    %v4836 = vpop.permute.xlu0 %4835
    %4837 = vrot.lane.b32.xlu0 %v4761, 80
    %v4838 = vpop.permute.xlu0 %4837
    %4839 = vrot.lane.b32.xlu0 %v4762, 80
    %v4840 = vpop.permute.xlu0 %4839
    %4841 = vrot.lane.b32.xlu0 %v4763, 80
    %v4842 = vpop.permute.xlu0 %4841
    %4843 = vrot.lane.b32.xlu0 %v4764, 80
    %v4844 = vpop.permute.xlu0 %4843
    %4845 = vrot.lane.b32.xlu0 %v4765, 80
    %v4846 = vpop.permute.xlu0 %4845
    %4847 = vrot.lane.b32.xlu0 %v4766, 80
    %v4848 = vpop.permute.xlu0 %4847
    %4849 = vrot.lane.b32.xlu0 %v4767, 80
    %v4850 = vpop.permute.xlu0 %4849
    %4851 = vrot.lane.b32.xlu0 %v4768, 80
    %v4852 = vpop.permute.xlu0 %4851
    %4853 = vrot.lane.b32.xlu0 %v4769, 80
    %v4854 = vpop.permute.xlu0 %4853
    %4855 = vrot.lane.b32.xlu0 %v4770, 80
    %v4856 = vpop.permute.xlu0 %4855
    %4857 = vrot.lane.b32.xlu0 %v4771, 80
    %v4858 = vpop.permute.xlu0 %4857
    %4859 = vrot.lane.b32.xlu0 %v4772, 80
    %v4860 = vpop.permute.xlu0 %4859
    %4861 = vrot.lane.b32.xlu0 %v4773, 80
    %v4862 = vpop.permute.xlu0 %4861
    %4863 = vrot.lane.b32.xlu0 %v4774, 80
    %v4864 = vpop.permute.xlu0 %4863
    %4865 = vrot.lane.b32.xlu0 %v4775, 80
    %v4866 = vpop.permute.xlu0 %4865
    %4867 = vrot.lane.b32.xlu0 %v4776, 80
    %v4868 = vpop.permute.xlu0 %4867
    %4869 = vrot.lane.b32.xlu0 %v4777, 80
    %v4870 = vpop.permute.xlu0 %4869
    %4871 = vrot.lane.b32.xlu0 %v4778, 80
    %v4872 = vpop.permute.xlu0 %4871
    %4873 = vrot.lane.b32.xlu0 %v4779, 80
    %v4874 = vpop.permute.xlu0 %4873
    %4875 = vrot.lane.b32.xlu0 %v4780, 80
    %v4876 = vpop.permute.xlu0 %4875
    %4909 = vst.msk [vmem:[#allocation3] sm:$0xff] %vm1872, %v4814
    %4910 = vst.msk [vmem:[#allocation3 + $0x10] sm:$0xff] %vm1872, %v4816
    %4911 = vst.msk [vmem:[#allocation3 + $0x20] sm:$0xff] %vm1872, %v4818
    %4912 = vst.msk [vmem:[#allocation3 + $0x30] sm:$0xff] %vm1872, %v4820
    %4913 = vst.msk [vmem:[#allocation3 + $0x40] sm:$0xff] %vm1872, %v4822
    %4914 = vst.msk [vmem:[#allocation3 + $0x50] sm:$0xff] %vm1872, %v4824
    %4915 = vst.msk [vmem:[#allocation3 + $0x60] sm:$0xff] %vm1872, %v4826
    %4916 = vst.msk [vmem:[#allocation3 + $0x70] sm:$0xff] %vm1872, %v4828
    %4917 = vst.msk [vmem:[#allocation3 + $0x80] sm:$0xff] %vm1872, %v4830
    %4918 = vst.msk [vmem:[#allocation3 + $0x90] sm:$0xff] %vm1872, %v4832
    %4919 = vst.msk [vmem:[#allocation3 + $0xa0] sm:$0xff] %vm1872, %v4834
    %4920 = vst.msk [vmem:[#allocation3 + $0xb0] sm:$0xff] %vm1872, %v4836
    %4921 = vst.msk [vmem:[#allocation3 + $0xc0] sm:$0xff] %vm1872, %v4838
    %4922 = vst.msk [vmem:[#allocation3 + $0xd0] sm:$0xff] %vm1872, %v4840
    %4923 = vst.msk [vmem:[#allocation3 + $0xe0] sm:$0xff] %vm1872, %v4842
    %4924 = vst.msk [vmem:[#allocation3 + $0xf0] sm:$0xff] %vm1872, %v4844
    %4925 = vst.msk [vmem:[#allocation3 + $0x100] sm:$0xff] %vm1872, %v4846
    %4926 = vst.msk [vmem:[#allocation3 + $0x110] sm:$0xff] %vm1872, %v4848
    %4927 = vst.msk [vmem:[#allocation3 + $0x120] sm:$0xff] %vm1872, %v4850
    %4928 = vst.msk [vmem:[#allocation3 + $0x130] sm:$0xff] %vm1872, %v4852
    %4929 = vst.msk [vmem:[#allocation3 + $0x140] sm:$0xff] %vm1872, %v4854
    %4930 = vst.msk [vmem:[#allocation3 + $0x150] sm:$0xff] %vm1872, %v4856
    %4931 = vst.msk [vmem:[#allocation3 + $0x160] sm:$0xff] %vm1872, %v4858
    %4932 = vst.msk [vmem:[#allocation3 + $0x170] sm:$0xff] %vm1872, %v4860
    %4933 = vst.msk [vmem:[#allocation3 + $0x180] sm:$0xff] %vm1872, %v4862
    %4934 = vst.msk [vmem:[#allocation3 + $0x190] sm:$0xff] %vm1872, %v4864
    %4935 = vst.msk [vmem:[#allocation3 + $0x1a0] sm:$0xff] %vm1872, %v4866
    %4936 = vst.msk [vmem:[#allocation3 + $0x1b0] sm:$0xff] %vm1872, %v4868
    %4937 = vst.msk [vmem:[#allocation3 + $0x1c0] sm:$0xff] %vm1872, %v4870
    %4938 = vst.msk [vmem:[#allocation3 + $0x1d0] sm:$0xff] %vm1872, %v4872
    %4939 = vst.msk [vmem:[#allocation3 + $0x1e0] sm:$0xff] %vm1872, %v4874
    %4940 = vst.msk [vmem:[#allocation3 + $0x1f0] sm:$0xff] %vm1872, %v4876
    %v4941 = vld [vmem:[%s1905] sm:$0xff]
    %v4942 = vld [vmem:[%s1905 + $0x8] sm:$0xff]
    %v4943 = vld [vmem:[%s1905 + $0x18] sm:$0xff]
    %v4944 = vld [vmem:[%s1905 + $0x20] sm:$0xff]
    %v4945 = vld [vmem:[%s1905 + $0x30] sm:$0xff]
    %v4946 = vld [vmem:[%s1905 + $0x38] sm:$0xff]
    %v4947 = vld [vmem:[%s1905 + $0x48] sm:$0xff]
    %v4948 = vld [vmem:[%s1905 + $0x50] sm:$0xff]
    %v4949 = vld [vmem:[%s1905 + $0x60] sm:$0xff]
    %v4950 = vld [vmem:[%s1905 + $0x68] sm:$0xff]
    %v4951 = vld [vmem:[%s1905 + $0x78] sm:$0xff]
    %v4952 = vld [vmem:[%s1905 + $0x80] sm:$0xff]
    %v4953 = vld [vmem:[%s1905 + $0x90] sm:$0xff]
    %v4954 = vld [vmem:[%s1905 + $0x98] sm:$0xff]
    %v4955 = vld [vmem:[%s1905 + $0xa8] sm:$0xff]
    %v4956 = vld [vmem:[%s1905 + $0xb0] sm:$0xff]
    %v4957 = vld [vmem:[%s1905 + $0xc0] sm:$0xff]
    %v4958 = vld [vmem:[%s1905 + $0xc8] sm:$0xff]
    %v4959 = vld [vmem:[%s1905 + $0xd8] sm:$0xff]
    %v4960 = vld [vmem:[%s1905 + $0xe0] sm:$0xff]
    %v4961 = vld [vmem:[%s1905 + $0xf0] sm:$0xff]
    %v4962 = vld [vmem:[%s1905 + $0xf8] sm:$0xff]
    %v4963 = vld [vmem:[%s1905 + $0x108] sm:$0xff]
    %v4964 = vld [vmem:[%s1905 + $0x110] sm:$0xff]
    %v4965 = vld [vmem:[%s1905 + $0x120] sm:$0xff]
    %v4966 = vld [vmem:[%s1905 + $0x128] sm:$0xff]
    %v4967 = vld [vmem:[%s1905 + $0x138] sm:$0xff]
    %v4968 = vld [vmem:[%s1905 + $0x140] sm:$0xff]
    %v4969 = vld [vmem:[%s1905 + $0x150] sm:$0xff]
    %v4970 = vld [vmem:[%s1905 + $0x158] sm:$0xff]
    %v4971 = vld [vmem:[%s1905 + $0x168] sm:$0xff]
    %v4972 = vld [vmem:[%s1905 + $0x170] sm:$0xff]
    %v4973 = vld [vmem:[%s1905 + $0x1b0] sm:$0xff]
    %v4974 = vld [vmem:[%s1905 + $0x1b8] sm:$0xff]
    %v4975 = vld [vmem:[%s1905 + $0x1c8] sm:$0xff]
    %v4976 = vld [vmem:[%s1905 + $0x1d0] sm:$0xff]
    %v4977 = vld [vmem:[%s1905 + $0x1e0] sm:$0xff]
    %v4978 = vld [vmem:[%s1905 + $0x1e8] sm:$0xff]
    %v4979 = vld [vmem:[%s1905 + $0x1f8] sm:$0xff]
    %v4980 = vld [vmem:[%s1905 + $0x200] sm:$0xff]
    %v4981 = vld [vmem:[%s1905 + $0x210] sm:$0xff]
    %v4982 = vld [vmem:[%s1905 + $0x218] sm:$0xff]
    %v4983 = vld [vmem:[%s1905 + $0x228] sm:$0xff]
    %v4984 = vld [vmem:[%s1905 + $0x230] sm:$0xff]
    %v4985 = vld [vmem:[%s1905 + $0x240] sm:$0xff]
    %v4986 = vld [vmem:[%s1905 + $0x248] sm:$0xff]
    %v4987 = vld [vmem:[%s1905 + $0x258] sm:$0xff]
    %v4988 = vld [vmem:[%s1905 + $0x260] sm:$0xff]
    %v4989 = vld [vmem:[%s1905 + $0x270] sm:$0xff]
    %v4990 = vld [vmem:[%s1905 + $0x278] sm:$0xff]
    %v4991 = vld [vmem:[%s1905 + $0x288] sm:$0xff]
    %v4992 = vld [vmem:[%s1905 + $0x290] sm:$0xff]
    %v4993 = vld [vmem:[%s1905 + $0x2a0] sm:$0xff]
    %v4994 = vld [vmem:[%s1905 + $0x2a8] sm:$0xff]
    %v4995 = vld [vmem:[%s1905 + $0x2b8] sm:$0xff]
    %v4996 = vld [vmem:[%s1905 + $0x2c0] sm:$0xff]
    %v4997 = vld [vmem:[%s1905 + $0x2d0] sm:$0xff]
    %v4998 = vld [vmem:[%s1905 + $0x2d8] sm:$0xff]
    %v4999 = vld [vmem:[%s1905 + $0x2e8] sm:$0xff]
    %v5000 = vld [vmem:[%s1905 + $0x2f0] sm:$0xff]
    %v5001 = vld [vmem:[%s1905 + $0x300] sm:$0xff]
    %v5002 = vld [vmem:[%s1905 + $0x308] sm:$0xff]
    %v5003 = vld [vmem:[%s1905 + $0x318] sm:$0xff]
    %v5004 = vld [vmem:[%s1905 + $0x320] sm:$0xff]
    %v5005 = vpack.c.bf16 %v4942, %v4941
    %v5006 = vpack.c.bf16 %v4944, %v4943
    %v5007 = vpack.c.bf16 %v4946, %v4945
    %v5008 = vpack.c.bf16 %v4948, %v4947
    %v5009 = vpack.c.bf16 %v4950, %v4949
    %v5010 = vpack.c.bf16 %v4952, %v4951
    %v5011 = vpack.c.bf16 %v4954, %v4953
    %v5012 = vpack.c.bf16 %v4956, %v4955
    %v5013 = vpack.c.bf16 %v4958, %v4957
    %v5014 = vpack.c.bf16 %v4960, %v4959
    %v5015 = vpack.c.bf16 %v4962, %v4961
    %v5016 = vpack.c.bf16 %v4964, %v4963
    %v5017 = vpack.c.bf16 %v4966, %v4965
    %v5018 = vpack.c.bf16 %v4968, %v4967
    %v5019 = vpack.c.bf16 %v4970, %v4969
    %v5020 = vpack.c.bf16 %v4972, %v4971
    %v5021 = vpack.c.bf16 %v4974, %v4973
    %v5022 = vpack.c.bf16 %v4976, %v4975
    %v5023 = vpack.c.bf16 %v4978, %v4977
    %v5024 = vpack.c.bf16 %v4980, %v4979
    %v5025 = vpack.c.bf16 %v4982, %v4981
    %v5026 = vpack.c.bf16 %v4984, %v4983
    %v5027 = vpack.c.bf16 %v4986, %v4985
    %v5028 = vpack.c.bf16 %v4988, %v4987
    %v5029 = vpack.c.bf16 %v4990, %v4989
    %v5030 = vpack.c.bf16 %v4992, %v4991
    %v5031 = vpack.c.bf16 %v4994, %v4993
    %v5032 = vpack.c.bf16 %v4996, %v4995
    %v5033 = vpack.c.bf16 %v4998, %v4997
    %v5034 = vpack.c.bf16 %v5000, %v4999
    %v5035 = vpack.c.bf16 %v5002, %v5001
    %v5036 = vpack.c.bf16 %v5004, %v5003
    %5069 = vrot.lane.b32.xlu0 %v5005, 96
    %v5070 = vpop.permute.xlu0 %5069
    %5071 = vrot.lane.b32.xlu0 %v5006, 96
    %v5072 = vpop.permute.xlu0 %5071
    %5073 = vrot.lane.b32.xlu0 %v5007, 96
    %v5074 = vpop.permute.xlu0 %5073
    %5075 = vrot.lane.b32.xlu0 %v5008, 96
    %v5076 = vpop.permute.xlu0 %5075
    %5077 = vrot.lane.b32.xlu0 %v5009, 96
    %v5078 = vpop.permute.xlu0 %5077
    %5079 = vrot.lane.b32.xlu0 %v5010, 96
    %v5080 = vpop.permute.xlu0 %5079
    %5081 = vrot.lane.b32.xlu0 %v5011, 96
    %v5082 = vpop.permute.xlu0 %5081
    %5083 = vrot.lane.b32.xlu0 %v5012, 96
    %v5084 = vpop.permute.xlu0 %5083
    %5085 = vrot.lane.b32.xlu0 %v5013, 96
    %v5086 = vpop.permute.xlu0 %5085
    %5087 = vrot.lane.b32.xlu0 %v5014, 96
    %v5088 = vpop.permute.xlu0 %5087
    %5089 = vrot.lane.b32.xlu0 %v5015, 96
    %v5090 = vpop.permute.xlu0 %5089
    %5091 = vrot.lane.b32.xlu0 %v5016, 96
    %v5092 = vpop.permute.xlu0 %5091
    %5093 = vrot.lane.b32.xlu0 %v5017, 96
    %v5094 = vpop.permute.xlu0 %5093
    %5095 = vrot.lane.b32.xlu0 %v5018, 96
    %v5096 = vpop.permute.xlu0 %5095
    %5097 = vrot.lane.b32.xlu0 %v5019, 96
    %v5098 = vpop.permute.xlu0 %5097
    %5099 = vrot.lane.b32.xlu0 %v5020, 96
    %v5100 = vpop.permute.xlu0 %5099
    %5101 = vrot.lane.b32.xlu0 %v5021, 96
    %v5102 = vpop.permute.xlu0 %5101
    %5103 = vrot.lane.b32.xlu0 %v5022, 96
    %v5104 = vpop.permute.xlu0 %5103
    %5105 = vrot.lane.b32.xlu0 %v5023, 96
    %v5106 = vpop.permute.xlu0 %5105
    %5107 = vrot.lane.b32.xlu0 %v5024, 96
    %v5108 = vpop.permute.xlu0 %5107
    %5109 = vrot.lane.b32.xlu0 %v5025, 96
    %v5110 = vpop.permute.xlu0 %5109
    %5111 = vrot.lane.b32.xlu0 %v5026, 96
    %v5112 = vpop.permute.xlu0 %5111
    %5113 = vrot.lane.b32.xlu0 %v5027, 96
    %v5114 = vpop.permute.xlu0 %5113
    %5115 = vrot.lane.b32.xlu0 %v5028, 96
    %v5116 = vpop.permute.xlu0 %5115
    %5117 = vrot.lane.b32.xlu0 %v5029, 96
    %v5118 = vpop.permute.xlu0 %5117
    %5119 = vrot.lane.b32.xlu0 %v5030, 96
    %v5120 = vpop.permute.xlu0 %5119
    %5121 = vrot.lane.b32.xlu0 %v5031, 96
    %v5122 = vpop.permute.xlu0 %5121
    %5123 = vrot.lane.b32.xlu0 %v5032, 96
    %v5124 = vpop.permute.xlu0 %5123
    %5125 = vrot.lane.b32.xlu0 %v5033, 96
    %v5126 = vpop.permute.xlu0 %5125
    %5127 = vrot.lane.b32.xlu0 %v5034, 96
    %v5128 = vpop.permute.xlu0 %5127
    %5129 = vrot.lane.b32.xlu0 %v5035, 96
    %v5130 = vpop.permute.xlu0 %5129
    %5131 = vrot.lane.b32.xlu0 %v5036, 96
    %v5132 = vpop.permute.xlu0 %5131
    %5165 = vst.msk [vmem:[#allocation3] sm:$0xff] %vm2130, %v5070
    %5166 = vst.msk [vmem:[#allocation3 + $0x10] sm:$0xff] %vm2130, %v5072
    %5167 = vst.msk [vmem:[#allocation3 + $0x20] sm:$0xff] %vm2130, %v5074
    %5168 = vst.msk [vmem:[#allocation3 + $0x30] sm:$0xff] %vm2130, %v5076
    %5169 = vst.msk [vmem:[#allocation3 + $0x40] sm:$0xff] %vm2130, %v5078
    %5170 = vst.msk [vmem:[#allocation3 + $0x50] sm:$0xff] %vm2130, %v5080
    %5171 = vst.msk [vmem:[#allocation3 + $0x60] sm:$0xff] %vm2130, %v5082
    %5172 = vst.msk [vmem:[#allocation3 + $0x70] sm:$0xff] %vm2130, %v5084
    %5173 = vst.msk [vmem:[#allocation3 + $0x80] sm:$0xff] %vm2130, %v5086
    %5174 = vst.msk [vmem:[#allocation3 + $0x90] sm:$0xff] %vm2130, %v5088
    %5175 = vst.msk [vmem:[#allocation3 + $0xa0] sm:$0xff] %vm2130, %v5090
    %5176 = vst.msk [vmem:[#allocation3 + $0xb0] sm:$0xff] %vm2130, %v5092
    %5177 = vst.msk [vmem:[#allocation3 + $0xc0] sm:$0xff] %vm2130, %v5094
    %5178 = vst.msk [vmem:[#allocation3 + $0xd0] sm:$0xff] %vm2130, %v5096
    %5179 = vst.msk [vmem:[#allocation3 + $0xe0] sm:$0xff] %vm2130, %v5098
    %5180 = vst.msk [vmem:[#allocation3 + $0xf0] sm:$0xff] %vm2130, %v5100
    %5181 = vst.msk [vmem:[#allocation3 + $0x100] sm:$0xff] %vm2130, %v5102
    %5182 = vst.msk [vmem:[#allocation3 + $0x110] sm:$0xff] %vm2130, %v5104
    %5183 = vst.msk [vmem:[#allocation3 + $0x120] sm:$0xff] %vm2130, %v5106
    %5184 = vst.msk [vmem:[#allocation3 + $0x130] sm:$0xff] %vm2130, %v5108
    %5185 = vst.msk [vmem:[#allocation3 + $0x140] sm:$0xff] %vm2130, %v5110
    %5186 = vst.msk [vmem:[#allocation3 + $0x150] sm:$0xff] %vm2130, %v5112
    %5187 = vst.msk [vmem:[#allocation3 + $0x160] sm:$0xff] %vm2130, %v5114
    %5188 = vst.msk [vmem:[#allocation3 + $0x170] sm:$0xff] %vm2130, %v5116
    %5189 = vst.msk [vmem:[#allocation3 + $0x180] sm:$0xff] %vm2130, %v5118
    %5190 = vst.msk [vmem:[#allocation3 + $0x190] sm:$0xff] %vm2130, %v5120
    %5191 = vst.msk [vmem:[#allocation3 + $0x1a0] sm:$0xff] %vm2130, %v5122
    %5192 = vst.msk [vmem:[#allocation3 + $0x1b0] sm:$0xff] %vm2130, %v5124
    %5193 = vst.msk [vmem:[#allocation3 + $0x1c0] sm:$0xff] %vm2130, %v5126
    %5194 = vst.msk [vmem:[#allocation3 + $0x1d0] sm:$0xff] %vm2130, %v5128
    %5195 = vst.msk [vmem:[#allocation3 + $0x1e0] sm:$0xff] %vm2130, %v5130
    %5196 = vst.msk [vmem:[#allocation3 + $0x1f0] sm:$0xff] %vm2130, %v5132
    %v5197 = vld [vmem:[%s1905 + $0x1] sm:$0xff]
    %v5198 = vld [vmem:[%s1905 + $0x9] sm:$0xff]
    %v5199 = vld [vmem:[%s1905 + $0x19] sm:$0xff]
    %v5200 = vld [vmem:[%s1905 + $0x21] sm:$0xff]
    %v5201 = vld [vmem:[%s1905 + $0x31] sm:$0xff]
    %v5202 = vld [vmem:[%s1905 + $0x39] sm:$0xff]
    %v5203 = vld [vmem:[%s1905 + $0x49] sm:$0xff]
    %v5204 = vld [vmem:[%s1905 + $0x51] sm:$0xff]
    %v5205 = vld [vmem:[%s1905 + $0x61] sm:$0xff]
    %v5206 = vld [vmem:[%s1905 + $0x69] sm:$0xff]
    %v5207 = vld [vmem:[%s1905 + $0x79] sm:$0xff]
    %v5208 = vld [vmem:[%s1905 + $0x81] sm:$0xff]
    %v5209 = vld [vmem:[%s1905 + $0x91] sm:$0xff]
    %v5210 = vld [vmem:[%s1905 + $0x99] sm:$0xff]
    %v5211 = vld [vmem:[%s1905 + $0xa9] sm:$0xff]
    %v5212 = vld [vmem:[%s1905 + $0xb1] sm:$0xff]
    %v5213 = vld [vmem:[%s1905 + $0xc1] sm:$0xff]
    %v5214 = vld [vmem:[%s1905 + $0xc9] sm:$0xff]
    %v5215 = vld [vmem:[%s1905 + $0xd9] sm:$0xff]
    %v5216 = vld [vmem:[%s1905 + $0xe1] sm:$0xff]
    %v5217 = vld [vmem:[%s1905 + $0xf1] sm:$0xff]
    %v5218 = vld [vmem:[%s1905 + $0xf9] sm:$0xff]
    %v5219 = vld [vmem:[%s1905 + $0x109] sm:$0xff]
    %v5220 = vld [vmem:[%s1905 + $0x111] sm:$0xff]
    %v5221 = vld [vmem:[%s1905 + $0x121] sm:$0xff]
    %v5222 = vld [vmem:[%s1905 + $0x129] sm:$0xff]
    %v5223 = vld [vmem:[%s1905 + $0x139] sm:$0xff]
    %v5224 = vld [vmem:[%s1905 + $0x141] sm:$0xff]
    %v5225 = vld [vmem:[%s1905 + $0x151] sm:$0xff]
    %v5226 = vld [vmem:[%s1905 + $0x159] sm:$0xff]
    %v5227 = vld [vmem:[%s1905 + $0x169] sm:$0xff]
    %v5228 = vld [vmem:[%s1905 + $0x171] sm:$0xff]
    %v5229 = vld [vmem:[%s1905 + $0x1b1] sm:$0xff]
    %v5230 = vld [vmem:[%s1905 + $0x1b9] sm:$0xff]
    %v5231 = vld [vmem:[%s1905 + $0x1c9] sm:$0xff]
    %v5232 = vld [vmem:[%s1905 + $0x1d1] sm:$0xff]
    %v5233 = vld [vmem:[%s1905 + $0x1e1] sm:$0xff]
    %v5234 = vld [vmem:[%s1905 + $0x1e9] sm:$0xff]
    %v5235 = vld [vmem:[%s1905 + $0x1f9] sm:$0xff]
    %v5236 = vld [vmem:[%s1905 + $0x201] sm:$0xff]
    %v5237 = vld [vmem:[%s1905 + $0x211] sm:$0xff]
    %v5238 = vld [vmem:[%s1905 + $0x219] sm:$0xff]
    %v5239 = vld [vmem:[%s1905 + $0x229] sm:$0xff]
    %v5240 = vld [vmem:[%s1905 + $0x231] sm:$0xff]
    %v5241 = vld [vmem:[%s1905 + $0x241] sm:$0xff]
    %v5242 = vld [vmem:[%s1905 + $0x249] sm:$0xff]
    %v5243 = vld [vmem:[%s1905 + $0x259] sm:$0xff]
    %v5244 = vld [vmem:[%s1905 + $0x261] sm:$0xff]
    %v5245 = vld [vmem:[%s1905 + $0x271] sm:$0xff]
    %v5246 = vld [vmem:[%s1905 + $0x279] sm:$0xff]
    %v5247 = vld [vmem:[%s1905 + $0x289] sm:$0xff]
    %v5248 = vld [vmem:[%s1905 + $0x291] sm:$0xff]
    %v5249 = vld [vmem:[%s1905 + $0x2a1] sm:$0xff]
    %v5250 = vld [vmem:[%s1905 + $0x2a9] sm:$0xff]
    %v5251 = vld [vmem:[%s1905 + $0x2b9] sm:$0xff]
    %v5252 = vld [vmem:[%s1905 + $0x2c1] sm:$0xff]
    %v5253 = vld [vmem:[%s1905 + $0x2d1] sm:$0xff]
    %v5254 = vld [vmem:[%s1905 + $0x2d9] sm:$0xff]
    %v5255 = vld [vmem:[%s1905 + $0x2e9] sm:$0xff]
    %v5256 = vld [vmem:[%s1905 + $0x2f1] sm:$0xff]
    %v5257 = vld [vmem:[%s1905 + $0x301] sm:$0xff]
    %v5258 = vld [vmem:[%s1905 + $0x309] sm:$0xff]
    %v5259 = vld [vmem:[%s1905 + $0x319] sm:$0xff]
    %v5260 = vld [vmem:[%s1905 + $0x321] sm:$0xff]
    %v5261 = vpack.c.bf16 %v5198, %v5197
    %v5262 = vpack.c.bf16 %v5200, %v5199
    %v5263 = vpack.c.bf16 %v5202, %v5201
    %v5264 = vpack.c.bf16 %v5204, %v5203
    %v5265 = vpack.c.bf16 %v5206, %v5205
    %v5266 = vpack.c.bf16 %v5208, %v5207
    %v5267 = vpack.c.bf16 %v5210, %v5209
    %v5268 = vpack.c.bf16 %v5212, %v5211
    %v5269 = vpack.c.bf16 %v5214, %v5213
    %v5270 = vpack.c.bf16 %v5216, %v5215
    %v5271 = vpack.c.bf16 %v5218, %v5217
    %v5272 = vpack.c.bf16 %v5220, %v5219
    %v5273 = vpack.c.bf16 %v5222, %v5221
    %v5274 = vpack.c.bf16 %v5224, %v5223
    %v5275 = vpack.c.bf16 %v5226, %v5225
    %v5276 = vpack.c.bf16 %v5228, %v5227
    %v5277 = vpack.c.bf16 %v5230, %v5229
    %v5278 = vpack.c.bf16 %v5232, %v5231
    %v5279 = vpack.c.bf16 %v5234, %v5233
    %v5280 = vpack.c.bf16 %v5236, %v5235
    %v5281 = vpack.c.bf16 %v5238, %v5237
    %v5282 = vpack.c.bf16 %v5240, %v5239
    %v5283 = vpack.c.bf16 %v5242, %v5241
    %v5284 = vpack.c.bf16 %v5244, %v5243
    %v5285 = vpack.c.bf16 %v5246, %v5245
    %v5286 = vpack.c.bf16 %v5248, %v5247
    %v5287 = vpack.c.bf16 %v5250, %v5249
    %v5288 = vpack.c.bf16 %v5252, %v5251
    %v5289 = vpack.c.bf16 %v5254, %v5253
    %v5290 = vpack.c.bf16 %v5256, %v5255
    %v5291 = vpack.c.bf16 %v5258, %v5257
    %v5292 = vpack.c.bf16 %v5260, %v5259
    %5325 = vrot.lane.b32.xlu0 %v5261, 112
    %v5326 = vpop.permute.xlu0 %5325
    %5327 = vrot.lane.b32.xlu0 %v5262, 112
    %v5328 = vpop.permute.xlu0 %5327
    %5329 = vrot.lane.b32.xlu0 %v5263, 112
    %v5330 = vpop.permute.xlu0 %5329
    %5331 = vrot.lane.b32.xlu0 %v5264, 112
    %v5332 = vpop.permute.xlu0 %5331
    %5333 = vrot.lane.b32.xlu0 %v5265, 112
    %v5334 = vpop.permute.xlu0 %5333
    %5335 = vrot.lane.b32.xlu0 %v5266, 112
    %v5336 = vpop.permute.xlu0 %5335
    %5337 = vrot.lane.b32.xlu0 %v5267, 112
    %v5338 = vpop.permute.xlu0 %5337
    %5339 = vrot.lane.b32.xlu0 %v5268, 112
    %v5340 = vpop.permute.xlu0 %5339
    %5341 = vrot.lane.b32.xlu0 %v5269, 112
    %v5342 = vpop.permute.xlu0 %5341
    %5343 = vrot.lane.b32.xlu0 %v5270, 112
    %v5344 = vpop.permute.xlu0 %5343
    %5345 = vrot.lane.b32.xlu0 %v5271, 112
    %v5346 = vpop.permute.xlu0 %5345
    %5347 = vrot.lane.b32.xlu0 %v5272, 112
    %v5348 = vpop.permute.xlu0 %5347
    %5349 = vrot.lane.b32.xlu0 %v5273, 112
    %v5350 = vpop.permute.xlu0 %5349
    %5351 = vrot.lane.b32.xlu0 %v5274, 112
    %v5352 = vpop.permute.xlu0 %5351
    %5353 = vrot.lane.b32.xlu0 %v5275, 112
    %v5354 = vpop.permute.xlu0 %5353
    %5355 = vrot.lane.b32.xlu0 %v5276, 112
    %v5356 = vpop.permute.xlu0 %5355
    %5357 = vrot.lane.b32.xlu0 %v5277, 112
    %v5358 = vpop.permute.xlu0 %5357
    %5359 = vrot.lane.b32.xlu0 %v5278, 112
    %v5360 = vpop.permute.xlu0 %5359
    %5361 = vrot.lane.b32.xlu0 %v5279, 112
    %v5362 = vpop.permute.xlu0 %5361
    %5363 = vrot.lane.b32.xlu0 %v5280, 112
    %v5364 = vpop.permute.xlu0 %5363
    %5365 = vrot.lane.b32.xlu0 %v5281, 112
    %v5366 = vpop.permute.xlu0 %5365
    %5367 = vrot.lane.b32.xlu0 %v5282, 112
    %v5368 = vpop.permute.xlu0 %5367
    %5369 = vrot.lane.b32.xlu0 %v5283, 112
    %v5370 = vpop.permute.xlu0 %5369
    %5371 = vrot.lane.b32.xlu0 %v5284, 112
    %v5372 = vpop.permute.xlu0 %5371
    %5373 = vrot.lane.b32.xlu0 %v5285, 112
    %v5374 = vpop.permute.xlu0 %5373
    %5375 = vrot.lane.b32.xlu0 %v5286, 112
    %v5376 = vpop.permute.xlu0 %5375
    %5377 = vrot.lane.b32.xlu0 %v5287, 112
    %v5378 = vpop.permute.xlu0 %5377
    %5379 = vrot.lane.b32.xlu0 %v5288, 112
    %v5380 = vpop.permute.xlu0 %5379
    %5381 = vrot.lane.b32.xlu0 %v5289, 112
    %v5382 = vpop.permute.xlu0 %5381
    %5383 = vrot.lane.b32.xlu0 %v5290, 112
    %v5384 = vpop.permute.xlu0 %5383
    %5385 = vrot.lane.b32.xlu0 %v5291, 112
    %v5386 = vpop.permute.xlu0 %5385
    %5387 = vrot.lane.b32.xlu0 %v5292, 112
    %v5388 = vpop.permute.xlu0 %5387
    %5421 = vst.msk [vmem:[#allocation3] sm:$0xff] %vm2387, %v5326
    %5422 = vst.msk [vmem:[#allocation3 + $0x10] sm:$0xff] %vm2387, %v5328
    %5423 = vst.msk [vmem:[#allocation3 + $0x20] sm:$0xff] %vm2387, %v5330
    %5424 = vst.msk [vmem:[#allocation3 + $0x30] sm:$0xff] %vm2387, %v5332
    %5425 = vst.msk [vmem:[#allocation3 + $0x40] sm:$0xff] %vm2387, %v5334
    %5426 = vst.msk [vmem:[#allocation3 + $0x50] sm:$0xff] %vm2387, %v5336
    %5427 = vst.msk [vmem:[#allocation3 + $0x60] sm:$0xff] %vm2387, %v5338
    %5428 = vst.msk [vmem:[#allocation3 + $0x70] sm:$0xff] %vm2387, %v5340
    %5429 = vst.msk [vmem:[#allocation3 + $0x80] sm:$0xff] %vm2387, %v5342
    %5430 = vst.msk [vmem:[#allocation3 + $0x90] sm:$0xff] %vm2387, %v5344
    %5431 = vst.msk [vmem:[#allocation3 + $0xa0] sm:$0xff] %vm2387, %v5346
    %5432 = vst.msk [vmem:[#allocation3 + $0xb0] sm:$0xff] %vm2387, %v5348
    %5433 = vst.msk [vmem:[#allocation3 + $0xc0] sm:$0xff] %vm2387, %v5350
    %5434 = vst.msk [vmem:[#allocation3 + $0xd0] sm:$0xff] %vm2387, %v5352
    %5435 = vst.msk [vmem:[#allocation3 + $0xe0] sm:$0xff] %vm2387, %v5354
    %5436 = vst.msk [vmem:[#allocation3 + $0xf0] sm:$0xff] %vm2387, %v5356
    %5437 = vst.msk [vmem:[#allocation3 + $0x100] sm:$0xff] %vm2387, %v5358
    %5438 = vst.msk [vmem:[#allocation3 + $0x110] sm:$0xff] %vm2387, %v5360
    %5439 = vst.msk [vmem:[#allocation3 + $0x120] sm:$0xff] %vm2387, %v5362
    %5440 = vst.msk [vmem:[#allocation3 + $0x130] sm:$0xff] %vm2387, %v5364
    %5441 = vst.msk [vmem:[#allocation3 + $0x140] sm:$0xff] %vm2387, %v5366
    %5442 = vst.msk [vmem:[#allocation3 + $0x150] sm:$0xff] %vm2387, %v5368
    %5443 = vst.msk [vmem:[#allocation3 + $0x160] sm:$0xff] %vm2387, %v5370
    %5444 = vst.msk [vmem:[#allocation3 + $0x170] sm:$0xff] %vm2387, %v5372
    %5445 = vst.msk [vmem:[#allocation3 + $0x180] sm:$0xff] %vm2387, %v5374
    %5446 = vst.msk [vmem:[#allocation3 + $0x190] sm:$0xff] %vm2387, %v5376
    %5447 = vst.msk [vmem:[#allocation3 + $0x1a0] sm:$0xff] %vm2387, %v5378
    %5448 = vst.msk [vmem:[#allocation3 + $0x1b0] sm:$0xff] %vm2387, %v5380
    %5449 = vst.msk [vmem:[#allocation3 + $0x1c0] sm:$0xff] %vm2387, %v5382
    %5450 = vst.msk [vmem:[#allocation3 + $0x1d0] sm:$0xff] %vm2387, %v5384
    %5451 = vst.msk [vmem:[#allocation3 + $0x1e0] sm:$0xff] %vm2387, %v5386
    %5452 = vst.msk [vmem:[#allocation3 + $0x1f0] sm:$0xff] %vm2387, %v5388
    %v5453 = vld [vmem:[%s1905 + $0x2] sm:$0xff]
    %v5454 = vld [vmem:[%s1905 + $0xa] sm:$0xff]
    %v5455 = vld [vmem:[%s1905 + $0x1a] sm:$0xff]
    %v5456 = vld [vmem:[%s1905 + $0x22] sm:$0xff]
    %v5457 = vld [vmem:[%s1905 + $0x32] sm:$0xff]
    %v5458 = vld [vmem:[%s1905 + $0x3a] sm:$0xff]
    %v5459 = vld [vmem:[%s1905 + $0x4a] sm:$0xff]
    %v5460 = vld [vmem:[%s1905 + $0x52] sm:$0xff]
    %v5461 = vld [vmem:[%s1905 + $0x62] sm:$0xff]
    %v5462 = vld [vmem:[%s1905 + $0x6a] sm:$0xff]
    %v5463 = vld [vmem:[%s1905 + $0x7a] sm:$0xff]
    %v5464 = vld [vmem:[%s1905 + $0x82] sm:$0xff]
    %v5465 = vld [vmem:[%s1905 + $0x92] sm:$0xff]
    %v5466 = vld [vmem:[%s1905 + $0x9a] sm:$0xff]
    %v5467 = vld [vmem:[%s1905 + $0xaa] sm:$0xff]
    %v5468 = vld [vmem:[%s1905 + $0xb2] sm:$0xff]
    %v5469 = vld [vmem:[%s1905 + $0xc2] sm:$0xff]
    %v5470 = vld [vmem:[%s1905 + $0xca] sm:$0xff]
    %v5471 = vld [vmem:[%s1905 + $0xda] sm:$0xff]
    %v5472 = vld [vmem:[%s1905 + $0xe2] sm:$0xff]
    %v5473 = vld [vmem:[%s1905 + $0xf2] sm:$0xff]
    %v5474 = vld [vmem:[%s1905 + $0xfa] sm:$0xff]
    %v5475 = vld [vmem:[%s1905 + $0x10a] sm:$0xff]
    %v5476 = vld [vmem:[%s1905 + $0x112] sm:$0xff]
    %v5477 = vld [vmem:[%s1905 + $0x122] sm:$0xff]
    %v5478 = vld [vmem:[%s1905 + $0x12a] sm:$0xff]
    %v5479 = vld [vmem:[%s1905 + $0x13a] sm:$0xff]
    %v5480 = vld [vmem:[%s1905 + $0x142] sm:$0xff]
    %v5481 = vld [vmem:[%s1905 + $0x152] sm:$0xff]
    %v5482 = vld [vmem:[%s1905 + $0x15a] sm:$0xff]
    %v5483 = vld [vmem:[%s1905 + $0x16a] sm:$0xff]
    %v5484 = vld [vmem:[%s1905 + $0x172] sm:$0xff]
    %v5485 = vld [vmem:[%s1905 + $0x1b2] sm:$0xff]
    %v5486 = vld [vmem:[%s1905 + $0x1ba] sm:$0xff]
    %v5487 = vld [vmem:[%s1905 + $0x1ca] sm:$0xff]
    %v5488 = vld [vmem:[%s1905 + $0x1d2] sm:$0xff]
    %v5489 = vld [vmem:[%s1905 + $0x1e2] sm:$0xff]
    %v5490 = vld [vmem:[%s1905 + $0x1ea] sm:$0xff]
    %v5491 = vld [vmem:[%s1905 + $0x1fa] sm:$0xff]
    %v5492 = vld [vmem:[%s1905 + $0x202] sm:$0xff]
    %v5493 = vld [vmem:[%s1905 + $0x212] sm:$0xff]
    %v5494 = vld [vmem:[%s1905 + $0x21a] sm:$0xff]
    %v5495 = vld [vmem:[%s1905 + $0x22a] sm:$0xff]
    %v5496 = vld [vmem:[%s1905 + $0x232] sm:$0xff]
    %v5497 = vld [vmem:[%s1905 + $0x242] sm:$0xff]
    %v5498 = vld [vmem:[%s1905 + $0x24a] sm:$0xff]
    %v5499 = vld [vmem:[%s1905 + $0x25a] sm:$0xff]
    %v5500 = vld [vmem:[%s1905 + $0x262] sm:$0xff]
    %v5501 = vld [vmem:[%s1905 + $0x272] sm:$0xff]
    %v5502 = vld [vmem:[%s1905 + $0x27a] sm:$0xff]
    %v5503 = vld [vmem:[%s1905 + $0x28a] sm:$0xff]
    %v5504 = vld [vmem:[%s1905 + $0x292] sm:$0xff]
    %v5505 = vld [vmem:[%s1905 + $0x2a2] sm:$0xff]
    %v5506 = vld [vmem:[%s1905 + $0x2aa] sm:$0xff]
    %v5507 = vld [vmem:[%s1905 + $0x2ba] sm:$0xff]
    %v5508 = vld [vmem:[%s1905 + $0x2c2] sm:$0xff]
    %v5509 = vld [vmem:[%s1905 + $0x2d2] sm:$0xff]
    %v5510 = vld [vmem:[%s1905 + $0x2da] sm:$0xff]
    %v5511 = vld [vmem:[%s1905 + $0x2ea] sm:$0xff]
    %v5512 = vld [vmem:[%s1905 + $0x2f2] sm:$0xff]
    %v5513 = vld [vmem:[%s1905 + $0x302] sm:$0xff]
    %v5514 = vld [vmem:[%s1905 + $0x30a] sm:$0xff]
    %v5515 = vld [vmem:[%s1905 + $0x31a] sm:$0xff]
    %v5516 = vld [vmem:[%s1905 + $0x322] sm:$0xff]
    %v5517 = vpack.c.bf16 %v5454, %v5453
    %v5518 = vpack.c.bf16 %v5456, %v5455
    %v5519 = vpack.c.bf16 %v5458, %v5457
    %v5520 = vpack.c.bf16 %v5460, %v5459
    %v5521 = vpack.c.bf16 %v5462, %v5461
    %v5522 = vpack.c.bf16 %v5464, %v5463
    %v5523 = vpack.c.bf16 %v5466, %v5465
    %v5524 = vpack.c.bf16 %v5468, %v5467
    %v5525 = vpack.c.bf16 %v5470, %v5469
    %v5526 = vpack.c.bf16 %v5472, %v5471
    %v5527 = vpack.c.bf16 %v5474, %v5473
    %v5528 = vpack.c.bf16 %v5476, %v5475
    %v5529 = vpack.c.bf16 %v5478, %v5477
    %v5530 = vpack.c.bf16 %v5480, %v5479
    %v5531 = vpack.c.bf16 %v5482, %v5481
    %v5532 = vpack.c.bf16 %v5484, %v5483
    %v5533 = vpack.c.bf16 %v5486, %v5485
    %v5534 = vpack.c.bf16 %v5488, %v5487
    %v5535 = vpack.c.bf16 %v5490, %v5489
    %v5536 = vpack.c.bf16 %v5492, %v5491
    %v5537 = vpack.c.bf16 %v5494, %v5493
    %v5538 = vpack.c.bf16 %v5496, %v5495
    %v5539 = vpack.c.bf16 %v5498, %v5497
    %v5540 = vpack.c.bf16 %v5500, %v5499
    %v5541 = vpack.c.bf16 %v5502, %v5501
    %v5542 = vpack.c.bf16 %v5504, %v5503
    %v5543 = vpack.c.bf16 %v5506, %v5505
    %v5544 = vpack.c.bf16 %v5508, %v5507
    %v5545 = vpack.c.bf16 %v5510, %v5509
    %v5546 = vpack.c.bf16 %v5512, %v5511
    %v5547 = vpack.c.bf16 %v5514, %v5513
    %v5548 = vpack.c.bf16 %v5516, %v5515
    %5549 = vst.msk [vmem:[#allocation3 + $0x8] sm:$0xff] %vm49, %v5517
    %5550 = vst.msk [vmem:[#allocation3 + $0x18] sm:$0xff] %vm49, %v5518
    %5551 = vst.msk [vmem:[#allocation3 + $0x28] sm:$0xff] %vm49, %v5519
    %5552 = vst.msk [vmem:[#allocation3 + $0x38] sm:$0xff] %vm49, %v5520
    %5553 = vst.msk [vmem:[#allocation3 + $0x48] sm:$0xff] %vm49, %v5521
    %5554 = vst.msk [vmem:[#allocation3 + $0x58] sm:$0xff] %vm49, %v5522
    %5555 = vst.msk [vmem:[#allocation3 + $0x68] sm:$0xff] %vm49, %v5523
    %5556 = vst.msk [vmem:[#allocation3 + $0x78] sm:$0xff] %vm49, %v5524
    %5557 = vst.msk [vmem:[#allocation3 + $0x88] sm:$0xff] %vm49, %v5525
    %5558 = vst.msk [vmem:[#allocation3 + $0x98] sm:$0xff] %vm49, %v5526
    %5559 = vst.msk [vmem:[#allocation3 + $0xa8] sm:$0xff] %vm49, %v5527
    %5560 = vst.msk [vmem:[#allocation3 + $0xb8] sm:$0xff] %vm49, %v5528
    %5561 = vst.msk [vmem:[#allocation3 + $0xc8] sm:$0xff] %vm49, %v5529
    %5562 = vst.msk [vmem:[#allocation3 + $0xd8] sm:$0xff] %vm49, %v5530
    %5563 = vst.msk [vmem:[#allocation3 + $0xe8] sm:$0xff] %vm49, %v5531
    %5564 = vst.msk [vmem:[#allocation3 + $0xf8] sm:$0xff] %vm49, %v5532
    %5565 = vst.msk [vmem:[#allocation3 + $0x108] sm:$0xff] %vm49, %v5533
    %5566 = vst.msk [vmem:[#allocation3 + $0x118] sm:$0xff] %vm49, %v5534
    %5567 = vst.msk [vmem:[#allocation3 + $0x128] sm:$0xff] %vm49, %v5535
    %5568 = vst.msk [vmem:[#allocation3 + $0x138] sm:$0xff] %vm49, %v5536
    %5569 = vst.msk [vmem:[#allocation3 + $0x148] sm:$0xff] %vm49, %v5537
    %5570 = vst.msk [vmem:[#allocation3 + $0x158] sm:$0xff] %vm49, %v5538
    %5571 = vst.msk [vmem:[#allocation3 + $0x168] sm:$0xff] %vm49, %v5539
    %5572 = vst.msk [vmem:[#allocation3 + $0x178] sm:$0xff] %vm49, %v5540
    %5573 = vst.msk [vmem:[#allocation3 + $0x188] sm:$0xff] %vm49, %v5541
    %5574 = vst.msk [vmem:[#allocation3 + $0x198] sm:$0xff] %vm49, %v5542
    %5575 = vst.msk [vmem:[#allocation3 + $0x1a8] sm:$0xff] %vm49, %v5543
    %5576 = vst.msk [vmem:[#allocation3 + $0x1b8] sm:$0xff] %vm49, %v5544
    %5577 = vst.msk [vmem:[#allocation3 + $0x1c8] sm:$0xff] %vm49, %v5545
    %5578 = vst.msk [vmem:[#allocation3 + $0x1d8] sm:$0xff] %vm49, %v5546
    %5579 = vst.msk [vmem:[#allocation3 + $0x1e8] sm:$0xff] %vm49, %v5547
    %5580 = vst.msk [vmem:[#allocation3 + $0x1f8] sm:$0xff] %vm49, %v5548
    %v5581 = vld [vmem:[#allocation3] sm:$0xff]
    %v5582 = vld [vmem:[#allocation3 + $0x8] sm:$0xff]
    %v5583 = vld [vmem:[#allocation3 + $0x10] sm:$0xff]
    %v5584 = vld [vmem:[#allocation3 + $0x18] sm:$0xff]
    %v5585 = vld [vmem:[#allocation3 + $0x20] sm:$0xff]
    %v5586 = vld [vmem:[#allocation3 + $0x28] sm:$0xff]
    %v5587 = vld [vmem:[#allocation3 + $0x30] sm:$0xff]
    %v5588 = vld [vmem:[#allocation3 + $0x38] sm:$0xff]
    %v5589 = vld [vmem:[#allocation3 + $0x40] sm:$0xff]
    %v5590 = vld [vmem:[#allocation3 + $0x48] sm:$0xff]
    %v5591 = vld [vmem:[#allocation3 + $0x50] sm:$0xff]
    %v5592 = vld [vmem:[#allocation3 + $0x58] sm:$0xff]
    %v5593 = vld [vmem:[#allocation3 + $0x60] sm:$0xff]
    %v5594 = vld [vmem:[#allocation3 + $0x68] sm:$0xff]
    %v5595 = vld [vmem:[#allocation3 + $0x70] sm:$0xff]
    %v5596 = vld [vmem:[#allocation3 + $0x78] sm:$0xff]
    %v5597 = vld [vmem:[#allocation3 + $0x80] sm:$0xff]
    %v5598 = vld [vmem:[#allocation3 + $0x88] sm:$0xff]
    %v5599 = vld [vmem:[#allocation3 + $0x90] sm:$0xff]
    %v5600 = vld [vmem:[#allocation3 + $0x98] sm:$0xff]
    %v5601 = vld [vmem:[#allocation3 + $0xa0] sm:$0xff]
    %v5602 = vld [vmem:[#allocation3 + $0xa8] sm:$0xff]
    %v5603 = vld [vmem:[#allocation3 + $0xb0] sm:$0xff]
    %v5604 = vld [vmem:[#allocation3 + $0xb8] sm:$0xff]
    %v5605 = vld [vmem:[#allocation3 + $0xc0] sm:$0xff]
    %v5606 = vld [vmem:[#allocation3 + $0xc8] sm:$0xff]
    %v5607 = vld [vmem:[#allocation3 + $0xd0] sm:$0xff]
    %v5608 = vld [vmem:[#allocation3 + $0xd8] sm:$0xff]
    %v5609 = vld [vmem:[#allocation3 + $0xe0] sm:$0xff]
    %v5610 = vld [vmem:[#allocation3 + $0xe8] sm:$0xff]
    %v5611 = vld [vmem:[#allocation3 + $0xf0] sm:$0xff]
    %v5612 = vld [vmem:[#allocation3 + $0xf8] sm:$0xff]
    %v5613 = vld [vmem:[#allocation3 + $0x100] sm:$0xff]
    %v5614 = vld [vmem:[#allocation3 + $0x108] sm:$0xff]
    %v5615 = vld [vmem:[#allocation3 + $0x110] sm:$0xff]
    %v5616 = vld [vmem:[#allocation3 + $0x118] sm:$0xff]
    %v5617 = vld [vmem:[#allocation3 + $0x120] sm:$0xff]
    %v5618 = vld [vmem:[#allocation3 + $0x128] sm:$0xff]
    %v5619 = vld [vmem:[#allocation3 + $0x130] sm:$0xff]
    %v5620 = vld [vmem:[#allocation3 + $0x138] sm:$0xff]
    %v5621 = vld [vmem:[#allocation3 + $0x140] sm:$0xff]
    %v5622 = vld [vmem:[#allocation3 + $0x148] sm:$0xff]
    %v5623 = vld [vmem:[#allocation3 + $0x150] sm:$0xff]
    %v5624 = vld [vmem:[#allocation3 + $0x158] sm:$0xff]
    %v5625 = vld [vmem:[#allocation3 + $0x160] sm:$0xff]
    %v5626 = vld [vmem:[#allocation3 + $0x168] sm:$0xff]
    %v5627 = vld [vmem:[#allocation3 + $0x170] sm:$0xff]
    %v5628 = vld [vmem:[#allocation3 + $0x178] sm:$0xff]
    %v5629 = vld [vmem:[#allocation3 + $0x180] sm:$0xff]
    %v5630 = vld [vmem:[#allocation3 + $0x188] sm:$0xff]
    %v5631 = vld [vmem:[#allocation3 + $0x190] sm:$0xff]
    %v5632 = vld [vmem:[#allocation3 + $0x198] sm:$0xff]
    %v5633 = vld [vmem:[#allocation3 + $0x1a0] sm:$0xff]
    %v5634 = vld [vmem:[#allocation3 + $0x1a8] sm:$0xff]
    %v5635 = vld [vmem:[#allocation3 + $0x1b0] sm:$0xff]
    %v5636 = vld [vmem:[#allocation3 + $0x1b8] sm:$0xff]
    %v5637 = vld [vmem:[#allocation3 + $0x1c0] sm:$0xff]
    %v5638 = vld [vmem:[#allocation3 + $0x1c8] sm:$0xff]
    %v5639 = vld [vmem:[#allocation3 + $0x1d0] sm:$0xff]
    %v5640 = vld [vmem:[#allocation3 + $0x1d8] sm:$0xff]
    %v5641 = vld [vmem:[#allocation3 + $0x1e0] sm:$0xff]
    %v5642 = vld [vmem:[#allocation3 + $0x1e8] sm:$0xff]
    %v5643 = vld [vmem:[#allocation3 + $0x1f0] sm:$0xff]
    %v5644 = vld [vmem:[#allocation3 + $0x1f8] sm:$0xff]
    %s5645 = scalar_lea.vmem %s1, 72
    %v5646 = vld [vmem:[%s5645] sm:$0xf]
    %v5647 = vld [vmem:[%s5645 + $0x4] sm:$0xf]
    %v5648 = vld [vmem:[%s5645 + $0x8] sm:$0xf]
    %v5649 = vld [vmem:[%s5645 + $0xc] sm:$0xf]
    %v5650 = vld [vmem:[%s5645 + $0x10] sm:$0xf]
    %v5651 = vld [vmem:[%s5645 + $0x14] sm:$0xf]
    %v5652 = vld [vmem:[%s5645 + $0x18] sm:$0xf]
    %v5653 = vld [vmem:[%s5645 + $0x1c] sm:$0xf]
    %v5654 = vld [vmem:[%s5645 + $0x20] sm:$0xf]
    %v5655 = vld [vmem:[%s5645 + $0x24] sm:$0xf]
    %v5656 = vld [vmem:[%s5645 + $0x28] sm:$0xf]
    %v5657 = vld [vmem:[%s5645 + $0x2c] sm:$0xf]
    %v5658 = vld [vmem:[%s5645 + $0x30] sm:$0xf]
    %v5659 = vld [vmem:[%s5645 + $0x34] sm:$0xf]
    %v5660 = vld [vmem:[%s5645 + $0x38] sm:$0xf]
    %v5661 = vld [vmem:[%s5645 + $0x3c] sm:$0xf]
    %v5662 = vld [vmem:[%s5645 + $0x40] sm:$0xf]
    %v5663 = vld [vmem:[%s5645 + $0x44] sm:$0xf]
    %v5682 = vunpack.c.l.b16 %v5646
    %v5683 = vunpack.c.l.b16 %v5647
    %v5684 = vunpack.c.l.b16 %v5648
    %v5685 = vunpack.c.l.b16 %v5649
    %v5686 = vunpack.c.l.b16 %v5650
    %v5687 = vunpack.c.l.b16 %v5651
    %v5688 = vunpack.c.l.b16 %v5652
    %v5689 = vunpack.c.l.b16 %v5653
    %v5690 = vunpack.c.l.b16 %v5654
    %v5691 = vunpack.c.l.b16 %v5655
    %v5692 = vunpack.c.l.b16 %v5656
    %v5693 = vunpack.c.l.b16 %v5657
    %v5694 = vunpack.c.l.b16 %v5658
    %v5695 = vunpack.c.l.b16 %v5659
    %v5696 = vunpack.c.l.b16 %v5660
    %v5697 = vunpack.c.l.b16 %v5661
    %v5698 = vunpack.c.l.b16 %v5662
    %v5699 = vunpack.c.l.b16 %v5663
    %v5700 = vpack.c.b16 %v5683, %v5682
    %v5701 = vpack.c.b16 %v5685, %v5684
    %v5702 = vpack.c.b16 %v5687, %v5686
    %v5703 = vpack.c.b16 %v5689, %v5688
    %v5704 = vpack.c.b16 %v5691, %v5690
    %v5705 = vpack.c.b16 %v5693, %v5692
    %v5706 = vpack.c.b16 %v5695, %v5694
    %v5707 = vpack.c.b16 %v5697, %v5696
    %v5708 = vpack.c.b16 %v5699, %v5698
    %v5719 = vsel %vm49, %v5582, 0
    %v5722 = vsel %vm49, %v5584, 0
    %v5725 = vsel %vm49, %v5586, 0
    %v5728 = vsel %vm49, %v5588, 0
    %v5731 = vsel %vm49, %v5590, 0
    %v5734 = vsel %vm49, %v5592, 0
    %v5737 = vsel %vm49, %v5594, 0
    %v5740 = vsel %vm49, %v5596, 0
    %v5743 = vsel %vm49, %v5598, 0
    %v5746 = vsel %vm49, %v5600, 0
    %v5749 = vsel %vm49, %v5602, 0
    %v5752 = vsel %vm49, %v5604, 0
    %v5755 = vsel %vm49, %v5606, 0
    %v5758 = vsel %vm49, %v5608, 0
    %v5761 = vsel %vm49, %v5610, 0
    %v5764 = vsel %vm49, %v5612, 0
    %v5767 = vsel %vm49, %v5614, 0
    %v5770 = vsel %vm49, %v5616, 0
    %v5773 = vsel %vm49, %v5618, 0
    %v5776 = vsel %vm49, %v5620, 0
    %v5779 = vsel %vm49, %v5622, 0
    %v5782 = vsel %vm49, %v5624, 0
    %v5785 = vsel %vm49, %v5626, 0
    %v5788 = vsel %vm49, %v5628, 0
    %v5791 = vsel %vm49, %v5630, 0
    %v5794 = vsel %vm49, %v5632, 0
    %v5797 = vsel %vm49, %v5634, 0
    %v5800 = vsel %vm49, %v5636, 0
    %v5803 = vsel %vm49, %v5638, 0
    %v5806 = vsel %vm49, %v5640, 0
    %v5809 = vsel %vm49, %v5642, 0
    %v5812 = vsel %vm49, %v5644, 0
    %5814 = vmatprep.subr.bf16.mxu0 0
    %5815 = vmatpush1.bf16.msra.mxu0 %v5700
    %5816 = vmatprep.subr.bf16.mxu0 0
    %5817 = vmatpush1.bf16.msra.mxu0 %v5701
    %5818 = vmatprep.subr.bf16.mxu0 0
    %5819 = vmatpush1.bf16.msra.mxu0 %v5702
    %5820 = vmatprep.subr.bf16.mxu0 0
    %5821 = vmatpush1.bf16.msra.mxu0 %v5703
    %5822 = vmatprep.subr.bf16.mxu0 0
    %5823 = vmatpush1.bf16.msra.mxu0 %v5704
    %5824 = vmatprep.subr.bf16.mxu0 0
    %5825 = vmatpush1.bf16.msra.mxu0 %v5705
    %5826 = vmatprep.subr.bf16.mxu0 0
    %5827 = vmatpush1.bf16.msra.mxu0 %v5706
    %5828 = vmatprep.subr.bf16.mxu0 0
    %5829 = vmatpush1.bf16.msra.mxu0 %v5707
    %5830 = vmatprep.subr.bf16.mxu0 0
    %5831 = vmatpush1.bf16.msra.mxu0 %v5708
    %5832 = vmatprep.subr.bf16.mxu0 0
    %5833 = vmatpush1.bf16.msra.mxu0 0
    %5834 = vmatprep.subr.bf16.mxu0 0
    %5835 = vmatpush1.bf16.msra.mxu0 0
    %5836 = vmatprep.subr.bf16.mxu0 0
    %5837 = vmatpush1.bf16.msra.mxu0 0
    %5838 = vmatprep.subr.bf16.mxu0 0
    %5839 = vmatpush1.bf16.msra.mxu0 0
    %5840 = vmatprep.subr.bf16.mxu0 0
    %5841 = vmatpush1.bf16.msra.mxu0 0
    %5842 = vmatprep.subr.bf16.mxu0 0
    %5843 = vmatpush1.bf16.msra.mxu0 0
    %5844 = vmatprep.subr.bf16.mxu0 0
    %5845 = vmatpush1.bf16.msra.mxu0 0
    %5846 = vmatprep.mubr.bf16.mxu0 %v5719
    %5847 = vmatmul.mubr.bf16.gmra.mrb[0].mxu0 %v5581
    %v5848 = vpop.f32.mrb[0].mxu0
    %v5849 = vadd.f32 0.0, %v5848
    %v5850 = vpop.f32.mrb[0].mxu0
    %v5851 = vpop.f32.mrb[0].mxu0
    %v5852 = vadd.f32 0.0, %v5851
    %v5853 = vpop.f32.mrb[0].mxu0
    %5854 = vmatprep.mubr.bf16.mxu0 %v5722
    %5855 = vmatmul.mubr.bf16.gmra.mrb[0].mxu0 %v5583
    %v5856 = vpop.f32.mrb[0].mxu0
    %v5857 = vadd.f32 0.0, %v5856
    %v5858 = vpop.f32.mrb[0].mxu0
    %v5859 = vpop.f32.mrb[0].mxu0
    %v5860 = vadd.f32 0.0, %v5859
    %v5861 = vpop.f32.mrb[0].mxu0
    %5862 = vmatprep.mubr.bf16.mxu0 %v5725
    %5863 = vmatmul.mubr.bf16.gmra.mrb[0].mxu0 %v5585
    %v5864 = vpop.f32.mrb[0].mxu0
    %v5865 = vadd.f32 0.0, %v5864
    %v5866 = vpop.f32.mrb[0].mxu0
    %v5867 = vpop.f32.mrb[0].mxu0
    %v5868 = vadd.f32 0.0, %v5867
    %v5869 = vpop.f32.mrb[0].mxu0
    %5870 = vmatprep.mubr.bf16.mxu0 %v5728
    %5871 = vmatmul.mubr.bf16.gmra.mrb[0].mxu0 %v5587
    %v5872 = vpop.f32.mrb[0].mxu0
    %v5873 = vadd.f32 0.0, %v5872
    %v5874 = vpop.f32.mrb[0].mxu0
    %v5875 = vpop.f32.mrb[0].mxu0
    %v5876 = vadd.f32 0.0, %v5875
    %v5877 = vpop.f32.mrb[0].mxu0
    %5878 = vmatprep.mubr.bf16.mxu0 %v5731
    %5879 = vmatmul.mubr.bf16.gmra.mrb[0].mxu0 %v5589
    %v5880 = vpop.f32.mrb[0].mxu0
    %v5881 = vadd.f32 0.0, %v5880
    %v5882 = vpop.f32.mrb[0].mxu0
    %v5883 = vpop.f32.mrb[0].mxu0
    %v5884 = vadd.f32 0.0, %v5883
    %v5885 = vpop.f32.mrb[0].mxu0
    %5886 = vmatprep.mubr.bf16.mxu0 %v5734
    %5887 = vmatmul.mubr.bf16.gmra.mrb[0].mxu0 %v5591
    %v5888 = vpop.f32.mrb[0].mxu0
    %v5889 = vadd.f32 0.0, %v5888
    %v5890 = vpop.f32.mrb[0].mxu0
    %v5891 = vpop.f32.mrb[0].mxu0
    %v5892 = vadd.f32 0.0, %v5891
    %v5893 = vpop.f32.mrb[0].mxu0
    %5894 = vmatprep.mubr.bf16.mxu0 %v5737
    %5895 = vmatmul.mubr.bf16.gmra.mrb[0].mxu0 %v5593
    %v5896 = vpop.f32.mrb[0].mxu0
    %v5897 = vadd.f32 0.0, %v5896
    %v5898 = vpop.f32.mrb[0].mxu0
    %v5899 = vpop.f32.mrb[0].mxu0
    %v5900 = vadd.f32 0.0, %v5899
    %v5901 = vpop.f32.mrb[0].mxu0
    %5902 = vmatprep.mubr.bf16.mxu0 %v5740
    %5903 = vmatmul.mubr.bf16.gmra.mrb[0].mxu0 %v5595
    %v5904 = vpop.f32.mrb[0].mxu0
    %v5905 = vadd.f32 0.0, %v5904
    %v5906 = vpop.f32.mrb[0].mxu0
    %v5907 = vpop.f32.mrb[0].mxu0
    %v5908 = vadd.f32 0.0, %v5907
    %v5909 = vpop.f32.mrb[0].mxu0
    %5910 = vmatprep.mubr.bf16.mxu0 %v5743
    %5911 = vmatmul.mubr.bf16.gmra.mrb[0].mxu0 %v5597
    %v5912 = vpop.f32.mrb[0].mxu0
    %v5913 = vadd.f32 0.0, %v5912
    %v5914 = vpop.f32.mrb[0].mxu0
    %v5915 = vpop.f32.mrb[0].mxu0
    %v5916 = vadd.f32 0.0, %v5915
    %v5917 = vpop.f32.mrb[0].mxu0
    %5918 = vmatprep.mubr.bf16.mxu0 %v5746
    %5919 = vmatmul.mubr.bf16.gmra.mrb[0].mxu0 %v5599
    %v5920 = vpop.f32.mrb[0].mxu0
    %v5921 = vadd.f32 0.0, %v5920
    %v5922 = vpop.f32.mrb[0].mxu0
    %v5923 = vpop.f32.mrb[0].mxu0
    %v5924 = vadd.f32 0.0, %v5923
    %v5925 = vpop.f32.mrb[0].mxu0
    %5926 = vmatprep.mubr.bf16.mxu0 %v5749
    %5927 = vmatmul.mubr.bf16.gmra.mrb[0].mxu0 %v5601
    %v5928 = vpop.f32.mrb[0].mxu0
    %v5929 = vadd.f32 0.0, %v5928
    %v5930 = vpop.f32.mrb[0].mxu0
    %v5931 = vpop.f32.mrb[0].mxu0
    %v5932 = vadd.f32 0.0, %v5931
    %v5933 = vpop.f32.mrb[0].mxu0
    %5934 = vmatprep.mubr.bf16.mxu0 %v5752
    %5935 = vmatmul.mubr.bf16.gmra.mrb[0].mxu0 %v5603
    %v5936 = vpop.f32.mrb[0].mxu0
    %v5937 = vadd.f32 0.0, %v5936
    %v5938 = vpop.f32.mrb[0].mxu0
    %v5939 = vpop.f32.mrb[0].mxu0
    %v5940 = vadd.f32 0.0, %v5939
    %v5941 = vpop.f32.mrb[0].mxu0
    %5942 = vmatprep.mubr.bf16.mxu0 %v5755
    %5943 = vmatmul.mubr.bf16.gmra.mrb[0].mxu0 %v5605
    %v5944 = vpop.f32.mrb[0].mxu0
    %v5945 = vadd.f32 0.0, %v5944
    %v5946 = vpop.f32.mrb[0].mxu0
    %v5947 = vpop.f32.mrb[0].mxu0
    %v5948 = vadd.f32 0.0, %v5947
    %v5949 = vpop.f32.mrb[0].mxu0
    %5950 = vmatprep.mubr.bf16.mxu0 %v5758
    %5951 = vmatmul.mubr.bf16.gmra.mrb[0].mxu0 %v5607
    %v5952 = vpop.f32.mrb[0].mxu0
    %v5953 = vadd.f32 0.0, %v5952
    %v5954 = vpop.f32.mrb[0].mxu0
    %v5955 = vpop.f32.mrb[0].mxu0
    %v5956 = vadd.f32 0.0, %v5955
    %v5957 = vpop.f32.mrb[0].mxu0
    %5958 = vmatprep.mubr.bf16.mxu0 %v5761
    %5959 = vmatmul.mubr.bf16.gmra.mrb[0].mxu0 %v5609
    %v5960 = vpop.f32.mrb[0].mxu0
    %v5961 = vadd.f32 0.0, %v5960
    %v5962 = vpop.f32.mrb[0].mxu0
    %v5963 = vpop.f32.mrb[0].mxu0
    %v5964 = vadd.f32 0.0, %v5963
    %v5965 = vpop.f32.mrb[0].mxu0
    %5966 = vmatprep.mubr.bf16.mxu0 %v5764
    %5967 = vmatmul.mubr.bf16.gmra.mrb[0].mxu0 %v5611
    %v5968 = vpop.f32.mrb[0].mxu0
    %v5969 = vadd.f32 0.0, %v5968
    %v5970 = vpop.f32.mrb[0].mxu0
    %v5971 = vpop.f32.mrb[0].mxu0
    %v5972 = vadd.f32 0.0, %v5971
    %v5973 = vpop.f32.mrb[0].mxu0
    %5974 = vmatprep.mubr.bf16.mxu0 %v5767
    %5975 = vmatmul.mubr.bf16.gmra.mrb[0].mxu0 %v5613
    %v5976 = vpop.f32.mrb[0].mxu0
    %v5977 = vadd.f32 0.0, %v5976
    %v5978 = vpop.f32.mrb[0].mxu0
    %v5979 = vpop.f32.mrb[0].mxu0
    %v5980 = vadd.f32 0.0, %v5979
    %v5981 = vpop.f32.mrb[0].mxu0
    %5982 = vmatprep.mubr.bf16.mxu0 %v5770
    %5983 = vmatmul.mubr.bf16.gmra.mrb[0].mxu0 %v5615
    %v5984 = vpop.f32.mrb[0].mxu0
    %v5985 = vadd.f32 0.0, %v5984
    %v5986 = vpop.f32.mrb[0].mxu0
    %v5987 = vpop.f32.mrb[0].mxu0
    %v5988 = vadd.f32 0.0, %v5987
    %v5989 = vpop.f32.mrb[0].mxu0
    %5990 = vmatprep.mubr.bf16.mxu0 %v5773
    %5991 = vmatmul.mubr.bf16.gmra.mrb[0].mxu0 %v5617
    %v5992 = vpop.f32.mrb[0].mxu0
    %v5993 = vadd.f32 0.0, %v5992
    %v5994 = vpop.f32.mrb[0].mxu0
    %v5995 = vpop.f32.mrb[0].mxu0
    %v5996 = vadd.f32 0.0, %v5995
    %v5997 = vpop.f32.mrb[0].mxu0
    %5998 = vmatprep.mubr.bf16.mxu0 %v5776
    %5999 = vmatmul.mubr.bf16.gmra.mrb[0].mxu0 %v5619
    %v6000 = vpop.f32.mrb[0].mxu0
    %v6001 = vadd.f32 0.0, %v6000
    %v6002 = vpop.f32.mrb[0].mxu0
    %v6003 = vpop.f32.mrb[0].mxu0
    %v6004 = vadd.f32 0.0, %v6003
    %v6005 = vpop.f32.mrb[0].mxu0
    %6006 = vmatprep.mubr.bf16.mxu0 %v5779
    %6007 = vmatmul.mubr.bf16.gmra.mrb[0].mxu0 %v5621
    %v6008 = vpop.f32.mrb[0].mxu0
    %v6009 = vadd.f32 0.0, %v6008
    %v6010 = vpop.f32.mrb[0].mxu0
    %v6011 = vpop.f32.mrb[0].mxu0
    %v6012 = vadd.f32 0.0, %v6011
    %v6013 = vpop.f32.mrb[0].mxu0
    %6014 = vmatprep.mubr.bf16.mxu0 %v5782
    %6015 = vmatmul.mubr.bf16.gmra.mrb[0].mxu0 %v5623
    %v6016 = vpop.f32.mrb[0].mxu0
    %v6017 = vadd.f32 0.0, %v6016
    %v6018 = vpop.f32.mrb[0].mxu0
    %v6019 = vpop.f32.mrb[0].mxu0
    %v6020 = vadd.f32 0.0, %v6019
    %v6021 = vpop.f32.mrb[0].mxu0
    %6022 = vmatprep.mubr.bf16.mxu0 %v5785
    %6023 = vmatmul.mubr.bf16.gmra.mrb[0].mxu0 %v5625
    %v6024 = vpop.f32.mrb[0].mxu0
    %v6025 = vadd.f32 0.0, %v6024
    %v6026 = vpop.f32.mrb[0].mxu0
    %v6027 = vpop.f32.mrb[0].mxu0
    %v6028 = vadd.f32 0.0, %v6027
    %v6029 = vpop.f32.mrb[0].mxu0
    %6030 = vmatprep.mubr.bf16.mxu0 %v5788
    %6031 = vmatmul.mubr.bf16.gmra.mrb[0].mxu0 %v5627
    %v6032 = vpop.f32.mrb[0].mxu0
    %v6033 = vadd.f32 0.0, %v6032
    %v6034 = vpop.f32.mrb[0].mxu0
    %v6035 = vpop.f32.mrb[0].mxu0
    %v6036 = vadd.f32 0.0, %v6035
    %v6037 = vpop.f32.mrb[0].mxu0
    %6038 = vmatprep.mubr.bf16.mxu0 %v5791
    %6039 = vmatmul.mubr.bf16.gmra.mrb[0].mxu0 %v5629
    %v6040 = vpop.f32.mrb[0].mxu0
    %v6041 = vadd.f32 0.0, %v6040
    %v6042 = vpop.f32.mrb[0].mxu0
    %v6043 = vpop.f32.mrb[0].mxu0
    %v6044 = vadd.f32 0.0, %v6043
    %v6045 = vpop.f32.mrb[0].mxu0
    %6046 = vmatprep.mubr.bf16.mxu0 %v5794
    %6047 = vmatmul.mubr.bf16.gmra.mrb[0].mxu0 %v5631
    %v6048 = vpop.f32.mrb[0].mxu0
    %v6049 = vadd.f32 0.0, %v6048
    %v6050 = vpop.f32.mrb[0].mxu0
    %v6051 = vpop.f32.mrb[0].mxu0
    %v6052 = vadd.f32 0.0, %v6051
    %v6053 = vpop.f32.mrb[0].mxu0
    %6054 = vmatprep.mubr.bf16.mxu0 %v5797
    %6055 = vmatmul.mubr.bf16.gmra.mrb[0].mxu0 %v5633
    %v6056 = vpop.f32.mrb[0].mxu0
    %v6057 = vadd.f32 0.0, %v6056
    %v6058 = vpop.f32.mrb[0].mxu0
    %v6059 = vpop.f32.mrb[0].mxu0
    %v6060 = vadd.f32 0.0, %v6059
    %v6061 = vpop.f32.mrb[0].mxu0
    %6062 = vmatprep.mubr.bf16.mxu0 %v5800
    %6063 = vmatmul.mubr.bf16.gmra.mrb[0].mxu0 %v5635
    %v6064 = vpop.f32.mrb[0].mxu0
    %v6065 = vadd.f32 0.0, %v6064
    %v6066 = vpop.f32.mrb[0].mxu0
    %v6067 = vpop.f32.mrb[0].mxu0
    %v6068 = vadd.f32 0.0, %v6067
    %v6069 = vpop.f32.mrb[0].mxu0
    %6070 = vmatprep.mubr.bf16.mxu0 %v5803
    %6071 = vmatmul.mubr.bf16.gmra.mrb[0].mxu0 %v5637
    %v6072 = vpop.f32.mrb[0].mxu0
    %v6073 = vadd.f32 0.0, %v6072
    %v6074 = vpop.f32.mrb[0].mxu0
    %v6075 = vpop.f32.mrb[0].mxu0
    %v6076 = vadd.f32 0.0, %v6075
    %v6077 = vpop.f32.mrb[0].mxu0
    %6078 = vmatprep.mubr.bf16.mxu0 %v5806
    %6079 = vmatmul.mubr.bf16.gmra.mrb[0].mxu0 %v5639
    %v6080 = vpop.f32.mrb[0].mxu0
    %v6081 = vadd.f32 0.0, %v6080
    %v6082 = vpop.f32.mrb[0].mxu0
    %v6083 = vpop.f32.mrb[0].mxu0
    %v6084 = vadd.f32 0.0, %v6083
    %v6085 = vpop.f32.mrb[0].mxu0
    %6086 = vmatprep.mubr.bf16.mxu0 %v5809
    %6087 = vmatmul.mubr.bf16.gmra.mrb[0].mxu0 %v5641
    %v6088 = vpop.f32.mrb[0].mxu0
    %v6089 = vadd.f32 0.0, %v6088
    %v6090 = vpop.f32.mrb[0].mxu0
    %v6091 = vpop.f32.mrb[0].mxu0
    %v6092 = vadd.f32 0.0, %v6091
    %v6093 = vpop.f32.mrb[0].mxu0
    %6094 = vmatprep.mubr.bf16.mxu0 %v5812
    %6095 = vmatmul.mubr.bf16.gmra.mrb[0].mxu0 %v5643
    %v6096 = vpop.f32.mrb[0].mxu0
    %v6097 = vadd.f32 0.0, %v6096
    %v6098 = vpop.f32.mrb[0].mxu0
    %v6099 = vpop.f32.mrb[0].mxu0
    %v6100 = vadd.f32 0.0, %v6099
    %v6101 = vpop.f32.mrb[0].mxu0
    %6102 = vdwg.mxu0
    %s6103 = scalar_lea.vmem %s2, 1
    %v6104 = vld [vmem:[%s6103] sm:$0x1]
    %v6106 = vlaneseq
    %v6107 = vshrl.u32 %v6106, 7
    %v6108 = vsub.s32 0, %v6107
    %v6109 = vrot.slane %v6104, %v6108
    %v6111 = vadd.f32 %v5849, %v6109
    %v6112 = vadd.f32 %v5852, %v6109
    %v6113 = vadd.f32 %v5857, %v6109
    %v6114 = vadd.f32 %v5860, %v6109
    %v6115 = vadd.f32 %v5865, %v6109
    %v6116 = vadd.f32 %v5868, %v6109
    %v6117 = vadd.f32 %v5873, %v6109
    %v6118 = vadd.f32 %v5876, %v6109
    %v6119 = vadd.f32 %v5881, %v6109
    %v6120 = vadd.f32 %v5884, %v6109
    %v6121 = vadd.f32 %v5889, %v6109
    %v6122 = vadd.f32 %v5892, %v6109
    %v6123 = vadd.f32 %v5897, %v6109
    %v6124 = vadd.f32 %v5900, %v6109
    %v6125 = vadd.f32 %v5905, %v6109
    %v6126 = vadd.f32 %v5908, %v6109
    %v6127 = vadd.f32 %v5913, %v6109
    %v6128 = vadd.f32 %v5916, %v6109
    %v6129 = vadd.f32 %v5921, %v6109
    %v6130 = vadd.f32 %v5924, %v6109
    %v6131 = vadd.f32 %v5929, %v6109
    %v6132 = vadd.f32 %v5932, %v6109
    %v6133 = vadd.f32 %v5937, %v6109
    %v6134 = vadd.f32 %v5940, %v6109
    %v6135 = vadd.f32 %v5945, %v6109
    %v6136 = vadd.f32 %v5948, %v6109
    %v6137 = vadd.f32 %v5953, %v6109
    %v6138 = vadd.f32 %v5956, %v6109
    %v6139 = vadd.f32 %v5961, %v6109
    %v6140 = vadd.f32 %v5964, %v6109
    %v6141 = vadd.f32 %v5969, %v6109
    %v6142 = vadd.f32 %v5972, %v6109
    %v6143 = vadd.f32 %v5977, %v6109
    %v6144 = vadd.f32 %v5980, %v6109
    %v6145 = vadd.f32 %v5985, %v6109
    %v6146 = vadd.f32 %v5988, %v6109
    %v6147 = vadd.f32 %v5993, %v6109
    %v6148 = vadd.f32 %v5996, %v6109
    %v6149 = vadd.f32 %v6001, %v6109
    %v6150 = vadd.f32 %v6004, %v6109
    %v6151 = vadd.f32 %v6009, %v6109
    %v6152 = vadd.f32 %v6012, %v6109
    %v6153 = vadd.f32 %v6017, %v6109
    %v6154 = vadd.f32 %v6020, %v6109
    %v6155 = vadd.f32 %v6025, %v6109
    %v6156 = vadd.f32 %v6028, %v6109
    %v6157 = vadd.f32 %v6033, %v6109
    %v6158 = vadd.f32 %v6036, %v6109
    %v6159 = vadd.f32 %v6041, %v6109
    %v6160 = vadd.f32 %v6044, %v6109
    %v6161 = vadd.f32 %v6049, %v6109
    %v6162 = vadd.f32 %v6052, %v6109
    %v6163 = vadd.f32 %v6057, %v6109
    %v6164 = vadd.f32 %v6060, %v6109
    %v6165 = vadd.f32 %v6065, %v6109
    %v6166 = vadd.f32 %v6068, %v6109
    %v6167 = vadd.f32 %v6073, %v6109
    %v6168 = vadd.f32 %v6076, %v6109
    %v6169 = vadd.f32 %v6081, %v6109
    %v6170 = vadd.f32 %v6084, %v6109
    %v6171 = vadd.f32 %v6089, %v6109
    %v6172 = vadd.f32 %v6092, %v6109
    %v6173 = vadd.f32 %v6097, %v6109
    %v6174 = vadd.f32 %v6100, %v6109
    %v6175 = vstv %s160
    %v6176 = vmul.f32 %v6175, %v6111
    %v6177 = vmul.f32 %v6175, %v6112
    %v6178 = vmul.f32 %v6175, %v6113
    %v6179 = vmul.f32 %v6175, %v6114
    %v6180 = vmul.f32 %v6175, %v6115
    %v6181 = vmul.f32 %v6175, %v6116
    %v6182 = vmul.f32 %v6175, %v6117
    %v6183 = vmul.f32 %v6175, %v6118
    %v6184 = vmul.f32 %v6175, %v6119
    %v6185 = vmul.f32 %v6175, %v6120
    %v6186 = vmul.f32 %v6175, %v6121
    %v6187 = vmul.f32 %v6175, %v6122
    %v6188 = vmul.f32 %v6175, %v6123
    %v6189 = vmul.f32 %v6175, %v6124
    %v6190 = vmul.f32 %v6175, %v6125
    %v6191 = vmul.f32 %v6175, %v6126
    %v6192 = vmul.f32 %v6175, %v6127
    %v6193 = vmul.f32 %v6175, %v6128
    %v6194 = vmul.f32 %v6175, %v6129
    %v6195 = vmul.f32 %v6175, %v6130
    %v6196 = vmul.f32 %v6175, %v6131
    %v6197 = vmul.f32 %v6175, %v6132
    %v6198 = vmul.f32 %v6175, %v6133
    %v6199 = vmul.f32 %v6175, %v6134
    %v6200 = vmul.f32 %v6175, %v6135
    %v6201 = vmul.f32 %v6175, %v6136
    %v6202 = vmul.f32 %v6175, %v6137
    %v6203 = vmul.f32 %v6175, %v6138
    %v6204 = vmul.f32 %v6175, %v6139
    %v6205 = vmul.f32 %v6175, %v6140
    %v6206 = vmul.f32 %v6175, %v6141
    %v6207 = vmul.f32 %v6175, %v6142
    %v6208 = vmul.f32 %v6175, %v6143
    %v6209 = vmul.f32 %v6175, %v6144
    %v6210 = vmul.f32 %v6175, %v6145
    %v6211 = vmul.f32 %v6175, %v6146
    %v6212 = vmul.f32 %v6175, %v6147
    %v6213 = vmul.f32 %v6175, %v6148
    %v6214 = vmul.f32 %v6175, %v6149
    %v6215 = vmul.f32 %v6175, %v6150
    %v6216 = vmul.f32 %v6175, %v6151
    %v6217 = vmul.f32 %v6175, %v6152
    %v6218 = vmul.f32 %v6175, %v6153
    %v6219 = vmul.f32 %v6175, %v6154
    %v6220 = vmul.f32 %v6175, %v6155
    %v6221 = vmul.f32 %v6175, %v6156
    %v6222 = vmul.f32 %v6175, %v6157
    %v6223 = vmul.f32 %v6175, %v6158
    %v6224 = vmul.f32 %v6175, %v6159
    %v6225 = vmul.f32 %v6175, %v6160
    %v6226 = vmul.f32 %v6175, %v6161
    %v6227 = vmul.f32 %v6175, %v6162
    %v6228 = vmul.f32 %v6175, %v6163
    %v6229 = vmul.f32 %v6175, %v6164
    %v6230 = vmul.f32 %v6175, %v6165
    %v6231 = vmul.f32 %v6175, %v6166
    %v6232 = vmul.f32 %v6175, %v6167
    %v6233 = vmul.f32 %v6175, %v6168
    %v6234 = vmul.f32 %v6175, %v6169
    %v6235 = vmul.f32 %v6175, %v6170
    %v6236 = vmul.f32 %v6175, %v6171
    %v6237 = vmul.f32 %v6175, %v6172
    %v6238 = vmul.f32 %v6175, %v6173
    %v6239 = vmul.f32 %v6175, %v6174
    %v6240 = vadd.f32 %v164, %v6176
    %v6241 = vadd.f32 %v165, %v6177
    %v6242 = vadd.f32 %v166, %v6178
    %v6243 = vadd.f32 %v167, %v6179
    %v6244 = vadd.f32 %v168, %v6180
    %v6245 = vadd.f32 %v169, %v6181
    %v6246 = vadd.f32 %v170, %v6182
    %v6247 = vadd.f32 %v171, %v6183
    %v6248 = vadd.f32 %v172, %v6184
    %v6249 = vadd.f32 %v173, %v6185
    %v6250 = vadd.f32 %v174, %v6186
    %v6251 = vadd.f32 %v175, %v6187
    %v6252 = vadd.f32 %v176, %v6188
    %v6253 = vadd.f32 %v177, %v6189
    %v6254 = vadd.f32 %v178, %v6190
    %v6255 = vadd.f32 %v179, %v6191
    %v6256 = vadd.f32 %v180, %v6192
    %v6257 = vadd.f32 %v181, %v6193
    %v6258 = vadd.f32 %v182, %v6194
    %v6259 = vadd.f32 %v183, %v6195
    %v6260 = vadd.f32 %v184, %v6196
    %v6261 = vadd.f32 %v185, %v6197
    %v6262 = vadd.f32 %v186, %v6198
    %v6263 = vadd.f32 %v187, %v6199
    %v6264 = vadd.f32 %v188, %v6200
    %v6265 = vadd.f32 %v189, %v6201
    %v6266 = vadd.f32 %v190, %v6202
    %v6267 = vadd.f32 %v191, %v6203
    %v6268 = vadd.f32 %v192, %v6204
    %v6269 = vadd.f32 %v193, %v6205
    %v6270 = vadd.f32 %v194, %v6206
    %v6271 = vadd.f32 %v195, %v6207
    %v6272 = vadd.f32 %v196, %v6208
    %v6273 = vadd.f32 %v197, %v6209
    %v6274 = vadd.f32 %v198, %v6210
    %v6275 = vadd.f32 %v199, %v6211
    %v6276 = vadd.f32 %v200, %v6212
    %v6277 = vadd.f32 %v201, %v6213
    %v6278 = vadd.f32 %v202, %v6214
    %v6279 = vadd.f32 %v203, %v6215
    %v6280 = vadd.f32 %v204, %v6216
    %v6281 = vadd.f32 %v205, %v6217
    %v6282 = vadd.f32 %v206, %v6218
    %v6283 = vadd.f32 %v207, %v6219
    %v6284 = vadd.f32 %v208, %v6220
    %v6285 = vadd.f32 %v209, %v6221
    %v6286 = vadd.f32 %v210, %v6222
    %v6287 = vadd.f32 %v211, %v6223
    %v6288 = vadd.f32 %v212, %v6224
    %v6289 = vadd.f32 %v213, %v6225
    %v6290 = vadd.f32 %v214, %v6226
    %v6291 = vadd.f32 %v215, %v6227
    %v6292 = vadd.f32 %v216, %v6228
    %v6293 = vadd.f32 %v217, %v6229
    %v6294 = vadd.f32 %v218, %v6230
    %v6295 = vadd.f32 %v219, %v6231
    %v6296 = vadd.f32 %v220, %v6232
    %v6297 = vadd.f32 %v221, %v6233
    %v6298 = vadd.f32 %v222, %v6234
    %v6299 = vadd.f32 %v223, %v6235
    %v6300 = vadd.f32 %v224, %v6236
    %v6301 = vadd.f32 %v225, %v6237
    %v6302 = vadd.f32 %v226, %v6238
    %v6303 = vadd.f32 %v227, %v6239
    %v6304 = vstv %s161
    %v6305 = vmul.f32 %v3076, %v6304
    %v6306 = vmul.f32 %v3077, %v6304
    %v6307 = vmul.f32 %v3078, %v6304
    %v6308 = vmul.f32 %v3079, %v6304
    %v6309 = vmul.f32 %v3080, %v6304
    %v6310 = vmul.f32 %v3081, %v6304
    %v6311 = vmul.f32 %v3082, %v6304
    %v6312 = vmul.f32 %v3083, %v6304
    %v6313 = vmul.f32 %v3084, %v6304
    %v6314 = vmul.f32 %v3085, %v6304
    %v6315 = vmul.f32 %v3086, %v6304
    %v6316 = vmul.f32 %v3087, %v6304
    %v6317 = vmul.f32 %v3088, %v6304
    %v6318 = vmul.f32 %v3089, %v6304
    %v6319 = vmul.f32 %v3090, %v6304
    %v6320 = vmul.f32 %v3091, %v6304
    %v6321 = vmul.f32 %v3092, %v6304
    %v6322 = vmul.f32 %v3093, %v6304
    %v6323 = vmul.f32 %v3094, %v6304
    %v6324 = vmul.f32 %v3095, %v6304
    %v6325 = vmul.f32 %v3096, %v6304
    %v6326 = vmul.f32 %v3097, %v6304
    %v6327 = vmul.f32 %v3098, %v6304
    %v6328 = vmul.f32 %v3099, %v6304
    %v6329 = vmul.f32 %v3100, %v6304
    %v6330 = vmul.f32 %v3101, %v6304
    %v6331 = vmul.f32 %v3102, %v6304
    %v6332 = vmul.f32 %v3103, %v6304
    %v6333 = vmul.f32 %v3104, %v6304
    %v6334 = vmul.f32 %v3105, %v6304
    %v6335 = vmul.f32 %v3106, %v6304
    %v6336 = vmul.f32 %v3107, %v6304
    %v6337 = vmul.f32 %v3108, %v6304
    %v6338 = vmul.f32 %v3109, %v6304
    %v6339 = vmul.f32 %v3110, %v6304
    %v6340 = vmul.f32 %v3111, %v6304
    %v6341 = vmul.f32 %v3112, %v6304
    %v6342 = vmul.f32 %v3113, %v6304
    %v6343 = vmul.f32 %v3114, %v6304
    %v6344 = vmul.f32 %v3115, %v6304
    %v6345 = vmul.f32 %v3116, %v6304
    %v6346 = vmul.f32 %v3117, %v6304
    %v6347 = vmul.f32 %v3118, %v6304
    %v6348 = vmul.f32 %v3119, %v6304
    %v6349 = vmul.f32 %v3120, %v6304
    %v6350 = vmul.f32 %v3121, %v6304
    %v6351 = vmul.f32 %v3122, %v6304
    %v6352 = vmul.f32 %v3123, %v6304
    %v6353 = vmul.f32 %v3124, %v6304
    %v6354 = vmul.f32 %v3125, %v6304
    %v6355 = vmul.f32 %v3126, %v6304
    %v6356 = vmul.f32 %v3127, %v6304
    %v6357 = vmul.f32 %v3128, %v6304
    %v6358 = vmul.f32 %v3129, %v6304
    %v6359 = vmul.f32 %v3130, %v6304
    %v6360 = vmul.f32 %v3131, %v6304
    %v6361 = vmul.f32 %v3132, %v6304
    %v6362 = vmul.f32 %v3133, %v6304
    %v6363 = vmul.f32 %v3134, %v6304
    %v6364 = vmul.f32 %v3135, %v6304
    %v6365 = vmul.f32 %v3136, %v6304
    %v6366 = vmul.f32 %v3137, %v6304
    %v6367 = vmul.f32 %v3138, %v6304
    %v6368 = vmul.f32 %v3139, %v6304
    %v6369 = vadd.f32 %v6240, %v6305
    %v6370 = vadd.f32 %v6241, %v6306
    %v6371 = vadd.f32 %v6242, %v6307
    %v6372 = vadd.f32 %v6243, %v6308
    %v6373 = vadd.f32 %v6244, %v6309
    %v6374 = vadd.f32 %v6245, %v6310
    %v6375 = vadd.f32 %v6246, %v6311
    %v6376 = vadd.f32 %v6247, %v6312
    %v6377 = vadd.f32 %v6248, %v6313
    %v6378 = vadd.f32 %v6249, %v6314
    %v6379 = vadd.f32 %v6250, %v6315
    %v6380 = vadd.f32 %v6251, %v6316
    %v6381 = vadd.f32 %v6252, %v6317
    %v6382 = vadd.f32 %v6253, %v6318
    %v6383 = vadd.f32 %v6254, %v6319
    %v6384 = vadd.f32 %v6255, %v6320
    %v6385 = vadd.f32 %v6256, %v6321
    %v6386 = vadd.f32 %v6257, %v6322
    %v6387 = vadd.f32 %v6258, %v6323
    %v6388 = vadd.f32 %v6259, %v6324
    %v6389 = vadd.f32 %v6260, %v6325
    %v6390 = vadd.f32 %v6261, %v6326
    %v6391 = vadd.f32 %v6262, %v6327
    %v6392 = vadd.f32 %v6263, %v6328
    %v6393 = vadd.f32 %v6264, %v6329
    %v6394 = vadd.f32 %v6265, %v6330
    %v6395 = vadd.f32 %v6266, %v6331
    %v6396 = vadd.f32 %v6267, %v6332
    %v6397 = vadd.f32 %v6268, %v6333
    %v6398 = vadd.f32 %v6269, %v6334
    %v6399 = vadd.f32 %v6270, %v6335
    %v6400 = vadd.f32 %v6271, %v6336
    %v6401 = vadd.f32 %v6272, %v6337
    %v6402 = vadd.f32 %v6273, %v6338
    %v6403 = vadd.f32 %v6274, %v6339
    %v6404 = vadd.f32 %v6275, %v6340
    %v6405 = vadd.f32 %v6276, %v6341
    %v6406 = vadd.f32 %v6277, %v6342
    %v6407 = vadd.f32 %v6278, %v6343
    %v6408 = vadd.f32 %v6279, %v6344
    %v6409 = vadd.f32 %v6280, %v6345
    %v6410 = vadd.f32 %v6281, %v6346
    %v6411 = vadd.f32 %v6282, %v6347
    %v6412 = vadd.f32 %v6283, %v6348
    %v6413 = vadd.f32 %v6284, %v6349
    %v6414 = vadd.f32 %v6285, %v6350
    %v6415 = vadd.f32 %v6286, %v6351
    %v6416 = vadd.f32 %v6287, %v6352
    %v6417 = vadd.f32 %v6288, %v6353
    %v6418 = vadd.f32 %v6289, %v6354
    %v6419 = vadd.f32 %v6290, %v6355
    %v6420 = vadd.f32 %v6291, %v6356
    %v6421 = vadd.f32 %v6292, %v6357
    %v6422 = vadd.f32 %v6293, %v6358
    %v6423 = vadd.f32 %v6294, %v6359
    %v6424 = vadd.f32 %v6295, %v6360
    %v6425 = vadd.f32 %v6296, %v6361
    %v6426 = vadd.f32 %v6297, %v6362
    %v6427 = vadd.f32 %v6298, %v6363
    %v6428 = vadd.f32 %v6299, %v6364
    %v6429 = vadd.f32 %v6300, %v6365
    %v6430 = vadd.f32 %v6301, %v6366
    %v6431 = vadd.f32 %v6302, %v6367
    %v6432 = vadd.f32 %v6303, %v6368
    %vm6433 = vcmp.ge.f32.partialorder %v6369, 0.0
    %vm6434 = vcmp.ge.f32.partialorder %v6370, 0.0
    %vm6435 = vcmp.ge.f32.partialorder %v6371, 0.0
    %vm6436 = vcmp.ge.f32.partialorder %v6372, 0.0
    %vm6437 = vcmp.ge.f32.partialorder %v6373, 0.0
    %vm6438 = vcmp.ge.f32.partialorder %v6374, 0.0
    %vm6439 = vcmp.ge.f32.partialorder %v6375, 0.0
    %vm6440 = vcmp.ge.f32.partialorder %v6376, 0.0
    %vm6441 = vcmp.ge.f32.partialorder %v6377, 0.0
    %vm6442 = vcmp.ge.f32.partialorder %v6378, 0.0
    %vm6443 = vcmp.ge.f32.partialorder %v6379, 0.0
    %vm6444 = vcmp.ge.f32.partialorder %v6380, 0.0
    %vm6445 = vcmp.ge.f32.partialorder %v6381, 0.0
    %vm6446 = vcmp.ge.f32.partialorder %v6382, 0.0
    %vm6447 = vcmp.ge.f32.partialorder %v6383, 0.0
    %vm6448 = vcmp.ge.f32.partialorder %v6384, 0.0
    %vm6449 = vcmp.ge.f32.partialorder %v6385, 0.0
    %vm6450 = vcmp.ge.f32.partialorder %v6386, 0.0
    %vm6451 = vcmp.ge.f32.partialorder %v6387, 0.0
    %vm6452 = vcmp.ge.f32.partialorder %v6388, 0.0
    %vm6453 = vcmp.ge.f32.partialorder %v6389, 0.0
    %vm6454 = vcmp.ge.f32.partialorder %v6390, 0.0
    %vm6455 = vcmp.ge.f32.partialorder %v6391, 0.0
    %vm6456 = vcmp.ge.f32.partialorder %v6392, 0.0
    %vm6457 = vcmp.ge.f32.partialorder %v6393, 0.0
    %vm6458 = vcmp.ge.f32.partialorder %v6394, 0.0
    %vm6459 = vcmp.ge.f32.partialorder %v6395, 0.0
    %vm6460 = vcmp.ge.f32.partialorder %v6396, 0.0
    %vm6461 = vcmp.ge.f32.partialorder %v6397, 0.0
    %vm6462 = vcmp.ge.f32.partialorder %v6398, 0.0
    %vm6463 = vcmp.ge.f32.partialorder %v6399, 0.0
    %vm6464 = vcmp.ge.f32.partialorder %v6400, 0.0
    %vm6465 = vcmp.ge.f32.partialorder %v6401, 0.0
    %vm6466 = vcmp.ge.f32.partialorder %v6402, 0.0
    %vm6467 = vcmp.ge.f32.partialorder %v6403, 0.0
    %vm6468 = vcmp.ge.f32.partialorder %v6404, 0.0
    %vm6469 = vcmp.ge.f32.partialorder %v6405, 0.0
    %vm6470 = vcmp.ge.f32.partialorder %v6406, 0.0
    %vm6471 = vcmp.ge.f32.partialorder %v6407, 0.0
    %vm6472 = vcmp.ge.f32.partialorder %v6408, 0.0
    %vm6473 = vcmp.ge.f32.partialorder %v6409, 0.0
    %vm6474 = vcmp.ge.f32.partialorder %v6410, 0.0
    %vm6475 = vcmp.ge.f32.partialorder %v6411, 0.0
    %vm6476 = vcmp.ge.f32.partialorder %v6412, 0.0
    %vm6477 = vcmp.ge.f32.partialorder %v6413, 0.0
    %vm6478 = vcmp.ge.f32.partialorder %v6414, 0.0
    %vm6479 = vcmp.ge.f32.partialorder %v6415, 0.0
    %vm6480 = vcmp.ge.f32.partialorder %v6416, 0.0
    %vm6481 = vcmp.ge.f32.partialorder %v6417, 0.0
    %vm6482 = vcmp.ge.f32.partialorder %v6418, 0.0
    %vm6483 = vcmp.ge.f32.partialorder %v6419, 0.0
    %vm6484 = vcmp.ge.f32.partialorder %v6420, 0.0
    %vm6485 = vcmp.ge.f32.partialorder %v6421, 0.0
    %vm6486 = vcmp.ge.f32.partialorder %v6422, 0.0
    %vm6487 = vcmp.ge.f32.partialorder %v6423, 0.0
    %vm6488 = vcmp.ge.f32.partialorder %v6424, 0.0
    %vm6489 = vcmp.ge.f32.partialorder %v6425, 0.0
    %vm6490 = vcmp.ge.f32.partialorder %v6426, 0.0
    %vm6491 = vcmp.ge.f32.partialorder %v6427, 0.0
    %vm6492 = vcmp.ge.f32.partialorder %v6428, 0.0
    %vm6493 = vcmp.ge.f32.partialorder %v6429, 0.0
    %vm6494 = vcmp.ge.f32.partialorder %v6430, 0.0
    %vm6495 = vcmp.ge.f32.partialorder %v6431, 0.0
    %vm6496 = vcmp.ge.f32.partialorder %v6432, 0.0
    %s6497 = scalar_lea.vmem %s3, 2
    %v6498 = vld [vmem:[%s6497] sm:$0x1]
    %v6500 = vlaneseq
    %v6501 = vshrl.u32 %v6500, 7
    %v6502 = vsub.s32 0, %v6501
    %v6503 = vrot.slane %v6498, %v6502
    %v6505 = vmul.f32 %v6369, %v6503
    %v6506 = vmul.f32 %v6370, %v6503
    %v6507 = vmul.f32 %v6371, %v6503
    %v6508 = vmul.f32 %v6372, %v6503
    %v6509 = vmul.f32 %v6373, %v6503
    %v6510 = vmul.f32 %v6374, %v6503
    %v6511 = vmul.f32 %v6375, %v6503
    %v6512 = vmul.f32 %v6376, %v6503
    %v6513 = vmul.f32 %v6377, %v6503
    %v6514 = vmul.f32 %v6378, %v6503
    %v6515 = vmul.f32 %v6379, %v6503
    %v6516 = vmul.f32 %v6380, %v6503
    %v6517 = vmul.f32 %v6381, %v6503
    %v6518 = vmul.f32 %v6382, %v6503
    %v6519 = vmul.f32 %v6383, %v6503
    %v6520 = vmul.f32 %v6384, %v6503
    %v6521 = vmul.f32 %v6385, %v6503
    %v6522 = vmul.f32 %v6386, %v6503
    %v6523 = vmul.f32 %v6387, %v6503
    %v6524 = vmul.f32 %v6388, %v6503
    %v6525 = vmul.f32 %v6389, %v6503
    %v6526 = vmul.f32 %v6390, %v6503
    %v6527 = vmul.f32 %v6391, %v6503
    %v6528 = vmul.f32 %v6392, %v6503
    %v6529 = vmul.f32 %v6393, %v6503
    %v6530 = vmul.f32 %v6394, %v6503
    %v6531 = vmul.f32 %v6395, %v6503
    %v6532 = vmul.f32 %v6396, %v6503
    %v6533 = vmul.f32 %v6397, %v6503
    %v6534 = vmul.f32 %v6398, %v6503
    %v6535 = vmul.f32 %v6399, %v6503
    %v6536 = vmul.f32 %v6400, %v6503
    %v6537 = vmul.f32 %v6401, %v6503
    %v6538 = vmul.f32 %v6402, %v6503
    %v6539 = vmul.f32 %v6403, %v6503
    %v6540 = vmul.f32 %v6404, %v6503
    %v6541 = vmul.f32 %v6405, %v6503
    %v6542 = vmul.f32 %v6406, %v6503
    %v6543 = vmul.f32 %v6407, %v6503
    %v6544 = vmul.f32 %v6408, %v6503
    %v6545 = vmul.f32 %v6409, %v6503
    %v6546 = vmul.f32 %v6410, %v6503
    %v6547 = vmul.f32 %v6411, %v6503
    %v6548 = vmul.f32 %v6412, %v6503
    %v6549 = vmul.f32 %v6413, %v6503
    %v6550 = vmul.f32 %v6414, %v6503
    %v6551 = vmul.f32 %v6415, %v6503
    %v6552 = vmul.f32 %v6416, %v6503
    %v6553 = vmul.f32 %v6417, %v6503
    %v6554 = vmul.f32 %v6418, %v6503
    %v6555 = vmul.f32 %v6419, %v6503
    %v6556 = vmul.f32 %v6420, %v6503
    %v6557 = vmul.f32 %v6421, %v6503
    %v6558 = vmul.f32 %v6422, %v6503
    %v6559 = vmul.f32 %v6423, %v6503
    %v6560 = vmul.f32 %v6424, %v6503
    %v6561 = vmul.f32 %v6425, %v6503
    %v6562 = vmul.f32 %v6426, %v6503
    %v6563 = vmul.f32 %v6427, %v6503
    %v6564 = vmul.f32 %v6428, %v6503
    %v6565 = vmul.f32 %v6429, %v6503
    %v6566 = vmul.f32 %v6430, %v6503
    %v6567 = vmul.f32 %v6431, %v6503
    %v6568 = vmul.f32 %v6432, %v6503
    %v6569 = vsel %vm6433, %v6369, %v6505
    %v6570 = vsel %vm6434, %v6370, %v6506
    %v6571 = vsel %vm6435, %v6371, %v6507
    %v6572 = vsel %vm6436, %v6372, %v6508
    %v6573 = vsel %vm6437, %v6373, %v6509
    %v6574 = vsel %vm6438, %v6374, %v6510
    %v6575 = vsel %vm6439, %v6375, %v6511
    %v6576 = vsel %vm6440, %v6376, %v6512
    %v6577 = vsel %vm6441, %v6377, %v6513
    %v6578 = vsel %vm6442, %v6378, %v6514
    %v6579 = vsel %vm6443, %v6379, %v6515
    %v6580 = vsel %vm6444, %v6380, %v6516
    %v6581 = vsel %vm6445, %v6381, %v6517
    %v6582 = vsel %vm6446, %v6382, %v6518
    %v6583 = vsel %vm6447, %v6383, %v6519
    %v6584 = vsel %vm6448, %v6384, %v6520
    %v6585 = vsel %vm6449, %v6385, %v6521
    %v6586 = vsel %vm6450, %v6386, %v6522
    %v6587 = vsel %vm6451, %v6387, %v6523
    %v6588 = vsel %vm6452, %v6388, %v6524
    %v6589 = vsel %vm6453, %v6389, %v6525
    %v6590 = vsel %vm6454, %v6390, %v6526
    %v6591 = vsel %vm6455, %v6391, %v6527
    %v6592 = vsel %vm6456, %v6392, %v6528
    %v6593 = vsel %vm6457, %v6393, %v6529
    %v6594 = vsel %vm6458, %v6394, %v6530
    %v6595 = vsel %vm6459, %v6395, %v6531
    %v6596 = vsel %vm6460, %v6396, %v6532
    %v6597 = vsel %vm6461, %v6397, %v6533
    %v6598 = vsel %vm6462, %v6398, %v6534
    %v6599 = vsel %vm6463, %v6399, %v6535
    %v6600 = vsel %vm6464, %v6400, %v6536
    %v6601 = vsel %vm6465, %v6401, %v6537
    %v6602 = vsel %vm6466, %v6402, %v6538
    %v6603 = vsel %vm6467, %v6403, %v6539
    %v6604 = vsel %vm6468, %v6404, %v6540
    %v6605 = vsel %vm6469, %v6405, %v6541
    %v6606 = vsel %vm6470, %v6406, %v6542
    %v6607 = vsel %vm6471, %v6407, %v6543
    %v6608 = vsel %vm6472, %v6408, %v6544
    %v6609 = vsel %vm6473, %v6409, %v6545
    %v6610 = vsel %vm6474, %v6410, %v6546
    %v6611 = vsel %vm6475, %v6411, %v6547
    %v6612 = vsel %vm6476, %v6412, %v6548
    %v6613 = vsel %vm6477, %v6413, %v6549
    %v6614 = vsel %vm6478, %v6414, %v6550
    %v6615 = vsel %vm6479, %v6415, %v6551
    %v6616 = vsel %vm6480, %v6416, %v6552
    %v6617 = vsel %vm6481, %v6417, %v6553
    %v6618 = vsel %vm6482, %v6418, %v6554
    %v6619 = vsel %vm6483, %v6419, %v6555
    %v6620 = vsel %vm6484, %v6420, %v6556
    %v6621 = vsel %vm6485, %v6421, %v6557
    %v6622 = vsel %vm6486, %v6422, %v6558
    %v6623 = vsel %vm6487, %v6423, %v6559
    %v6624 = vsel %vm6488, %v6424, %v6560
    %v6625 = vsel %vm6489, %v6425, %v6561
    %v6626 = vsel %vm6490, %v6426, %v6562
    %v6627 = vsel %vm6491, %v6427, %v6563
    %v6628 = vsel %vm6492, %v6428, %v6564
    %v6629 = vsel %vm6493, %v6429, %v6565
    %v6630 = vsel %vm6494, %v6430, %v6566
    %v6631 = vsel %vm6495, %v6431, %v6567
    %v6632 = vsel %vm6496, %v6432, %v6568
    %6633 = vst.msk [vmem:[%s427 + $0x1] sm:$0xff] %vm49, %v6569
    %6634 = vst.msk [vmem:[%s427 + $0x9] sm:$0xff] %vm49, %v6570
    %6635 = vst.msk [vmem:[%s427 + $0x19] sm:$0xff] %vm49, %v6571
    %6636 = vst.msk [vmem:[%s427 + $0x21] sm:$0xff] %vm49, %v6572
    %6637 = vst.msk [vmem:[%s427 + $0x31] sm:$0xff] %vm49, %v6573
    %6638 = vst.msk [vmem:[%s427 + $0x39] sm:$0xff] %vm49, %v6574
    %6639 = vst.msk [vmem:[%s427 + $0x49] sm:$0xff] %vm49, %v6575
    %6640 = vst.msk [vmem:[%s427 + $0x51] sm:$0xff] %vm49, %v6576
    %6641 = vst.msk [vmem:[%s427 + $0x61] sm:$0xff] %vm49, %v6577
    %6642 = vst.msk [vmem:[%s427 + $0x69] sm:$0xff] %vm49, %v6578
    %6643 = vst.msk [vmem:[%s427 + $0x79] sm:$0xff] %vm49, %v6579
    %6644 = vst.msk [vmem:[%s427 + $0x81] sm:$0xff] %vm49, %v6580
    %6645 = vst.msk [vmem:[%s427 + $0x91] sm:$0xff] %vm49, %v6581
    %6646 = vst.msk [vmem:[%s427 + $0x99] sm:$0xff] %vm49, %v6582
    %6647 = vst.msk [vmem:[%s427 + $0xa9] sm:$0xff] %vm49, %v6583
    %6648 = vst.msk [vmem:[%s427 + $0xb1] sm:$0xff] %vm49, %v6584
    %6649 = vst.msk [vmem:[%s427 + $0xc1] sm:$0xff] %vm49, %v6585
    %6650 = vst.msk [vmem:[%s427 + $0xc9] sm:$0xff] %vm49, %v6586
    %6651 = vst.msk [vmem:[%s427 + $0xd9] sm:$0xff] %vm49, %v6587
    %6652 = vst.msk [vmem:[%s427 + $0xe1] sm:$0xff] %vm49, %v6588
    %6653 = vst.msk [vmem:[%s427 + $0xf1] sm:$0xff] %vm49, %v6589
    %6654 = vst.msk [vmem:[%s427 + $0xf9] sm:$0xff] %vm49, %v6590
    %6655 = vst.msk [vmem:[%s427 + $0x109] sm:$0xff] %vm49, %v6591
    %6656 = vst.msk [vmem:[%s427 + $0x111] sm:$0xff] %vm49, %v6592
    %6657 = vst.msk [vmem:[%s427 + $0x121] sm:$0xff] %vm49, %v6593
    %6658 = vst.msk [vmem:[%s427 + $0x129] sm:$0xff] %vm49, %v6594
    %6659 = vst.msk [vmem:[%s427 + $0x139] sm:$0xff] %vm49, %v6595
    %6660 = vst.msk [vmem:[%s427 + $0x141] sm:$0xff] %vm49, %v6596
    %6661 = vst.msk [vmem:[%s427 + $0x151] sm:$0xff] %vm49, %v6597
    %6662 = vst.msk [vmem:[%s427 + $0x159] sm:$0xff] %vm49, %v6598
    %6663 = vst.msk [vmem:[%s427 + $0x169] sm:$0xff] %vm49, %v6599
    %6664 = vst.msk [vmem:[%s427 + $0x171] sm:$0xff] %vm49, %v6600
    %6665 = vst.msk [vmem:[%s427 + $0x1b1] sm:$0xff] %vm49, %v6601
    %6666 = vst.msk [vmem:[%s427 + $0x1b9] sm:$0xff] %vm49, %v6602
    %6667 = vst.msk [vmem:[%s427 + $0x1c9] sm:$0xff] %vm49, %v6603
    %6668 = vst.msk [vmem:[%s427 + $0x1d1] sm:$0xff] %vm49, %v6604
    %6669 = vst.msk [vmem:[%s427 + $0x1e1] sm:$0xff] %vm49, %v6605
    %6670 = vst.msk [vmem:[%s427 + $0x1e9] sm:$0xff] %vm49, %v6606
    %6671 = vst.msk [vmem:[%s427 + $0x1f9] sm:$0xff] %vm49, %v6607
    %6672 = vst.msk [vmem:[%s427 + $0x201] sm:$0xff] %vm49, %v6608
    %6673 = vst.msk [vmem:[%s427 + $0x211] sm:$0xff] %vm49, %v6609
    %6674 = vst.msk [vmem:[%s427 + $0x219] sm:$0xff] %vm49, %v6610
    %6675 = vst.msk [vmem:[%s427 + $0x229] sm:$0xff] %vm49, %v6611
    %6676 = vst.msk [vmem:[%s427 + $0x231] sm:$0xff] %vm49, %v6612
    %6677 = vst.msk [vmem:[%s427 + $0x241] sm:$0xff] %vm49, %v6613
    %6678 = vst.msk [vmem:[%s427 + $0x249] sm:$0xff] %vm49, %v6614
    %6679 = vst.msk [vmem:[%s427 + $0x259] sm:$0xff] %vm49, %v6615
    %6680 = vst.msk [vmem:[%s427 + $0x261] sm:$0xff] %vm49, %v6616
    %6681 = vst.msk [vmem:[%s427 + $0x271] sm:$0xff] %vm49, %v6617
    %6682 = vst.msk [vmem:[%s427 + $0x279] sm:$0xff] %vm49, %v6618
    %6683 = vst.msk [vmem:[%s427 + $0x289] sm:$0xff] %vm49, %v6619
    %6684 = vst.msk [vmem:[%s427 + $0x291] sm:$0xff] %vm49, %v6620
    %6685 = vst.msk [vmem:[%s427 + $0x2a1] sm:$0xff] %vm49, %v6621
    %6686 = vst.msk [vmem:[%s427 + $0x2a9] sm:$0xff] %vm49, %v6622
    %6687 = vst.msk [vmem:[%s427 + $0x2b9] sm:$0xff] %vm49, %v6623
    %6688 = vst.msk [vmem:[%s427 + $0x2c1] sm:$0xff] %vm49, %v6624
    %6689 = vst.msk [vmem:[%s427 + $0x2d1] sm:$0xff] %vm49, %v6625
    %6690 = vst.msk [vmem:[%s427 + $0x2d9] sm:$0xff] %vm49, %v6626
    %6691 = vst.msk [vmem:[%s427 + $0x2e9] sm:$0xff] %vm49, %v6627
    %6692 = vst.msk [vmem:[%s427 + $0x2f1] sm:$0xff] %vm49, %v6628
    %6693 = vst.msk [vmem:[%s427 + $0x301] sm:$0xff] %vm49, %v6629
    %6694 = vst.msk [vmem:[%s427 + $0x309] sm:$0xff] %vm49, %v6630
    %6695 = vst.msk [vmem:[%s427 + $0x319] sm:$0xff] %vm49, %v6631
    %6696 = vst.msk [vmem:[%s427 + $0x321] sm:$0xff] %vm49, %v6632
    %v6697 = vld [vmem:[#allocation2] sm:$0xff]
    %v6698 = vld [vmem:[#allocation2 + $0x8] sm:$0xff]
    %v6699 = vld [vmem:[#allocation2 + $0x18] sm:$0xff]
    %v6700 = vld [vmem:[#allocation2 + $0x20] sm:$0xff]
    %v6701 = vld [vmem:[#allocation2 + $0x30] sm:$0xff]
    %v6702 = vld [vmem:[#allocation2 + $0x38] sm:$0xff]
    %v6703 = vld [vmem:[#allocation2 + $0x48] sm:$0xff]
    %v6704 = vld [vmem:[#allocation2 + $0x50] sm:$0xff]
    %v6705 = vld [vmem:[#allocation2 + $0x60] sm:$0xff]
    %v6706 = vld [vmem:[#allocation2 + $0x68] sm:$0xff]
    %v6707 = vld [vmem:[#allocation2 + $0x78] sm:$0xff]
    %v6708 = vld [vmem:[#allocation2 + $0x80] sm:$0xff]
    %v6709 = vld [vmem:[#allocation2 + $0x90] sm:$0xff]
    %v6710 = vld [vmem:[#allocation2 + $0x98] sm:$0xff]
    %v6711 = vld [vmem:[#allocation2 + $0xa8] sm:$0xff]
    %v6712 = vld [vmem:[#allocation2 + $0xb0] sm:$0xff]
    %v6713 = vld [vmem:[#allocation2 + $0xc0] sm:$0xff]
    %v6714 = vld [vmem:[#allocation2 + $0xc8] sm:$0xff]
    %v6715 = vld [vmem:[#allocation2 + $0xd8] sm:$0xff]
    %v6716 = vld [vmem:[#allocation2 + $0xe0] sm:$0xff]
    %v6717 = vld [vmem:[#allocation2 + $0xf0] sm:$0xff]
    %v6718 = vld [vmem:[#allocation2 + $0xf8] sm:$0xff]
    %v6719 = vld [vmem:[#allocation2 + $0x108] sm:$0xff]
    %v6720 = vld [vmem:[#allocation2 + $0x110] sm:$0xff]
    %v6721 = vld [vmem:[#allocation2 + $0x120] sm:$0xff]
    %v6722 = vld [vmem:[#allocation2 + $0x128] sm:$0xff]
    %v6723 = vld [vmem:[#allocation2 + $0x138] sm:$0xff]
    %v6724 = vld [vmem:[#allocation2 + $0x140] sm:$0xff]
    %v6725 = vld [vmem:[#allocation2 + $0x150] sm:$0xff]
    %v6726 = vld [vmem:[#allocation2 + $0x158] sm:$0xff]
    %v6727 = vld [vmem:[#allocation2 + $0x168] sm:$0xff]
    %v6728 = vld [vmem:[#allocation2 + $0x170] sm:$0xff]
    %v6729 = vld [vmem:[#allocation2 + $0x1b0] sm:$0xff]
    %v6730 = vld [vmem:[#allocation2 + $0x1b8] sm:$0xff]
    %v6731 = vld [vmem:[#allocation2 + $0x1c8] sm:$0xff]
    %v6732 = vld [vmem:[#allocation2 + $0x1d0] sm:$0xff]
    %v6733 = vld [vmem:[#allocation2 + $0x1e0] sm:$0xff]
    %v6734 = vld [vmem:[#allocation2 + $0x1e8] sm:$0xff]
    %v6735 = vld [vmem:[#allocation2 + $0x1f8] sm:$0xff]
    %v6736 = vld [vmem:[#allocation2 + $0x200] sm:$0xff]
    %v6737 = vld [vmem:[#allocation2 + $0x210] sm:$0xff]
    %v6738 = vld [vmem:[#allocation2 + $0x218] sm:$0xff]
    %v6739 = vld [vmem:[#allocation2 + $0x228] sm:$0xff]
    %v6740 = vld [vmem:[#allocation2 + $0x230] sm:$0xff]
    %v6741 = vld [vmem:[#allocation2 + $0x240] sm:$0xff]
    %v6742 = vld [vmem:[#allocation2 + $0x248] sm:$0xff]
    %v6743 = vld [vmem:[#allocation2 + $0x258] sm:$0xff]
    %v6744 = vld [vmem:[#allocation2 + $0x260] sm:$0xff]
    %v6745 = vld [vmem:[#allocation2 + $0x270] sm:$0xff]
    %v6746 = vld [vmem:[#allocation2 + $0x278] sm:$0xff]
    %v6747 = vld [vmem:[#allocation2 + $0x288] sm:$0xff]
    %v6748 = vld [vmem:[#allocation2 + $0x290] sm:$0xff]
    %v6749 = vld [vmem:[#allocation2 + $0x2a0] sm:$0xff]
    %v6750 = vld [vmem:[#allocation2 + $0x2a8] sm:$0xff]
    %v6751 = vld [vmem:[#allocation2 + $0x2b8] sm:$0xff]
    %v6752 = vld [vmem:[#allocation2 + $0x2c0] sm:$0xff]
    %v6753 = vld [vmem:[#allocation2 + $0x2d0] sm:$0xff]
    %v6754 = vld [vmem:[#allocation2 + $0x2d8] sm:$0xff]
    %v6755 = vld [vmem:[#allocation2 + $0x2e8] sm:$0xff]
    %v6756 = vld [vmem:[#allocation2 + $0x2f0] sm:$0xff]
    %v6757 = vld [vmem:[#allocation2 + $0x300] sm:$0xff]
    %v6758 = vld [vmem:[#allocation2 + $0x308] sm:$0xff]
    %v6759 = vld [vmem:[#allocation2 + $0x318] sm:$0xff]
    %v6760 = vld [vmem:[#allocation2 + $0x320] sm:$0xff]
    %v6761 = vpack.c.bf16 %v6698, %v6697
    %v6762 = vpack.c.bf16 %v6700, %v6699
    %v6763 = vpack.c.bf16 %v6702, %v6701
    %v6764 = vpack.c.bf16 %v6704, %v6703
    %v6765 = vpack.c.bf16 %v6706, %v6705
    %v6766 = vpack.c.bf16 %v6708, %v6707
    %v6767 = vpack.c.bf16 %v6710, %v6709
    %v6768 = vpack.c.bf16 %v6712, %v6711
    %v6769 = vpack.c.bf16 %v6714, %v6713
    %v6770 = vpack.c.bf16 %v6716, %v6715
    %v6771 = vpack.c.bf16 %v6718, %v6717
    %v6772 = vpack.c.bf16 %v6720, %v6719
    %v6773 = vpack.c.bf16 %v6722, %v6721
    %v6774 = vpack.c.bf16 %v6724, %v6723
    %v6775 = vpack.c.bf16 %v6726, %v6725
    %v6776 = vpack.c.bf16 %v6728, %v6727
    %v6777 = vpack.c.bf16 %v6730, %v6729
    %v6778 = vpack.c.bf16 %v6732, %v6731
    %v6779 = vpack.c.bf16 %v6734, %v6733
    %v6780 = vpack.c.bf16 %v6736, %v6735
    %v6781 = vpack.c.bf16 %v6738, %v6737
    %v6782 = vpack.c.bf16 %v6740, %v6739
    %v6783 = vpack.c.bf16 %v6742, %v6741
    %v6784 = vpack.c.bf16 %v6744, %v6743
    %v6785 = vpack.c.bf16 %v6746, %v6745
    %v6786 = vpack.c.bf16 %v6748, %v6747
    %v6787 = vpack.c.bf16 %v6750, %v6749
    %v6788 = vpack.c.bf16 %v6752, %v6751
    %v6789 = vpack.c.bf16 %v6754, %v6753
    %v6790 = vpack.c.bf16 %v6756, %v6755
    %v6791 = vpack.c.bf16 %v6758, %v6757
    %v6792 = vpack.c.bf16 %v6760, %v6759
    %6793 = vst.msk [vmem:[#allocation3] sm:$0xff] %vm49, %v6761
    %6794 = vst.msk [vmem:[#allocation3 + $0x10] sm:$0xff] %vm49, %v6762
    %6795 = vst.msk [vmem:[#allocation3 + $0x20] sm:$0xff] %vm49, %v6763
    %6796 = vst.msk [vmem:[#allocation3 + $0x30] sm:$0xff] %vm49, %v6764
    %6797 = vst.msk [vmem:[#allocation3 + $0x40] sm:$0xff] %vm49, %v6765
    %6798 = vst.msk [vmem:[#allocation3 + $0x50] sm:$0xff] %vm49, %v6766
    %6799 = vst.msk [vmem:[#allocation3 + $0x60] sm:$0xff] %vm49, %v6767
    %6800 = vst.msk [vmem:[#allocation3 + $0x70] sm:$0xff] %vm49, %v6768
    %6801 = vst.msk [vmem:[#allocation3 + $0x80] sm:$0xff] %vm49, %v6769
    %6802 = vst.msk [vmem:[#allocation3 + $0x90] sm:$0xff] %vm49, %v6770
    %6803 = vst.msk [vmem:[#allocation3 + $0xa0] sm:$0xff] %vm49, %v6771
    %6804 = vst.msk [vmem:[#allocation3 + $0xb0] sm:$0xff] %vm49, %v6772
    %6805 = vst.msk [vmem:[#allocation3 + $0xc0] sm:$0xff] %vm49, %v6773
    %6806 = vst.msk [vmem:[#allocation3 + $0xd0] sm:$0xff] %vm49, %v6774
    %6807 = vst.msk [vmem:[#allocation3 + $0xe0] sm:$0xff] %vm49, %v6775
    %6808 = vst.msk [vmem:[#allocation3 + $0xf0] sm:$0xff] %vm49, %v6776
    %6809 = vst.msk [vmem:[#allocation3 + $0x100] sm:$0xff] %vm49, %v6777
    %6810 = vst.msk [vmem:[#allocation3 + $0x110] sm:$0xff] %vm49, %v6778
    %6811 = vst.msk [vmem:[#allocation3 + $0x120] sm:$0xff] %vm49, %v6779
    %6812 = vst.msk [vmem:[#allocation3 + $0x130] sm:$0xff] %vm49, %v6780
    %6813 = vst.msk [vmem:[#allocation3 + $0x140] sm:$0xff] %vm49, %v6781
    %6814 = vst.msk [vmem:[#allocation3 + $0x150] sm:$0xff] %vm49, %v6782
    %6815 = vst.msk [vmem:[#allocation3 + $0x160] sm:$0xff] %vm49, %v6783
    %6816 = vst.msk [vmem:[#allocation3 + $0x170] sm:$0xff] %vm49, %v6784
    %6817 = vst.msk [vmem:[#allocation3 + $0x180] sm:$0xff] %vm49, %v6785
    %6818 = vst.msk [vmem:[#allocation3 + $0x190] sm:$0xff] %vm49, %v6786
    %6819 = vst.msk [vmem:[#allocation3 + $0x1a0] sm:$0xff] %vm49, %v6787
    %6820 = vst.msk [vmem:[#allocation3 + $0x1b0] sm:$0xff] %vm49, %v6788
    %6821 = vst.msk [vmem:[#allocation3 + $0x1c0] sm:$0xff] %vm49, %v6789
    %6822 = vst.msk [vmem:[#allocation3 + $0x1d0] sm:$0xff] %vm49, %v6790
    %6823 = vst.msk [vmem:[#allocation3 + $0x1e0] sm:$0xff] %vm49, %v6791
    %6824 = vst.msk [vmem:[#allocation3 + $0x1f0] sm:$0xff] %vm49, %v6792
    %v6825 = vld [vmem:[#allocation2 + $0x1] sm:$0xff]
    %v6826 = vld [vmem:[#allocation2 + $0x9] sm:$0xff]
    %v6827 = vld [vmem:[#allocation2 + $0x19] sm:$0xff]
    %v6828 = vld [vmem:[#allocation2 + $0x21] sm:$0xff]
    %v6829 = vld [vmem:[#allocation2 + $0x31] sm:$0xff]
    %v6830 = vld [vmem:[#allocation2 + $0x39] sm:$0xff]
    %v6831 = vld [vmem:[#allocation2 + $0x49] sm:$0xff]
    %v6832 = vld [vmem:[#allocation2 + $0x51] sm:$0xff]
    %v6833 = vld [vmem:[#allocation2 + $0x61] sm:$0xff]
    %v6834 = vld [vmem:[#allocation2 + $0x69] sm:$0xff]
    %v6835 = vld [vmem:[#allocation2 + $0x79] sm:$0xff]
    %v6836 = vld [vmem:[#allocation2 + $0x81] sm:$0xff]
    %v6837 = vld [vmem:[#allocation2 + $0x91] sm:$0xff]
    %v6838 = vld [vmem:[#allocation2 + $0x99] sm:$0xff]
    %v6839 = vld [vmem:[#allocation2 + $0xa9] sm:$0xff]
    %v6840 = vld [vmem:[#allocation2 + $0xb1] sm:$0xff]
    %v6841 = vld [vmem:[#allocation2 + $0xc1] sm:$0xff]
    %v6842 = vld [vmem:[#allocation2 + $0xc9] sm:$0xff]
    %v6843 = vld [vmem:[#allocation2 + $0xd9] sm:$0xff]
    %v6844 = vld [vmem:[#allocation2 + $0xe1] sm:$0xff]
    %v6845 = vld [vmem:[#allocation2 + $0xf1] sm:$0xff]
    %v6846 = vld [vmem:[#allocation2 + $0xf9] sm:$0xff]
    %v6847 = vld [vmem:[#allocation2 + $0x109] sm:$0xff]
    %v6848 = vld [vmem:[#allocation2 + $0x111] sm:$0xff]
    %v6849 = vld [vmem:[#allocation2 + $0x121] sm:$0xff]
    %v6850 = vld [vmem:[#allocation2 + $0x129] sm:$0xff]
    %v6851 = vld [vmem:[#allocation2 + $0x139] sm:$0xff]
    %v6852 = vld [vmem:[#allocation2 + $0x141] sm:$0xff]
    %v6853 = vld [vmem:[#allocation2 + $0x151] sm:$0xff]
    %v6854 = vld [vmem:[#allocation2 + $0x159] sm:$0xff]
    %v6855 = vld [vmem:[#allocation2 + $0x169] sm:$0xff]
    %v6856 = vld [vmem:[#allocation2 + $0x171] sm:$0xff]
    %v6857 = vld [vmem:[#allocation2 + $0x1b1] sm:$0xff]
    %v6858 = vld [vmem:[#allocation2 + $0x1b9] sm:$0xff]
    %v6859 = vld [vmem:[#allocation2 + $0x1c9] sm:$0xff]
    %v6860 = vld [vmem:[#allocation2 + $0x1d1] sm:$0xff]
    %v6861 = vld [vmem:[#allocation2 + $0x1e1] sm:$0xff]
    %v6862 = vld [vmem:[#allocation2 + $0x1e9] sm:$0xff]
    %v6863 = vld [vmem:[#allocation2 + $0x1f9] sm:$0xff]
    %v6864 = vld [vmem:[#allocation2 + $0x201] sm:$0xff]
    %v6865 = vld [vmem:[#allocation2 + $0x211] sm:$0xff]
    %v6866 = vld [vmem:[#allocation2 + $0x219] sm:$0xff]
    %v6867 = vld [vmem:[#allocation2 + $0x229] sm:$0xff]
    %v6868 = vld [vmem:[#allocation2 + $0x231] sm:$0xff]
    %v6869 = vld [vmem:[#allocation2 + $0x241] sm:$0xff]
    %v6870 = vld [vmem:[#allocation2 + $0x249] sm:$0xff]
    %v6871 = vld [vmem:[#allocation2 + $0x259] sm:$0xff]
    %v6872 = vld [vmem:[#allocation2 + $0x261] sm:$0xff]
    %v6873 = vld [vmem:[#allocation2 + $0x271] sm:$0xff]
    %v6874 = vld [vmem:[#allocation2 + $0x279] sm:$0xff]
    %v6875 = vld [vmem:[#allocation2 + $0x289] sm:$0xff]
    %v6876 = vld [vmem:[#allocation2 + $0x291] sm:$0xff]
    %v6877 = vld [vmem:[#allocation2 + $0x2a1] sm:$0xff]
    %v6878 = vld [vmem:[#allocation2 + $0x2a9] sm:$0xff]
    %v6879 = vld [vmem:[#allocation2 + $0x2b9] sm:$0xff]
    %v6880 = vld [vmem:[#allocation2 + $0x2c1] sm:$0xff]
    %v6881 = vld [vmem:[#allocation2 + $0x2d1] sm:$0xff]
    %v6882 = vld [vmem:[#allocation2 + $0x2d9] sm:$0xff]
    %v6883 = vld [vmem:[#allocation2 + $0x2e9] sm:$0xff]
    %v6884 = vld [vmem:[#allocation2 + $0x2f1] sm:$0xff]
    %v6885 = vld [vmem:[#allocation2 + $0x301] sm:$0xff]
    %v6886 = vld [vmem:[#allocation2 + $0x309] sm:$0xff]
    %v6887 = vld [vmem:[#allocation2 + $0x319] sm:$0xff]
    %v6888 = vld [vmem:[#allocation2 + $0x321] sm:$0xff]
    %v6889 = vpack.c.bf16 %v6826, %v6825
    %v6890 = vpack.c.bf16 %v6828, %v6827
    %v6891 = vpack.c.bf16 %v6830, %v6829
    %v6892 = vpack.c.bf16 %v6832, %v6831
    %v6893 = vpack.c.bf16 %v6834, %v6833
    %v6894 = vpack.c.bf16 %v6836, %v6835
    %v6895 = vpack.c.bf16 %v6838, %v6837
    %v6896 = vpack.c.bf16 %v6840, %v6839
    %v6897 = vpack.c.bf16 %v6842, %v6841
    %v6898 = vpack.c.bf16 %v6844, %v6843
    %v6899 = vpack.c.bf16 %v6846, %v6845
    %v6900 = vpack.c.bf16 %v6848, %v6847
    %v6901 = vpack.c.bf16 %v6850, %v6849
    %v6902 = vpack.c.bf16 %v6852, %v6851
    %v6903 = vpack.c.bf16 %v6854, %v6853
    %v6904 = vpack.c.bf16 %v6856, %v6855
    %v6905 = vpack.c.bf16 %v6858, %v6857
    %v6906 = vpack.c.bf16 %v6860, %v6859
    %v6907 = vpack.c.bf16 %v6862, %v6861
    %v6908 = vpack.c.bf16 %v6864, %v6863
    %v6909 = vpack.c.bf16 %v6866, %v6865
    %v6910 = vpack.c.bf16 %v6868, %v6867
    %v6911 = vpack.c.bf16 %v6870, %v6869
    %v6912 = vpack.c.bf16 %v6872, %v6871
    %v6913 = vpack.c.bf16 %v6874, %v6873
    %v6914 = vpack.c.bf16 %v6876, %v6875
    %v6915 = vpack.c.bf16 %v6878, %v6877
    %v6916 = vpack.c.bf16 %v6880, %v6879
    %v6917 = vpack.c.bf16 %v6882, %v6881
    %v6918 = vpack.c.bf16 %v6884, %v6883
    %v6919 = vpack.c.bf16 %v6886, %v6885
    %v6920 = vpack.c.bf16 %v6888, %v6887
    %6953 = vrot.lane.b32.xlu0 %v6889, 16
    %v6954 = vpop.permute.xlu0 %6953
    %6955 = vrot.lane.b32.xlu0 %v6890, 16
    %v6956 = vpop.permute.xlu0 %6955
    %6957 = vrot.lane.b32.xlu0 %v6891, 16
    %v6958 = vpop.permute.xlu0 %6957
    %6959 = vrot.lane.b32.xlu0 %v6892, 16
    %v6960 = vpop.permute.xlu0 %6959
    %6961 = vrot.lane.b32.xlu0 %v6893, 16
    %v6962 = vpop.permute.xlu0 %6961
    %6963 = vrot.lane.b32.xlu0 %v6894, 16
    %v6964 = vpop.permute.xlu0 %6963
    %6965 = vrot.lane.b32.xlu0 %v6895, 16
    %v6966 = vpop.permute.xlu0 %6965
    %6967 = vrot.lane.b32.xlu0 %v6896, 16
    %v6968 = vpop.permute.xlu0 %6967
    %6969 = vrot.lane.b32.xlu0 %v6897, 16
    %v6970 = vpop.permute.xlu0 %6969
    %6971 = vrot.lane.b32.xlu0 %v6898, 16
    %v6972 = vpop.permute.xlu0 %6971
    %6973 = vrot.lane.b32.xlu0 %v6899, 16
    %v6974 = vpop.permute.xlu0 %6973
    %6975 = vrot.lane.b32.xlu0 %v6900, 16
    %v6976 = vpop.permute.xlu0 %6975
    %6977 = vrot.lane.b32.xlu0 %v6901, 16
    %v6978 = vpop.permute.xlu0 %6977
    %6979 = vrot.lane.b32.xlu0 %v6902, 16
    %v6980 = vpop.permute.xlu0 %6979
    %6981 = vrot.lane.b32.xlu0 %v6903, 16
    %v6982 = vpop.permute.xlu0 %6981
    %6983 = vrot.lane.b32.xlu0 %v6904, 16
    %v6984 = vpop.permute.xlu0 %6983
    %6985 = vrot.lane.b32.xlu0 %v6905, 16
    %v6986 = vpop.permute.xlu0 %6985
    %6987 = vrot.lane.b32.xlu0 %v6906, 16
    %v6988 = vpop.permute.xlu0 %6987
    %6989 = vrot.lane.b32.xlu0 %v6907, 16
    %v6990 = vpop.permute.xlu0 %6989
    %6991 = vrot.lane.b32.xlu0 %v6908, 16
    %v6992 = vpop.permute.xlu0 %6991
    %6993 = vrot.lane.b32.xlu0 %v6909, 16
    %v6994 = vpop.permute.xlu0 %6993
    %6995 = vrot.lane.b32.xlu0 %v6910, 16
    %v6996 = vpop.permute.xlu0 %6995
    %6997 = vrot.lane.b32.xlu0 %v6911, 16
    %v6998 = vpop.permute.xlu0 %6997
    %6999 = vrot.lane.b32.xlu0 %v6912, 16
    %v7000 = vpop.permute.xlu0 %6999
    %7001 = vrot.lane.b32.xlu0 %v6913, 16
    %v7002 = vpop.permute.xlu0 %7001
    %7003 = vrot.lane.b32.xlu0 %v6914, 16
    %v7004 = vpop.permute.xlu0 %7003
    %7005 = vrot.lane.b32.xlu0 %v6915, 16
    %v7006 = vpop.permute.xlu0 %7005
    %7007 = vrot.lane.b32.xlu0 %v6916, 16
    %v7008 = vpop.permute.xlu0 %7007
    %7009 = vrot.lane.b32.xlu0 %v6917, 16
    %v7010 = vpop.permute.xlu0 %7009
    %7011 = vrot.lane.b32.xlu0 %v6918, 16
    %v7012 = vpop.permute.xlu0 %7011
    %7013 = vrot.lane.b32.xlu0 %v6919, 16
    %v7014 = vpop.permute.xlu0 %7013
    %7015 = vrot.lane.b32.xlu0 %v6920, 16
    %v7016 = vpop.permute.xlu0 %7015
    %7049 = vst.msk [vmem:[#allocation3] sm:$0xff] %vm844, %v6954
    %7050 = vst.msk [vmem:[#allocation3 + $0x10] sm:$0xff] %vm844, %v6956
    %7051 = vst.msk [vmem:[#allocation3 + $0x20] sm:$0xff] %vm844, %v6958
    %7052 = vst.msk [vmem:[#allocation3 + $0x30] sm:$0xff] %vm844, %v6960
    %7053 = vst.msk [vmem:[#allocation3 + $0x40] sm:$0xff] %vm844, %v6962
    %7054 = vst.msk [vmem:[#allocation3 + $0x50] sm:$0xff] %vm844, %v6964
    %7055 = vst.msk [vmem:[#allocation3 + $0x60] sm:$0xff] %vm844, %v6966
    %7056 = vst.msk [vmem:[#allocation3 + $0x70] sm:$0xff] %vm844, %v6968
    %7057 = vst.msk [vmem:[#allocation3 + $0x80] sm:$0xff] %vm844, %v6970
    %7058 = vst.msk [vmem:[#allocation3 + $0x90] sm:$0xff] %vm844, %v6972
    %7059 = vst.msk [vmem:[#allocation3 + $0xa0] sm:$0xff] %vm844, %v6974
    %7060 = vst.msk [vmem:[#allocation3 + $0xb0] sm:$0xff] %vm844, %v6976
    %7061 = vst.msk [vmem:[#allocation3 + $0xc0] sm:$0xff] %vm844, %v6978
    %7062 = vst.msk [vmem:[#allocation3 + $0xd0] sm:$0xff] %vm844, %v6980
    %7063 = vst.msk [vmem:[#allocation3 + $0xe0] sm:$0xff] %vm844, %v6982
    %7064 = vst.msk [vmem:[#allocation3 + $0xf0] sm:$0xff] %vm844, %v6984
    %7065 = vst.msk [vmem:[#allocation3 + $0x100] sm:$0xff] %vm844, %v6986
    %7066 = vst.msk [vmem:[#allocation3 + $0x110] sm:$0xff] %vm844, %v6988
    %7067 = vst.msk [vmem:[#allocation3 + $0x120] sm:$0xff] %vm844, %v6990
    %7068 = vst.msk [vmem:[#allocation3 + $0x130] sm:$0xff] %vm844, %v6992
    %7069 = vst.msk [vmem:[#allocation3 + $0x140] sm:$0xff] %vm844, %v6994
    %7070 = vst.msk [vmem:[#allocation3 + $0x150] sm:$0xff] %vm844, %v6996
    %7071 = vst.msk [vmem:[#allocation3 + $0x160] sm:$0xff] %vm844, %v6998
    %7072 = vst.msk [vmem:[#allocation3 + $0x170] sm:$0xff] %vm844, %v7000
    %7073 = vst.msk [vmem:[#allocation3 + $0x180] sm:$0xff] %vm844, %v7002
    %7074 = vst.msk [vmem:[#allocation3 + $0x190] sm:$0xff] %vm844, %v7004
    %7075 = vst.msk [vmem:[#allocation3 + $0x1a0] sm:$0xff] %vm844, %v7006
    %7076 = vst.msk [vmem:[#allocation3 + $0x1b0] sm:$0xff] %vm844, %v7008
    %7077 = vst.msk [vmem:[#allocation3 + $0x1c0] sm:$0xff] %vm844, %v7010
    %7078 = vst.msk [vmem:[#allocation3 + $0x1d0] sm:$0xff] %vm844, %v7012
    %7079 = vst.msk [vmem:[#allocation3 + $0x1e0] sm:$0xff] %vm844, %v7014
    %7080 = vst.msk [vmem:[#allocation3 + $0x1f0] sm:$0xff] %vm844, %v7016
    %v7081 = vld [vmem:[#allocation2 + $0x2] sm:$0xff]
    %v7082 = vld [vmem:[#allocation2 + $0xa] sm:$0xff]
    %v7083 = vld [vmem:[#allocation2 + $0x1a] sm:$0xff]
    %v7084 = vld [vmem:[#allocation2 + $0x22] sm:$0xff]
    %v7085 = vld [vmem:[#allocation2 + $0x32] sm:$0xff]
    %v7086 = vld [vmem:[#allocation2 + $0x3a] sm:$0xff]
    %v7087 = vld [vmem:[#allocation2 + $0x4a] sm:$0xff]
    %v7088 = vld [vmem:[#allocation2 + $0x52] sm:$0xff]
    %v7089 = vld [vmem:[#allocation2 + $0x62] sm:$0xff]
    %v7090 = vld [vmem:[#allocation2 + $0x6a] sm:$0xff]
    %v7091 = vld [vmem:[#allocation2 + $0x7a] sm:$0xff]
    %v7092 = vld [vmem:[#allocation2 + $0x82] sm:$0xff]
    %v7093 = vld [vmem:[#allocation2 + $0x92] sm:$0xff]
    %v7094 = vld [vmem:[#allocation2 + $0x9a] sm:$0xff]
    %v7095 = vld [vmem:[#allocation2 + $0xaa] sm:$0xff]
    %v7096 = vld [vmem:[#allocation2 + $0xb2] sm:$0xff]
    %v7097 = vld [vmem:[#allocation2 + $0xc2] sm:$0xff]
    %v7098 = vld [vmem:[#allocation2 + $0xca] sm:$0xff]
    %v7099 = vld [vmem:[#allocation2 + $0xda] sm:$0xff]
    %v7100 = vld [vmem:[#allocation2 + $0xe2] sm:$0xff]
    %v7101 = vld [vmem:[#allocation2 + $0xf2] sm:$0xff]
    %v7102 = vld [vmem:[#allocation2 + $0xfa] sm:$0xff]
    %v7103 = vld [vmem:[#allocation2 + $0x10a] sm:$0xff]
    %v7104 = vld [vmem:[#allocation2 + $0x112] sm:$0xff]
    %v7105 = vld [vmem:[#allocation2 + $0x122] sm:$0xff]
    %v7106 = vld [vmem:[#allocation2 + $0x12a] sm:$0xff]
    %v7107 = vld [vmem:[#allocation2 + $0x13a] sm:$0xff]
    %v7108 = vld [vmem:[#allocation2 + $0x142] sm:$0xff]
    %v7109 = vld [vmem:[#allocation2 + $0x152] sm:$0xff]
    %v7110 = vld [vmem:[#allocation2 + $0x15a] sm:$0xff]
    %v7111 = vld [vmem:[#allocation2 + $0x16a] sm:$0xff]
    %v7112 = vld [vmem:[#allocation2 + $0x172] sm:$0xff]
    %v7113 = vld [vmem:[#allocation2 + $0x1b2] sm:$0xff]
    %v7114 = vld [vmem:[#allocation2 + $0x1ba] sm:$0xff]
    %v7115 = vld [vmem:[#allocation2 + $0x1ca] sm:$0xff]
    %v7116 = vld [vmem:[#allocation2 + $0x1d2] sm:$0xff]
    %v7117 = vld [vmem:[#allocation2 + $0x1e2] sm:$0xff]
    %v7118 = vld [vmem:[#allocation2 + $0x1ea] sm:$0xff]
    %v7119 = vld [vmem:[#allocation2 + $0x1fa] sm:$0xff]
    %v7120 = vld [vmem:[#allocation2 + $0x202] sm:$0xff]
    %v7121 = vld [vmem:[#allocation2 + $0x212] sm:$0xff]
    %v7122 = vld [vmem:[#allocation2 + $0x21a] sm:$0xff]
    %v7123 = vld [vmem:[#allocation2 + $0x22a] sm:$0xff]
    %v7124 = vld [vmem:[#allocation2 + $0x232] sm:$0xff]
    %v7125 = vld [vmem:[#allocation2 + $0x242] sm:$0xff]
    %v7126 = vld [vmem:[#allocation2 + $0x24a] sm:$0xff]
    %v7127 = vld [vmem:[#allocation2 + $0x25a] sm:$0xff]
    %v7128 = vld [vmem:[#allocation2 + $0x262] sm:$0xff]
    %v7129 = vld [vmem:[#allocation2 + $0x272] sm:$0xff]
    %v7130 = vld [vmem:[#allocation2 + $0x27a] sm:$0xff]
    %v7131 = vld [vmem:[#allocation2 + $0x28a] sm:$0xff]
    %v7132 = vld [vmem:[#allocation2 + $0x292] sm:$0xff]
    %v7133 = vld [vmem:[#allocation2 + $0x2a2] sm:$0xff]
    %v7134 = vld [vmem:[#allocation2 + $0x2aa] sm:$0xff]
    %v7135 = vld [vmem:[#allocation2 + $0x2ba] sm:$0xff]
    %v7136 = vld [vmem:[#allocation2 + $0x2c2] sm:$0xff]
    %v7137 = vld [vmem:[#allocation2 + $0x2d2] sm:$0xff]
    %v7138 = vld [vmem:[#allocation2 + $0x2da] sm:$0xff]
    %v7139 = vld [vmem:[#allocation2 + $0x2ea] sm:$0xff]
    %v7140 = vld [vmem:[#allocation2 + $0x2f2] sm:$0xff]
    %v7141 = vld [vmem:[#allocation2 + $0x302] sm:$0xff]
    %v7142 = vld [vmem:[#allocation2 + $0x30a] sm:$0xff]
    %v7143 = vld [vmem:[#allocation2 + $0x31a] sm:$0xff]
    %v7144 = vld [vmem:[#allocation2 + $0x322] sm:$0xff]
    %v7145 = vpack.c.bf16 %v7082, %v7081
    %v7146 = vpack.c.bf16 %v7084, %v7083
    %v7147 = vpack.c.bf16 %v7086, %v7085
    %v7148 = vpack.c.bf16 %v7088, %v7087
    %v7149 = vpack.c.bf16 %v7090, %v7089
    %v7150 = vpack.c.bf16 %v7092, %v7091
    %v7151 = vpack.c.bf16 %v7094, %v7093
    %v7152 = vpack.c.bf16 %v7096, %v7095
    %v7153 = vpack.c.bf16 %v7098, %v7097
    %v7154 = vpack.c.bf16 %v7100, %v7099
    %v7155 = vpack.c.bf16 %v7102, %v7101
    %v7156 = vpack.c.bf16 %v7104, %v7103
    %v7157 = vpack.c.bf16 %v7106, %v7105
    %v7158 = vpack.c.bf16 %v7108, %v7107
    %v7159 = vpack.c.bf16 %v7110, %v7109
    %v7160 = vpack.c.bf16 %v7112, %v7111
    %v7161 = vpack.c.bf16 %v7114, %v7113
    %v7162 = vpack.c.bf16 %v7116, %v7115
    %v7163 = vpack.c.bf16 %v7118, %v7117
    %v7164 = vpack.c.bf16 %v7120, %v7119
    %v7165 = vpack.c.bf16 %v7122, %v7121
    %v7166 = vpack.c.bf16 %v7124, %v7123
    %v7167 = vpack.c.bf16 %v7126, %v7125
    %v7168 = vpack.c.bf16 %v7128, %v7127
    %v7169 = vpack.c.bf16 %v7130, %v7129
    %v7170 = vpack.c.bf16 %v7132, %v7131
    %v7171 = vpack.c.bf16 %v7134, %v7133
    %v7172 = vpack.c.bf16 %v7136, %v7135
    %v7173 = vpack.c.bf16 %v7138, %v7137
    %v7174 = vpack.c.bf16 %v7140, %v7139
    %v7175 = vpack.c.bf16 %v7142, %v7141
    %v7176 = vpack.c.bf16 %v7144, %v7143
    %7209 = vrot.lane.b32.xlu0 %v7145, 32
    %v7210 = vpop.permute.xlu0 %7209
    %7211 = vrot.lane.b32.xlu0 %v7146, 32
    %v7212 = vpop.permute.xlu0 %7211
    %7213 = vrot.lane.b32.xlu0 %v7147, 32
    %v7214 = vpop.permute.xlu0 %7213
    %7215 = vrot.lane.b32.xlu0 %v7148, 32
    %v7216 = vpop.permute.xlu0 %7215
    %7217 = vrot.lane.b32.xlu0 %v7149, 32
    %v7218 = vpop.permute.xlu0 %7217
    %7219 = vrot.lane.b32.xlu0 %v7150, 32
    %v7220 = vpop.permute.xlu0 %7219
    %7221 = vrot.lane.b32.xlu0 %v7151, 32
    %v7222 = vpop.permute.xlu0 %7221
    %7223 = vrot.lane.b32.xlu0 %v7152, 32
    %v7224 = vpop.permute.xlu0 %7223
    %7225 = vrot.lane.b32.xlu0 %v7153, 32
    %v7226 = vpop.permute.xlu0 %7225
    %7227 = vrot.lane.b32.xlu0 %v7154, 32
    %v7228 = vpop.permute.xlu0 %7227
    %7229 = vrot.lane.b32.xlu0 %v7155, 32
    %v7230 = vpop.permute.xlu0 %7229
    %7231 = vrot.lane.b32.xlu0 %v7156, 32
    %v7232 = vpop.permute.xlu0 %7231
    %7233 = vrot.lane.b32.xlu0 %v7157, 32
    %v7234 = vpop.permute.xlu0 %7233
    %7235 = vrot.lane.b32.xlu0 %v7158, 32
    %v7236 = vpop.permute.xlu0 %7235
    %7237 = vrot.lane.b32.xlu0 %v7159, 32
    %v7238 = vpop.permute.xlu0 %7237
    %7239 = vrot.lane.b32.xlu0 %v7160, 32
    %v7240 = vpop.permute.xlu0 %7239
    %7241 = vrot.lane.b32.xlu0 %v7161, 32
    %v7242 = vpop.permute.xlu0 %7241
    %7243 = vrot.lane.b32.xlu0 %v7162, 32
    %v7244 = vpop.permute.xlu0 %7243
    %7245 = vrot.lane.b32.xlu0 %v7163, 32
    %v7246 = vpop.permute.xlu0 %7245
    %7247 = vrot.lane.b32.xlu0 %v7164, 32
    %v7248 = vpop.permute.xlu0 %7247
    %7249 = vrot.lane.b32.xlu0 %v7165, 32
    %v7250 = vpop.permute.xlu0 %7249
    %7251 = vrot.lane.b32.xlu0 %v7166, 32
    %v7252 = vpop.permute.xlu0 %7251
    %7253 = vrot.lane.b32.xlu0 %v7167, 32
    %v7254 = vpop.permute.xlu0 %7253
    %7255 = vrot.lane.b32.xlu0 %v7168, 32
    %v7256 = vpop.permute.xlu0 %7255
    %7257 = vrot.lane.b32.xlu0 %v7169, 32
    %v7258 = vpop.permute.xlu0 %7257
    %7259 = vrot.lane.b32.xlu0 %v7170, 32
    %v7260 = vpop.permute.xlu0 %7259
    %7261 = vrot.lane.b32.xlu0 %v7171, 32
    %v7262 = vpop.permute.xlu0 %7261
    %7263 = vrot.lane.b32.xlu0 %v7172, 32
    %v7264 = vpop.permute.xlu0 %7263
    %7265 = vrot.lane.b32.xlu0 %v7173, 32
    %v7266 = vpop.permute.xlu0 %7265
    %7267 = vrot.lane.b32.xlu0 %v7174, 32
    %v7268 = vpop.permute.xlu0 %7267
    %7269 = vrot.lane.b32.xlu0 %v7175, 32
    %v7270 = vpop.permute.xlu0 %7269
    %7271 = vrot.lane.b32.xlu0 %v7176, 32
    %v7272 = vpop.permute.xlu0 %7271
    %7305 = vst.msk [vmem:[#allocation3] sm:$0xff] %vm1101, %v7210
    %7306 = vst.msk [vmem:[#allocation3 + $0x10] sm:$0xff] %vm1101, %v7212
    %7307 = vst.msk [vmem:[#allocation3 + $0x20] sm:$0xff] %vm1101, %v7214
    %7308 = vst.msk [vmem:[#allocation3 + $0x30] sm:$0xff] %vm1101, %v7216
    %7309 = vst.msk [vmem:[#allocation3 + $0x40] sm:$0xff] %vm1101, %v7218
    %7310 = vst.msk [vmem:[#allocation3 + $0x50] sm:$0xff] %vm1101, %v7220
    %7311 = vst.msk [vmem:[#allocation3 + $0x60] sm:$0xff] %vm1101, %v7222
    %7312 = vst.msk [vmem:[#allocation3 + $0x70] sm:$0xff] %vm1101, %v7224
    %7313 = vst.msk [vmem:[#allocation3 + $0x80] sm:$0xff] %vm1101, %v7226
    %7314 = vst.msk [vmem:[#allocation3 + $0x90] sm:$0xff] %vm1101, %v7228
    %7315 = vst.msk [vmem:[#allocation3 + $0xa0] sm:$0xff] %vm1101, %v7230
    %7316 = vst.msk [vmem:[#allocation3 + $0xb0] sm:$0xff] %vm1101, %v7232
    %7317 = vst.msk [vmem:[#allocation3 + $0xc0] sm:$0xff] %vm1101, %v7234
    %7318 = vst.msk [vmem:[#allocation3 + $0xd0] sm:$0xff] %vm1101, %v7236
    %7319 = vst.msk [vmem:[#allocation3 + $0xe0] sm:$0xff] %vm1101, %v7238
    %7320 = vst.msk [vmem:[#allocation3 + $0xf0] sm:$0xff] %vm1101, %v7240
    %7321 = vst.msk [vmem:[#allocation3 + $0x100] sm:$0xff] %vm1101, %v7242
    %7322 = vst.msk [vmem:[#allocation3 + $0x110] sm:$0xff] %vm1101, %v7244
    %7323 = vst.msk [vmem:[#allocation3 + $0x120] sm:$0xff] %vm1101, %v7246
    %7324 = vst.msk [vmem:[#allocation3 + $0x130] sm:$0xff] %vm1101, %v7248
    %7325 = vst.msk [vmem:[#allocation3 + $0x140] sm:$0xff] %vm1101, %v7250
    %7326 = vst.msk [vmem:[#allocation3 + $0x150] sm:$0xff] %vm1101, %v7252
    %7327 = vst.msk [vmem:[#allocation3 + $0x160] sm:$0xff] %vm1101, %v7254
    %7328 = vst.msk [vmem:[#allocation3 + $0x170] sm:$0xff] %vm1101, %v7256
    %7329 = vst.msk [vmem:[#allocation3 + $0x180] sm:$0xff] %vm1101, %v7258
    %7330 = vst.msk [vmem:[#allocation3 + $0x190] sm:$0xff] %vm1101, %v7260
    %7331 = vst.msk [vmem:[#allocation3 + $0x1a0] sm:$0xff] %vm1101, %v7262
    %7332 = vst.msk [vmem:[#allocation3 + $0x1b0] sm:$0xff] %vm1101, %v7264
    %7333 = vst.msk [vmem:[#allocation3 + $0x1c0] sm:$0xff] %vm1101, %v7266
    %7334 = vst.msk [vmem:[#allocation3 + $0x1d0] sm:$0xff] %vm1101, %v7268
    %7335 = vst.msk [vmem:[#allocation3 + $0x1e0] sm:$0xff] %vm1101, %v7270
    %7336 = vst.msk [vmem:[#allocation3 + $0x1f0] sm:$0xff] %vm1101, %v7272
    %v7337 = vld [vmem:[%s427] sm:$0xff]
    %v7338 = vld [vmem:[%s427 + $0x8] sm:$0xff]
    %v7339 = vld [vmem:[%s427 + $0x18] sm:$0xff]
    %v7340 = vld [vmem:[%s427 + $0x20] sm:$0xff]
    %v7341 = vld [vmem:[%s427 + $0x30] sm:$0xff]
    %v7342 = vld [vmem:[%s427 + $0x38] sm:$0xff]
    %v7343 = vld [vmem:[%s427 + $0x48] sm:$0xff]
    %v7344 = vld [vmem:[%s427 + $0x50] sm:$0xff]
    %v7345 = vld [vmem:[%s427 + $0x60] sm:$0xff]
    %v7346 = vld [vmem:[%s427 + $0x68] sm:$0xff]
    %v7347 = vld [vmem:[%s427 + $0x78] sm:$0xff]
    %v7348 = vld [vmem:[%s427 + $0x80] sm:$0xff]
    %v7349 = vld [vmem:[%s427 + $0x90] sm:$0xff]
    %v7350 = vld [vmem:[%s427 + $0x98] sm:$0xff]
    %v7351 = vld [vmem:[%s427 + $0xa8] sm:$0xff]
    %v7352 = vld [vmem:[%s427 + $0xb0] sm:$0xff]
    %v7353 = vld [vmem:[%s427 + $0xc0] sm:$0xff]
    %v7354 = vld [vmem:[%s427 + $0xc8] sm:$0xff]
    %v7355 = vld [vmem:[%s427 + $0xd8] sm:$0xff]
    %v7356 = vld [vmem:[%s427 + $0xe0] sm:$0xff]
    %v7357 = vld [vmem:[%s427 + $0xf0] sm:$0xff]
    %v7358 = vld [vmem:[%s427 + $0xf8] sm:$0xff]
    %v7359 = vld [vmem:[%s427 + $0x108] sm:$0xff]
    %v7360 = vld [vmem:[%s427 + $0x110] sm:$0xff]
    %v7361 = vld [vmem:[%s427 + $0x120] sm:$0xff]
    %v7362 = vld [vmem:[%s427 + $0x128] sm:$0xff]
    %v7363 = vld [vmem:[%s427 + $0x138] sm:$0xff]
    %v7364 = vld [vmem:[%s427 + $0x140] sm:$0xff]
    %v7365 = vld [vmem:[%s427 + $0x150] sm:$0xff]
    %v7366 = vld [vmem:[%s427 + $0x158] sm:$0xff]
    %v7367 = vld [vmem:[%s427 + $0x168] sm:$0xff]
    %v7368 = vld [vmem:[%s427 + $0x170] sm:$0xff]
    %v7369 = vld [vmem:[%s427 + $0x1b0] sm:$0xff]
    %v7370 = vld [vmem:[%s427 + $0x1b8] sm:$0xff]
    %v7371 = vld [vmem:[%s427 + $0x1c8] sm:$0xff]
    %v7372 = vld [vmem:[%s427 + $0x1d0] sm:$0xff]
    %v7373 = vld [vmem:[%s427 + $0x1e0] sm:$0xff]
    %v7374 = vld [vmem:[%s427 + $0x1e8] sm:$0xff]
    %v7375 = vld [vmem:[%s427 + $0x1f8] sm:$0xff]
    %v7376 = vld [vmem:[%s427 + $0x200] sm:$0xff]
    %v7377 = vld [vmem:[%s427 + $0x210] sm:$0xff]
    %v7378 = vld [vmem:[%s427 + $0x218] sm:$0xff]
    %v7379 = vld [vmem:[%s427 + $0x228] sm:$0xff]
    %v7380 = vld [vmem:[%s427 + $0x230] sm:$0xff]
    %v7381 = vld [vmem:[%s427 + $0x240] sm:$0xff]
    %v7382 = vld [vmem:[%s427 + $0x248] sm:$0xff]
    %v7383 = vld [vmem:[%s427 + $0x258] sm:$0xff]
    %v7384 = vld [vmem:[%s427 + $0x260] sm:$0xff]
    %v7385 = vld [vmem:[%s427 + $0x270] sm:$0xff]
    %v7386 = vld [vmem:[%s427 + $0x278] sm:$0xff]
    %v7387 = vld [vmem:[%s427 + $0x288] sm:$0xff]
    %v7388 = vld [vmem:[%s427 + $0x290] sm:$0xff]
    %v7389 = vld [vmem:[%s427 + $0x2a0] sm:$0xff]
    %v7390 = vld [vmem:[%s427 + $0x2a8] sm:$0xff]
    %v7391 = vld [vmem:[%s427 + $0x2b8] sm:$0xff]
    %v7392 = vld [vmem:[%s427 + $0x2c0] sm:$0xff]
    %v7393 = vld [vmem:[%s427 + $0x2d0] sm:$0xff]
    %v7394 = vld [vmem:[%s427 + $0x2d8] sm:$0xff]
    %v7395 = vld [vmem:[%s427 + $0x2e8] sm:$0xff]
    %v7396 = vld [vmem:[%s427 + $0x2f0] sm:$0xff]
    %v7397 = vld [vmem:[%s427 + $0x300] sm:$0xff]
    %v7398 = vld [vmem:[%s427 + $0x308] sm:$0xff]
    %v7399 = vld [vmem:[%s427 + $0x318] sm:$0xff]
    %v7400 = vld [vmem:[%s427 + $0x320] sm:$0xff]
    %v7401 = vpack.c.bf16 %v7338, %v7337
    %v7402 = vpack.c.bf16 %v7340, %v7339
    %v7403 = vpack.c.bf16 %v7342, %v7341
    %v7404 = vpack.c.bf16 %v7344, %v7343
    %v7405 = vpack.c.bf16 %v7346, %v7345
    %v7406 = vpack.c.bf16 %v7348, %v7347
    %v7407 = vpack.c.bf16 %v7350, %v7349
    %v7408 = vpack.c.bf16 %v7352, %v7351
    %v7409 = vpack.c.bf16 %v7354, %v7353
    %v7410 = vpack.c.bf16 %v7356, %v7355
    %v7411 = vpack.c.bf16 %v7358, %v7357
    %v7412 = vpack.c.bf16 %v7360, %v7359
    %v7413 = vpack.c.bf16 %v7362, %v7361
    %v7414 = vpack.c.bf16 %v7364, %v7363
    %v7415 = vpack.c.bf16 %v7366, %v7365
    %v7416 = vpack.c.bf16 %v7368, %v7367
    %v7417 = vpack.c.bf16 %v7370, %v7369
    %v7418 = vpack.c.bf16 %v7372, %v7371
    %v7419 = vpack.c.bf16 %v7374, %v7373
    %v7420 = vpack.c.bf16 %v7376, %v7375
    %v7421 = vpack.c.bf16 %v7378, %v7377
    %v7422 = vpack.c.bf16 %v7380, %v7379
    %v7423 = vpack.c.bf16 %v7382, %v7381
    %v7424 = vpack.c.bf16 %v7384, %v7383
    %v7425 = vpack.c.bf16 %v7386, %v7385
    %v7426 = vpack.c.bf16 %v7388, %v7387
    %v7427 = vpack.c.bf16 %v7390, %v7389
    %v7428 = vpack.c.bf16 %v7392, %v7391
    %v7429 = vpack.c.bf16 %v7394, %v7393
    %v7430 = vpack.c.bf16 %v7396, %v7395
    %v7431 = vpack.c.bf16 %v7398, %v7397
    %v7432 = vpack.c.bf16 %v7400, %v7399
    %7465 = vrot.lane.b32.xlu0 %v7401, 48
    %v7466 = vpop.permute.xlu0 %7465
    %7467 = vrot.lane.b32.xlu0 %v7402, 48
    %v7468 = vpop.permute.xlu0 %7467
    %7469 = vrot.lane.b32.xlu0 %v7403, 48
    %v7470 = vpop.permute.xlu0 %7469
    %7471 = vrot.lane.b32.xlu0 %v7404, 48
    %v7472 = vpop.permute.xlu0 %7471
    %7473 = vrot.lane.b32.xlu0 %v7405, 48
    %v7474 = vpop.permute.xlu0 %7473
    %7475 = vrot.lane.b32.xlu0 %v7406, 48
    %v7476 = vpop.permute.xlu0 %7475
    %7477 = vrot.lane.b32.xlu0 %v7407, 48
    %v7478 = vpop.permute.xlu0 %7477
    %7479 = vrot.lane.b32.xlu0 %v7408, 48
    %v7480 = vpop.permute.xlu0 %7479
    %7481 = vrot.lane.b32.xlu0 %v7409, 48
    %v7482 = vpop.permute.xlu0 %7481
    %7483 = vrot.lane.b32.xlu0 %v7410, 48
    %v7484 = vpop.permute.xlu0 %7483
    %7485 = vrot.lane.b32.xlu0 %v7411, 48
    %v7486 = vpop.permute.xlu0 %7485
    %7487 = vrot.lane.b32.xlu0 %v7412, 48
    %v7488 = vpop.permute.xlu0 %7487
    %7489 = vrot.lane.b32.xlu0 %v7413, 48
    %v7490 = vpop.permute.xlu0 %7489
    %7491 = vrot.lane.b32.xlu0 %v7414, 48
    %v7492 = vpop.permute.xlu0 %7491
    %7493 = vrot.lane.b32.xlu0 %v7415, 48
    %v7494 = vpop.permute.xlu0 %7493
    %7495 = vrot.lane.b32.xlu0 %v7416, 48
    %v7496 = vpop.permute.xlu0 %7495
    %7497 = vrot.lane.b32.xlu0 %v7417, 48
    %v7498 = vpop.permute.xlu0 %7497
    %7499 = vrot.lane.b32.xlu0 %v7418, 48
    %v7500 = vpop.permute.xlu0 %7499
    %7501 = vrot.lane.b32.xlu0 %v7419, 48
    %v7502 = vpop.permute.xlu0 %7501
    %7503 = vrot.lane.b32.xlu0 %v7420, 48
    %v7504 = vpop.permute.xlu0 %7503
    %7505 = vrot.lane.b32.xlu0 %v7421, 48
    %v7506 = vpop.permute.xlu0 %7505
    %7507 = vrot.lane.b32.xlu0 %v7422, 48
    %v7508 = vpop.permute.xlu0 %7507
    %7509 = vrot.lane.b32.xlu0 %v7423, 48
    %v7510 = vpop.permute.xlu0 %7509
    %7511 = vrot.lane.b32.xlu0 %v7424, 48
    %v7512 = vpop.permute.xlu0 %7511
    %7513 = vrot.lane.b32.xlu0 %v7425, 48
    %v7514 = vpop.permute.xlu0 %7513
    %7515 = vrot.lane.b32.xlu0 %v7426, 48
    %v7516 = vpop.permute.xlu0 %7515
    %7517 = vrot.lane.b32.xlu0 %v7427, 48
    %v7518 = vpop.permute.xlu0 %7517
    %7519 = vrot.lane.b32.xlu0 %v7428, 48
    %v7520 = vpop.permute.xlu0 %7519
    %7521 = vrot.lane.b32.xlu0 %v7429, 48
    %v7522 = vpop.permute.xlu0 %7521
    %7523 = vrot.lane.b32.xlu0 %v7430, 48
    %v7524 = vpop.permute.xlu0 %7523
    %7525 = vrot.lane.b32.xlu0 %v7431, 48
    %v7526 = vpop.permute.xlu0 %7525
    %7527 = vrot.lane.b32.xlu0 %v7432, 48
    %v7528 = vpop.permute.xlu0 %7527
    %7561 = vst.msk [vmem:[#allocation3] sm:$0xff] %vm1358, %v7466
    %7562 = vst.msk [vmem:[#allocation3 + $0x10] sm:$0xff] %vm1358, %v7468
    %7563 = vst.msk [vmem:[#allocation3 + $0x20] sm:$0xff] %vm1358, %v7470
    %7564 = vst.msk [vmem:[#allocation3 + $0x30] sm:$0xff] %vm1358, %v7472
    %7565 = vst.msk [vmem:[#allocation3 + $0x40] sm:$0xff] %vm1358, %v7474
    %7566 = vst.msk [vmem:[#allocation3 + $0x50] sm:$0xff] %vm1358, %v7476
    %7567 = vst.msk [vmem:[#allocation3 + $0x60] sm:$0xff] %vm1358, %v7478
    %7568 = vst.msk [vmem:[#allocation3 + $0x70] sm:$0xff] %vm1358, %v7480
    %7569 = vst.msk [vmem:[#allocation3 + $0x80] sm:$0xff] %vm1358, %v7482
    %7570 = vst.msk [vmem:[#allocation3 + $0x90] sm:$0xff] %vm1358, %v7484
    %7571 = vst.msk [vmem:[#allocation3 + $0xa0] sm:$0xff] %vm1358, %v7486
    %7572 = vst.msk [vmem:[#allocation3 + $0xb0] sm:$0xff] %vm1358, %v7488
    %7573 = vst.msk [vmem:[#allocation3 + $0xc0] sm:$0xff] %vm1358, %v7490
    %7574 = vst.msk [vmem:[#allocation3 + $0xd0] sm:$0xff] %vm1358, %v7492
    %7575 = vst.msk [vmem:[#allocation3 + $0xe0] sm:$0xff] %vm1358, %v7494
    %7576 = vst.msk [vmem:[#allocation3 + $0xf0] sm:$0xff] %vm1358, %v7496
    %7577 = vst.msk [vmem:[#allocation3 + $0x100] sm:$0xff] %vm1358, %v7498
    %7578 = vst.msk [vmem:[#allocation3 + $0x110] sm:$0xff] %vm1358, %v7500
    %7579 = vst.msk [vmem:[#allocation3 + $0x120] sm:$0xff] %vm1358, %v7502
    %7580 = vst.msk [vmem:[#allocation3 + $0x130] sm:$0xff] %vm1358, %v7504
    %7581 = vst.msk [vmem:[#allocation3 + $0x140] sm:$0xff] %vm1358, %v7506
    %7582 = vst.msk [vmem:[#allocation3 + $0x150] sm:$0xff] %vm1358, %v7508
    %7583 = vst.msk [vmem:[#allocation3 + $0x160] sm:$0xff] %vm1358, %v7510
    %7584 = vst.msk [vmem:[#allocation3 + $0x170] sm:$0xff] %vm1358, %v7512
    %7585 = vst.msk [vmem:[#allocation3 + $0x180] sm:$0xff] %vm1358, %v7514
    %7586 = vst.msk [vmem:[#allocation3 + $0x190] sm:$0xff] %vm1358, %v7516
    %7587 = vst.msk [vmem:[#allocation3 + $0x1a0] sm:$0xff] %vm1358, %v7518
    %7588 = vst.msk [vmem:[#allocation3 + $0x1b0] sm:$0xff] %vm1358, %v7520
    %7589 = vst.msk [vmem:[#allocation3 + $0x1c0] sm:$0xff] %vm1358, %v7522
    %7590 = vst.msk [vmem:[#allocation3 + $0x1d0] sm:$0xff] %vm1358, %v7524
    %7591 = vst.msk [vmem:[#allocation3 + $0x1e0] sm:$0xff] %vm1358, %v7526
    %7592 = vst.msk [vmem:[#allocation3 + $0x1f0] sm:$0xff] %vm1358, %v7528
    %v7593 = vld [vmem:[%s427 + $0x1] sm:$0xff]
    %v7594 = vld [vmem:[%s427 + $0x9] sm:$0xff]
    %v7595 = vld [vmem:[%s427 + $0x19] sm:$0xff]
    %v7596 = vld [vmem:[%s427 + $0x21] sm:$0xff]
    %v7597 = vld [vmem:[%s427 + $0x31] sm:$0xff]
    %v7598 = vld [vmem:[%s427 + $0x39] sm:$0xff]
    %v7599 = vld [vmem:[%s427 + $0x49] sm:$0xff]
    %v7600 = vld [vmem:[%s427 + $0x51] sm:$0xff]
    %v7601 = vld [vmem:[%s427 + $0x61] sm:$0xff]
    %v7602 = vld [vmem:[%s427 + $0x69] sm:$0xff]
    %v7603 = vld [vmem:[%s427 + $0x79] sm:$0xff]
    %v7604 = vld [vmem:[%s427 + $0x81] sm:$0xff]
    %v7605 = vld [vmem:[%s427 + $0x91] sm:$0xff]
    %v7606 = vld [vmem:[%s427 + $0x99] sm:$0xff]
    %v7607 = vld [vmem:[%s427 + $0xa9] sm:$0xff]
    %v7608 = vld [vmem:[%s427 + $0xb1] sm:$0xff]
    %v7609 = vld [vmem:[%s427 + $0xc1] sm:$0xff]
    %v7610 = vld [vmem:[%s427 + $0xc9] sm:$0xff]
    %v7611 = vld [vmem:[%s427 + $0xd9] sm:$0xff]
    %v7612 = vld [vmem:[%s427 + $0xe1] sm:$0xff]
    %v7613 = vld [vmem:[%s427 + $0xf1] sm:$0xff]
    %v7614 = vld [vmem:[%s427 + $0xf9] sm:$0xff]
    %v7615 = vld [vmem:[%s427 + $0x109] sm:$0xff]
    %v7616 = vld [vmem:[%s427 + $0x111] sm:$0xff]
    %v7617 = vld [vmem:[%s427 + $0x121] sm:$0xff]
    %v7618 = vld [vmem:[%s427 + $0x129] sm:$0xff]
    %v7619 = vld [vmem:[%s427 + $0x139] sm:$0xff]
    %v7620 = vld [vmem:[%s427 + $0x141] sm:$0xff]
    %v7621 = vld [vmem:[%s427 + $0x151] sm:$0xff]
    %v7622 = vld [vmem:[%s427 + $0x159] sm:$0xff]
    %v7623 = vld [vmem:[%s427 + $0x169] sm:$0xff]
    %v7624 = vld [vmem:[%s427 + $0x171] sm:$0xff]
    %v7625 = vld [vmem:[%s427 + $0x1b1] sm:$0xff]
    %v7626 = vld [vmem:[%s427 + $0x1b9] sm:$0xff]
    %v7627 = vld [vmem:[%s427 + $0x1c9] sm:$0xff]
    %v7628 = vld [vmem:[%s427 + $0x1d1] sm:$0xff]
    %v7629 = vld [vmem:[%s427 + $0x1e1] sm:$0xff]
    %v7630 = vld [vmem:[%s427 + $0x1e9] sm:$0xff]
    %v7631 = vld [vmem:[%s427 + $0x1f9] sm:$0xff]
    %v7632 = vld [vmem:[%s427 + $0x201] sm:$0xff]
    %v7633 = vld [vmem:[%s427 + $0x211] sm:$0xff]
    %v7634 = vld [vmem:[%s427 + $0x219] sm:$0xff]
    %v7635 = vld [vmem:[%s427 + $0x229] sm:$0xff]
    %v7636 = vld [vmem:[%s427 + $0x231] sm:$0xff]
    %v7637 = vld [vmem:[%s427 + $0x241] sm:$0xff]
    %v7638 = vld [vmem:[%s427 + $0x249] sm:$0xff]
    %v7639 = vld [vmem:[%s427 + $0x259] sm:$0xff]
    %v7640 = vld [vmem:[%s427 + $0x261] sm:$0xff]
    %v7641 = vld [vmem:[%s427 + $0x271] sm:$0xff]
    %v7642 = vld [vmem:[%s427 + $0x279] sm:$0xff]
    %v7643 = vld [vmem:[%s427 + $0x289] sm:$0xff]
    %v7644 = vld [vmem:[%s427 + $0x291] sm:$0xff]
    %v7645 = vld [vmem:[%s427 + $0x2a1] sm:$0xff]
    %v7646 = vld [vmem:[%s427 + $0x2a9] sm:$0xff]
    %v7647 = vld [vmem:[%s427 + $0x2b9] sm:$0xff]
    %v7648 = vld [vmem:[%s427 + $0x2c1] sm:$0xff]
    %v7649 = vld [vmem:[%s427 + $0x2d1] sm:$0xff]
    %v7650 = vld [vmem:[%s427 + $0x2d9] sm:$0xff]
    %v7651 = vld [vmem:[%s427 + $0x2e9] sm:$0xff]
    %v7652 = vld [vmem:[%s427 + $0x2f1] sm:$0xff]
    %v7653 = vld [vmem:[%s427 + $0x301] sm:$0xff]
    %v7654 = vld [vmem:[%s427 + $0x309] sm:$0xff]
    %v7655 = vld [vmem:[%s427 + $0x319] sm:$0xff]
    %v7656 = vld [vmem:[%s427 + $0x321] sm:$0xff]
    %v7657 = vpack.c.bf16 %v7594, %v7593
    %v7658 = vpack.c.bf16 %v7596, %v7595
    %v7659 = vpack.c.bf16 %v7598, %v7597
    %v7660 = vpack.c.bf16 %v7600, %v7599
    %v7661 = vpack.c.bf16 %v7602, %v7601
    %v7662 = vpack.c.bf16 %v7604, %v7603
    %v7663 = vpack.c.bf16 %v7606, %v7605
    %v7664 = vpack.c.bf16 %v7608, %v7607
    %v7665 = vpack.c.bf16 %v7610, %v7609
    %v7666 = vpack.c.bf16 %v7612, %v7611
    %v7667 = vpack.c.bf16 %v7614, %v7613
    %v7668 = vpack.c.bf16 %v7616, %v7615
    %v7669 = vpack.c.bf16 %v7618, %v7617
    %v7670 = vpack.c.bf16 %v7620, %v7619
    %v7671 = vpack.c.bf16 %v7622, %v7621
    %v7672 = vpack.c.bf16 %v7624, %v7623
    %v7673 = vpack.c.bf16 %v7626, %v7625
    %v7674 = vpack.c.bf16 %v7628, %v7627
    %v7675 = vpack.c.bf16 %v7630, %v7629
    %v7676 = vpack.c.bf16 %v7632, %v7631
    %v7677 = vpack.c.bf16 %v7634, %v7633
    %v7678 = vpack.c.bf16 %v7636, %v7635
    %v7679 = vpack.c.bf16 %v7638, %v7637
    %v7680 = vpack.c.bf16 %v7640, %v7639
    %v7681 = vpack.c.bf16 %v7642, %v7641
    %v7682 = vpack.c.bf16 %v7644, %v7643
    %v7683 = vpack.c.bf16 %v7646, %v7645
    %v7684 = vpack.c.bf16 %v7648, %v7647
    %v7685 = vpack.c.bf16 %v7650, %v7649
    %v7686 = vpack.c.bf16 %v7652, %v7651
    %v7687 = vpack.c.bf16 %v7654, %v7653
    %v7688 = vpack.c.bf16 %v7656, %v7655
    %7721 = vrot.lane.b32.xlu0 %v7657, 64
    %v7722 = vpop.permute.xlu0 %7721
    %7723 = vrot.lane.b32.xlu0 %v7658, 64
    %v7724 = vpop.permute.xlu0 %7723
    %7725 = vrot.lane.b32.xlu0 %v7659, 64
    %v7726 = vpop.permute.xlu0 %7725
    %7727 = vrot.lane.b32.xlu0 %v7660, 64
    %v7728 = vpop.permute.xlu0 %7727
    %7729 = vrot.lane.b32.xlu0 %v7661, 64
    %v7730 = vpop.permute.xlu0 %7729
    %7731 = vrot.lane.b32.xlu0 %v7662, 64
    %v7732 = vpop.permute.xlu0 %7731
    %7733 = vrot.lane.b32.xlu0 %v7663, 64
    %v7734 = vpop.permute.xlu0 %7733
    %7735 = vrot.lane.b32.xlu0 %v7664, 64
    %v7736 = vpop.permute.xlu0 %7735
    %7737 = vrot.lane.b32.xlu0 %v7665, 64
    %v7738 = vpop.permute.xlu0 %7737
    %7739 = vrot.lane.b32.xlu0 %v7666, 64
    %v7740 = vpop.permute.xlu0 %7739
    %7741 = vrot.lane.b32.xlu0 %v7667, 64
    %v7742 = vpop.permute.xlu0 %7741
    %7743 = vrot.lane.b32.xlu0 %v7668, 64
    %v7744 = vpop.permute.xlu0 %7743
    %7745 = vrot.lane.b32.xlu0 %v7669, 64
    %v7746 = vpop.permute.xlu0 %7745
    %7747 = vrot.lane.b32.xlu0 %v7670, 64
    %v7748 = vpop.permute.xlu0 %7747
    %7749 = vrot.lane.b32.xlu0 %v7671, 64
    %v7750 = vpop.permute.xlu0 %7749
    %7751 = vrot.lane.b32.xlu0 %v7672, 64
    %v7752 = vpop.permute.xlu0 %7751
    %7753 = vrot.lane.b32.xlu0 %v7673, 64
    %v7754 = vpop.permute.xlu0 %7753
    %7755 = vrot.lane.b32.xlu0 %v7674, 64
    %v7756 = vpop.permute.xlu0 %7755
    %7757 = vrot.lane.b32.xlu0 %v7675, 64
    %v7758 = vpop.permute.xlu0 %7757
    %7759 = vrot.lane.b32.xlu0 %v7676, 64
    %v7760 = vpop.permute.xlu0 %7759
    %7761 = vrot.lane.b32.xlu0 %v7677, 64
    %v7762 = vpop.permute.xlu0 %7761
    %7763 = vrot.lane.b32.xlu0 %v7678, 64
    %v7764 = vpop.permute.xlu0 %7763
    %7765 = vrot.lane.b32.xlu0 %v7679, 64
    %v7766 = vpop.permute.xlu0 %7765
    %7767 = vrot.lane.b32.xlu0 %v7680, 64
    %v7768 = vpop.permute.xlu0 %7767
    %7769 = vrot.lane.b32.xlu0 %v7681, 64
    %v7770 = vpop.permute.xlu0 %7769
    %7771 = vrot.lane.b32.xlu0 %v7682, 64
    %v7772 = vpop.permute.xlu0 %7771
    %7773 = vrot.lane.b32.xlu0 %v7683, 64
    %v7774 = vpop.permute.xlu0 %7773
    %7775 = vrot.lane.b32.xlu0 %v7684, 64
    %v7776 = vpop.permute.xlu0 %7775
    %7777 = vrot.lane.b32.xlu0 %v7685, 64
    %v7778 = vpop.permute.xlu0 %7777
    %7779 = vrot.lane.b32.xlu0 %v7686, 64
    %v7780 = vpop.permute.xlu0 %7779
    %7781 = vrot.lane.b32.xlu0 %v7687, 64
    %v7782 = vpop.permute.xlu0 %7781
    %7783 = vrot.lane.b32.xlu0 %v7688, 64
    %v7784 = vpop.permute.xlu0 %7783
    %7817 = vst.msk [vmem:[#allocation3] sm:$0xff] %vm1615, %v7722
    %7818 = vst.msk [vmem:[#allocation3 + $0x10] sm:$0xff] %vm1615, %v7724
    %7819 = vst.msk [vmem:[#allocation3 + $0x20] sm:$0xff] %vm1615, %v7726
    %7820 = vst.msk [vmem:[#allocation3 + $0x30] sm:$0xff] %vm1615, %v7728
    %7821 = vst.msk [vmem:[#allocation3 + $0x40] sm:$0xff] %vm1615, %v7730
    %7822 = vst.msk [vmem:[#allocation3 + $0x50] sm:$0xff] %vm1615, %v7732
    %7823 = vst.msk [vmem:[#allocation3 + $0x60] sm:$0xff] %vm1615, %v7734
    %7824 = vst.msk [vmem:[#allocation3 + $0x70] sm:$0xff] %vm1615, %v7736
    %7825 = vst.msk [vmem:[#allocation3 + $0x80] sm:$0xff] %vm1615, %v7738
    %7826 = vst.msk [vmem:[#allocation3 + $0x90] sm:$0xff] %vm1615, %v7740
    %7827 = vst.msk [vmem:[#allocation3 + $0xa0] sm:$0xff] %vm1615, %v7742
    %7828 = vst.msk [vmem:[#allocation3 + $0xb0] sm:$0xff] %vm1615, %v7744
    %7829 = vst.msk [vmem:[#allocation3 + $0xc0] sm:$0xff] %vm1615, %v7746
    %7830 = vst.msk [vmem:[#allocation3 + $0xd0] sm:$0xff] %vm1615, %v7748
    %7831 = vst.msk [vmem:[#allocation3 + $0xe0] sm:$0xff] %vm1615, %v7750
    %7832 = vst.msk [vmem:[#allocation3 + $0xf0] sm:$0xff] %vm1615, %v7752
    %7833 = vst.msk [vmem:[#allocation3 + $0x100] sm:$0xff] %vm1615, %v7754
    %7834 = vst.msk [vmem:[#allocation3 + $0x110] sm:$0xff] %vm1615, %v7756
    %7835 = vst.msk [vmem:[#allocation3 + $0x120] sm:$0xff] %vm1615, %v7758
    %7836 = vst.msk [vmem:[#allocation3 + $0x130] sm:$0xff] %vm1615, %v7760
    %7837 = vst.msk [vmem:[#allocation3 + $0x140] sm:$0xff] %vm1615, %v7762
    %7838 = vst.msk [vmem:[#allocation3 + $0x150] sm:$0xff] %vm1615, %v7764
    %7839 = vst.msk [vmem:[#allocation3 + $0x160] sm:$0xff] %vm1615, %v7766
    %7840 = vst.msk [vmem:[#allocation3 + $0x170] sm:$0xff] %vm1615, %v7768
    %7841 = vst.msk [vmem:[#allocation3 + $0x180] sm:$0xff] %vm1615, %v7770
    %7842 = vst.msk [vmem:[#allocation3 + $0x190] sm:$0xff] %vm1615, %v7772
    %7843 = vst.msk [vmem:[#allocation3 + $0x1a0] sm:$0xff] %vm1615, %v7774
    %7844 = vst.msk [vmem:[#allocation3 + $0x1b0] sm:$0xff] %vm1615, %v7776
    %7845 = vst.msk [vmem:[#allocation3 + $0x1c0] sm:$0xff] %vm1615, %v7778
    %7846 = vst.msk [vmem:[#allocation3 + $0x1d0] sm:$0xff] %vm1615, %v7780
    %7847 = vst.msk [vmem:[#allocation3 + $0x1e0] sm:$0xff] %vm1615, %v7782
    %7848 = vst.msk [vmem:[#allocation3 + $0x1f0] sm:$0xff] %vm1615, %v7784
    %v7849 = vld [vmem:[%s427 + $0x2] sm:$0xff]
    %v7850 = vld [vmem:[%s427 + $0xa] sm:$0xff]
    %v7851 = vld [vmem:[%s427 + $0x1a] sm:$0xff]
    %v7852 = vld [vmem:[%s427 + $0x22] sm:$0xff]
    %v7853 = vld [vmem:[%s427 + $0x32] sm:$0xff]
    %v7854 = vld [vmem:[%s427 + $0x3a] sm:$0xff]
    %v7855 = vld [vmem:[%s427 + $0x4a] sm:$0xff]
    %v7856 = vld [vmem:[%s427 + $0x52] sm:$0xff]
    %v7857 = vld [vmem:[%s427 + $0x62] sm:$0xff]
    %v7858 = vld [vmem:[%s427 + $0x6a] sm:$0xff]
    %v7859 = vld [vmem:[%s427 + $0x7a] sm:$0xff]
    %v7860 = vld [vmem:[%s427 + $0x82] sm:$0xff]
    %v7861 = vld [vmem:[%s427 + $0x92] sm:$0xff]
    %v7862 = vld [vmem:[%s427 + $0x9a] sm:$0xff]
    %v7863 = vld [vmem:[%s427 + $0xaa] sm:$0xff]
    %v7864 = vld [vmem:[%s427 + $0xb2] sm:$0xff]
    %v7865 = vld [vmem:[%s427 + $0xc2] sm:$0xff]
    %v7866 = vld [vmem:[%s427 + $0xca] sm:$0xff]
    %v7867 = vld [vmem:[%s427 + $0xda] sm:$0xff]
    %v7868 = vld [vmem:[%s427 + $0xe2] sm:$0xff]
    %v7869 = vld [vmem:[%s427 + $0xf2] sm:$0xff]
    %v7870 = vld [vmem:[%s427 + $0xfa] sm:$0xff]
    %v7871 = vld [vmem:[%s427 + $0x10a] sm:$0xff]
    %v7872 = vld [vmem:[%s427 + $0x112] sm:$0xff]
    %v7873 = vld [vmem:[%s427 + $0x122] sm:$0xff]
    %v7874 = vld [vmem:[%s427 + $0x12a] sm:$0xff]
    %v7875 = vld [vmem:[%s427 + $0x13a] sm:$0xff]
    %v7876 = vld [vmem:[%s427 + $0x142] sm:$0xff]
    %v7877 = vld [vmem:[%s427 + $0x152] sm:$0xff]
    %v7878 = vld [vmem:[%s427 + $0x15a] sm:$0xff]
    %v7879 = vld [vmem:[%s427 + $0x16a] sm:$0xff]
    %v7880 = vld [vmem:[%s427 + $0x172] sm:$0xff]
    %v7881 = vld [vmem:[%s427 + $0x1b2] sm:$0xff]
    %v7882 = vld [vmem:[%s427 + $0x1ba] sm:$0xff]
    %v7883 = vld [vmem:[%s427 + $0x1ca] sm:$0xff]
    %v7884 = vld [vmem:[%s427 + $0x1d2] sm:$0xff]
    %v7885 = vld [vmem:[%s427 + $0x1e2] sm:$0xff]
    %v7886 = vld [vmem:[%s427 + $0x1ea] sm:$0xff]
    %v7887 = vld [vmem:[%s427 + $0x1fa] sm:$0xff]
    %v7888 = vld [vmem:[%s427 + $0x202] sm:$0xff]
    %v7889 = vld [vmem:[%s427 + $0x212] sm:$0xff]
    %v7890 = vld [vmem:[%s427 + $0x21a] sm:$0xff]
    %v7891 = vld [vmem:[%s427 + $0x22a] sm:$0xff]
    %v7892 = vld [vmem:[%s427 + $0x232] sm:$0xff]
    %v7893 = vld [vmem:[%s427 + $0x242] sm:$0xff]
    %v7894 = vld [vmem:[%s427 + $0x24a] sm:$0xff]
    %v7895 = vld [vmem:[%s427 + $0x25a] sm:$0xff]
    %v7896 = vld [vmem:[%s427 + $0x262] sm:$0xff]
    %v7897 = vld [vmem:[%s427 + $0x272] sm:$0xff]
    %v7898 = vld [vmem:[%s427 + $0x27a] sm:$0xff]
    %v7899 = vld [vmem:[%s427 + $0x28a] sm:$0xff]
    %v7900 = vld [vmem:[%s427 + $0x292] sm:$0xff]
    %v7901 = vld [vmem:[%s427 + $0x2a2] sm:$0xff]
    %v7902 = vld [vmem:[%s427 + $0x2aa] sm:$0xff]
    %v7903 = vld [vmem:[%s427 + $0x2ba] sm:$0xff]
    %v7904 = vld [vmem:[%s427 + $0x2c2] sm:$0xff]
    %v7905 = vld [vmem:[%s427 + $0x2d2] sm:$0xff]
    %v7906 = vld [vmem:[%s427 + $0x2da] sm:$0xff]
    %v7907 = vld [vmem:[%s427 + $0x2ea] sm:$0xff]
    %v7908 = vld [vmem:[%s427 + $0x2f2] sm:$0xff]
    %v7909 = vld [vmem:[%s427 + $0x302] sm:$0xff]
    %v7910 = vld [vmem:[%s427 + $0x30a] sm:$0xff]
    %v7911 = vld [vmem:[%s427 + $0x31a] sm:$0xff]
    %v7912 = vld [vmem:[%s427 + $0x322] sm:$0xff]
    %v7913 = vpack.c.bf16 %v7850, %v7849
    %v7914 = vpack.c.bf16 %v7852, %v7851
    %v7915 = vpack.c.bf16 %v7854, %v7853
    %v7916 = vpack.c.bf16 %v7856, %v7855
    %v7917 = vpack.c.bf16 %v7858, %v7857
    %v7918 = vpack.c.bf16 %v7860, %v7859
    %v7919 = vpack.c.bf16 %v7862, %v7861
    %v7920 = vpack.c.bf16 %v7864, %v7863
    %v7921 = vpack.c.bf16 %v7866, %v7865
    %v7922 = vpack.c.bf16 %v7868, %v7867
    %v7923 = vpack.c.bf16 %v7870, %v7869
    %v7924 = vpack.c.bf16 %v7872, %v7871
    %v7925 = vpack.c.bf16 %v7874, %v7873
    %v7926 = vpack.c.bf16 %v7876, %v7875
    %v7927 = vpack.c.bf16 %v7878, %v7877
    %v7928 = vpack.c.bf16 %v7880, %v7879
    %v7929 = vpack.c.bf16 %v7882, %v7881
    %v7930 = vpack.c.bf16 %v7884, %v7883
    %v7931 = vpack.c.bf16 %v7886, %v7885
    %v7932 = vpack.c.bf16 %v7888, %v7887
    %v7933 = vpack.c.bf16 %v7890, %v7889
    %v7934 = vpack.c.bf16 %v7892, %v7891
    %v7935 = vpack.c.bf16 %v7894, %v7893
    %v7936 = vpack.c.bf16 %v7896, %v7895
    %v7937 = vpack.c.bf16 %v7898, %v7897
    %v7938 = vpack.c.bf16 %v7900, %v7899
    %v7939 = vpack.c.bf16 %v7902, %v7901
    %v7940 = vpack.c.bf16 %v7904, %v7903
    %v7941 = vpack.c.bf16 %v7906, %v7905
    %v7942 = vpack.c.bf16 %v7908, %v7907
    %v7943 = vpack.c.bf16 %v7910, %v7909
    %v7944 = vpack.c.bf16 %v7912, %v7911
    %7977 = vrot.lane.b32.xlu0 %v7913, 80
    %v7978 = vpop.permute.xlu0 %7977
    %7979 = vrot.lane.b32.xlu0 %v7914, 80
    %v7980 = vpop.permute.xlu0 %7979
    %7981 = vrot.lane.b32.xlu0 %v7915, 80
    %v7982 = vpop.permute.xlu0 %7981
    %7983 = vrot.lane.b32.xlu0 %v7916, 80
    %v7984 = vpop.permute.xlu0 %7983
    %7985 = vrot.lane.b32.xlu0 %v7917, 80
    %v7986 = vpop.permute.xlu0 %7985
    %7987 = vrot.lane.b32.xlu0 %v7918, 80
    %v7988 = vpop.permute.xlu0 %7987
    %7989 = vrot.lane.b32.xlu0 %v7919, 80
    %v7990 = vpop.permute.xlu0 %7989
    %7991 = vrot.lane.b32.xlu0 %v7920, 80
    %v7992 = vpop.permute.xlu0 %7991
    %7993 = vrot.lane.b32.xlu0 %v7921, 80
    %v7994 = vpop.permute.xlu0 %7993
    %7995 = vrot.lane.b32.xlu0 %v7922, 80
    %v7996 = vpop.permute.xlu0 %7995
    %7997 = vrot.lane.b32.xlu0 %v7923, 80
    %v7998 = vpop.permute.xlu0 %7997
    %7999 = vrot.lane.b32.xlu0 %v7924, 80
    %v8000 = vpop.permute.xlu0 %7999
    %8001 = vrot.lane.b32.xlu0 %v7925, 80
    %v8002 = vpop.permute.xlu0 %8001
    %8003 = vrot.lane.b32.xlu0 %v7926, 80
    %v8004 = vpop.permute.xlu0 %8003
    %8005 = vrot.lane.b32.xlu0 %v7927, 80
    %v8006 = vpop.permute.xlu0 %8005
    %8007 = vrot.lane.b32.xlu0 %v7928, 80
    %v8008 = vpop.permute.xlu0 %8007
    %8009 = vrot.lane.b32.xlu0 %v7929, 80
    %v8010 = vpop.permute.xlu0 %8009
    %8011 = vrot.lane.b32.xlu0 %v7930, 80
    %v8012 = vpop.permute.xlu0 %8011
    %8013 = vrot.lane.b32.xlu0 %v7931, 80
    %v8014 = vpop.permute.xlu0 %8013
    %8015 = vrot.lane.b32.xlu0 %v7932, 80
    %v8016 = vpop.permute.xlu0 %8015
    %8017 = vrot.lane.b32.xlu0 %v7933, 80
    %v8018 = vpop.permute.xlu0 %8017
    %8019 = vrot.lane.b32.xlu0 %v7934, 80
    %v8020 = vpop.permute.xlu0 %8019
    %8021 = vrot.lane.b32.xlu0 %v7935, 80
    %v8022 = vpop.permute.xlu0 %8021
    %8023 = vrot.lane.b32.xlu0 %v7936, 80
    %v8024 = vpop.permute.xlu0 %8023
    %8025 = vrot.lane.b32.xlu0 %v7937, 80
    %v8026 = vpop.permute.xlu0 %8025
    %8027 = vrot.lane.b32.xlu0 %v7938, 80
    %v8028 = vpop.permute.xlu0 %8027
    %8029 = vrot.lane.b32.xlu0 %v7939, 80
    %v8030 = vpop.permute.xlu0 %8029
    %8031 = vrot.lane.b32.xlu0 %v7940, 80
    %v8032 = vpop.permute.xlu0 %8031
    %8033 = vrot.lane.b32.xlu0 %v7941, 80
    %v8034 = vpop.permute.xlu0 %8033
    %8035 = vrot.lane.b32.xlu0 %v7942, 80
    %v8036 = vpop.permute.xlu0 %8035
    %8037 = vrot.lane.b32.xlu0 %v7943, 80
    %v8038 = vpop.permute.xlu0 %8037
    %8039 = vrot.lane.b32.xlu0 %v7944, 80
    %v8040 = vpop.permute.xlu0 %8039
    %8073 = vst.msk [vmem:[#allocation3] sm:$0xff] %vm1872, %v7978
    %8074 = vst.msk [vmem:[#allocation3 + $0x10] sm:$0xff] %vm1872, %v7980
    %8075 = vst.msk [vmem:[#allocation3 + $0x20] sm:$0xff] %vm1872, %v7982
    %8076 = vst.msk [vmem:[#allocation3 + $0x30] sm:$0xff] %vm1872, %v7984
    %8077 = vst.msk [vmem:[#allocation3 + $0x40] sm:$0xff] %vm1872, %v7986
    %8078 = vst.msk [vmem:[#allocation3 + $0x50] sm:$0xff] %vm1872, %v7988
    %8079 = vst.msk [vmem:[#allocation3 + $0x60] sm:$0xff] %vm1872, %v7990
    %8080 = vst.msk [vmem:[#allocation3 + $0x70] sm:$0xff] %vm1872, %v7992
    %8081 = vst.msk [vmem:[#allocation3 + $0x80] sm:$0xff] %vm1872, %v7994
    %8082 = vst.msk [vmem:[#allocation3 + $0x90] sm:$0xff] %vm1872, %v7996
    %8083 = vst.msk [vmem:[#allocation3 + $0xa0] sm:$0xff] %vm1872, %v7998
    %8084 = vst.msk [vmem:[#allocation3 + $0xb0] sm:$0xff] %vm1872, %v8000
    %8085 = vst.msk [vmem:[#allocation3 + $0xc0] sm:$0xff] %vm1872, %v8002
    %8086 = vst.msk [vmem:[#allocation3 + $0xd0] sm:$0xff] %vm1872, %v8004
    %8087 = vst.msk [vmem:[#allocation3 + $0xe0] sm:$0xff] %vm1872, %v8006
    %8088 = vst.msk [vmem:[#allocation3 + $0xf0] sm:$0xff] %vm1872, %v8008
    %8089 = vst.msk [vmem:[#allocation3 + $0x100] sm:$0xff] %vm1872, %v8010
    %8090 = vst.msk [vmem:[#allocation3 + $0x110] sm:$0xff] %vm1872, %v8012
    %8091 = vst.msk [vmem:[#allocation3 + $0x120] sm:$0xff] %vm1872, %v8014
    %8092 = vst.msk [vmem:[#allocation3 + $0x130] sm:$0xff] %vm1872, %v8016
    %8093 = vst.msk [vmem:[#allocation3 + $0x140] sm:$0xff] %vm1872, %v8018
    %8094 = vst.msk [vmem:[#allocation3 + $0x150] sm:$0xff] %vm1872, %v8020
    %8095 = vst.msk [vmem:[#allocation3 + $0x160] sm:$0xff] %vm1872, %v8022
    %8096 = vst.msk [vmem:[#allocation3 + $0x170] sm:$0xff] %vm1872, %v8024
    %8097 = vst.msk [vmem:[#allocation3 + $0x180] sm:$0xff] %vm1872, %v8026
    %8098 = vst.msk [vmem:[#allocation3 + $0x190] sm:$0xff] %vm1872, %v8028
    %8099 = vst.msk [vmem:[#allocation3 + $0x1a0] sm:$0xff] %vm1872, %v8030
    %8100 = vst.msk [vmem:[#allocation3 + $0x1b0] sm:$0xff] %vm1872, %v8032
    %8101 = vst.msk [vmem:[#allocation3 + $0x1c0] sm:$0xff] %vm1872, %v8034
    %8102 = vst.msk [vmem:[#allocation3 + $0x1d0] sm:$0xff] %vm1872, %v8036
    %8103 = vst.msk [vmem:[#allocation3 + $0x1e0] sm:$0xff] %vm1872, %v8038
    %8104 = vst.msk [vmem:[#allocation3 + $0x1f0] sm:$0xff] %vm1872, %v8040
    %v8105 = vld [vmem:[%s1905] sm:$0xff]
    %v8106 = vld [vmem:[%s1905 + $0x8] sm:$0xff]
    %v8107 = vld [vmem:[%s1905 + $0x18] sm:$0xff]
    %v8108 = vld [vmem:[%s1905 + $0x20] sm:$0xff]
    %v8109 = vld [vmem:[%s1905 + $0x30] sm:$0xff]
    %v8110 = vld [vmem:[%s1905 + $0x38] sm:$0xff]
    %v8111 = vld [vmem:[%s1905 + $0x48] sm:$0xff]
    %v8112 = vld [vmem:[%s1905 + $0x50] sm:$0xff]
    %v8113 = vld [vmem:[%s1905 + $0x60] sm:$0xff]
    %v8114 = vld [vmem:[%s1905 + $0x68] sm:$0xff]
    %v8115 = vld [vmem:[%s1905 + $0x78] sm:$0xff]
    %v8116 = vld [vmem:[%s1905 + $0x80] sm:$0xff]
    %v8117 = vld [vmem:[%s1905 + $0x90] sm:$0xff]
    %v8118 = vld [vmem:[%s1905 + $0x98] sm:$0xff]
    %v8119 = vld [vmem:[%s1905 + $0xa8] sm:$0xff]
    %v8120 = vld [vmem:[%s1905 + $0xb0] sm:$0xff]
    %v8121 = vld [vmem:[%s1905 + $0xc0] sm:$0xff]
    %v8122 = vld [vmem:[%s1905 + $0xc8] sm:$0xff]
    %v8123 = vld [vmem:[%s1905 + $0xd8] sm:$0xff]
    %v8124 = vld [vmem:[%s1905 + $0xe0] sm:$0xff]
    %v8125 = vld [vmem:[%s1905 + $0xf0] sm:$0xff]
    %v8126 = vld [vmem:[%s1905 + $0xf8] sm:$0xff]
    %v8127 = vld [vmem:[%s1905 + $0x108] sm:$0xff]
    %v8128 = vld [vmem:[%s1905 + $0x110] sm:$0xff]
    %v8129 = vld [vmem:[%s1905 + $0x120] sm:$0xff]
    %v8130 = vld [vmem:[%s1905 + $0x128] sm:$0xff]
    %v8131 = vld [vmem:[%s1905 + $0x138] sm:$0xff]
    %v8132 = vld [vmem:[%s1905 + $0x140] sm:$0xff]
    %v8133 = vld [vmem:[%s1905 + $0x150] sm:$0xff]
    %v8134 = vld [vmem:[%s1905 + $0x158] sm:$0xff]
    %v8135 = vld [vmem:[%s1905 + $0x168] sm:$0xff]
    %v8136 = vld [vmem:[%s1905 + $0x170] sm:$0xff]
    %v8137 = vld [vmem:[%s1905 + $0x1b0] sm:$0xff]
    %v8138 = vld [vmem:[%s1905 + $0x1b8] sm:$0xff]
    %v8139 = vld [vmem:[%s1905 + $0x1c8] sm:$0xff]
    %v8140 = vld [vmem:[%s1905 + $0x1d0] sm:$0xff]
    %v8141 = vld [vmem:[%s1905 + $0x1e0] sm:$0xff]
    %v8142 = vld [vmem:[%s1905 + $0x1e8] sm:$0xff]
    %v8143 = vld [vmem:[%s1905 + $0x1f8] sm:$0xff]
    %v8144 = vld [vmem:[%s1905 + $0x200] sm:$0xff]
    %v8145 = vld [vmem:[%s1905 + $0x210] sm:$0xff]
    %v8146 = vld [vmem:[%s1905 + $0x218] sm:$0xff]
    %v8147 = vld [vmem:[%s1905 + $0x228] sm:$0xff]
    %v8148 = vld [vmem:[%s1905 + $0x230] sm:$0xff]
    %v8149 = vld [vmem:[%s1905 + $0x240] sm:$0xff]
    %v8150 = vld [vmem:[%s1905 + $0x248] sm:$0xff]
    %v8151 = vld [vmem:[%s1905 + $0x258] sm:$0xff]
    %v8152 = vld [vmem:[%s1905 + $0x260] sm:$0xff]
    %v8153 = vld [vmem:[%s1905 + $0x270] sm:$0xff]
    %v8154 = vld [vmem:[%s1905 + $0x278] sm:$0xff]
    %v8155 = vld [vmem:[%s1905 + $0x288] sm:$0xff]
    %v8156 = vld [vmem:[%s1905 + $0x290] sm:$0xff]
    %v8157 = vld [vmem:[%s1905 + $0x2a0] sm:$0xff]
    %v8158 = vld [vmem:[%s1905 + $0x2a8] sm:$0xff]
    %v8159 = vld [vmem:[%s1905 + $0x2b8] sm:$0xff]
    %v8160 = vld [vmem:[%s1905 + $0x2c0] sm:$0xff]
    %v8161 = vld [vmem:[%s1905 + $0x2d0] sm:$0xff]
    %v8162 = vld [vmem:[%s1905 + $0x2d8] sm:$0xff]
    %v8163 = vld [vmem:[%s1905 + $0x2e8] sm:$0xff]
    %v8164 = vld [vmem:[%s1905 + $0x2f0] sm:$0xff]
    %v8165 = vld [vmem:[%s1905 + $0x300] sm:$0xff]
    %v8166 = vld [vmem:[%s1905 + $0x308] sm:$0xff]
    %v8167 = vld [vmem:[%s1905 + $0x318] sm:$0xff]
    %v8168 = vld [vmem:[%s1905 + $0x320] sm:$0xff]
    %v8169 = vpack.c.bf16 %v8106, %v8105
    %v8170 = vpack.c.bf16 %v8108, %v8107
    %v8171 = vpack.c.bf16 %v8110, %v8109
    %v8172 = vpack.c.bf16 %v8112, %v8111
    %v8173 = vpack.c.bf16 %v8114, %v8113
    %v8174 = vpack.c.bf16 %v8116, %v8115
    %v8175 = vpack.c.bf16 %v8118, %v8117
    %v8176 = vpack.c.bf16 %v8120, %v8119
    %v8177 = vpack.c.bf16 %v8122, %v8121
    %v8178 = vpack.c.bf16 %v8124, %v8123
    %v8179 = vpack.c.bf16 %v8126, %v8125
    %v8180 = vpack.c.bf16 %v8128, %v8127
    %v8181 = vpack.c.bf16 %v8130, %v8129
    %v8182 = vpack.c.bf16 %v8132, %v8131
    %v8183 = vpack.c.bf16 %v8134, %v8133
    %v8184 = vpack.c.bf16 %v8136, %v8135
    %v8185 = vpack.c.bf16 %v8138, %v8137
    %v8186 = vpack.c.bf16 %v8140, %v8139
    %v8187 = vpack.c.bf16 %v8142, %v8141
    %v8188 = vpack.c.bf16 %v8144, %v8143
    %v8189 = vpack.c.bf16 %v8146, %v8145
    %v8190 = vpack.c.bf16 %v8148, %v8147
    %v8191 = vpack.c.bf16 %v8150, %v8149
    %v8192 = vpack.c.bf16 %v8152, %v8151
    %v8193 = vpack.c.bf16 %v8154, %v8153
    %v8194 = vpack.c.bf16 %v8156, %v8155
    %v8195 = vpack.c.bf16 %v8158, %v8157
    %v8196 = vpack.c.bf16 %v8160, %v8159
    %v8197 = vpack.c.bf16 %v8162, %v8161
    %v8198 = vpack.c.bf16 %v8164, %v8163
    %v8199 = vpack.c.bf16 %v8166, %v8165
    %v8200 = vpack.c.bf16 %v8168, %v8167
    %8233 = vrot.lane.b32.xlu0 %v8169, 96
    %v8234 = vpop.permute.xlu0 %8233
    %8235 = vrot.lane.b32.xlu0 %v8170, 96
    %v8236 = vpop.permute.xlu0 %8235
    %8237 = vrot.lane.b32.xlu0 %v8171, 96
    %v8238 = vpop.permute.xlu0 %8237
    %8239 = vrot.lane.b32.xlu0 %v8172, 96
    %v8240 = vpop.permute.xlu0 %8239
    %8241 = vrot.lane.b32.xlu0 %v8173, 96
    %v8242 = vpop.permute.xlu0 %8241
    %8243 = vrot.lane.b32.xlu0 %v8174, 96
    %v8244 = vpop.permute.xlu0 %8243
    %8245 = vrot.lane.b32.xlu0 %v8175, 96
    %v8246 = vpop.permute.xlu0 %8245
    %8247 = vrot.lane.b32.xlu0 %v8176, 96
    %v8248 = vpop.permute.xlu0 %8247
    %8249 = vrot.lane.b32.xlu0 %v8177, 96
    %v8250 = vpop.permute.xlu0 %8249
    %8251 = vrot.lane.b32.xlu0 %v8178, 96
    %v8252 = vpop.permute.xlu0 %8251
    %8253 = vrot.lane.b32.xlu0 %v8179, 96
    %v8254 = vpop.permute.xlu0 %8253
    %8255 = vrot.lane.b32.xlu0 %v8180, 96
    %v8256 = vpop.permute.xlu0 %8255
    %8257 = vrot.lane.b32.xlu0 %v8181, 96
    %v8258 = vpop.permute.xlu0 %8257
    %8259 = vrot.lane.b32.xlu0 %v8182, 96
    %v8260 = vpop.permute.xlu0 %8259
    %8261 = vrot.lane.b32.xlu0 %v8183, 96
    %v8262 = vpop.permute.xlu0 %8261
    %8263 = vrot.lane.b32.xlu0 %v8184, 96
    %v8264 = vpop.permute.xlu0 %8263
    %8265 = vrot.lane.b32.xlu0 %v8185, 96
    %v8266 = vpop.permute.xlu0 %8265
    %8267 = vrot.lane.b32.xlu0 %v8186, 96
    %v8268 = vpop.permute.xlu0 %8267
    %8269 = vrot.lane.b32.xlu0 %v8187, 96
    %v8270 = vpop.permute.xlu0 %8269
    %8271 = vrot.lane.b32.xlu0 %v8188, 96
    %v8272 = vpop.permute.xlu0 %8271
    %8273 = vrot.lane.b32.xlu0 %v8189, 96
    %v8274 = vpop.permute.xlu0 %8273
    %8275 = vrot.lane.b32.xlu0 %v8190, 96
    %v8276 = vpop.permute.xlu0 %8275
    %8277 = vrot.lane.b32.xlu0 %v8191, 96
    %v8278 = vpop.permute.xlu0 %8277
    %8279 = vrot.lane.b32.xlu0 %v8192, 96
    %v8280 = vpop.permute.xlu0 %8279
    %8281 = vrot.lane.b32.xlu0 %v8193, 96
    %v8282 = vpop.permute.xlu0 %8281
    %8283 = vrot.lane.b32.xlu0 %v8194, 96
    %v8284 = vpop.permute.xlu0 %8283
    %8285 = vrot.lane.b32.xlu0 %v8195, 96
    %v8286 = vpop.permute.xlu0 %8285
    %8287 = vrot.lane.b32.xlu0 %v8196, 96
    %v8288 = vpop.permute.xlu0 %8287
    %8289 = vrot.lane.b32.xlu0 %v8197, 96
    %v8290 = vpop.permute.xlu0 %8289
    %8291 = vrot.lane.b32.xlu0 %v8198, 96
    %v8292 = vpop.permute.xlu0 %8291
    %8293 = vrot.lane.b32.xlu0 %v8199, 96
    %v8294 = vpop.permute.xlu0 %8293
    %8295 = vrot.lane.b32.xlu0 %v8200, 96
    %v8296 = vpop.permute.xlu0 %8295
    %8329 = vst.msk [vmem:[#allocation3] sm:$0xff] %vm2130, %v8234
    %8330 = vst.msk [vmem:[#allocation3 + $0x10] sm:$0xff] %vm2130, %v8236
    %8331 = vst.msk [vmem:[#allocation3 + $0x20] sm:$0xff] %vm2130, %v8238
    %8332 = vst.msk [vmem:[#allocation3 + $0x30] sm:$0xff] %vm2130, %v8240
    %8333 = vst.msk [vmem:[#allocation3 + $0x40] sm:$0xff] %vm2130, %v8242
    %8334 = vst.msk [vmem:[#allocation3 + $0x50] sm:$0xff] %vm2130, %v8244
    %8335 = vst.msk [vmem:[#allocation3 + $0x60] sm:$0xff] %vm2130, %v8246
    %8336 = vst.msk [vmem:[#allocation3 + $0x70] sm:$0xff] %vm2130, %v8248
    %8337 = vst.msk [vmem:[#allocation3 + $0x80] sm:$0xff] %vm2130, %v8250
    %8338 = vst.msk [vmem:[#allocation3 + $0x90] sm:$0xff] %vm2130, %v8252
    %8339 = vst.msk [vmem:[#allocation3 + $0xa0] sm:$0xff] %vm2130, %v8254
    %8340 = vst.msk [vmem:[#allocation3 + $0xb0] sm:$0xff] %vm2130, %v8256
    %8341 = vst.msk [vmem:[#allocation3 + $0xc0] sm:$0xff] %vm2130, %v8258
    %8342 = vst.msk [vmem:[#allocation3 + $0xd0] sm:$0xff] %vm2130, %v8260
    %8343 = vst.msk [vmem:[#allocation3 + $0xe0] sm:$0xff] %vm2130, %v8262
    %8344 = vst.msk [vmem:[#allocation3 + $0xf0] sm:$0xff] %vm2130, %v8264
    %8345 = vst.msk [vmem:[#allocation3 + $0x100] sm:$0xff] %vm2130, %v8266
    %8346 = vst.msk [vmem:[#allocation3 + $0x110] sm:$0xff] %vm2130, %v8268
    %8347 = vst.msk [vmem:[#allocation3 + $0x120] sm:$0xff] %vm2130, %v8270
    %8348 = vst.msk [vmem:[#allocation3 + $0x130] sm:$0xff] %vm2130, %v8272
    %8349 = vst.msk [vmem:[#allocation3 + $0x140] sm:$0xff] %vm2130, %v8274
    %8350 = vst.msk [vmem:[#allocation3 + $0x150] sm:$0xff] %vm2130, %v8276
    %8351 = vst.msk [vmem:[#allocation3 + $0x160] sm:$0xff] %vm2130, %v8278
    %8352 = vst.msk [vmem:[#allocation3 + $0x170] sm:$0xff] %vm2130, %v8280
    %8353 = vst.msk [vmem:[#allocation3 + $0x180] sm:$0xff] %vm2130, %v8282
    %8354 = vst.msk [vmem:[#allocation3 + $0x190] sm:$0xff] %vm2130, %v8284
    %8355 = vst.msk [vmem:[#allocation3 + $0x1a0] sm:$0xff] %vm2130, %v8286
    %8356 = vst.msk [vmem:[#allocation3 + $0x1b0] sm:$0xff] %vm2130, %v8288
    %8357 = vst.msk [vmem:[#allocation3 + $0x1c0] sm:$0xff] %vm2130, %v8290
    %8358 = vst.msk [vmem:[#allocation3 + $0x1d0] sm:$0xff] %vm2130, %v8292
    %8359 = vst.msk [vmem:[#allocation3 + $0x1e0] sm:$0xff] %vm2130, %v8294
    %8360 = vst.msk [vmem:[#allocation3 + $0x1f0] sm:$0xff] %vm2130, %v8296
    %v8361 = vld [vmem:[%s1905 + $0x1] sm:$0xff]
    %v8362 = vld [vmem:[%s1905 + $0x9] sm:$0xff]
    %v8363 = vld [vmem:[%s1905 + $0x19] sm:$0xff]
    %v8364 = vld [vmem:[%s1905 + $0x21] sm:$0xff]
    %v8365 = vld [vmem:[%s1905 + $0x31] sm:$0xff]
    %v8366 = vld [vmem:[%s1905 + $0x39] sm:$0xff]
    %v8367 = vld [vmem:[%s1905 + $0x49] sm:$0xff]
    %v8368 = vld [vmem:[%s1905 + $0x51] sm:$0xff]
    %v8369 = vld [vmem:[%s1905 + $0x61] sm:$0xff]
    %v8370 = vld [vmem:[%s1905 + $0x69] sm:$0xff]
    %v8371 = vld [vmem:[%s1905 + $0x79] sm:$0xff]
    %v8372 = vld [vmem:[%s1905 + $0x81] sm:$0xff]
    %v8373 = vld [vmem:[%s1905 + $0x91] sm:$0xff]
    %v8374 = vld [vmem:[%s1905 + $0x99] sm:$0xff]
    %v8375 = vld [vmem:[%s1905 + $0xa9] sm:$0xff]
    %v8376 = vld [vmem:[%s1905 + $0xb1] sm:$0xff]
    %v8377 = vld [vmem:[%s1905 + $0xc1] sm:$0xff]
    %v8378 = vld [vmem:[%s1905 + $0xc9] sm:$0xff]
    %v8379 = vld [vmem:[%s1905 + $0xd9] sm:$0xff]
    %v8380 = vld [vmem:[%s1905 + $0xe1] sm:$0xff]
    %v8381 = vld [vmem:[%s1905 + $0xf1] sm:$0xff]
    %v8382 = vld [vmem:[%s1905 + $0xf9] sm:$0xff]
    %v8383 = vld [vmem:[%s1905 + $0x109] sm:$0xff]
    %v8384 = vld [vmem:[%s1905 + $0x111] sm:$0xff]
    %v8385 = vld [vmem:[%s1905 + $0x121] sm:$0xff]
    %v8386 = vld [vmem:[%s1905 + $0x129] sm:$0xff]
    %v8387 = vld [vmem:[%s1905 + $0x139] sm:$0xff]
    %v8388 = vld [vmem:[%s1905 + $0x141] sm:$0xff]
    %v8389 = vld [vmem:[%s1905 + $0x151] sm:$0xff]
    %v8390 = vld [vmem:[%s1905 + $0x159] sm:$0xff]
    %v8391 = vld [vmem:[%s1905 + $0x169] sm:$0xff]
    %v8392 = vld [vmem:[%s1905 + $0x171] sm:$0xff]
    %v8393 = vld [vmem:[%s1905 + $0x1b1] sm:$0xff]
    %v8394 = vld [vmem:[%s1905 + $0x1b9] sm:$0xff]
    %v8395 = vld [vmem:[%s1905 + $0x1c9] sm:$0xff]
    %v8396 = vld [vmem:[%s1905 + $0x1d1] sm:$0xff]
    %v8397 = vld [vmem:[%s1905 + $0x1e1] sm:$0xff]
    %v8398 = vld [vmem:[%s1905 + $0x1e9] sm:$0xff]
    %v8399 = vld [vmem:[%s1905 + $0x1f9] sm:$0xff]
    %v8400 = vld [vmem:[%s1905 + $0x201] sm:$0xff]
    %v8401 = vld [vmem:[%s1905 + $0x211] sm:$0xff]
    %v8402 = vld [vmem:[%s1905 + $0x219] sm:$0xff]
    %v8403 = vld [vmem:[%s1905 + $0x229] sm:$0xff]
    %v8404 = vld [vmem:[%s1905 + $0x231] sm:$0xff]
    %v8405 = vld [vmem:[%s1905 + $0x241] sm:$0xff]
    %v8406 = vld [vmem:[%s1905 + $0x249] sm:$0xff]
    %v8407 = vld [vmem:[%s1905 + $0x259] sm:$0xff]
    %v8408 = vld [vmem:[%s1905 + $0x261] sm:$0xff]
    %v8409 = vld [vmem:[%s1905 + $0x271] sm:$0xff]
    %v8410 = vld [vmem:[%s1905 + $0x279] sm:$0xff]
    %v8411 = vld [vmem:[%s1905 + $0x289] sm:$0xff]
    %v8412 = vld [vmem:[%s1905 + $0x291] sm:$0xff]
    %v8413 = vld [vmem:[%s1905 + $0x2a1] sm:$0xff]
    %v8414 = vld [vmem:[%s1905 + $0x2a9] sm:$0xff]
    %v8415 = vld [vmem:[%s1905 + $0x2b9] sm:$0xff]
    %v8416 = vld [vmem:[%s1905 + $0x2c1] sm:$0xff]
    %v8417 = vld [vmem:[%s1905 + $0x2d1] sm:$0xff]
    %v8418 = vld [vmem:[%s1905 + $0x2d9] sm:$0xff]
    %v8419 = vld [vmem:[%s1905 + $0x2e9] sm:$0xff]
    %v8420 = vld [vmem:[%s1905 + $0x2f1] sm:$0xff]
    %v8421 = vld [vmem:[%s1905 + $0x301] sm:$0xff]
    %v8422 = vld [vmem:[%s1905 + $0x309] sm:$0xff]
    %v8423 = vld [vmem:[%s1905 + $0x319] sm:$0xff]
    %v8424 = vld [vmem:[%s1905 + $0x321] sm:$0xff]
    %v8425 = vpack.c.bf16 %v8362, %v8361
    %v8426 = vpack.c.bf16 %v8364, %v8363
    %v8427 = vpack.c.bf16 %v8366, %v8365
    %v8428 = vpack.c.bf16 %v8368, %v8367
    %v8429 = vpack.c.bf16 %v8370, %v8369
    %v8430 = vpack.c.bf16 %v8372, %v8371
    %v8431 = vpack.c.bf16 %v8374, %v8373
    %v8432 = vpack.c.bf16 %v8376, %v8375
    %v8433 = vpack.c.bf16 %v8378, %v8377
    %v8434 = vpack.c.bf16 %v8380, %v8379
    %v8435 = vpack.c.bf16 %v8382, %v8381
    %v8436 = vpack.c.bf16 %v8384, %v8383
    %v8437 = vpack.c.bf16 %v8386, %v8385
    %v8438 = vpack.c.bf16 %v8388, %v8387
    %v8439 = vpack.c.bf16 %v8390, %v8389
    %v8440 = vpack.c.bf16 %v8392, %v8391
    %v8441 = vpack.c.bf16 %v8394, %v8393
    %v8442 = vpack.c.bf16 %v8396, %v8395
    %v8443 = vpack.c.bf16 %v8398, %v8397
    %v8444 = vpack.c.bf16 %v8400, %v8399
    %v8445 = vpack.c.bf16 %v8402, %v8401
    %v8446 = vpack.c.bf16 %v8404, %v8403
    %v8447 = vpack.c.bf16 %v8406, %v8405
    %v8448 = vpack.c.bf16 %v8408, %v8407
    %v8449 = vpack.c.bf16 %v8410, %v8409
    %v8450 = vpack.c.bf16 %v8412, %v8411
    %v8451 = vpack.c.bf16 %v8414, %v8413
    %v8452 = vpack.c.bf16 %v8416, %v8415
    %v8453 = vpack.c.bf16 %v8418, %v8417
    %v8454 = vpack.c.bf16 %v8420, %v8419
    %v8455 = vpack.c.bf16 %v8422, %v8421
    %v8456 = vpack.c.bf16 %v8424, %v8423
    %8489 = vrot.lane.b32.xlu0 %v8425, 112
    %v8490 = vpop.permute.xlu0 %8489
    %8491 = vrot.lane.b32.xlu0 %v8426, 112
    %v8492 = vpop.permute.xlu0 %8491
    %8493 = vrot.lane.b32.xlu0 %v8427, 112
    %v8494 = vpop.permute.xlu0 %8493
    %8495 = vrot.lane.b32.xlu0 %v8428, 112
    %v8496 = vpop.permute.xlu0 %8495
    %8497 = vrot.lane.b32.xlu0 %v8429, 112
    %v8498 = vpop.permute.xlu0 %8497
    %8499 = vrot.lane.b32.xlu0 %v8430, 112
    %v8500 = vpop.permute.xlu0 %8499
    %8501 = vrot.lane.b32.xlu0 %v8431, 112
    %v8502 = vpop.permute.xlu0 %8501
    %8503 = vrot.lane.b32.xlu0 %v8432, 112
    %v8504 = vpop.permute.xlu0 %8503
    %8505 = vrot.lane.b32.xlu0 %v8433, 112
    %v8506 = vpop.permute.xlu0 %8505
    %8507 = vrot.lane.b32.xlu0 %v8434, 112
    %v8508 = vpop.permute.xlu0 %8507
    %8509 = vrot.lane.b32.xlu0 %v8435, 112
    %v8510 = vpop.permute.xlu0 %8509
    %8511 = vrot.lane.b32.xlu0 %v8436, 112
    %v8512 = vpop.permute.xlu0 %8511
    %8513 = vrot.lane.b32.xlu0 %v8437, 112
    %v8514 = vpop.permute.xlu0 %8513
    %8515 = vrot.lane.b32.xlu0 %v8438, 112
    %v8516 = vpop.permute.xlu0 %8515
    %8517 = vrot.lane.b32.xlu0 %v8439, 112
    %v8518 = vpop.permute.xlu0 %8517
    %8519 = vrot.lane.b32.xlu0 %v8440, 112
    %v8520 = vpop.permute.xlu0 %8519
    %8521 = vrot.lane.b32.xlu0 %v8441, 112
    %v8522 = vpop.permute.xlu0 %8521
    %8523 = vrot.lane.b32.xlu0 %v8442, 112
    %v8524 = vpop.permute.xlu0 %8523
    %8525 = vrot.lane.b32.xlu0 %v8443, 112
    %v8526 = vpop.permute.xlu0 %8525
    %8527 = vrot.lane.b32.xlu0 %v8444, 112
    %v8528 = vpop.permute.xlu0 %8527
    %8529 = vrot.lane.b32.xlu0 %v8445, 112
    %v8530 = vpop.permute.xlu0 %8529
    %8531 = vrot.lane.b32.xlu0 %v8446, 112
    %v8532 = vpop.permute.xlu0 %8531
    %8533 = vrot.lane.b32.xlu0 %v8447, 112
    %v8534 = vpop.permute.xlu0 %8533
    %8535 = vrot.lane.b32.xlu0 %v8448, 112
    %v8536 = vpop.permute.xlu0 %8535
    %8537 = vrot.lane.b32.xlu0 %v8449, 112
    %v8538 = vpop.permute.xlu0 %8537
    %8539 = vrot.lane.b32.xlu0 %v8450, 112
    %v8540 = vpop.permute.xlu0 %8539
    %8541 = vrot.lane.b32.xlu0 %v8451, 112
    %v8542 = vpop.permute.xlu0 %8541
    %8543 = vrot.lane.b32.xlu0 %v8452, 112
    %v8544 = vpop.permute.xlu0 %8543
    %8545 = vrot.lane.b32.xlu0 %v8453, 112
    %v8546 = vpop.permute.xlu0 %8545
    %8547 = vrot.lane.b32.xlu0 %v8454, 112
    %v8548 = vpop.permute.xlu0 %8547
    %8549 = vrot.lane.b32.xlu0 %v8455, 112
    %v8550 = vpop.permute.xlu0 %8549
    %8551 = vrot.lane.b32.xlu0 %v8456, 112
    %v8552 = vpop.permute.xlu0 %8551
    %8585 = vst.msk [vmem:[#allocation3] sm:$0xff] %vm2387, %v8490
    %8586 = vst.msk [vmem:[#allocation3 + $0x10] sm:$0xff] %vm2387, %v8492
    %8587 = vst.msk [vmem:[#allocation3 + $0x20] sm:$0xff] %vm2387, %v8494
    %8588 = vst.msk [vmem:[#allocation3 + $0x30] sm:$0xff] %vm2387, %v8496
    %8589 = vst.msk [vmem:[#allocation3 + $0x40] sm:$0xff] %vm2387, %v8498
    %8590 = vst.msk [vmem:[#allocation3 + $0x50] sm:$0xff] %vm2387, %v8500
    %8591 = vst.msk [vmem:[#allocation3 + $0x60] sm:$0xff] %vm2387, %v8502
    %8592 = vst.msk [vmem:[#allocation3 + $0x70] sm:$0xff] %vm2387, %v8504
    %8593 = vst.msk [vmem:[#allocation3 + $0x80] sm:$0xff] %vm2387, %v8506
    %8594 = vst.msk [vmem:[#allocation3 + $0x90] sm:$0xff] %vm2387, %v8508
    %8595 = vst.msk [vmem:[#allocation3 + $0xa0] sm:$0xff] %vm2387, %v8510
    %8596 = vst.msk [vmem:[#allocation3 + $0xb0] sm:$0xff] %vm2387, %v8512
    %8597 = vst.msk [vmem:[#allocation3 + $0xc0] sm:$0xff] %vm2387, %v8514
    %8598 = vst.msk [vmem:[#allocation3 + $0xd0] sm:$0xff] %vm2387, %v8516
    %8599 = vst.msk [vmem:[#allocation3 + $0xe0] sm:$0xff] %vm2387, %v8518
    %8600 = vst.msk [vmem:[#allocation3 + $0xf0] sm:$0xff] %vm2387, %v8520
    %8601 = vst.msk [vmem:[#allocation3 + $0x100] sm:$0xff] %vm2387, %v8522
    %8602 = vst.msk [vmem:[#allocation3 + $0x110] sm:$0xff] %vm2387, %v8524
    %8603 = vst.msk [vmem:[#allocation3 + $0x120] sm:$0xff] %vm2387, %v8526
    %8604 = vst.msk [vmem:[#allocation3 + $0x130] sm:$0xff] %vm2387, %v8528
    %8605 = vst.msk [vmem:[#allocation3 + $0x140] sm:$0xff] %vm2387, %v8530
    %8606 = vst.msk [vmem:[#allocation3 + $0x150] sm:$0xff] %vm2387, %v8532
    %8607 = vst.msk [vmem:[#allocation3 + $0x160] sm:$0xff] %vm2387, %v8534
    %8608 = vst.msk [vmem:[#allocation3 + $0x170] sm:$0xff] %vm2387, %v8536
    %8609 = vst.msk [vmem:[#allocation3 + $0x180] sm:$0xff] %vm2387, %v8538
    %8610 = vst.msk [vmem:[#allocation3 + $0x190] sm:$0xff] %vm2387, %v8540
    %8611 = vst.msk [vmem:[#allocation3 + $0x1a0] sm:$0xff] %vm2387, %v8542
    %8612 = vst.msk [vmem:[#allocation3 + $0x1b0] sm:$0xff] %vm2387, %v8544
    %8613 = vst.msk [vmem:[#allocation3 + $0x1c0] sm:$0xff] %vm2387, %v8546
    %8614 = vst.msk [vmem:[#allocation3 + $0x1d0] sm:$0xff] %vm2387, %v8548
    %8615 = vst.msk [vmem:[#allocation3 + $0x1e0] sm:$0xff] %vm2387, %v8550
    %8616 = vst.msk [vmem:[#allocation3 + $0x1f0] sm:$0xff] %vm2387, %v8552
    %v8617 = vld [vmem:[%s1905 + $0x2] sm:$0xff]
    %v8618 = vld [vmem:[%s1905 + $0xa] sm:$0xff]
    %v8619 = vld [vmem:[%s1905 + $0x1a] sm:$0xff]
    %v8620 = vld [vmem:[%s1905 + $0x22] sm:$0xff]
    %v8621 = vld [vmem:[%s1905 + $0x32] sm:$0xff]
    %v8622 = vld [vmem:[%s1905 + $0x3a] sm:$0xff]
    %v8623 = vld [vmem:[%s1905 + $0x4a] sm:$0xff]
    %v8624 = vld [vmem:[%s1905 + $0x52] sm:$0xff]
    %v8625 = vld [vmem:[%s1905 + $0x62] sm:$0xff]
    %v8626 = vld [vmem:[%s1905 + $0x6a] sm:$0xff]
    %v8627 = vld [vmem:[%s1905 + $0x7a] sm:$0xff]
    %v8628 = vld [vmem:[%s1905 + $0x82] sm:$0xff]
    %v8629 = vld [vmem:[%s1905 + $0x92] sm:$0xff]
    %v8630 = vld [vmem:[%s1905 + $0x9a] sm:$0xff]
    %v8631 = vld [vmem:[%s1905 + $0xaa] sm:$0xff]
    %v8632 = vld [vmem:[%s1905 + $0xb2] sm:$0xff]
    %v8633 = vld [vmem:[%s1905 + $0xc2] sm:$0xff]
    %v8634 = vld [vmem:[%s1905 + $0xca] sm:$0xff]
    %v8635 = vld [vmem:[%s1905 + $0xda] sm:$0xff]
    %v8636 = vld [vmem:[%s1905 + $0xe2] sm:$0xff]
    %v8637 = vld [vmem:[%s1905 + $0xf2] sm:$0xff]
    %v8638 = vld [vmem:[%s1905 + $0xfa] sm:$0xff]
    %v8639 = vld [vmem:[%s1905 + $0x10a] sm:$0xff]
    %v8640 = vld [vmem:[%s1905 + $0x112] sm:$0xff]
    %v8641 = vld [vmem:[%s1905 + $0x122] sm:$0xff]
    %v8642 = vld [vmem:[%s1905 + $0x12a] sm:$0xff]
    %v8643 = vld [vmem:[%s1905 + $0x13a] sm:$0xff]
    %v8644 = vld [vmem:[%s1905 + $0x142] sm:$0xff]
    %v8645 = vld [vmem:[%s1905 + $0x152] sm:$0xff]
    %v8646 = vld [vmem:[%s1905 + $0x15a] sm:$0xff]
    %v8647 = vld [vmem:[%s1905 + $0x16a] sm:$0xff]
    %v8648 = vld [vmem:[%s1905 + $0x172] sm:$0xff]
    %v8649 = vld [vmem:[%s1905 + $0x1b2] sm:$0xff]
    %v8650 = vld [vmem:[%s1905 + $0x1ba] sm:$0xff]
    %v8651 = vld [vmem:[%s1905 + $0x1ca] sm:$0xff]
    %v8652 = vld [vmem:[%s1905 + $0x1d2] sm:$0xff]
    %v8653 = vld [vmem:[%s1905 + $0x1e2] sm:$0xff]
    %v8654 = vld [vmem:[%s1905 + $0x1ea] sm:$0xff]
    %v8655 = vld [vmem:[%s1905 + $0x1fa] sm:$0xff]
    %v8656 = vld [vmem:[%s1905 + $0x202] sm:$0xff]
    %v8657 = vld [vmem:[%s1905 + $0x212] sm:$0xff]
    %v8658 = vld [vmem:[%s1905 + $0x21a] sm:$0xff]
    %v8659 = vld [vmem:[%s1905 + $0x22a] sm:$0xff]
    %v8660 = vld [vmem:[%s1905 + $0x232] sm:$0xff]
    %v8661 = vld [vmem:[%s1905 + $0x242] sm:$0xff]
    %v8662 = vld [vmem:[%s1905 + $0x24a] sm:$0xff]
    %v8663 = vld [vmem:[%s1905 + $0x25a] sm:$0xff]
    %v8664 = vld [vmem:[%s1905 + $0x262] sm:$0xff]
    %v8665 = vld [vmem:[%s1905 + $0x272] sm:$0xff]
    %v8666 = vld [vmem:[%s1905 + $0x27a] sm:$0xff]
    %v8667 = vld [vmem:[%s1905 + $0x28a] sm:$0xff]
    %v8668 = vld [vmem:[%s1905 + $0x292] sm:$0xff]
    %v8669 = vld [vmem:[%s1905 + $0x2a2] sm:$0xff]
    %v8670 = vld [vmem:[%s1905 + $0x2aa] sm:$0xff]
    %v8671 = vld [vmem:[%s1905 + $0x2ba] sm:$0xff]
    %v8672 = vld [vmem:[%s1905 + $0x2c2] sm:$0xff]
    %v8673 = vld [vmem:[%s1905 + $0x2d2] sm:$0xff]
    %v8674 = vld [vmem:[%s1905 + $0x2da] sm:$0xff]
    %v8675 = vld [vmem:[%s1905 + $0x2ea] sm:$0xff]
    %v8676 = vld [vmem:[%s1905 + $0x2f2] sm:$0xff]
    %v8677 = vld [vmem:[%s1905 + $0x302] sm:$0xff]
    %v8678 = vld [vmem:[%s1905 + $0x30a] sm:$0xff]
    %v8679 = vld [vmem:[%s1905 + $0x31a] sm:$0xff]
    %v8680 = vld [vmem:[%s1905 + $0x322] sm:$0xff]
    %v8681 = vpack.c.bf16 %v8618, %v8617
    %v8682 = vpack.c.bf16 %v8620, %v8619
    %v8683 = vpack.c.bf16 %v8622, %v8621
    %v8684 = vpack.c.bf16 %v8624, %v8623
    %v8685 = vpack.c.bf16 %v8626, %v8625
    %v8686 = vpack.c.bf16 %v8628, %v8627
    %v8687 = vpack.c.bf16 %v8630, %v8629
    %v8688 = vpack.c.bf16 %v8632, %v8631
    %v8689 = vpack.c.bf16 %v8634, %v8633
    %v8690 = vpack.c.bf16 %v8636, %v8635
    %v8691 = vpack.c.bf16 %v8638, %v8637
    %v8692 = vpack.c.bf16 %v8640, %v8639
    %v8693 = vpack.c.bf16 %v8642, %v8641
    %v8694 = vpack.c.bf16 %v8644, %v8643
    %v8695 = vpack.c.bf16 %v8646, %v8645
    %v8696 = vpack.c.bf16 %v8648, %v8647
    %v8697 = vpack.c.bf16 %v8650, %v8649
    %v8698 = vpack.c.bf16 %v8652, %v8651
    %v8699 = vpack.c.bf16 %v8654, %v8653
    %v8700 = vpack.c.bf16 %v8656, %v8655
    %v8701 = vpack.c.bf16 %v8658, %v8657
    %v8702 = vpack.c.bf16 %v8660, %v8659
    %v8703 = vpack.c.bf16 %v8662, %v8661
    %v8704 = vpack.c.bf16 %v8664, %v8663
    %v8705 = vpack.c.bf16 %v8666, %v8665
    %v8706 = vpack.c.bf16 %v8668, %v8667
    %v8707 = vpack.c.bf16 %v8670, %v8669
    %v8708 = vpack.c.bf16 %v8672, %v8671
    %v8709 = vpack.c.bf16 %v8674, %v8673
    %v8710 = vpack.c.bf16 %v8676, %v8675
    %v8711 = vpack.c.bf16 %v8678, %v8677
    %v8712 = vpack.c.bf16 %v8680, %v8679
    %8713 = vst.msk [vmem:[#allocation3 + $0x8] sm:$0xff] %vm49, %v8681
    %8714 = vst.msk [vmem:[#allocation3 + $0x18] sm:$0xff] %vm49, %v8682
    %8715 = vst.msk [vmem:[#allocation3 + $0x28] sm:$0xff] %vm49, %v8683
    %8716 = vst.msk [vmem:[#allocation3 + $0x38] sm:$0xff] %vm49, %v8684
    %8717 = vst.msk [vmem:[#allocation3 + $0x48] sm:$0xff] %vm49, %v8685
    %8718 = vst.msk [vmem:[#allocation3 + $0x58] sm:$0xff] %vm49, %v8686
    %8719 = vst.msk [vmem:[#allocation3 + $0x68] sm:$0xff] %vm49, %v8687
    %8720 = vst.msk [vmem:[#allocation3 + $0x78] sm:$0xff] %vm49, %v8688
    %8721 = vst.msk [vmem:[#allocation3 + $0x88] sm:$0xff] %vm49, %v8689
    %8722 = vst.msk [vmem:[#allocation3 + $0x98] sm:$0xff] %vm49, %v8690
    %8723 = vst.msk [vmem:[#allocation3 + $0xa8] sm:$0xff] %vm49, %v8691
    %8724 = vst.msk [vmem:[#allocation3 + $0xb8] sm:$0xff] %vm49, %v8692
    %8725 = vst.msk [vmem:[#allocation3 + $0xc8] sm:$0xff] %vm49, %v8693
    %8726 = vst.msk [vmem:[#allocation3 + $0xd8] sm:$0xff] %vm49, %v8694
    %8727 = vst.msk [vmem:[#allocation3 + $0xe8] sm:$0xff] %vm49, %v8695
    %8728 = vst.msk [vmem:[#allocation3 + $0xf8] sm:$0xff] %vm49, %v8696
    %8729 = vst.msk [vmem:[#allocation3 + $0x108] sm:$0xff] %vm49, %v8697
    %8730 = vst.msk [vmem:[#allocation3 + $0x118] sm:$0xff] %vm49, %v8698
    %8731 = vst.msk [vmem:[#allocation3 + $0x128] sm:$0xff] %vm49, %v8699
    %8732 = vst.msk [vmem:[#allocation3 + $0x138] sm:$0xff] %vm49, %v8700
    %8733 = vst.msk [vmem:[#allocation3 + $0x148] sm:$0xff] %vm49, %v8701
    %8734 = vst.msk [vmem:[#allocation3 + $0x158] sm:$0xff] %vm49, %v8702
    %8735 = vst.msk [vmem:[#allocation3 + $0x168] sm:$0xff] %vm49, %v8703
    %8736 = vst.msk [vmem:[#allocation3 + $0x178] sm:$0xff] %vm49, %v8704
    %8737 = vst.msk [vmem:[#allocation3 + $0x188] sm:$0xff] %vm49, %v8705
    %8738 = vst.msk [vmem:[#allocation3 + $0x198] sm:$0xff] %vm49, %v8706
    %8739 = vst.msk [vmem:[#allocation3 + $0x1a8] sm:$0xff] %vm49, %v8707
    %8740 = vst.msk [vmem:[#allocation3 + $0x1b8] sm:$0xff] %vm49, %v8708
    %8741 = vst.msk [vmem:[#allocation3 + $0x1c8] sm:$0xff] %vm49, %v8709
    %8742 = vst.msk [vmem:[#allocation3 + $0x1d8] sm:$0xff] %vm49, %v8710
    %8743 = vst.msk [vmem:[#allocation3 + $0x1e8] sm:$0xff] %vm49, %v8711
    %8744 = vst.msk [vmem:[#allocation3 + $0x1f8] sm:$0xff] %vm49, %v8712
    %v8745 = vld [vmem:[#allocation3] sm:$0xff]
    %v8746 = vld [vmem:[#allocation3 + $0x8] sm:$0xff]
    %v8747 = vld [vmem:[#allocation3 + $0x10] sm:$0xff]
    %v8748 = vld [vmem:[#allocation3 + $0x18] sm:$0xff]
    %v8749 = vld [vmem:[#allocation3 + $0x20] sm:$0xff]
    %v8750 = vld [vmem:[#allocation3 + $0x28] sm:$0xff]
    %v8751 = vld [vmem:[#allocation3 + $0x30] sm:$0xff]
    %v8752 = vld [vmem:[#allocation3 + $0x38] sm:$0xff]
    %v8753 = vld [vmem:[#allocation3 + $0x40] sm:$0xff]
    %v8754 = vld [vmem:[#allocation3 + $0x48] sm:$0xff]
    %v8755 = vld [vmem:[#allocation3 + $0x50] sm:$0xff]
    %v8756 = vld [vmem:[#allocation3 + $0x58] sm:$0xff]
    %v8757 = vld [vmem:[#allocation3 + $0x60] sm:$0xff]
    %v8758 = vld [vmem:[#allocation3 + $0x68] sm:$0xff]
    %v8759 = vld [vmem:[#allocation3 + $0x70] sm:$0xff]
    %v8760 = vld [vmem:[#allocation3 + $0x78] sm:$0xff]
    %v8761 = vld [vmem:[#allocation3 + $0x80] sm:$0xff]
    %v8762 = vld [vmem:[#allocation3 + $0x88] sm:$0xff]
    %v8763 = vld [vmem:[#allocation3 + $0x90] sm:$0xff]
    %v8764 = vld [vmem:[#allocation3 + $0x98] sm:$0xff]
    %v8765 = vld [vmem:[#allocation3 + $0xa0] sm:$0xff]
    %v8766 = vld [vmem:[#allocation3 + $0xa8] sm:$0xff]
    %v8767 = vld [vmem:[#allocation3 + $0xb0] sm:$0xff]
    %v8768 = vld [vmem:[#allocation3 + $0xb8] sm:$0xff]
    %v8769 = vld [vmem:[#allocation3 + $0xc0] sm:$0xff]
    %v8770 = vld [vmem:[#allocation3 + $0xc8] sm:$0xff]
    %v8771 = vld [vmem:[#allocation3 + $0xd0] sm:$0xff]
    %v8772 = vld [vmem:[#allocation3 + $0xd8] sm:$0xff]
    %v8773 = vld [vmem:[#allocation3 + $0xe0] sm:$0xff]
    %v8774 = vld [vmem:[#allocation3 + $0xe8] sm:$0xff]
    %v8775 = vld [vmem:[#allocation3 + $0xf0] sm:$0xff]
    %v8776 = vld [vmem:[#allocation3 + $0xf8] sm:$0xff]
    %v8777 = vld [vmem:[#allocation3 + $0x100] sm:$0xff]
    %v8778 = vld [vmem:[#allocation3 + $0x108] sm:$0xff]
    %v8779 = vld [vmem:[#allocation3 + $0x110] sm:$0xff]
    %v8780 = vld [vmem:[#allocation3 + $0x118] sm:$0xff]
    %v8781 = vld [vmem:[#allocation3 + $0x120] sm:$0xff]
    %v8782 = vld [vmem:[#allocation3 + $0x128] sm:$0xff]
    %v8783 = vld [vmem:[#allocation3 + $0x130] sm:$0xff]
    %v8784 = vld [vmem:[#allocation3 + $0x138] sm:$0xff]
    %v8785 = vld [vmem:[#allocation3 + $0x140] sm:$0xff]
    %v8786 = vld [vmem:[#allocation3 + $0x148] sm:$0xff]
    %v8787 = vld [vmem:[#allocation3 + $0x150] sm:$0xff]
    %v8788 = vld [vmem:[#allocation3 + $0x158] sm:$0xff]
    %v8789 = vld [vmem:[#allocation3 + $0x160] sm:$0xff]
    %v8790 = vld [vmem:[#allocation3 + $0x168] sm:$0xff]
    %v8791 = vld [vmem:[#allocation3 + $0x170] sm:$0xff]
    %v8792 = vld [vmem:[#allocation3 + $0x178] sm:$0xff]
    %v8793 = vld [vmem:[#allocation3 + $0x180] sm:$0xff]
    %v8794 = vld [vmem:[#allocation3 + $0x188] sm:$0xff]
    %v8795 = vld [vmem:[#allocation3 + $0x190] sm:$0xff]
    %v8796 = vld [vmem:[#allocation3 + $0x198] sm:$0xff]
    %v8797 = vld [vmem:[#allocation3 + $0x1a0] sm:$0xff]
    %v8798 = vld [vmem:[#allocation3 + $0x1a8] sm:$0xff]
    %v8799 = vld [vmem:[#allocation3 + $0x1b0] sm:$0xff]
    %v8800 = vld [vmem:[#allocation3 + $0x1b8] sm:$0xff]
    %v8801 = vld [vmem:[#allocation3 + $0x1c0] sm:$0xff]
    %v8802 = vld [vmem:[#allocation3 + $0x1c8] sm:$0xff]
    %v8803 = vld [vmem:[#allocation3 + $0x1d0] sm:$0xff]
    %v8804 = vld [vmem:[#allocation3 + $0x1d8] sm:$0xff]
    %v8805 = vld [vmem:[#allocation3 + $0x1e0] sm:$0xff]
    %v8806 = vld [vmem:[#allocation3 + $0x1e8] sm:$0xff]
    %v8807 = vld [vmem:[#allocation3 + $0x1f0] sm:$0xff]
    %v8808 = vld [vmem:[#allocation3 + $0x1f8] sm:$0xff]
    %s8809 = scalar_lea.vmem %s1, 144
    %v8810 = vld [vmem:[%s8809] sm:$0xf]
    %v8811 = vld [vmem:[%s8809 + $0x4] sm:$0xf]
    %v8812 = vld [vmem:[%s8809 + $0x8] sm:$0xf]
    %v8813 = vld [vmem:[%s8809 + $0xc] sm:$0xf]
    %v8814 = vld [vmem:[%s8809 + $0x10] sm:$0xf]
    %v8815 = vld [vmem:[%s8809 + $0x14] sm:$0xf]
    %v8816 = vld [vmem:[%s8809 + $0x18] sm:$0xf]
    %v8817 = vld [vmem:[%s8809 + $0x1c] sm:$0xf]
    %v8818 = vld [vmem:[%s8809 + $0x20] sm:$0xf]
    %v8819 = vld [vmem:[%s8809 + $0x24] sm:$0xf]
    %v8820 = vld [vmem:[%s8809 + $0x28] sm:$0xf]
    %v8821 = vld [vmem:[%s8809 + $0x2c] sm:$0xf]
    %v8822 = vld [vmem:[%s8809 + $0x30] sm:$0xf]
    %v8823 = vld [vmem:[%s8809 + $0x34] sm:$0xf]
    %v8824 = vld [vmem:[%s8809 + $0x38] sm:$0xf]
    %v8825 = vld [vmem:[%s8809 + $0x3c] sm:$0xf]
    %v8826 = vld [vmem:[%s8809 + $0x40] sm:$0xf]
    %v8827 = vld [vmem:[%s8809 + $0x44] sm:$0xf]
    %v8846 = vunpack.c.l.b16 %v8810
    %v8847 = vunpack.c.l.b16 %v8811
    %v8848 = vunpack.c.l.b16 %v8812
    %v8849 = vunpack.c.l.b16 %v8813
    %v8850 = vunpack.c.l.b16 %v8814
    %v8851 = vunpack.c.l.b16 %v8815
    %v8852 = vunpack.c.l.b16 %v8816
    %v8853 = vunpack.c.l.b16 %v8817
    %v8854 = vunpack.c.l.b16 %v8818
    %v8855 = vunpack.c.l.b16 %v8819
    %v8856 = vunpack.c.l.b16 %v8820
    %v8857 = vunpack.c.l.b16 %v8821
    %v8858 = vunpack.c.l.b16 %v8822
    %v8859 = vunpack.c.l.b16 %v8823
    %v8860 = vunpack.c.l.b16 %v8824
    %v8861 = vunpack.c.l.b16 %v8825
    %v8862 = vunpack.c.l.b16 %v8826
    %v8863 = vunpack.c.l.b16 %v8827
    %v8864 = vpack.c.b16 %v8847, %v8846
    %v8865 = vpack.c.b16 %v8849, %v8848
    %v8866 = vpack.c.b16 %v8851, %v8850
    %v8867 = vpack.c.b16 %v8853, %v8852
    %v8868 = vpack.c.b16 %v8855, %v8854
    %v8869 = vpack.c.b16 %v8857, %v8856
    %v8870 = vpack.c.b16 %v8859, %v8858
    %v8871 = vpack.c.b16 %v8861, %v8860
    %v8872 = vpack.c.b16 %v8863, %v8862
    %v8883 = vsel %vm49, %v8746, 0
    %v8886 = vsel %vm49, %v8748, 0
    %v8889 = vsel %vm49, %v8750, 0
    %v8892 = vsel %vm49, %v8752, 0
    %v8895 = vsel %vm49, %v8754, 0
    %v8898 = vsel %vm49, %v8756, 0
    %v8901 = vsel %vm49, %v8758, 0
    %v8904 = vsel %vm49, %v8760, 0
    %v8907 = vsel %vm49, %v8762, 0
    %v8910 = vsel %vm49, %v8764, 0
    %v8913 = vsel %vm49, %v8766, 0
    %v8916 = vsel %vm49, %v8768, 0
    %v8919 = vsel %vm49, %v8770, 0
    %v8922 = vsel %vm49, %v8772, 0
    %v8925 = vsel %vm49, %v8774, 0
    %v8928 = vsel %vm49, %v8776, 0
    %v8931 = vsel %vm49, %v8778, 0
    %v8934 = vsel %vm49, %v8780, 0
    %v8937 = vsel %vm49, %v8782, 0
    %v8940 = vsel %vm49, %v8784, 0
    %v8943 = vsel %vm49, %v8786, 0
    %v8946 = vsel %vm49, %v8788, 0
    %v8949 = vsel %vm49, %v8790, 0
    %v8952 = vsel %vm49, %v8792, 0
    %v8955 = vsel %vm49, %v8794, 0
    %v8958 = vsel %vm49, %v8796, 0
    %v8961 = vsel %vm49, %v8798, 0
    %v8964 = vsel %vm49, %v8800, 0
    %v8967 = vsel %vm49, %v8802, 0
    %v8970 = vsel %vm49, %v8804, 0
    %v8973 = vsel %vm49, %v8806, 0
    %v8976 = vsel %vm49, %v8808, 0
    %8978 = vmatprep.subr.bf16.mxu0 0
    %8979 = vmatpush1.bf16.msra.mxu0 %v8864
    %8980 = vmatprep.subr.bf16.mxu0 0
    %8981 = vmatpush1.bf16.msra.mxu0 %v8865
    %8982 = vmatprep.subr.bf16.mxu0 0
    %8983 = vmatpush1.bf16.msra.mxu0 %v8866
    %8984 = vmatprep.subr.bf16.mxu0 0
    %8985 = vmatpush1.bf16.msra.mxu0 %v8867
    %8986 = vmatprep.subr.bf16.mxu0 0
    %8987 = vmatpush1.bf16.msra.mxu0 %v8868
    %8988 = vmatprep.subr.bf16.mxu0 0
    %8989 = vmatpush1.bf16.msra.mxu0 %v8869
    %8990 = vmatprep.subr.bf16.mxu0 0
    %8991 = vmatpush1.bf16.msra.mxu0 %v8870
    %8992 = vmatprep.subr.bf16.mxu0 0
    %8993 = vmatpush1.bf16.msra.mxu0 %v8871
    %8994 = vmatprep.subr.bf16.mxu0 0
    %8995 = vmatpush1.bf16.msra.mxu0 %v8872
    %8996 = vmatprep.subr.bf16.mxu0 0
    %8997 = vmatpush1.bf16.msra.mxu0 0
    %8998 = vmatprep.subr.bf16.mxu0 0
    %8999 = vmatpush1.bf16.msra.mxu0 0
    %9000 = vmatprep.subr.bf16.mxu0 0
    %9001 = vmatpush1.bf16.msra.mxu0 0
    %9002 = vmatprep.subr.bf16.mxu0 0
    %9003 = vmatpush1.bf16.msra.mxu0 0
    %9004 = vmatprep.subr.bf16.mxu0 0
    %9005 = vmatpush1.bf16.msra.mxu0 0
    %9006 = vmatprep.subr.bf16.mxu0 0
    %9007 = vmatpush1.bf16.msra.mxu0 0
    %9008 = vmatprep.subr.bf16.mxu0 0
    %9009 = vmatpush1.bf16.msra.mxu0 0
    %9010 = vmatprep.mubr.bf16.mxu0 %v8883
    %9011 = vmatmul.mubr.bf16.gmra.mrb[0].mxu0 %v8745
    %v9012 = vpop.f32.mrb[0].mxu0
    %v9013 = vadd.f32 0.0, %v9012
    %v9014 = vpop.f32.mrb[0].mxu0
    %v9015 = vpop.f32.mrb[0].mxu0
    %v9016 = vadd.f32 0.0, %v9015
    %v9017 = vpop.f32.mrb[0].mxu0
    %9018 = vmatprep.mubr.bf16.mxu0 %v8886
    %9019 = vmatmul.mubr.bf16.gmra.mrb[0].mxu0 %v8747
    %v9020 = vpop.f32.mrb[0].mxu0
    %v9021 = vadd.f32 0.0, %v9020
    %v9022 = vpop.f32.mrb[0].mxu0
    %v9023 = vpop.f32.mrb[0].mxu0
    %v9024 = vadd.f32 0.0, %v9023
    %v9025 = vpop.f32.mrb[0].mxu0
    %9026 = vmatprep.mubr.bf16.mxu0 %v8889
    %9027 = vmatmul.mubr.bf16.gmra.mrb[0].mxu0 %v8749
    %v9028 = vpop.f32.mrb[0].mxu0
    %v9029 = vadd.f32 0.0, %v9028
    %v9030 = vpop.f32.mrb[0].mxu0
    %v9031 = vpop.f32.mrb[0].mxu0
    %v9032 = vadd.f32 0.0, %v9031
    %v9033 = vpop.f32.mrb[0].mxu0
    %9034 = vmatprep.mubr.bf16.mxu0 %v8892
    %9035 = vmatmul.mubr.bf16.gmra.mrb[0].mxu0 %v8751
    %v9036 = vpop.f32.mrb[0].mxu0
    %v9037 = vadd.f32 0.0, %v9036
    %v9038 = vpop.f32.mrb[0].mxu0
    %v9039 = vpop.f32.mrb[0].mxu0
    %v9040 = vadd.f32 0.0, %v9039
    %v9041 = vpop.f32.mrb[0].mxu0
    %9042 = vmatprep.mubr.bf16.mxu0 %v8895
    %9043 = vmatmul.mubr.bf16.gmra.mrb[0].mxu0 %v8753
    %v9044 = vpop.f32.mrb[0].mxu0
    %v9045 = vadd.f32 0.0, %v9044
    %v9046 = vpop.f32.mrb[0].mxu0
    %v9047 = vpop.f32.mrb[0].mxu0
    %v9048 = vadd.f32 0.0, %v9047
    %v9049 = vpop.f32.mrb[0].mxu0
    %9050 = vmatprep.mubr.bf16.mxu0 %v8898
    %9051 = vmatmul.mubr.bf16.gmra.mrb[0].mxu0 %v8755
    %v9052 = vpop.f32.mrb[0].mxu0
    %v9053 = vadd.f32 0.0, %v9052
    %v9054 = vpop.f32.mrb[0].mxu0
    %v9055 = vpop.f32.mrb[0].mxu0
    %v9056 = vadd.f32 0.0, %v9055
    %v9057 = vpop.f32.mrb[0].mxu0
    %9058 = vmatprep.mubr.bf16.mxu0 %v8901
    %9059 = vmatmul.mubr.bf16.gmra.mrb[0].mxu0 %v8757
    %v9060 = vpop.f32.mrb[0].mxu0
    %v9061 = vadd.f32 0.0, %v9060
    %v9062 = vpop.f32.mrb[0].mxu0
    %v9063 = vpop.f32.mrb[0].mxu0
    %v9064 = vadd.f32 0.0, %v9063
    %v9065 = vpop.f32.mrb[0].mxu0
    %9066 = vmatprep.mubr.bf16.mxu0 %v8904
    %9067 = vmatmul.mubr.bf16.gmra.mrb[0].mxu0 %v8759
    %v9068 = vpop.f32.mrb[0].mxu0
    %v9069 = vadd.f32 0.0, %v9068
    %v9070 = vpop.f32.mrb[0].mxu0
    %v9071 = vpop.f32.mrb[0].mxu0
    %v9072 = vadd.f32 0.0, %v9071
    %v9073 = vpop.f32.mrb[0].mxu0
    %9074 = vmatprep.mubr.bf16.mxu0 %v8907
    %9075 = vmatmul.mubr.bf16.gmra.mrb[0].mxu0 %v8761
    %v9076 = vpop.f32.mrb[0].mxu0
    %v9077 = vadd.f32 0.0, %v9076
    %v9078 = vpop.f32.mrb[0].mxu0
    %v9079 = vpop.f32.mrb[0].mxu0
    %v9080 = vadd.f32 0.0, %v9079
    %v9081 = vpop.f32.mrb[0].mxu0
    %9082 = vmatprep.mubr.bf16.mxu0 %v8910
    %9083 = vmatmul.mubr.bf16.gmra.mrb[0].mxu0 %v8763
    %v9084 = vpop.f32.mrb[0].mxu0
    %v9085 = vadd.f32 0.0, %v9084
    %v9086 = vpop.f32.mrb[0].mxu0
    %v9087 = vpop.f32.mrb[0].mxu0
    %v9088 = vadd.f32 0.0, %v9087
    %v9089 = vpop.f32.mrb[0].mxu0
    %9090 = vmatprep.mubr.bf16.mxu0 %v8913
    %9091 = vmatmul.mubr.bf16.gmra.mrb[0].mxu0 %v8765
    %v9092 = vpop.f32.mrb[0].mxu0
    %v9093 = vadd.f32 0.0, %v9092
    %v9094 = vpop.f32.mrb[0].mxu0
    %v9095 = vpop.f32.mrb[0].mxu0
    %v9096 = vadd.f32 0.0, %v9095
    %v9097 = vpop.f32.mrb[0].mxu0
    %9098 = vmatprep.mubr.bf16.mxu0 %v8916
    %9099 = vmatmul.mubr.bf16.gmra.mrb[0].mxu0 %v8767
    %v9100 = vpop.f32.mrb[0].mxu0
    %v9101 = vadd.f32 0.0, %v9100
    %v9102 = vpop.f32.mrb[0].mxu0
    %v9103 = vpop.f32.mrb[0].mxu0
    %v9104 = vadd.f32 0.0, %v9103
    %v9105 = vpop.f32.mrb[0].mxu0
    %9106 = vmatprep.mubr.bf16.mxu0 %v8919
    %9107 = vmatmul.mubr.bf16.gmra.mrb[0].mxu0 %v8769
    %v9108 = vpop.f32.mrb[0].mxu0
    %v9109 = vadd.f32 0.0, %v9108
    %v9110 = vpop.f32.mrb[0].mxu0
    %v9111 = vpop.f32.mrb[0].mxu0
    %v9112 = vadd.f32 0.0, %v9111
    %v9113 = vpop.f32.mrb[0].mxu0
    %9114 = vmatprep.mubr.bf16.mxu0 %v8922
    %9115 = vmatmul.mubr.bf16.gmra.mrb[0].mxu0 %v8771
    %v9116 = vpop.f32.mrb[0].mxu0
    %v9117 = vadd.f32 0.0, %v9116
    %v9118 = vpop.f32.mrb[0].mxu0
    %v9119 = vpop.f32.mrb[0].mxu0
    %v9120 = vadd.f32 0.0, %v9119
    %v9121 = vpop.f32.mrb[0].mxu0
    %9122 = vmatprep.mubr.bf16.mxu0 %v8925
    %9123 = vmatmul.mubr.bf16.gmra.mrb[0].mxu0 %v8773
    %v9124 = vpop.f32.mrb[0].mxu0
    %v9125 = vadd.f32 0.0, %v9124
    %v9126 = vpop.f32.mrb[0].mxu0
    %v9127 = vpop.f32.mrb[0].mxu0
    %v9128 = vadd.f32 0.0, %v9127
    %v9129 = vpop.f32.mrb[0].mxu0
    %9130 = vmatprep.mubr.bf16.mxu0 %v8928
    %9131 = vmatmul.mubr.bf16.gmra.mrb[0].mxu0 %v8775
    %v9132 = vpop.f32.mrb[0].mxu0
    %v9133 = vadd.f32 0.0, %v9132
    %v9134 = vpop.f32.mrb[0].mxu0
    %v9135 = vpop.f32.mrb[0].mxu0
    %v9136 = vadd.f32 0.0, %v9135
    %v9137 = vpop.f32.mrb[0].mxu0
    %9138 = vmatprep.mubr.bf16.mxu0 %v8931
    %9139 = vmatmul.mubr.bf16.gmra.mrb[0].mxu0 %v8777
    %v9140 = vpop.f32.mrb[0].mxu0
    %v9141 = vadd.f32 0.0, %v9140
    %v9142 = vpop.f32.mrb[0].mxu0
    %v9143 = vpop.f32.mrb[0].mxu0
    %v9144 = vadd.f32 0.0, %v9143
    %v9145 = vpop.f32.mrb[0].mxu0
    %9146 = vmatprep.mubr.bf16.mxu0 %v8934
    %9147 = vmatmul.mubr.bf16.gmra.mrb[0].mxu0 %v8779
    %v9148 = vpop.f32.mrb[0].mxu0
    %v9149 = vadd.f32 0.0, %v9148
    %v9150 = vpop.f32.mrb[0].mxu0
    %v9151 = vpop.f32.mrb[0].mxu0
    %v9152 = vadd.f32 0.0, %v9151
    %v9153 = vpop.f32.mrb[0].mxu0
    %9154 = vmatprep.mubr.bf16.mxu0 %v8937
    %9155 = vmatmul.mubr.bf16.gmra.mrb[0].mxu0 %v8781
    %v9156 = vpop.f32.mrb[0].mxu0
    %v9157 = vadd.f32 0.0, %v9156
    %v9158 = vpop.f32.mrb[0].mxu0
    %v9159 = vpop.f32.mrb[0].mxu0
    %v9160 = vadd.f32 0.0, %v9159
    %v9161 = vpop.f32.mrb[0].mxu0
    %9162 = vmatprep.mubr.bf16.mxu0 %v8940
    %9163 = vmatmul.mubr.bf16.gmra.mrb[0].mxu0 %v8783
    %v9164 = vpop.f32.mrb[0].mxu0
    %v9165 = vadd.f32 0.0, %v9164
    %v9166 = vpop.f32.mrb[0].mxu0
    %v9167 = vpop.f32.mrb[0].mxu0
    %v9168 = vadd.f32 0.0, %v9167
    %v9169 = vpop.f32.mrb[0].mxu0
    %9170 = vmatprep.mubr.bf16.mxu0 %v8943
    %9171 = vmatmul.mubr.bf16.gmra.mrb[0].mxu0 %v8785
    %v9172 = vpop.f32.mrb[0].mxu0
    %v9173 = vadd.f32 0.0, %v9172
    %v9174 = vpop.f32.mrb[0].mxu0
    %v9175 = vpop.f32.mrb[0].mxu0
    %v9176 = vadd.f32 0.0, %v9175
    %v9177 = vpop.f32.mrb[0].mxu0
    %9178 = vmatprep.mubr.bf16.mxu0 %v8946
    %9179 = vmatmul.mubr.bf16.gmra.mrb[0].mxu0 %v8787
    %v9180 = vpop.f32.mrb[0].mxu0
    %v9181 = vadd.f32 0.0, %v9180
    %v9182 = vpop.f32.mrb[0].mxu0
    %v9183 = vpop.f32.mrb[0].mxu0
    %v9184 = vadd.f32 0.0, %v9183
    %v9185 = vpop.f32.mrb[0].mxu0
    %9186 = vmatprep.mubr.bf16.mxu0 %v8949
    %9187 = vmatmul.mubr.bf16.gmra.mrb[0].mxu0 %v8789
    %v9188 = vpop.f32.mrb[0].mxu0
    %v9189 = vadd.f32 0.0, %v9188
    %v9190 = vpop.f32.mrb[0].mxu0
    %v9191 = vpop.f32.mrb[0].mxu0
    %v9192 = vadd.f32 0.0, %v9191
    %v9193 = vpop.f32.mrb[0].mxu0
    %9194 = vmatprep.mubr.bf16.mxu0 %v8952
    %9195 = vmatmul.mubr.bf16.gmra.mrb[0].mxu0 %v8791
    %v9196 = vpop.f32.mrb[0].mxu0
    %v9197 = vadd.f32 0.0, %v9196
    %v9198 = vpop.f32.mrb[0].mxu0
    %v9199 = vpop.f32.mrb[0].mxu0
    %v9200 = vadd.f32 0.0, %v9199
    %v9201 = vpop.f32.mrb[0].mxu0
    %9202 = vmatprep.mubr.bf16.mxu0 %v8955
    %9203 = vmatmul.mubr.bf16.gmra.mrb[0].mxu0 %v8793
    %v9204 = vpop.f32.mrb[0].mxu0
    %v9205 = vadd.f32 0.0, %v9204
    %v9206 = vpop.f32.mrb[0].mxu0
    %v9207 = vpop.f32.mrb[0].mxu0
    %v9208 = vadd.f32 0.0, %v9207
    %v9209 = vpop.f32.mrb[0].mxu0
    %9210 = vmatprep.mubr.bf16.mxu0 %v8958
    %9211 = vmatmul.mubr.bf16.gmra.mrb[0].mxu0 %v8795
    %v9212 = vpop.f32.mrb[0].mxu0
    %v9213 = vadd.f32 0.0, %v9212
    %v9214 = vpop.f32.mrb[0].mxu0
    %v9215 = vpop.f32.mrb[0].mxu0
    %v9216 = vadd.f32 0.0, %v9215
    %v9217 = vpop.f32.mrb[0].mxu0
    %9218 = vmatprep.mubr.bf16.mxu0 %v8961
    %9219 = vmatmul.mubr.bf16.gmra.mrb[0].mxu0 %v8797
    %v9220 = vpop.f32.mrb[0].mxu0
    %v9221 = vadd.f32 0.0, %v9220
    %v9222 = vpop.f32.mrb[0].mxu0
    %v9223 = vpop.f32.mrb[0].mxu0
    %v9224 = vadd.f32 0.0, %v9223
    %v9225 = vpop.f32.mrb[0].mxu0
    %9226 = vmatprep.mubr.bf16.mxu0 %v8964
    %9227 = vmatmul.mubr.bf16.gmra.mrb[0].mxu0 %v8799
    %v9228 = vpop.f32.mrb[0].mxu0
    %v9229 = vadd.f32 0.0, %v9228
    %v9230 = vpop.f32.mrb[0].mxu0
    %v9231 = vpop.f32.mrb[0].mxu0
    %v9232 = vadd.f32 0.0, %v9231
    %v9233 = vpop.f32.mrb[0].mxu0
    %9234 = vmatprep.mubr.bf16.mxu0 %v8967
    %9235 = vmatmul.mubr.bf16.gmra.mrb[0].mxu0 %v8801
    %v9236 = vpop.f32.mrb[0].mxu0
    %v9237 = vadd.f32 0.0, %v9236
    %v9238 = vpop.f32.mrb[0].mxu0
    %v9239 = vpop.f32.mrb[0].mxu0
    %v9240 = vadd.f32 0.0, %v9239
    %v9241 = vpop.f32.mrb[0].mxu0
    %9242 = vmatprep.mubr.bf16.mxu0 %v8970
    %9243 = vmatmul.mubr.bf16.gmra.mrb[0].mxu0 %v8803
    %v9244 = vpop.f32.mrb[0].mxu0
    %v9245 = vadd.f32 0.0, %v9244
    %v9246 = vpop.f32.mrb[0].mxu0
    %v9247 = vpop.f32.mrb[0].mxu0
    %v9248 = vadd.f32 0.0, %v9247
    %v9249 = vpop.f32.mrb[0].mxu0
    %9250 = vmatprep.mubr.bf16.mxu0 %v8973
    %9251 = vmatmul.mubr.bf16.gmra.mrb[0].mxu0 %v8805
    %v9252 = vpop.f32.mrb[0].mxu0
    %v9253 = vadd.f32 0.0, %v9252
    %v9254 = vpop.f32.mrb[0].mxu0
    %v9255 = vpop.f32.mrb[0].mxu0
    %v9256 = vadd.f32 0.0, %v9255
    %v9257 = vpop.f32.mrb[0].mxu0
    %9258 = vmatprep.mubr.bf16.mxu0 %v8976
    %9259 = vmatmul.mubr.bf16.gmra.mrb[0].mxu0 %v8807
    %v9260 = vpop.f32.mrb[0].mxu0
    %v9261 = vadd.f32 0.0, %v9260
    %v9262 = vpop.f32.mrb[0].mxu0
    %v9263 = vpop.f32.mrb[0].mxu0
    %v9264 = vadd.f32 0.0, %v9263
    %v9265 = vpop.f32.mrb[0].mxu0
    %9266 = vdwg.mxu0
    %s9267 = scalar_lea.vmem %s2, 2
    %v9268 = vld [vmem:[%s9267] sm:$0x1]
    %v9270 = vlaneseq
    %v9271 = vshrl.u32 %v9270, 7
    %v9272 = vsub.s32 0, %v9271
    %v9273 = vrot.slane %v9268, %v9272
    %v9275 = vadd.f32 %v9013, %v9273
    %v9276 = vadd.f32 %v9016, %v9273
    %v9277 = vadd.f32 %v9021, %v9273
    %v9278 = vadd.f32 %v9024, %v9273
    %v9279 = vadd.f32 %v9029, %v9273
    %v9280 = vadd.f32 %v9032, %v9273
    %v9281 = vadd.f32 %v9037, %v9273
    %v9282 = vadd.f32 %v9040, %v9273
    %v9283 = vadd.f32 %v9045, %v9273
    %v9284 = vadd.f32 %v9048, %v9273
    %v9285 = vadd.f32 %v9053, %v9273
    %v9286 = vadd.f32 %v9056, %v9273
    %v9287 = vadd.f32 %v9061, %v9273
    %v9288 = vadd.f32 %v9064, %v9273
    %v9289 = vadd.f32 %v9069, %v9273
    %v9290 = vadd.f32 %v9072, %v9273
    %v9291 = vadd.f32 %v9077, %v9273
    %v9292 = vadd.f32 %v9080, %v9273
    %v9293 = vadd.f32 %v9085, %v9273
    %v9294 = vadd.f32 %v9088, %v9273
    %v9295 = vadd.f32 %v9093, %v9273
    %v9296 = vadd.f32 %v9096, %v9273
    %v9297 = vadd.f32 %v9101, %v9273
    %v9298 = vadd.f32 %v9104, %v9273
    %v9299 = vadd.f32 %v9109, %v9273
    %v9300 = vadd.f32 %v9112, %v9273
    %v9301 = vadd.f32 %v9117, %v9273
    %v9302 = vadd.f32 %v9120, %v9273
    %v9303 = vadd.f32 %v9125, %v9273
    %v9304 = vadd.f32 %v9128, %v9273
    %v9305 = vadd.f32 %v9133, %v9273
    %v9306 = vadd.f32 %v9136, %v9273
    %v9307 = vadd.f32 %v9141, %v9273
    %v9308 = vadd.f32 %v9144, %v9273
    %v9309 = vadd.f32 %v9149, %v9273
    %v9310 = vadd.f32 %v9152, %v9273
    %v9311 = vadd.f32 %v9157, %v9273
    %v9312 = vadd.f32 %v9160, %v9273
    %v9313 = vadd.f32 %v9165, %v9273
    %v9314 = vadd.f32 %v9168, %v9273
    %v9315 = vadd.f32 %v9173, %v9273
    %v9316 = vadd.f32 %v9176, %v9273
    %v9317 = vadd.f32 %v9181, %v9273
    %v9318 = vadd.f32 %v9184, %v9273
    %v9319 = vadd.f32 %v9189, %v9273
    %v9320 = vadd.f32 %v9192, %v9273
    %v9321 = vadd.f32 %v9197, %v9273
    %v9322 = vadd.f32 %v9200, %v9273
    %v9323 = vadd.f32 %v9205, %v9273
    %v9324 = vadd.f32 %v9208, %v9273
    %v9325 = vadd.f32 %v9213, %v9273
    %v9326 = vadd.f32 %v9216, %v9273
    %v9327 = vadd.f32 %v9221, %v9273
    %v9328 = vadd.f32 %v9224, %v9273
    %v9329 = vadd.f32 %v9229, %v9273
    %v9330 = vadd.f32 %v9232, %v9273
    %v9331 = vadd.f32 %v9237, %v9273
    %v9332 = vadd.f32 %v9240, %v9273
    %v9333 = vadd.f32 %v9245, %v9273
    %v9334 = vadd.f32 %v9248, %v9273
    %v9335 = vadd.f32 %v9253, %v9273
    %v9336 = vadd.f32 %v9256, %v9273
    %v9337 = vadd.f32 %v9261, %v9273
    %v9338 = vadd.f32 %v9264, %v9273
    %v9339 = vstv %s162
    %v9340 = vmul.f32 %v6111, %v9339
    %v9341 = vmul.f32 %v6112, %v9339
    %v9342 = vmul.f32 %v6113, %v9339
    %v9343 = vmul.f32 %v6114, %v9339
    %v9344 = vmul.f32 %v6115, %v9339
    %v9345 = vmul.f32 %v6116, %v9339
    %v9346 = vmul.f32 %v6117, %v9339
    %v9347 = vmul.f32 %v6118, %v9339
    %v9348 = vmul.f32 %v6119, %v9339
    %v9349 = vmul.f32 %v6120, %v9339
    %v9350 = vmul.f32 %v6121, %v9339
    %v9351 = vmul.f32 %v6122, %v9339
    %v9352 = vmul.f32 %v6123, %v9339
    %v9353 = vmul.f32 %v6124, %v9339
    %v9354 = vmul.f32 %v6125, %v9339
    %v9355 = vmul.f32 %v6126, %v9339
    %v9356 = vmul.f32 %v6127, %v9339
    %v9357 = vmul.f32 %v6128, %v9339
    %v9358 = vmul.f32 %v6129, %v9339
    %v9359 = vmul.f32 %v6130, %v9339
    %v9360 = vmul.f32 %v6131, %v9339
    %v9361 = vmul.f32 %v6132, %v9339
    %v9362 = vmul.f32 %v6133, %v9339
    %v9363 = vmul.f32 %v6134, %v9339
    %v9364 = vmul.f32 %v6135, %v9339
    %v9365 = vmul.f32 %v6136, %v9339
    %v9366 = vmul.f32 %v6137, %v9339
    %v9367 = vmul.f32 %v6138, %v9339
    %v9368 = vmul.f32 %v6139, %v9339
    %v9369 = vmul.f32 %v6140, %v9339
    %v9370 = vmul.f32 %v6141, %v9339
    %v9371 = vmul.f32 %v6142, %v9339
    %v9372 = vmul.f32 %v6143, %v9339
    %v9373 = vmul.f32 %v6144, %v9339
    %v9374 = vmul.f32 %v6145, %v9339
    %v9375 = vmul.f32 %v6146, %v9339
    %v9376 = vmul.f32 %v6147, %v9339
    %v9377 = vmul.f32 %v6148, %v9339
    %v9378 = vmul.f32 %v6149, %v9339
    %v9379 = vmul.f32 %v6150, %v9339
    %v9380 = vmul.f32 %v6151, %v9339
    %v9381 = vmul.f32 %v6152, %v9339
    %v9382 = vmul.f32 %v6153, %v9339
    %v9383 = vmul.f32 %v6154, %v9339
    %v9384 = vmul.f32 %v6155, %v9339
    %v9385 = vmul.f32 %v6156, %v9339
    %v9386 = vmul.f32 %v6157, %v9339
    %v9387 = vmul.f32 %v6158, %v9339
    %v9388 = vmul.f32 %v6159, %v9339
    %v9389 = vmul.f32 %v6160, %v9339
    %v9390 = vmul.f32 %v6161, %v9339
    %v9391 = vmul.f32 %v6162, %v9339
    %v9392 = vmul.f32 %v6163, %v9339
    %v9393 = vmul.f32 %v6164, %v9339
    %v9394 = vmul.f32 %v6165, %v9339
    %v9395 = vmul.f32 %v6166, %v9339
    %v9396 = vmul.f32 %v6167, %v9339
    %v9397 = vmul.f32 %v6168, %v9339
    %v9398 = vmul.f32 %v6169, %v9339
    %v9399 = vmul.f32 %v6170, %v9339
    %v9400 = vmul.f32 %v6171, %v9339
    %v9401 = vmul.f32 %v6172, %v9339
    %v9402 = vmul.f32 %v6173, %v9339
    %v9403 = vmul.f32 %v6174, %v9339
    %v9404 = vadd.f32 %v9275, %v9340
    %v9405 = vadd.f32 %v9276, %v9341
    %v9406 = vadd.f32 %v9277, %v9342
    %v9407 = vadd.f32 %v9278, %v9343
    %v9408 = vadd.f32 %v9279, %v9344
    %v9409 = vadd.f32 %v9280, %v9345
    %v9410 = vadd.f32 %v9281, %v9346
    %v9411 = vadd.f32 %v9282, %v9347
    %v9412 = vadd.f32 %v9283, %v9348
    %v9413 = vadd.f32 %v9284, %v9349
    %v9414 = vadd.f32 %v9285, %v9350
    %v9415 = vadd.f32 %v9286, %v9351
    %v9416 = vadd.f32 %v9287, %v9352
    %v9417 = vadd.f32 %v9288, %v9353
    %v9418 = vadd.f32 %v9289, %v9354
    %v9419 = vadd.f32 %v9290, %v9355
    %v9420 = vadd.f32 %v9291, %v9356
    %v9421 = vadd.f32 %v9292, %v9357
    %v9422 = vadd.f32 %v9293, %v9358
    %v9423 = vadd.f32 %v9294, %v9359
    %v9424 = vadd.f32 %v9295, %v9360
    %v9425 = vadd.f32 %v9296, %v9361
    %v9426 = vadd.f32 %v9297, %v9362
    %v9427 = vadd.f32 %v9298, %v9363
    %v9428 = vadd.f32 %v9299, %v9364
    %v9429 = vadd.f32 %v9300, %v9365
    %v9430 = vadd.f32 %v9301, %v9366
    %v9431 = vadd.f32 %v9302, %v9367
    %v9432 = vadd.f32 %v9303, %v9368
    %v9433 = vadd.f32 %v9304, %v9369
    %v9434 = vadd.f32 %v9305, %v9370
    %v9435 = vadd.f32 %v9306, %v9371
    %v9436 = vadd.f32 %v9307, %v9372
    %v9437 = vadd.f32 %v9308, %v9373
    %v9438 = vadd.f32 %v9309, %v9374
    %v9439 = vadd.f32 %v9310, %v9375
    %v9440 = vadd.f32 %v9311, %v9376
    %v9441 = vadd.f32 %v9312, %v9377
    %v9442 = vadd.f32 %v9313, %v9378
    %v9443 = vadd.f32 %v9314, %v9379
    %v9444 = vadd.f32 %v9315, %v9380
    %v9445 = vadd.f32 %v9316, %v9381
    %v9446 = vadd.f32 %v9317, %v9382
    %v9447 = vadd.f32 %v9318, %v9383
    %v9448 = vadd.f32 %v9319, %v9384
    %v9449 = vadd.f32 %v9320, %v9385
    %v9450 = vadd.f32 %v9321, %v9386
    %v9451 = vadd.f32 %v9322, %v9387
    %v9452 = vadd.f32 %v9323, %v9388
    %v9453 = vadd.f32 %v9324, %v9389
    %v9454 = vadd.f32 %v9325, %v9390
    %v9455 = vadd.f32 %v9326, %v9391
    %v9456 = vadd.f32 %v9327, %v9392
    %v9457 = vadd.f32 %v9328, %v9393
    %v9458 = vadd.f32 %v9329, %v9394
    %v9459 = vadd.f32 %v9330, %v9395
    %v9460 = vadd.f32 %v9331, %v9396
    %v9461 = vadd.f32 %v9332, %v9397
    %v9462 = vadd.f32 %v9333, %v9398
    %v9463 = vadd.f32 %v9334, %v9399
    %v9464 = vadd.f32 %v9335, %v9400
    %v9465 = vadd.f32 %v9336, %v9401
    %v9466 = vadd.f32 %v9337, %v9402
    %v9467 = vadd.f32 %v9338, %v9403
    %v9468 = vadd.f32 %v9404, %v3076
    %v9469 = vadd.f32 %v9405, %v3077
    %v9470 = vadd.f32 %v9406, %v3078
    %v9471 = vadd.f32 %v9407, %v3079
    %v9472 = vadd.f32 %v9408, %v3080
    %v9473 = vadd.f32 %v9409, %v3081
    %v9474 = vadd.f32 %v9410, %v3082
    %v9475 = vadd.f32 %v9411, %v3083
    %v9476 = vadd.f32 %v9412, %v3084
    %v9477 = vadd.f32 %v9413, %v3085
    %v9478 = vadd.f32 %v9414, %v3086
    %v9479 = vadd.f32 %v9415, %v3087
    %v9480 = vadd.f32 %v9416, %v3088
    %v9481 = vadd.f32 %v9417, %v3089
    %v9482 = vadd.f32 %v9418, %v3090
    %v9483 = vadd.f32 %v9419, %v3091
    %v9484 = vadd.f32 %v9420, %v3092
    %v9485 = vadd.f32 %v9421, %v3093
    %v9486 = vadd.f32 %v9422, %v3094
    %v9487 = vadd.f32 %v9423, %v3095
    %v9488 = vadd.f32 %v9424, %v3096
    %v9489 = vadd.f32 %v9425, %v3097
    %v9490 = vadd.f32 %v9426, %v3098
    %v9491 = vadd.f32 %v9427, %v3099
    %v9492 = vadd.f32 %v9428, %v3100
    %v9493 = vadd.f32 %v9429, %v3101
    %v9494 = vadd.f32 %v9430, %v3102
    %v9495 = vadd.f32 %v9431, %v3103
    %v9496 = vadd.f32 %v9432, %v3104
    %v9497 = vadd.f32 %v9433, %v3105
    %v9498 = vadd.f32 %v9434, %v3106
    %v9499 = vadd.f32 %v9435, %v3107
    %v9500 = vadd.f32 %v9436, %v3108
    %v9501 = vadd.f32 %v9437, %v3109
    %v9502 = vadd.f32 %v9438, %v3110
    %v9503 = vadd.f32 %v9439, %v3111
    %v9504 = vadd.f32 %v9440, %v3112
    %v9505 = vadd.f32 %v9441, %v3113
    %v9506 = vadd.f32 %v9442, %v3114
    %v9507 = vadd.f32 %v9443, %v3115
    %v9508 = vadd.f32 %v9444, %v3116
    %v9509 = vadd.f32 %v9445, %v3117
    %v9510 = vadd.f32 %v9446, %v3118
    %v9511 = vadd.f32 %v9447, %v3119
    %v9512 = vadd.f32 %v9448, %v3120
    %v9513 = vadd.f32 %v9449, %v3121
    %v9514 = vadd.f32 %v9450, %v3122
    %v9515 = vadd.f32 %v9451, %v3123
    %v9516 = vadd.f32 %v9452, %v3124
    %v9517 = vadd.f32 %v9453, %v3125
    %v9518 = vadd.f32 %v9454, %v3126
    %v9519 = vadd.f32 %v9455, %v3127
    %v9520 = vadd.f32 %v9456, %v3128
    %v9521 = vadd.f32 %v9457, %v3129
    %v9522 = vadd.f32 %v9458, %v3130
    %v9523 = vadd.f32 %v9459, %v3131
    %v9524 = vadd.f32 %v9460, %v3132
    %v9525 = vadd.f32 %v9461, %v3133
    %v9526 = vadd.f32 %v9462, %v3134
    %v9527 = vadd.f32 %v9463, %v3135
    %v9528 = vadd.f32 %v9464, %v3136
    %v9529 = vadd.f32 %v9465, %v3137
    %v9530 = vadd.f32 %v9466, %v3138
    %v9531 = vadd.f32 %v9467, %v3139
    %v9532 = vstv %s163
    %v9533 = vmul.f32 %v9468, %v9532
    %v9534 = vmul.f32 %v9469, %v9532
    %v9535 = vmul.f32 %v9470, %v9532
    %v9536 = vmul.f32 %v9471, %v9532
    %v9537 = vmul.f32 %v9472, %v9532
    %v9538 = vmul.f32 %v9473, %v9532
    %v9539 = vmul.f32 %v9474, %v9532
    %v9540 = vmul.f32 %v9475, %v9532
    %v9541 = vmul.f32 %v9476, %v9532
    %v9542 = vmul.f32 %v9477, %v9532
    %v9543 = vmul.f32 %v9478, %v9532
    %v9544 = vmul.f32 %v9479, %v9532
    %v9545 = vmul.f32 %v9480, %v9532
    %v9546 = vmul.f32 %v9481, %v9532
    %v9547 = vmul.f32 %v9482, %v9532
    %v9548 = vmul.f32 %v9483, %v9532
    %v9549 = vmul.f32 %v9484, %v9532
    %v9550 = vmul.f32 %v9485, %v9532
    %v9551 = vmul.f32 %v9486, %v9532
    %v9552 = vmul.f32 %v9487, %v9532
    %v9553 = vmul.f32 %v9488, %v9532
    %v9554 = vmul.f32 %v9489, %v9532
    %v9555 = vmul.f32 %v9490, %v9532
    %v9556 = vmul.f32 %v9491, %v9532
    %v9557 = vmul.f32 %v9492, %v9532
    %v9558 = vmul.f32 %v9493, %v9532
    %v9559 = vmul.f32 %v9494, %v9532
    %v9560 = vmul.f32 %v9495, %v9532
    %v9561 = vmul.f32 %v9496, %v9532
    %v9562 = vmul.f32 %v9497, %v9532
    %v9563 = vmul.f32 %v9498, %v9532
    %v9564 = vmul.f32 %v9499, %v9532
    %v9565 = vmul.f32 %v9500, %v9532
    %v9566 = vmul.f32 %v9501, %v9532
    %v9567 = vmul.f32 %v9502, %v9532
    %v9568 = vmul.f32 %v9503, %v9532
    %v9569 = vmul.f32 %v9504, %v9532
    %v9570 = vmul.f32 %v9505, %v9532
    %v9571 = vmul.f32 %v9506, %v9532
    %v9572 = vmul.f32 %v9507, %v9532
    %v9573 = vmul.f32 %v9508, %v9532
    %v9574 = vmul.f32 %v9509, %v9532
    %v9575 = vmul.f32 %v9510, %v9532
    %v9576 = vmul.f32 %v9511, %v9532
    %v9577 = vmul.f32 %v9512, %v9532
    %v9578 = vmul.f32 %v9513, %v9532
    %v9579 = vmul.f32 %v9514, %v9532
    %v9580 = vmul.f32 %v9515, %v9532
    %v9581 = vmul.f32 %v9516, %v9532
    %v9582 = vmul.f32 %v9517, %v9532
    %v9583 = vmul.f32 %v9518, %v9532
    %v9584 = vmul.f32 %v9519, %v9532
    %v9585 = vmul.f32 %v9520, %v9532
    %v9586 = vmul.f32 %v9521, %v9532
    %v9587 = vmul.f32 %v9522, %v9532
    %v9588 = vmul.f32 %v9523, %v9532
    %v9589 = vmul.f32 %v9524, %v9532
    %v9590 = vmul.f32 %v9525, %v9532
    %v9591 = vmul.f32 %v9526, %v9532
    %v9592 = vmul.f32 %v9527, %v9532
    %v9593 = vmul.f32 %v9528, %v9532
    %v9594 = vmul.f32 %v9529, %v9532
    %v9595 = vmul.f32 %v9530, %v9532
    %v9596 = vmul.f32 %v9531, %v9532
    %v9597 = vadd.f32 %v9533, %v164
    %v9598 = vadd.f32 %v9534, %v165
    %v9599 = vadd.f32 %v9535, %v166
    %v9600 = vadd.f32 %v9536, %v167
    %v9601 = vadd.f32 %v9537, %v168
    %v9602 = vadd.f32 %v9538, %v169
    %v9603 = vadd.f32 %v9539, %v170
    %v9604 = vadd.f32 %v9540, %v171
    %v9605 = vadd.f32 %v9541, %v172
    %v9606 = vadd.f32 %v9542, %v173
    %v9607 = vadd.f32 %v9543, %v174
    %v9608 = vadd.f32 %v9544, %v175
    %v9609 = vadd.f32 %v9545, %v176
    %v9610 = vadd.f32 %v9546, %v177
    %v9611 = vadd.f32 %v9547, %v178
    %v9612 = vadd.f32 %v9548, %v179
    %v9613 = vadd.f32 %v9549, %v180
    %v9614 = vadd.f32 %v9550, %v181
    %v9615 = vadd.f32 %v9551, %v182
    %v9616 = vadd.f32 %v9552, %v183
    %v9617 = vadd.f32 %v9553, %v184
    %v9618 = vadd.f32 %v9554, %v185
    %v9619 = vadd.f32 %v9555, %v186
    %v9620 = vadd.f32 %v9556, %v187
    %v9621 = vadd.f32 %v9557, %v188
    %v9622 = vadd.f32 %v9558, %v189
    %v9623 = vadd.f32 %v9559, %v190
    %v9624 = vadd.f32 %v9560, %v191
    %v9625 = vadd.f32 %v9561, %v192
    %v9626 = vadd.f32 %v9562, %v193
    %v9627 = vadd.f32 %v9563, %v194
    %v9628 = vadd.f32 %v9564, %v195
    %v9629 = vadd.f32 %v9565, %v196
    %v9630 = vadd.f32 %v9566, %v197
    %v9631 = vadd.f32 %v9567, %v198
    %v9632 = vadd.f32 %v9568, %v199
    %v9633 = vadd.f32 %v9569, %v200
    %v9634 = vadd.f32 %v9570, %v201
    %v9635 = vadd.f32 %v9571, %v202
    %v9636 = vadd.f32 %v9572, %v203
    %v9637 = vadd.f32 %v9573, %v204
    %v9638 = vadd.f32 %v9574, %v205
    %v9639 = vadd.f32 %v9575, %v206
    %v9640 = vadd.f32 %v9576, %v207
    %v9641 = vadd.f32 %v9577, %v208
    %v9642 = vadd.f32 %v9578, %v209
    %v9643 = vadd.f32 %v9579, %v210
    %v9644 = vadd.f32 %v9580, %v211
    %v9645 = vadd.f32 %v9581, %v212
    %v9646 = vadd.f32 %v9582, %v213
    %v9647 = vadd.f32 %v9583, %v214
    %v9648 = vadd.f32 %v9584, %v215
    %v9649 = vadd.f32 %v9585, %v216
    %v9650 = vadd.f32 %v9586, %v217
    %v9651 = vadd.f32 %v9587, %v218
    %v9652 = vadd.f32 %v9588, %v219
    %v9653 = vadd.f32 %v9589, %v220
    %v9654 = vadd.f32 %v9590, %v221
    %v9655 = vadd.f32 %v9591, %v222
    %v9656 = vadd.f32 %v9592, %v223
    %v9657 = vadd.f32 %v9593, %v224
    %v9658 = vadd.f32 %v9594, %v225
    %v9659 = vadd.f32 %v9595, %v226
    %v9660 = vadd.f32 %v9596, %v227
    %9661 = vst.msk [vmem:[#allocation9] sm:$0xff] %vm49, %v9597
    %9662 = vst.msk [vmem:[#allocation9 + $0x8] sm:$0xff] %vm49, %v9598
    %9663 = vst.msk [vmem:[#allocation9 + $0x10] sm:$0xff] %vm49, %v9599
    %9664 = vst.msk [vmem:[#allocation9 + $0x18] sm:$0xff] %vm49, %v9600
    %9665 = vst.msk [vmem:[#allocation9 + $0x20] sm:$0xff] %vm49, %v9601
    %9666 = vst.msk [vmem:[#allocation9 + $0x28] sm:$0xff] %vm49, %v9602
    %9667 = vst.msk [vmem:[#allocation9 + $0x30] sm:$0xff] %vm49, %v9603
    %9668 = vst.msk [vmem:[#allocation9 + $0x38] sm:$0xff] %vm49, %v9604
    %9669 = vst.msk [vmem:[#allocation9 + $0x40] sm:$0xff] %vm49, %v9605
    %9670 = vst.msk [vmem:[#allocation9 + $0x48] sm:$0xff] %vm49, %v9606
    %9671 = vst.msk [vmem:[#allocation9 + $0x50] sm:$0xff] %vm49, %v9607
    %9672 = vst.msk [vmem:[#allocation9 + $0x58] sm:$0xff] %vm49, %v9608
    %9673 = vst.msk [vmem:[#allocation9 + $0x60] sm:$0xff] %vm49, %v9609
    %9674 = vst.msk [vmem:[#allocation9 + $0x68] sm:$0xff] %vm49, %v9610
    %9675 = vst.msk [vmem:[#allocation9 + $0x70] sm:$0xff] %vm49, %v9611
    %9676 = vst.msk [vmem:[#allocation9 + $0x78] sm:$0xff] %vm49, %v9612
    %9677 = vst.msk [vmem:[#allocation9 + $0x80] sm:$0xff] %vm49, %v9613
    %9678 = vst.msk [vmem:[#allocation9 + $0x88] sm:$0xff] %vm49, %v9614
    %9679 = vst.msk [vmem:[#allocation9 + $0x90] sm:$0xff] %vm49, %v9615
    %9680 = vst.msk [vmem:[#allocation9 + $0x98] sm:$0xff] %vm49, %v9616
    %9681 = vst.msk [vmem:[#allocation9 + $0xa0] sm:$0xff] %vm49, %v9617
    %9682 = vst.msk [vmem:[#allocation9 + $0xa8] sm:$0xff] %vm49, %v9618
    %9683 = vst.msk [vmem:[#allocation9 + $0xb0] sm:$0xff] %vm49, %v9619
    %9684 = vst.msk [vmem:[#allocation9 + $0xb8] sm:$0xff] %vm49, %v9620
    %9685 = vst.msk [vmem:[#allocation9 + $0xc0] sm:$0xff] %vm49, %v9621
    %9686 = vst.msk [vmem:[#allocation9 + $0xc8] sm:$0xff] %vm49, %v9622
    %9687 = vst.msk [vmem:[#allocation9 + $0xd0] sm:$0xff] %vm49, %v9623
    %9688 = vst.msk [vmem:[#allocation9 + $0xd8] sm:$0xff] %vm49, %v9624
    %9689 = vst.msk [vmem:[#allocation9 + $0xe0] sm:$0xff] %vm49, %v9625
    %9690 = vst.msk [vmem:[#allocation9 + $0xe8] sm:$0xff] %vm49, %v9626
    %9691 = vst.msk [vmem:[#allocation9 + $0xf0] sm:$0xff] %vm49, %v9627
    %9692 = vst.msk [vmem:[#allocation9 + $0xf8] sm:$0xff] %vm49, %v9628
    %9693 = vst.msk [vmem:[#allocation9 + $0x100] sm:$0xff] %vm49, %v9629
    %9694 = vst.msk [vmem:[#allocation9 + $0x108] sm:$0xff] %vm49, %v9630
    %9695 = vst.msk [vmem:[#allocation9 + $0x110] sm:$0xff] %vm49, %v9631
    %9696 = vst.msk [vmem:[#allocation9 + $0x118] sm:$0xff] %vm49, %v9632
    %9697 = vst.msk [vmem:[#allocation9 + $0x120] sm:$0xff] %vm49, %v9633
    %9698 = vst.msk [vmem:[#allocation9 + $0x128] sm:$0xff] %vm49, %v9634
    %9699 = vst.msk [vmem:[#allocation9 + $0x130] sm:$0xff] %vm49, %v9635
    %9700 = vst.msk [vmem:[#allocation9 + $0x138] sm:$0xff] %vm49, %v9636
    %9701 = vst.msk [vmem:[#allocation9 + $0x140] sm:$0xff] %vm49, %v9637
    %9702 = vst.msk [vmem:[#allocation9 + $0x148] sm:$0xff] %vm49, %v9638
    %9703 = vst.msk [vmem:[#allocation9 + $0x150] sm:$0xff] %vm49, %v9639
    %9704 = vst.msk [vmem:[#allocation9 + $0x158] sm:$0xff] %vm49, %v9640
    %9705 = vst.msk [vmem:[#allocation9 + $0x160] sm:$0xff] %vm49, %v9641
    %9706 = vst.msk [vmem:[#allocation9 + $0x168] sm:$0xff] %vm49, %v9642
    %9707 = vst.msk [vmem:[#allocation9 + $0x170] sm:$0xff] %vm49, %v9643
    %9708 = vst.msk [vmem:[#allocation9 + $0x178] sm:$0xff] %vm49, %v9644
    %9709 = vst.msk [vmem:[#allocation9 + $0x180] sm:$0xff] %vm49, %v9645
    %9710 = vst.msk [vmem:[#allocation9 + $0x188] sm:$0xff] %vm49, %v9646
    %9711 = vst.msk [vmem:[#allocation9 + $0x190] sm:$0xff] %vm49, %v9647
    %9712 = vst.msk [vmem:[#allocation9 + $0x198] sm:$0xff] %vm49, %v9648
    %9713 = vst.msk [vmem:[#allocation9 + $0x1a0] sm:$0xff] %vm49, %v9649
    %9714 = vst.msk [vmem:[#allocation9 + $0x1a8] sm:$0xff] %vm49, %v9650
    %9715 = vst.msk [vmem:[#allocation9 + $0x1b0] sm:$0xff] %vm49, %v9651
    %9716 = vst.msk [vmem:[#allocation9 + $0x1b8] sm:$0xff] %vm49, %v9652
    %9717 = vst.msk [vmem:[#allocation9 + $0x1c0] sm:$0xff] %vm49, %v9653
    %9718 = vst.msk [vmem:[#allocation9 + $0x1c8] sm:$0xff] %vm49, %v9654
    %9719 = vst.msk [vmem:[#allocation9 + $0x1d0] sm:$0xff] %vm49, %v9655
    %9720 = vst.msk [vmem:[#allocation9 + $0x1d8] sm:$0xff] %vm49, %v9656
    %9721 = vst.msk [vmem:[#allocation9 + $0x1e0] sm:$0xff] %vm49, %v9657
    %9722 = vst.msk [vmem:[#allocation9 + $0x1e8] sm:$0xff] %vm49, %v9658
    %9723 = vst.msk [vmem:[#allocation9 + $0x1f0] sm:$0xff] %vm49, %v9659
    %9724 = vst.msk [vmem:[#allocation9 + $0x1f8] sm:$0xff] %vm49, %v9660
    // Predicated region
    $region30: #{tpu_custom_call.1} parent=1 // pred_check
      _
    $region31: #{tpu_custom_call.1} parent=1 // pred_check_branch
      %9726 = sbr.rel (0) target = $region33
    $region32: #{tpu_custom_call.1} parent=1 // pred_region
      %s9728 = ssub.s32 8192, 8192
      %9729 = vsyncadd [#allocation6], %s9728
      %s9730 = sshll.u32 [#allocation9], 4
      %s9731 = int_to_ptr.vmem [resolvable:$true] %s9730
      %9736 = dma.vmem_to_hbm [thread:$0]  %s9731, 8192, %s5, [#allocation6], 128, 128, 8
    $region33: #{tpu_custom_call.1} parent=1 // pred_fallthru
      _
    // Predicated region
    $region34: #{tpu_custom_call.1} parent=1 // pred_check
      _
    $region35: #{tpu_custom_call.1} parent=1 // pred_check_branch
      %9738 = sbr.rel (0) target = $region37
    $region36: #{tpu_custom_call.1} parent=1 // pred_region
      %9739 = dma.done [#allocation6], 8192
    $region37: #{tpu_custom_call.1} parent=1 // pred_fallthru
      _
    %9740 = vsyncpa [#allocation5], 1
    %9741 = vsyncpa [#allocation6], 1
    %9742 = vsyncpa [#allocation7], 1

</llo_original>
